<compile_context>
chip_gen: v6e
topology: v6e:2x2x1
jax: 0.10.0
libtpu: 0.0.40
codegen_flags: <defaults>
</compile_context>

<pallas_src>
import jax
import jax.numpy as jnp
from jax import lax
from jax.experimental import pallas as pl
from jax.experimental.pallas import tpu as pltpu

NUM_LAYERS = 8
HIDDEN = 512


def style_kernel(z_ref, w_ref, b_ref, aw_ref, ab_ref, out_ref):
    # z_ref:  (TILE_B, 512)        f32   input latent tile
    # w_ref:  (8, 512, 512)        bf16  all mapping weights (in, out), VMEM-resident
    # b_ref:  (8, 1, 512)          f32   all mapping biases
    # aw_ref: (512, DP)            bf16  affine weight (transposed, lane-padded)
    # ab_ref: (1, DP)              f32   affine bias (lane-padded)
    # out_ref:(TILE_B, DP)         f32   output tile
    h0 = z_ref[...].astype(jnp.bfloat16)

    def layer(l, h):
        # bf16 x bf16 on the MXU with f32 accumulation.
        y = jnp.dot(h, w_ref[l], preferred_element_type=jnp.float32) + b_ref[l]
        # LeakyReLU(0.2) in f32 on the VPU (v5e-friendly), then cast once for
        # the next layer's MXU input.
        y = jnp.where(y > 0, y, 0.2 * y)
        return y.astype(jnp.bfloat16)

    h = lax.fori_loop(0, NUM_LAYERS, layer, h0, unroll=True)

    # Affine epilogue: Linear(512, dim), lane-dense store.
    out_ref[...] = (
        jnp.dot(h, aw_ref[...], preferred_element_type=jnp.float32) + ab_ref[...]
    )


def style_forward(z, map_w, map_b, aff_w, aff_b, *, max_tile_b=256):
    """z: (B, 512). map_w: (8,512,512) stored (in,out). map_b: (8,1,512).
    aff_w: (512,dim). aff_b: (1,dim). Returns (B, dim, 1, 1) float32."""
    B = z.shape[0]
    dim = aff_w.shape[1]

    # Batch padding / tiling.  When Bp >= 16 force at least two batch tiles so
    # the "parallel" grid axis can shard across v7x's two TensorCores.
    Bp8 = max(8, ((B + 7) // 8) * 8)
    if Bp8 >= 16:
        tile_b = min(max_tile_b, ((Bp8 // 2 + 7) // 8) * 8)
    else:
        tile_b = Bp8
    nb = pl.cdiv(Bp8, tile_b)
    Bp = nb * tile_b
    zp = jnp.zeros((Bp, HIDDEN), jnp.float32).at[:B].set(z.astype(jnp.float32))

    # Lane-pad the affine output dim to a multiple of 128 (unmasked stores).
    DP = max(128, ((dim + 127) // 128) * 128)
    aff_w_p = jnp.zeros((HIDDEN, DP), jnp.float32).at[:, :dim].set(
        aff_w.astype(jnp.float32)
    )
    aff_b_p = jnp.zeros((1, DP), jnp.float32).at[:, :dim].set(
        aff_b.astype(jnp.float32)
    )

    # bf16 weights (the bandwidth-dominant term); biases stay f32.
    map_w_bf = map_w.astype(jnp.bfloat16)
    aff_w_bf = aff_w_p.astype(jnp.bfloat16)
    map_b_f = map_b.astype(jnp.float32)

    out = pl.pallas_call(
        style_kernel,
        out_shape=jax.ShapeDtypeStruct((Bp, DP), jnp.float32),
        grid_spec=pltpu.PrefetchScalarGridSpec(
            num_scalar_prefetch=0,
            grid=(nb,),
            in_specs=[
                pl.BlockSpec((tile_b, HIDDEN), lambda b: (b, 0)),              # z tile
                pl.BlockSpec((NUM_LAYERS, HIDDEN, HIDDEN), lambda b: (0, 0, 0)),  # all map_w
                pl.BlockSpec((NUM_LAYERS, 1, HIDDEN), lambda b: (0, 0, 0)),       # all map_b
                pl.BlockSpec((HIDDEN, DP), lambda b: (0, 0)),                   # aff_w
                pl.BlockSpec((1, DP), lambda b: (0, 0)),                        # aff_b
            ],
            out_specs=pl.BlockSpec((tile_b, DP), lambda b: (b, 0)),
        ),
        compiler_params=pltpu.CompilerParams(
            dimension_semantics=("parallel",),
            vmem_limit_bytes=24 << 20,
        ),
    )(zp, map_w_bf, map_b_f, aff_w_bf, aff_b_p)

    style = out[:B, :dim]
    return style.reshape(B, dim, 1, 1)


def init_params(key, dim):
    """Deterministic synthetic parameters (shapes match nn.Linear(512,512)x8 + nn.Linear(512,dim))."""
    keys = jax.random.split(key, 2 * NUM_LAYERS + 2)
    scale = 1.0 / jnp.sqrt(jnp.float32(HIDDEN))
    # Stored already transposed to (in, out) for `h @ W`.
    map_w = jnp.stack(
        [
            jax.random.uniform(keys[i], (HIDDEN, HIDDEN), jnp.float32, -scale, scale)
            for i in range(NUM_LAYERS)
        ]
    )
    map_b = jnp.stack(
        [
            jax.random.uniform(
                keys[NUM_LAYERS + i], (1, HIDDEN), jnp.float32, -scale, scale
            )
            for i in range(NUM_LAYERS)
        ]
    )
    aff_w = jax.random.uniform(keys[-2], (HIDDEN, dim), jnp.float32, -scale, scale)
    aff_b = jax.random.uniform(keys[-1], (1, dim), jnp.float32, -scale, scale)
    return map_w, map_b, aff_w, aff_b


def style_reference_f32(z, map_w, map_b, aff_w, aff_b):
    h = z.astype(jnp.float32)
    for i in range(NUM_LAYERS):
        h = h @ map_w[i] + map_b[i]
        h = jnp.where(h > 0, h, 0.2 * h)
    style = h @ aff_w + aff_b
    return style.reshape(style.shape[0], style.shape[1], 1, 1)


def style_reference_bf16(z, map_w, map_b, aff_w, aff_b):
    """Reference matching the kernel's mixed precision (bf16 operands, f32 accum)."""
    h = z.astype(jnp.float32)
    w_bf = map_w.astype(jnp.bfloat16)
    aw_bf = aff_w.astype(jnp.bfloat16)
    for i in range(NUM_LAYERS):
        h = (
            jnp.dot(h.astype(jnp.bfloat16), w_bf[i], preferred_element_type=jnp.float32)
            + map_b[i]
        )
        h = jnp.where(h > 0, h, 0.2 * h)
    style = (
        jnp.dot(h.astype(jnp.bfloat16), aw_bf, preferred_element_type=jnp.float32)
        + aff_b
    )
    return style.reshape(style.shape[0], style.shape[1], 1, 1)


if __name__ == "__main__":
    key = jax.random.PRNGKey(0)
    k_param, k_z = jax.random.split(key)

    B = 2
    DIM = 64  # `dim` argument of Style(dim)

    map_w, map_b, aff_w, aff_b = init_params(k_param, DIM)
    z = jax.random.normal(k_z, (B, HIDDEN), jnp.float32)

    out = style_forward(z, map_w, map_b, aff_w, aff_b)
    out = jax.block_until_ready(out)
    assert out.shape == (B, DIM, 1, 1), out.shape

    # Tight check against a precision-matched (bf16 weights, f32 accum) reference.
    ref_bf = style_reference_bf16(z, map_w, map_b, aff_w, aff_b)
    assert jnp.allclose(out, ref_bf, atol=2e-3, rtol=1e-2), float(
        jnp.max(jnp.abs(out - ref_bf))
    )
    # Loose sanity check against the full-f32 reference (bf16 weight rounding error).
    ref_f32 = style_reference_f32(z, map_w, map_b, aff_w, aff_b)
    assert jnp.allclose(out, ref_f32, atol=5e-2, rtol=5e-2), float(
        jnp.max(jnp.abs(out - ref_f32))
    )

    print("KERNEL_OK")
</pallas_src>

<mosaic_0001>
module attributes {stable_mosaic.version = 11 : i64} {
  func.func @style_kernel(%arg0: i32, %arg1: memref<8x512xf32, #tpu.memory_space<vmem>>, %arg2: memref<8x512x512xbf16, #tpu.memory_space<vmem>>, %arg3: memref<8x1x512xf32, #tpu.memory_space<vmem>>, %arg4: memref<512x128xbf16, #tpu.memory_space<vmem>>, %arg5: memref<1x128xf32, #tpu.memory_space<vmem>>, %arg6: memref<8x128xf32, #tpu.memory_space<vmem>>) attributes {dimension_semantics = [#tpu.dimension_semantics<parallel>], iteration_bounds = array<i64: 1>, scalar_prefetch = 0 : i64, scratch_operands = 0 : i64, tpu.core_type = #tpu.core_type<tc>, window_params = [{transform_indices = @transform_0, window_bounds = array<i64: 8, 512>}, {pipeline_mode = #tpu.pipeline_mode<synchronous>, transform_indices = @transform_1, window_bounds = array<i64: 8, 512, 512>}, {pipeline_mode = #tpu.pipeline_mode<synchronous>, transform_indices = @transform_2, window_bounds = array<i64: 8, 1, 512>}, {pipeline_mode = #tpu.pipeline_mode<synchronous>, transform_indices = @transform_3, window_bounds = array<i64: 512, 128>}, {pipeline_mode = #tpu.pipeline_mode<synchronous>, transform_indices = @transform_4, window_bounds = array<i64: 1, 128>}, {transform_indices = @transform_5, window_bounds = array<i64: 8, 128>}]} {
    %c0 = arith.constant 0 : index
    %c0_0 = arith.constant 0 : index
    %0 = vector.load %arg1[%c0, %c0_0] : memref<8x512xf32, #tpu.memory_space<vmem>>, vector<8x512xf32>
    %1 = arith.truncf %0 : vector<8x512xf32> to vector<8x512xbf16>
    %c0_i32 = arith.constant 0 : i32
    %2 = arith.index_cast %c0_i32 : i32 to index
    %c0_1 = arith.constant 0 : index
    %c0_2 = arith.constant 0 : index
    %3 = vector.load %arg2[%2, %c0_1, %c0_2] : memref<8x512x512xbf16, #tpu.memory_space<vmem>>, vector<1x512x512xbf16>
    %4 = vector.shape_cast %3 : vector<1x512x512xbf16> to vector<512x512xbf16>
    %cst = arith.constant dense<0.000000e+00> : vector<8x512xf32>
    %5 = tpu.matmul %1, %4, %cst {dimension_numbers = #tpu.dot_dimension_numbers<[1], [0], [0], [1], [0, 0, 1, 1], [], []>} : vector<8x512xbf16>, vector<512x512xbf16>, vector<8x512xf32> -> vector<8x512xf32>
    %6 = arith.index_cast %c0_i32 : i32 to index
    %c0_3 = arith.constant 0 : index
    %c0_4 = arith.constant 0 : index
    %7 = vector.load %arg3[%6, %c0_3, %c0_4] : memref<8x1x512xf32, #tpu.memory_space<vmem>>, vector<1x1x512xf32>
    %8 = vector.shape_cast %7 : vector<1x1x512xf32> to vector<1x512xf32>
    %9 = vector.broadcast %8 : vector<1x512xf32> to vector<8x512xf32>
    %10 = arith.addf %5, %9 : vector<8x512xf32>
    %cst_5 = arith.constant 0.000000e+00 : f32
    %11 = vector.broadcast %cst_5 : f32 to vector<8x512xf32>
    %12 = arith.cmpf ogt, %10, %11 : vector<8x512xf32>
    %cst_6 = arith.constant 2.000000e-01 : f32
    %13 = vector.broadcast %cst_6 : f32 to vector<8x512xf32>
    %14 = arith.mulf %13, %10 : vector<8x512xf32>
    %15 = arith.select %12, %10, %14 : vector<8x512xi1>, vector<8x512xf32>
    %16 = arith.truncf %15 : vector<8x512xf32> to vector<8x512xbf16>
    %c1_i32 = arith.constant 1 : i32
    %17 = arith.index_cast %c1_i32 : i32 to index
    %c0_7 = arith.constant 0 : index
    %c0_8 = arith.constant 0 : index
    %18 = vector.load %arg2[%17, %c0_7, %c0_8] : memref<8x512x512xbf16, #tpu.memory_space<vmem>>, vector<1x512x512xbf16>
    %19 = vector.shape_cast %18 : vector<1x512x512xbf16> to vector<512x512xbf16>
    %cst_9 = arith.constant dense<0.000000e+00> : vector<8x512xf32>
    %20 = tpu.matmul %16, %19, %cst_9 {dimension_numbers = #tpu.dot_dimension_numbers<[1], [0], [0], [1], [0, 0, 1, 1], [], []>} : vector<8x512xbf16>, vector<512x512xbf16>, vector<8x512xf32> -> vector<8x512xf32>
    %21 = arith.index_cast %c1_i32 : i32 to index
    %c0_10 = arith.constant 0 : index
    %c0_11 = arith.constant 0 : index
    %22 = vector.load %arg3[%21, %c0_10, %c0_11] : memref<8x1x512xf32, #tpu.memory_space<vmem>>, vector<1x1x512xf32>
    %23 = vector.shape_cast %22 : vector<1x1x512xf32> to vector<1x512xf32>
    %24 = vector.broadcast %23 : vector<1x512xf32> to vector<8x512xf32>
    %25 = arith.addf %20, %24 : vector<8x512xf32>
    %cst_12 = arith.constant 0.000000e+00 : f32
    %26 = vector.broadcast %cst_12 : f32 to vector<8x512xf32>
    %27 = arith.cmpf ogt, %25, %26 : vector<8x512xf32>
    %cst_13 = arith.constant 2.000000e-01 : f32
    %28 = vector.broadcast %cst_13 : f32 to vector<8x512xf32>
    %29 = arith.mulf %28, %25 : vector<8x512xf32>
    %30 = arith.select %27, %25, %29 : vector<8x512xi1>, vector<8x512xf32>
    %31 = arith.truncf %30 : vector<8x512xf32> to vector<8x512xbf16>
    %c2_i32 = arith.constant 2 : i32
    %32 = arith.index_cast %c2_i32 : i32 to index
    %c0_14 = arith.constant 0 : index
    %c0_15 = arith.constant 0 : index
    %33 = vector.load %arg2[%32, %c0_14, %c0_15] : memref<8x512x512xbf16, #tpu.memory_space<vmem>>, vector<1x512x512xbf16>
    %34 = vector.shape_cast %33 : vector<1x512x512xbf16> to vector<512x512xbf16>
    %cst_16 = arith.constant dense<0.000000e+00> : vector<8x512xf32>
    %35 = tpu.matmul %31, %34, %cst_16 {dimension_numbers = #tpu.dot_dimension_numbers<[1], [0], [0], [1], [0, 0, 1, 1], [], []>} : vector<8x512xbf16>, vector<512x512xbf16>, vector<8x512xf32> -> vector<8x512xf32>
    %36 = arith.index_cast %c2_i32 : i32 to index
    %c0_17 = arith.constant 0 : index
    %c0_18 = arith.constant 0 : index
    %37 = vector.load %arg3[%36, %c0_17, %c0_18] : memref<8x1x512xf32, #tpu.memory_space<vmem>>, vector<1x1x512xf32>
    %38 = vector.shape_cast %37 : vector<1x1x512xf32> to vector<1x512xf32>
    %39 = vector.broadcast %38 : vector<1x512xf32> to vector<8x512xf32>
    %40 = arith.addf %35, %39 : vector<8x512xf32>
    %cst_19 = arith.constant 0.000000e+00 : f32
    %41 = vector.broadcast %cst_19 : f32 to vector<8x512xf32>
    %42 = arith.cmpf ogt, %40, %41 : vector<8x512xf32>
    %cst_20 = arith.constant 2.000000e-01 : f32
    %43 = vector.broadcast %cst_20 : f32 to vector<8x512xf32>
    %44 = arith.mulf %43, %40 : vector<8x512xf32>
    %45 = arith.select %42, %40, %44 : vector<8x512xi1>, vector<8x512xf32>
    %46 = arith.truncf %45 : vector<8x512xf32> to vector<8x512xbf16>
    %c3_i32 = arith.constant 3 : i32
    %47 = arith.index_cast %c3_i32 : i32 to index
    %c0_21 = arith.constant 0 : index
    %c0_22 = arith.constant 0 : index
    %48 = vector.load %arg2[%47, %c0_21, %c0_22] : memref<8x512x512xbf16, #tpu.memory_space<vmem>>, vector<1x512x512xbf16>
    %49 = vector.shape_cast %48 : vector<1x512x512xbf16> to vector<512x512xbf16>
    %cst_23 = arith.constant dense<0.000000e+00> : vector<8x512xf32>
    %50 = tpu.matmul %46, %49, %cst_23 {dimension_numbers = #tpu.dot_dimension_numbers<[1], [0], [0], [1], [0, 0, 1, 1], [], []>} : vector<8x512xbf16>, vector<512x512xbf16>, vector<8x512xf32> -> vector<8x512xf32>
    %51 = arith.index_cast %c3_i32 : i32 to index
    %c0_24 = arith.constant 0 : index
    %c0_25 = arith.constant 0 : index
    %52 = vector.load %arg3[%51, %c0_24, %c0_25] : memref<8x1x512xf32, #tpu.memory_space<vmem>>, vector<1x1x512xf32>
    %53 = vector.shape_cast %52 : vector<1x1x512xf32> to vector<1x512xf32>
    %54 = vector.broadcast %53 : vector<1x512xf32> to vector<8x512xf32>
    %55 = arith.addf %50, %54 : vector<8x512xf32>
    %cst_26 = arith.constant 0.000000e+00 : f32
    %56 = vector.broadcast %cst_26 : f32 to vector<8x512xf32>
    %57 = arith.cmpf ogt, %55, %56 : vector<8x512xf32>
    %cst_27 = arith.constant 2.000000e-01 : f32
    %58 = vector.broadcast %cst_27 : f32 to vector<8x512xf32>
    %59 = arith.mulf %58, %55 : vector<8x512xf32>
    %60 = arith.select %57, %55, %59 : vector<8x512xi1>, vector<8x512xf32>
    %61 = arith.truncf %60 : vector<8x512xf32> to vector<8x512xbf16>
    %c4_i32 = arith.constant 4 : i32
    %62 = arith.index_cast %c4_i32 : i32 to index
    %c0_28 = arith.constant 0 : index
    %c0_29 = arith.constant 0 : index
    %63 = vector.load %arg2[%62, %c0_28, %c0_29] : memref<8x512x512xbf16, #tpu.memory_space<vmem>>, vector<1x512x512xbf16>
    %64 = vector.shape_cast %63 : vector<1x512x512xbf16> to vector<512x512xbf16>
    %cst_30 = arith.constant dense<0.000000e+00> : vector<8x512xf32>
    %65 = tpu.matmul %61, %64, %cst_30 {dimension_numbers = #tpu.dot_dimension_numbers<[1], [0], [0], [1], [0, 0, 1, 1], [], []>} : vector<8x512xbf16>, vector<512x512xbf16>, vector<8x512xf32> -> vector<8x512xf32>
    %66 = arith.index_cast %c4_i32 : i32 to index
    %c0_31 = arith.constant 0 : index
    %c0_32 = arith.constant 0 : index
    %67 = vector.load %arg3[%66, %c0_31, %c0_32] : memref<8x1x512xf32, #tpu.memory_space<vmem>>, vector<1x1x512xf32>
    %68 = vector.shape_cast %67 : vector<1x1x512xf32> to vector<1x512xf32>
    %69 = vector.broadcast %68 : vector<1x512xf32> to vector<8x512xf32>
    %70 = arith.addf %65, %69 : vector<8x512xf32>
    %cst_33 = arith.constant 0.000000e+00 : f32
    %71 = vector.broadcast %cst_33 : f32 to vector<8x512xf32>
    %72 = arith.cmpf ogt, %70, %71 : vector<8x512xf32>
    %cst_34 = arith.constant 2.000000e-01 : f32
    %73 = vector.broadcast %cst_34 : f32 to vector<8x512xf32>
    %74 = arith.mulf %73, %70 : vector<8x512xf32>
    %75 = arith.select %72, %70, %74 : vector<8x512xi1>, vector<8x512xf32>
    %76 = arith.truncf %75 : vector<8x512xf32> to vector<8x512xbf16>
    %c5_i32 = arith.constant 5 : i32
    %77 = arith.index_cast %c5_i32 : i32 to index
    %c0_35 = arith.constant 0 : index
    %c0_36 = arith.constant 0 : index
    %78 = vector.load %arg2[%77, %c0_35, %c0_36] : memref<8x512x512xbf16, #tpu.memory_space<vmem>>, vector<1x512x512xbf16>
    %79 = vector.shape_cast %78 : vector<1x512x512xbf16> to vector<512x512xbf16>
    %cst_37 = arith.constant dense<0.000000e+00> : vector<8x512xf32>
    %80 = tpu.matmul %76, %79, %cst_37 {dimension_numbers = #tpu.dot_dimension_numbers<[1], [0], [0], [1], [0, 0, 1, 1], [], []>} : vector<8x512xbf16>, vector<512x512xbf16>, vector<8x512xf32> -> vector<8x512xf32>
    %81 = arith.index_cast %c5_i32 : i32 to index
    %c0_38 = arith.constant 0 : index
    %c0_39 = arith.constant 0 : index
    %82 = vector.load %arg3[%81, %c0_38, %c0_39] : memref<8x1x512xf32, #tpu.memory_space<vmem>>, vector<1x1x512xf32>
    %83 = vector.shape_cast %82 : vector<1x1x512xf32> to vector<1x512xf32>
    %84 = vector.broadcast %83 : vector<1x512xf32> to vector<8x512xf32>
    %85 = arith.addf %80, %84 : vector<8x512xf32>
    %cst_40 = arith.constant 0.000000e+00 : f32
    %86 = vector.broadcast %cst_40 : f32 to vector<8x512xf32>
    %87 = arith.cmpf ogt, %85, %86 : vector<8x512xf32>
    %cst_41 = arith.constant 2.000000e-01 : f32
    %88 = vector.broadcast %cst_41 : f32 to vector<8x512xf32>
    %89 = arith.mulf %88, %85 : vector<8x512xf32>
    %90 = arith.select %87, %85, %89 : vector<8x512xi1>, vector<8x512xf32>
    %91 = arith.truncf %90 : vector<8x512xf32> to vector<8x512xbf16>
    %c6_i32 = arith.constant 6 : i32
    %92 = arith.index_cast %c6_i32 : i32 to index
    %c0_42 = arith.constant 0 : index
    %c0_43 = arith.constant 0 : index
    %93 = vector.load %arg2[%92, %c0_42, %c0_43] : memref<8x512x512xbf16, #tpu.memory_space<vmem>>, vector<1x512x512xbf16>
    %94 = vector.shape_cast %93 : vector<1x512x512xbf16> to vector<512x512xbf16>
    %cst_44 = arith.constant dense<0.000000e+00> : vector<8x512xf32>
    %95 = tpu.matmul %91, %94, %cst_44 {dimension_numbers = #tpu.dot_dimension_numbers<[1], [0], [0], [1], [0, 0, 1, 1], [], []>} : vector<8x512xbf16>, vector<512x512xbf16>, vector<8x512xf32> -> vector<8x512xf32>
    %96 = arith.index_cast %c6_i32 : i32 to index
    %c0_45 = arith.constant 0 : index
    %c0_46 = arith.constant 0 : index
    %97 = vector.load %arg3[%96, %c0_45, %c0_46] : memref<8x1x512xf32, #tpu.memory_space<vmem>>, vector<1x1x512xf32>
    %98 = vector.shape_cast %97 : vector<1x1x512xf32> to vector<1x512xf32>
    %99 = vector.broadcast %98 : vector<1x512xf32> to vector<8x512xf32>
    %100 = arith.addf %95, %99 : vector<8x512xf32>
    %cst_47 = arith.constant 0.000000e+00 : f32
    %101 = vector.broadcast %cst_47 : f32 to vector<8x512xf32>
    %102 = arith.cmpf ogt, %100, %101 : vector<8x512xf32>
    %cst_48 = arith.constant 2.000000e-01 : f32
    %103 = vector.broadcast %cst_48 : f32 to vector<8x512xf32>
    %104 = arith.mulf %103, %100 : vector<8x512xf32>
    %105 = arith.select %102, %100, %104 : vector<8x512xi1>, vector<8x512xf32>
    %106 = arith.truncf %105 : vector<8x512xf32> to vector<8x512xbf16>
    %c7_i32 = arith.constant 7 : i32
    %107 = arith.index_cast %c7_i32 : i32 to index
    %c0_49 = arith.constant 0 : index
    %c0_50 = arith.constant 0 : index
    %108 = vector.load %arg2[%107, %c0_49, %c0_50] : memref<8x512x512xbf16, #tpu.memory_space<vmem>>, vector<1x512x512xbf16>
    %109 = vector.shape_cast %108 : vector<1x512x512xbf16> to vector<512x512xbf16>
    %cst_51 = arith.constant dense<0.000000e+00> : vector<8x512xf32>
    %110 = tpu.matmul %106, %109, %cst_51 {dimension_numbers = #tpu.dot_dimension_numbers<[1], [0], [0], [1], [0, 0, 1, 1], [], []>} : vector<8x512xbf16>, vector<512x512xbf16>, vector<8x512xf32> -> vector<8x512xf32>
    %111 = arith.index_cast %c7_i32 : i32 to index
    %c0_52 = arith.constant 0 : index
    %c0_53 = arith.constant 0 : index
    %112 = vector.load %arg3[%111, %c0_52, %c0_53] : memref<8x1x512xf32, #tpu.memory_space<vmem>>, vector<1x1x512xf32>
    %113 = vector.shape_cast %112 : vector<1x1x512xf32> to vector<1x512xf32>
    %114 = vector.broadcast %113 : vector<1x512xf32> to vector<8x512xf32>
    %115 = arith.addf %110, %114 : vector<8x512xf32>
    %cst_54 = arith.constant 0.000000e+00 : f32
    %116 = vector.broadcast %cst_54 : f32 to vector<8x512xf32>
    %117 = arith.cmpf ogt, %115, %116 : vector<8x512xf32>
    %cst_55 = arith.constant 2.000000e-01 : f32
    %118 = vector.broadcast %cst_55 : f32 to vector<8x512xf32>
    %119 = arith.mulf %118, %115 : vector<8x512xf32>
    %120 = arith.select %117, %115, %119 : vector<8x512xi1>, vector<8x512xf32>
    %121 = arith.truncf %120 : vector<8x512xf32> to vector<8x512xbf16>
    %c8_i32 = arith.constant 8 : i32
    %c0_56 = arith.constant 0 : index
    %c0_57 = arith.constant 0 : index
    %122 = vector.load %arg4[%c0_56, %c0_57] : memref<512x128xbf16, #tpu.memory_space<vmem>>, vector<512x128xbf16>
    %cst_58 = arith.constant dense<0.000000e+00> : vector<8x128xf32>
    %123 = tpu.matmul %121, %122, %cst_58 {dimension_numbers = #tpu.dot_dimension_numbers<[1], [0], [0], [1], [0, 0, 1, 1], [], []>} : vector<8x512xbf16>, vector<512x128xbf16>, vector<8x128xf32> -> vector<8x128xf32>
    %c0_59 = arith.constant 0 : index
    %c0_60 = arith.constant 0 : index
    %124 = vector.load %arg5[%c0_59, %c0_60] : memref<1x128xf32, #tpu.memory_space<vmem>>, vector<1x128xf32>
    %125 = vector.broadcast %124 : vector<1x128xf32> to vector<8x128xf32>
    %126 = arith.addf %123, %125 : vector<8x128xf32>
    %c0_61 = arith.constant 0 : index
    %c0_62 = arith.constant 0 : index
    %127 = vector.load %arg6[%c0_61, %c0_62] : memref<8x128xf32, #tpu.memory_space<vmem>>, vector<8x128xf32>
    tpu.vector_store %arg6[%c0_61, %c0_62], %126 {strides = array<i32>} : memref<8x128xf32, #tpu.memory_space<vmem>>, vector<8x128xf32>,
    return
  }
  func.func @transform_0(%arg0: i32) -> (i32, i32) {
    %c0_i32 = arith.constant 0 : i32
    %c0_i32_0 = arith.constant 0 : i32
    return %arg0, %c0_i32 : i32, i32
  }
  func.func @transform_1(%arg0: i32) -> (i32, i32, i32) {
    %c0_i32 = arith.constant 0 : i32
    %c0_i32_0 = arith.constant 0 : i32
    %c0_i32_1 = arith.constant 0 : i32
    %c0_i32_2 = arith.constant 0 : i32
    return %c0_i32, %c0_i32_0, %c0_i32_1 : i32, i32, i32
  }
  func.func @transform_2(%arg0: i32) -> (i32, i32, i32) {
    %c0_i32 = arith.constant 0 : i32
    %c0_i32_0 = arith.constant 0 : i32
    %c0_i32_1 = arith.constant 0 : i32
    %c0_i32_2 = arith.constant 0 : i32
    return %c0_i32, %c0_i32_0, %c0_i32_1 : i32, i32, i32
  }
  func.func @transform_3(%arg0: i32) -> (i32, i32) {
    %c0_i32 = arith.constant 0 : i32
    %c0_i32_0 = arith.constant 0 : i32
    %c0_i32_1 = arith.constant 0 : i32
    return %c0_i32, %c0_i32_0 : i32, i32
  }
  func.func @transform_4(%arg0: i32) -> (i32, i32) {
    %c0_i32 = arith.constant 0 : i32
    %c0_i32_0 = arith.constant 0 : i32
    %c0_i32_1 = arith.constant 0 : i32
    return %c0_i32, %c0_i32_0 : i32, i32
  }
  func.func @transform_5(%arg0: i32) -> (i32, i32) {
    %c0_i32 = arith.constant 0 : i32
    %c0_i32_0 = arith.constant 0 : i32
    return %arg0, %c0_i32 : i32, i32
  }
}

</mosaic_0001>

<llo_original>
// kernel: tpu_custom_call.1
$region0: #{tpu_custom_call.1}
  #allocation0 [shape = 'u32[]', space=smem, size = 0x4, offset = 0x4, fixed_abs, tag = 'smem constant byte address 0x4 - core index']
  #allocation1 [shape = 'u32[144,128]{1,0:T(1,128)}', space=vmem, size = 0x12000, scoped, tag = 'internal scratch']
  %s0 = inlined_call_operand.hbm [shape: f32[8,512], index: 0, kind: input, shape index: {}]
  %s1 = inlined_call_operand.hbm [shape: bf16[8,512,512], index: 1, kind: input, shape index: {}]
  %s2 = inlined_call_operand.hbm [shape: f32[8,1,512], index: 2, kind: input, shape index: {}]
  %s3 = inlined_call_operand.hbm [shape: bf16[512,128], index: 3, kind: input, shape index: {}]
  %s4 = inlined_call_operand.hbm [shape: f32[1,128], index: 4, kind: input, shape index: {}]
  %s5 = inlined_call_operand.hbm [shape: f32[8,128], index: 5, kind: output, shape index: {}]
  %s6 = sld [smem:[#allocation0]]
  $region50: #{tpu_custom_call.1} parent=0
    _
  %s8 = ssub.s32 1, %s6
  %s9 = scalar_select 0, %s8, %s6
  $region1: #{tpu_custom_call.1} parent=0
    #allocation2 [shape = 'u8[16384]{0}', space=vmem, size = 0x4000, scoped, tag = 'input window, operand 0, single buffered']
    #allocation3 [shape = 's32[1]{0}', space=sflag, size = 0x4, scoped, tag = 'scoped memory for tpu_custom_call.1']
    #allocation4 [shape = 's32[1]{0}', space=sflag, size = 0x4, scoped, tag = 'scoped memory for tpu_custom_call.1']
    #allocation5 [shape = 'u8[4194304]{0}', space=vmem, size = 0x400000, scoped, tag = 'input window, operand 1, single buffered']
    #allocation6 [shape = 's32[1]{0}', space=sflag, size = 0x4, scoped, tag = 'scoped memory for tpu_custom_call.1']
    #allocation7 [shape = 'u8[16384]{0}', space=vmem, size = 0x4000, scoped, tag = 'input window, operand 2, single buffered']
    #allocation8 [shape = 'u8[131072]{0}', space=vmem, size = 0x20000, scoped, tag = 'input window, operand 3, single buffered']
    #allocation9 [shape = 's32[1]{0}', space=sflag, size = 0x4, scoped, tag = 'scoped memory for tpu_custom_call.1']
    #allocation10 [shape = 'u8[512]{0}', space=vmem, size = 0x400, scoped, tag = 'input window, operand 4, single buffered']
    #allocation11 [shape = 'u8[4096]{0}', space=vmem, size = 0x1000, scoped, tag = 'output window, operand 0, single buffered']
    %10 = vsyncpa [#allocation3], 0
    %11 = vsyncpa [#allocation6], 0
    %12 = vsyncpa [#allocation9], 0
    %13 = vsyncpa [#allocation4], 0
    // Predicated region
    $region2: #{tpu_custom_call.1} parent=1 // pred_check
      _
    $region3: #{tpu_custom_call.1} parent=1 // pred_check_branch
      %15 = sbr.rel (0) target = $region5
    $region4: #{tpu_custom_call.1} parent=1 // pred_region
      %s17 = ssub.s32 512, 512
      %18 = vsyncadd [#allocation3], %s17
      %s20 = sshll.u32 [#allocation2], 4
      %s21 = int_to_ptr.vmem [resolvable:$true] %s20
      %23 = dma.hbm_to_vmem [thread:$0]  %s0, 512, %s21, [#allocation3]
    $region5: #{tpu_custom_call.1} parent=1 // pred_fallthru
      _
    // Predicated region
    $region6: #{tpu_custom_call.1} parent=1 // pred_check
      _
    $region7: #{tpu_custom_call.1} parent=1 // pred_check_branch
      %25 = sbr.rel (0) target = $region9
    $region8: #{tpu_custom_call.1} parent=1 // pred_region
      %s27 = ssub.s32 131072, 131072
      %28 = vsyncadd [#allocation6], %s27
      %s29 = sshll.u32 [#allocation5], 4
      %s30 = int_to_ptr.vmem [resolvable:$true] %s29
      %35 = dma.hbm_to_vmem [thread:$0]  %s1, 131072, %s30, [#allocation6], 256, 256, 16
    $region9: #{tpu_custom_call.1} parent=1 // pred_fallthru
      _
    // Predicated region
    $region10: #{tpu_custom_call.1} parent=1 // pred_check
      _
    $region11: #{tpu_custom_call.1} parent=1 // pred_check_branch
      %37 = sbr.rel (0) target = $region13
    $region12: #{tpu_custom_call.1} parent=1 // pred_region
      %s39 = ssub.s32 512, 512
      %40 = vsyncadd [#allocation6], %s39
      %s41 = sshll.u32 [#allocation7], 4
      %s42 = int_to_ptr.vmem [resolvable:$true] %s41
      %47 = dma.hbm_to_vmem [thread:$0]  %s2, 512, %s42, [#allocation6], 64, 64, 4
    $region13: #{tpu_custom_call.1} parent=1 // pred_fallthru
      _
    // Predicated region
    $region14: #{tpu_custom_call.1} parent=1 // pred_check
      _
    $region15: #{tpu_custom_call.1} parent=1 // pred_check_branch
      %49 = sbr.rel (0) target = $region17
    $region16: #{tpu_custom_call.1} parent=1 // pred_region
      %s51 = ssub.s32 4096, 4096
      %52 = vsyncadd [#allocation9], %s51
      %s53 = sshll.u32 [#allocation8], 4
      %s54 = int_to_ptr.vmem [resolvable:$true] %s53
      %59 = dma.hbm_to_vmem [thread:$0]  %s3, 4096, %s54, [#allocation9], 64, 64, 4
    $region17: #{tpu_custom_call.1} parent=1 // pred_fallthru
      _
    // Predicated region
    $region18: #{tpu_custom_call.1} parent=1 // pred_check
      _
    $region19: #{tpu_custom_call.1} parent=1 // pred_check_branch
      %61 = sbr.rel (0) target = $region21
    $region20: #{tpu_custom_call.1} parent=1 // pred_region
      %s63 = ssub.s32 16, 16
      %64 = vsyncadd [#allocation9], %s63
      %s66 = sshll.u32 [#allocation10], 4
      %s67 = int_to_ptr.vmem [resolvable:$true] %s66
      %69 = dma.hbm_to_vmem [thread:$0]  %s4, 16, %s67, [#allocation9]
    $region21: #{tpu_custom_call.1} parent=1 // pred_fallthru
      _
    // Predicated region
    $region22: #{tpu_custom_call.1} parent=1 // pred_check
      _
    $region23: #{tpu_custom_call.1} parent=1 // pred_check_branch
      %71 = sbr.rel (0) target = $region25
    $region24: #{tpu_custom_call.1} parent=1 // pred_region
      %72 = dma.done [#allocation3], 512
    $region25: #{tpu_custom_call.1} parent=1 // pred_fallthru
      _
    // Predicated region
    $region26: #{tpu_custom_call.1} parent=1 // pred_check
      _
    $region27: #{tpu_custom_call.1} parent=1 // pred_check_branch
      %74 = sbr.rel (0) target = $region29
    $region28: #{tpu_custom_call.1} parent=1 // pred_region
      %75 = dma.done [#allocation6], 131072
    $region29: #{tpu_custom_call.1} parent=1 // pred_fallthru
      _
    // Predicated region
    $region30: #{tpu_custom_call.1} parent=1 // pred_check
      _
    $region31: #{tpu_custom_call.1} parent=1 // pred_check_branch
      %77 = sbr.rel (0) target = $region33
    $region32: #{tpu_custom_call.1} parent=1 // pred_region
      %78 = dma.done [#allocation6], 512
    $region33: #{tpu_custom_call.1} parent=1 // pred_fallthru
      _
    // Predicated region
    $region34: #{tpu_custom_call.1} parent=1 // pred_check
      _
    $region35: #{tpu_custom_call.1} parent=1 // pred_check_branch
      %80 = sbr.rel (0) target = $region37
    $region36: #{tpu_custom_call.1} parent=1 // pred_region
      %81 = dma.done [#allocation9], 4096
    $region37: #{tpu_custom_call.1} parent=1 // pred_fallthru
      _
    // Predicated region
    $region38: #{tpu_custom_call.1} parent=1 // pred_check
      _
    $region39: #{tpu_custom_call.1} parent=1 // pred_check_branch
      %83 = sbr.rel (0) target = $region41
    $region40: #{tpu_custom_call.1} parent=1 // pred_region
      %84 = dma.done [#allocation9], 16
    $region41: #{tpu_custom_call.1} parent=1 // pred_fallthru
      _
    %v86 = vld [vmem:[#allocation2] sm:$0xff]
    %v87 = vld [vmem:[#allocation2 + $0x8] sm:$0xff]
    %v88 = vld [vmem:[#allocation2 + $0x10] sm:$0xff]
    %v89 = vld [vmem:[#allocation2 + $0x18] sm:$0xff]
    %v90 = vpack.c.bf16 %v86, %v86
    %v91 = vpack.c.bf16 %v87, %v87
    %v92 = vpack.c.bf16 %v88, %v88
    %v93 = vpack.c.bf16 %v89, %v89
    %v94 = vld [vmem:[#allocation5] sm:$0xff]
    %v95 = vld [vmem:[#allocation5 + $0x8] sm:$0xff]
    %v96 = vld [vmem:[#allocation5 + $0x10] sm:$0xff]
    %v97 = vld [vmem:[#allocation5 + $0x18] sm:$0xff]
    %v98 = vld [vmem:[#allocation5 + $0x20] sm:$0xff]
    %v99 = vld [vmem:[#allocation5 + $0x28] sm:$0xff]
    %v100 = vld [vmem:[#allocation5 + $0x30] sm:$0xff]
    %v101 = vld [vmem:[#allocation5 + $0x38] sm:$0xff]
    %v102 = vld [vmem:[#allocation5 + $0x40] sm:$0xff]
    %v103 = vld [vmem:[#allocation5 + $0x48] sm:$0xff]
    %v104 = vld [vmem:[#allocation5 + $0x50] sm:$0xff]
    %v105 = vld [vmem:[#allocation5 + $0x58] sm:$0xff]
    %v106 = vld [vmem:[#allocation5 + $0x60] sm:$0xff]
    %v107 = vld [vmem:[#allocation5 + $0x68] sm:$0xff]
    %v108 = vld [vmem:[#allocation5 + $0x70] sm:$0xff]
    %v109 = vld [vmem:[#allocation5 + $0x78] sm:$0xff]
    %v110 = vld [vmem:[#allocation5 + $0x80] sm:$0xff]
    %v111 = vld [vmem:[#allocation5 + $0x88] sm:$0xff]
    %v112 = vld [vmem:[#allocation5 + $0x90] sm:$0xff]
    %v113 = vld [vmem:[#allocation5 + $0x98] sm:$0xff]
    %v114 = vld [vmem:[#allocation5 + $0xa0] sm:$0xff]
    %v115 = vld [vmem:[#allocation5 + $0xa8] sm:$0xff]
    %v116 = vld [vmem:[#allocation5 + $0xb0] sm:$0xff]
    %v117 = vld [vmem:[#allocation5 + $0xb8] sm:$0xff]
    %v118 = vld [vmem:[#allocation5 + $0xc0] sm:$0xff]
    %v119 = vld [vmem:[#allocation5 + $0xc8] sm:$0xff]
    %v120 = vld [vmem:[#allocation5 + $0xd0] sm:$0xff]
    %v121 = vld [vmem:[#allocation5 + $0xd8] sm:$0xff]
    %v122 = vld [vmem:[#allocation5 + $0xe0] sm:$0xff]
    %v123 = vld [vmem:[#allocation5 + $0xe8] sm:$0xff]
    %v124 = vld [vmem:[#allocation5 + $0xf0] sm:$0xff]
    %v125 = vld [vmem:[#allocation5 + $0xf8] sm:$0xff]
    %v126 = vld [vmem:[#allocation5 + $0x100] sm:$0xff]
    %v127 = vld [vmem:[#allocation5 + $0x108] sm:$0xff]
    %v128 = vld [vmem:[#allocation5 + $0x110] sm:$0xff]
    %v129 = vld [vmem:[#allocation5 + $0x118] sm:$0xff]
    %v130 = vld [vmem:[#allocation5 + $0x120] sm:$0xff]
    %v131 = vld [vmem:[#allocation5 + $0x128] sm:$0xff]
    %v132 = vld [vmem:[#allocation5 + $0x130] sm:$0xff]
    %v133 = vld [vmem:[#allocation5 + $0x138] sm:$0xff]
    %v134 = vld [vmem:[#allocation5 + $0x140] sm:$0xff]
    %v135 = vld [vmem:[#allocation5 + $0x148] sm:$0xff]
    %v136 = vld [vmem:[#allocation5 + $0x150] sm:$0xff]
    %v137 = vld [vmem:[#allocation5 + $0x158] sm:$0xff]
    %v138 = vld [vmem:[#allocation5 + $0x160] sm:$0xff]
    %v139 = vld [vmem:[#allocation5 + $0x168] sm:$0xff]
    %v140 = vld [vmem:[#allocation5 + $0x170] sm:$0xff]
    %v141 = vld [vmem:[#allocation5 + $0x178] sm:$0xff]
    %v142 = vld [vmem:[#allocation5 + $0x180] sm:$0xff]
    %v143 = vld [vmem:[#allocation5 + $0x188] sm:$0xff]
    %v144 = vld [vmem:[#allocation5 + $0x190] sm:$0xff]
    %v145 = vld [vmem:[#allocation5 + $0x198] sm:$0xff]
    %v146 = vld [vmem:[#allocation5 + $0x1a0] sm:$0xff]
    %v147 = vld [vmem:[#allocation5 + $0x1a8] sm:$0xff]
    %v148 = vld [vmem:[#allocation5 + $0x1b0] sm:$0xff]
    %v149 = vld [vmem:[#allocation5 + $0x1b8] sm:$0xff]
    %v150 = vld [vmem:[#allocation5 + $0x1c0] sm:$0xff]
    %v151 = vld [vmem:[#allocation5 + $0x1c8] sm:$0xff]
    %v152 = vld [vmem:[#allocation5 + $0x1d0] sm:$0xff]
    %v153 = vld [vmem:[#allocation5 + $0x1d8] sm:$0xff]
    %v154 = vld [vmem:[#allocation5 + $0x1e0] sm:$0xff]
    %v155 = vld [vmem:[#allocation5 + $0x1e8] sm:$0xff]
    %v156 = vld [vmem:[#allocation5 + $0x1f0] sm:$0xff]
    %v157 = vld [vmem:[#allocation5 + $0x1f8] sm:$0xff]
    %v158 = vld [vmem:[#allocation5 + $0x200] sm:$0xff]
    %v159 = vld [vmem:[#allocation5 + $0x208] sm:$0xff]
    %v160 = vld [vmem:[#allocation5 + $0x210] sm:$0xff]
    %v161 = vld [vmem:[#allocation5 + $0x218] sm:$0xff]
    %v162 = vld [vmem:[#allocation5 + $0x220] sm:$0xff]
    %v163 = vld [vmem:[#allocation5 + $0x228] sm:$0xff]
    %v164 = vld [vmem:[#allocation5 + $0x230] sm:$0xff]
    %v165 = vld [vmem:[#allocation5 + $0x238] sm:$0xff]
    %v166 = vld [vmem:[#allocation5 + $0x240] sm:$0xff]
    %v167 = vld [vmem:[#allocation5 + $0x248] sm:$0xff]
    %v168 = vld [vmem:[#allocation5 + $0x250] sm:$0xff]
    %v169 = vld [vmem:[#allocation5 + $0x258] sm:$0xff]
    %v170 = vld [vmem:[#allocation5 + $0x260] sm:$0xff]
    %v171 = vld [vmem:[#allocation5 + $0x268] sm:$0xff]
    %v172 = vld [vmem:[#allocation5 + $0x270] sm:$0xff]
    %v173 = vld [vmem:[#allocation5 + $0x278] sm:$0xff]
    %v174 = vld [vmem:[#allocation5 + $0x280] sm:$0xff]
    %v175 = vld [vmem:[#allocation5 + $0x288] sm:$0xff]
    %v176 = vld [vmem:[#allocation5 + $0x290] sm:$0xff]
    %v177 = vld [vmem:[#allocation5 + $0x298] sm:$0xff]
    %v178 = vld [vmem:[#allocation5 + $0x2a0] sm:$0xff]
    %v179 = vld [vmem:[#allocation5 + $0x2a8] sm:$0xff]
    %v180 = vld [vmem:[#allocation5 + $0x2b0] sm:$0xff]
    %v181 = vld [vmem:[#allocation5 + $0x2b8] sm:$0xff]
    %v182 = vld [vmem:[#allocation5 + $0x2c0] sm:$0xff]
    %v183 = vld [vmem:[#allocation5 + $0x2c8] sm:$0xff]
    %v184 = vld [vmem:[#allocation5 + $0x2d0] sm:$0xff]
    %v185 = vld [vmem:[#allocation5 + $0x2d8] sm:$0xff]
    %v186 = vld [vmem:[#allocation5 + $0x2e0] sm:$0xff]
    %v187 = vld [vmem:[#allocation5 + $0x2e8] sm:$0xff]
    %v188 = vld [vmem:[#allocation5 + $0x2f0] sm:$0xff]
    %v189 = vld [vmem:[#allocation5 + $0x2f8] sm:$0xff]
    %v190 = vld [vmem:[#allocation5 + $0x300] sm:$0xff]
    %v191 = vld [vmem:[#allocation5 + $0x308] sm:$0xff]
    %v192 = vld [vmem:[#allocation5 + $0x310] sm:$0xff]
    %v193 = vld [vmem:[#allocation5 + $0x318] sm:$0xff]
    %v194 = vld [vmem:[#allocation5 + $0x320] sm:$0xff]
    %v195 = vld [vmem:[#allocation5 + $0x328] sm:$0xff]
    %v196 = vld [vmem:[#allocation5 + $0x330] sm:$0xff]
    %v197 = vld [vmem:[#allocation5 + $0x338] sm:$0xff]
    %v198 = vld [vmem:[#allocation5 + $0x340] sm:$0xff]
    %v199 = vld [vmem:[#allocation5 + $0x348] sm:$0xff]
    %v200 = vld [vmem:[#allocation5 + $0x350] sm:$0xff]
    %v201 = vld [vmem:[#allocation5 + $0x358] sm:$0xff]
    %v202 = vld [vmem:[#allocation5 + $0x360] sm:$0xff]
    %v203 = vld [vmem:[#allocation5 + $0x368] sm:$0xff]
    %v204 = vld [vmem:[#allocation5 + $0x370] sm:$0xff]
    %v205 = vld [vmem:[#allocation5 + $0x378] sm:$0xff]
    %v206 = vld [vmem:[#allocation5 + $0x380] sm:$0xff]
    %v207 = vld [vmem:[#allocation5 + $0x388] sm:$0xff]
    %v208 = vld [vmem:[#allocation5 + $0x390] sm:$0xff]
    %v209 = vld [vmem:[#allocation5 + $0x398] sm:$0xff]
    %v210 = vld [vmem:[#allocation5 + $0x3a0] sm:$0xff]
    %v211 = vld [vmem:[#allocation5 + $0x3a8] sm:$0xff]
    %v212 = vld [vmem:[#allocation5 + $0x3b0] sm:$0xff]
    %v213 = vld [vmem:[#allocation5 + $0x3b8] sm:$0xff]
    %v214 = vld [vmem:[#allocation5 + $0x3c0] sm:$0xff]
    %v215 = vld [vmem:[#allocation5 + $0x3c8] sm:$0xff]
    %v216 = vld [vmem:[#allocation5 + $0x3d0] sm:$0xff]
    %v217 = vld [vmem:[#allocation5 + $0x3d8] sm:$0xff]
    %v218 = vld [vmem:[#allocation5 + $0x3e0] sm:$0xff]
    %v219 = vld [vmem:[#allocation5 + $0x3e8] sm:$0xff]
    %v220 = vld [vmem:[#allocation5 + $0x3f0] sm:$0xff]
    %v221 = vld [vmem:[#allocation5 + $0x3f8] sm:$0xff]
    %v222 = vld [vmem:[#allocation7] sm:$0xf]
    %v224 = vlaneseq
    %v225 = vshrl.u32 %v224, 7
    %v226 = vsub.s32 0, %v225
    %v227 = vrot.slane %v222, %v226
    %v228 = vlaneseq
    %v229 = vshrl.u32 %v228, 7
    %v230 = vsub.s32 1, %v229
    %v231 = vrot.slane %v222, %v230
    %v232 = vlaneseq
    %v233 = vshrl.u32 %v232, 7
    %v234 = vsub.s32 2, %v233
    %v235 = vrot.slane %v222, %v234
    %v236 = vlaneseq
    %v237 = vshrl.u32 %v236, 7
    %v238 = vsub.s32 3, %v237
    %v239 = vrot.slane %v222, %v238
    %v372 = vunpack.c.l.b16 %v94
    %v373 = vunpack.c.h.b16 %v94
    %v374 = vunpack.c.l.b16 %v95
    %v375 = vunpack.c.h.b16 %v95
    %v376 = vunpack.c.l.b16 %v96
    %v377 = vunpack.c.h.b16 %v96
    %v378 = vunpack.c.l.b16 %v97
    %v379 = vunpack.c.h.b16 %v97
    %v380 = vunpack.c.l.b16 %v98
    %v381 = vunpack.c.h.b16 %v98
    %v382 = vunpack.c.l.b16 %v99
    %v383 = vunpack.c.h.b16 %v99
    %v384 = vunpack.c.l.b16 %v100
    %v385 = vunpack.c.h.b16 %v100
    %v386 = vunpack.c.l.b16 %v101
    %v387 = vunpack.c.h.b16 %v101
    %v388 = vunpack.c.l.b16 %v102
    %v389 = vunpack.c.h.b16 %v102
    %v390 = vunpack.c.l.b16 %v103
    %v391 = vunpack.c.h.b16 %v103
    %v392 = vunpack.c.l.b16 %v104
    %v393 = vunpack.c.h.b16 %v104
    %v394 = vunpack.c.l.b16 %v105
    %v395 = vunpack.c.h.b16 %v105
    %v396 = vunpack.c.l.b16 %v106
    %v397 = vunpack.c.h.b16 %v106
    %v398 = vunpack.c.l.b16 %v107
    %v399 = vunpack.c.h.b16 %v107
    %v400 = vunpack.c.l.b16 %v108
    %v401 = vunpack.c.h.b16 %v108
    %v402 = vunpack.c.l.b16 %v109
    %v403 = vunpack.c.h.b16 %v109
    %v404 = vunpack.c.l.b16 %v110
    %v405 = vunpack.c.h.b16 %v110
    %v406 = vunpack.c.l.b16 %v111
    %v407 = vunpack.c.h.b16 %v111
    %v408 = vunpack.c.l.b16 %v112
    %v409 = vunpack.c.h.b16 %v112
    %v410 = vunpack.c.l.b16 %v113
    %v411 = vunpack.c.h.b16 %v113
    %v412 = vunpack.c.l.b16 %v114
    %v413 = vunpack.c.h.b16 %v114
    %v414 = vunpack.c.l.b16 %v115
    %v415 = vunpack.c.h.b16 %v115
    %v416 = vunpack.c.l.b16 %v116
    %v417 = vunpack.c.h.b16 %v116
    %v418 = vunpack.c.l.b16 %v117
    %v419 = vunpack.c.h.b16 %v117
    %v420 = vunpack.c.l.b16 %v118
    %v421 = vunpack.c.h.b16 %v118
    %v422 = vunpack.c.l.b16 %v119
    %v423 = vunpack.c.h.b16 %v119
    %v424 = vunpack.c.l.b16 %v120
    %v425 = vunpack.c.h.b16 %v120
    %v426 = vunpack.c.l.b16 %v121
    %v427 = vunpack.c.h.b16 %v121
    %v428 = vunpack.c.l.b16 %v122
    %v429 = vunpack.c.h.b16 %v122
    %v430 = vunpack.c.l.b16 %v123
    %v431 = vunpack.c.h.b16 %v123
    %v432 = vunpack.c.l.b16 %v124
    %v433 = vunpack.c.h.b16 %v124
    %v434 = vunpack.c.l.b16 %v125
    %v435 = vunpack.c.h.b16 %v125
    %v436 = vunpack.c.l.b16 %v126
    %v437 = vunpack.c.h.b16 %v126
    %v438 = vunpack.c.l.b16 %v127
    %v439 = vunpack.c.h.b16 %v127
    %v440 = vunpack.c.l.b16 %v128
    %v441 = vunpack.c.h.b16 %v128
    %v442 = vunpack.c.l.b16 %v129
    %v443 = vunpack.c.h.b16 %v129
    %v444 = vunpack.c.l.b16 %v130
    %v445 = vunpack.c.h.b16 %v130
    %v446 = vunpack.c.l.b16 %v131
    %v447 = vunpack.c.h.b16 %v131
    %v448 = vunpack.c.l.b16 %v132
    %v449 = vunpack.c.h.b16 %v132
    %v450 = vunpack.c.l.b16 %v133
    %v451 = vunpack.c.h.b16 %v133
    %v452 = vunpack.c.l.b16 %v134
    %v453 = vunpack.c.h.b16 %v134
    %v454 = vunpack.c.l.b16 %v135
    %v455 = vunpack.c.h.b16 %v135
    %v456 = vunpack.c.l.b16 %v136
    %v457 = vunpack.c.h.b16 %v136
    %v458 = vunpack.c.l.b16 %v137
    %v459 = vunpack.c.h.b16 %v137
    %v460 = vunpack.c.l.b16 %v138
    %v461 = vunpack.c.h.b16 %v138
    %v462 = vunpack.c.l.b16 %v139
    %v463 = vunpack.c.h.b16 %v139
    %v464 = vunpack.c.l.b16 %v140
    %v465 = vunpack.c.h.b16 %v140
    %v466 = vunpack.c.l.b16 %v141
    %v467 = vunpack.c.h.b16 %v141
    %v468 = vunpack.c.l.b16 %v142
    %v469 = vunpack.c.h.b16 %v142
    %v470 = vunpack.c.l.b16 %v143
    %v471 = vunpack.c.h.b16 %v143
    %v472 = vunpack.c.l.b16 %v144
    %v473 = vunpack.c.h.b16 %v144
    %v474 = vunpack.c.l.b16 %v145
    %v475 = vunpack.c.h.b16 %v145
    %v476 = vunpack.c.l.b16 %v146
    %v477 = vunpack.c.h.b16 %v146
    %v478 = vunpack.c.l.b16 %v147
    %v479 = vunpack.c.h.b16 %v147
    %v480 = vunpack.c.l.b16 %v148
    %v481 = vunpack.c.h.b16 %v148
    %v482 = vunpack.c.l.b16 %v149
    %v483 = vunpack.c.h.b16 %v149
    %v484 = vunpack.c.l.b16 %v150
    %v485 = vunpack.c.h.b16 %v150
    %v486 = vunpack.c.l.b16 %v151
    %v487 = vunpack.c.h.b16 %v151
    %v488 = vunpack.c.l.b16 %v152
    %v489 = vunpack.c.h.b16 %v152
    %v490 = vunpack.c.l.b16 %v153
    %v491 = vunpack.c.h.b16 %v153
    %v492 = vunpack.c.l.b16 %v154
    %v493 = vunpack.c.h.b16 %v154
    %v494 = vunpack.c.l.b16 %v155
    %v495 = vunpack.c.h.b16 %v155
    %v496 = vunpack.c.l.b16 %v156
    %v497 = vunpack.c.h.b16 %v156
    %v498 = vunpack.c.l.b16 %v157
    %v499 = vunpack.c.h.b16 %v157
    %v500 = vunpack.c.l.b16 %v158
    %v501 = vunpack.c.h.b16 %v158
    %v502 = vunpack.c.l.b16 %v159
    %v503 = vunpack.c.h.b16 %v159
    %v504 = vunpack.c.l.b16 %v160
    %v505 = vunpack.c.h.b16 %v160
    %v506 = vunpack.c.l.b16 %v161
    %v507 = vunpack.c.h.b16 %v161
    %v508 = vunpack.c.l.b16 %v162
    %v509 = vunpack.c.h.b16 %v162
    %v510 = vunpack.c.l.b16 %v163
    %v511 = vunpack.c.h.b16 %v163
    %v512 = vunpack.c.l.b16 %v164
    %v513 = vunpack.c.h.b16 %v164
    %v514 = vunpack.c.l.b16 %v165
    %v515 = vunpack.c.h.b16 %v165
    %v516 = vunpack.c.l.b16 %v166
    %v517 = vunpack.c.h.b16 %v166
    %v518 = vunpack.c.l.b16 %v167
    %v519 = vunpack.c.h.b16 %v167
    %v520 = vunpack.c.l.b16 %v168
    %v521 = vunpack.c.h.b16 %v168
    %v522 = vunpack.c.l.b16 %v169
    %v523 = vunpack.c.h.b16 %v169
    %v524 = vunpack.c.l.b16 %v170
    %v525 = vunpack.c.h.b16 %v170
    %v526 = vunpack.c.l.b16 %v171
    %v527 = vunpack.c.h.b16 %v171
    %v528 = vunpack.c.l.b16 %v172
    %v529 = vunpack.c.h.b16 %v172
    %v530 = vunpack.c.l.b16 %v173
    %v531 = vunpack.c.h.b16 %v173
    %v532 = vunpack.c.l.b16 %v174
    %v533 = vunpack.c.h.b16 %v174
    %v534 = vunpack.c.l.b16 %v175
    %v535 = vunpack.c.h.b16 %v175
    %v536 = vunpack.c.l.b16 %v176
    %v537 = vunpack.c.h.b16 %v176
    %v538 = vunpack.c.l.b16 %v177
    %v539 = vunpack.c.h.b16 %v177
    %v540 = vunpack.c.l.b16 %v178
    %v541 = vunpack.c.h.b16 %v178
    %v542 = vunpack.c.l.b16 %v179
    %v543 = vunpack.c.h.b16 %v179
    %v544 = vunpack.c.l.b16 %v180
    %v545 = vunpack.c.h.b16 %v180
    %v546 = vunpack.c.l.b16 %v181
    %v547 = vunpack.c.h.b16 %v181
    %v548 = vunpack.c.l.b16 %v182
    %v549 = vunpack.c.h.b16 %v182
    %v550 = vunpack.c.l.b16 %v183
    %v551 = vunpack.c.h.b16 %v183
    %v552 = vunpack.c.l.b16 %v184
    %v553 = vunpack.c.h.b16 %v184
    %v554 = vunpack.c.l.b16 %v185
    %v555 = vunpack.c.h.b16 %v185
    %v556 = vunpack.c.l.b16 %v186
    %v557 = vunpack.c.h.b16 %v186
    %v558 = vunpack.c.l.b16 %v187
    %v559 = vunpack.c.h.b16 %v187
    %v560 = vunpack.c.l.b16 %v188
    %v561 = vunpack.c.h.b16 %v188
    %v562 = vunpack.c.l.b16 %v189
    %v563 = vunpack.c.h.b16 %v189
    %v564 = vunpack.c.l.b16 %v190
    %v565 = vunpack.c.h.b16 %v190
    %v566 = vunpack.c.l.b16 %v191
    %v567 = vunpack.c.h.b16 %v191
    %v568 = vunpack.c.l.b16 %v192
    %v569 = vunpack.c.h.b16 %v192
    %v570 = vunpack.c.l.b16 %v193
    %v571 = vunpack.c.h.b16 %v193
    %v572 = vunpack.c.l.b16 %v194
    %v573 = vunpack.c.h.b16 %v194
    %v574 = vunpack.c.l.b16 %v195
    %v575 = vunpack.c.h.b16 %v195
    %v576 = vunpack.c.l.b16 %v196
    %v577 = vunpack.c.h.b16 %v196
    %v578 = vunpack.c.l.b16 %v197
    %v579 = vunpack.c.h.b16 %v197
    %v580 = vunpack.c.l.b16 %v198
    %v581 = vunpack.c.h.b16 %v198
    %v582 = vunpack.c.l.b16 %v199
    %v583 = vunpack.c.h.b16 %v199
    %v584 = vunpack.c.l.b16 %v200
    %v585 = vunpack.c.h.b16 %v200
    %v586 = vunpack.c.l.b16 %v201
    %v587 = vunpack.c.h.b16 %v201
    %v588 = vunpack.c.l.b16 %v202
    %v589 = vunpack.c.h.b16 %v202
    %v590 = vunpack.c.l.b16 %v203
    %v591 = vunpack.c.h.b16 %v203
    %v592 = vunpack.c.l.b16 %v204
    %v593 = vunpack.c.h.b16 %v204
    %v594 = vunpack.c.l.b16 %v205
    %v595 = vunpack.c.h.b16 %v205
    %v596 = vunpack.c.l.b16 %v206
    %v597 = vunpack.c.h.b16 %v206
    %v598 = vunpack.c.l.b16 %v207
    %v599 = vunpack.c.h.b16 %v207
    %v600 = vunpack.c.l.b16 %v208
    %v601 = vunpack.c.h.b16 %v208
    %v602 = vunpack.c.l.b16 %v209
    %v603 = vunpack.c.h.b16 %v209
    %v604 = vunpack.c.l.b16 %v210
    %v605 = vunpack.c.h.b16 %v210
    %v606 = vunpack.c.l.b16 %v211
    %v607 = vunpack.c.h.b16 %v211
    %v608 = vunpack.c.l.b16 %v212
    %v609 = vunpack.c.h.b16 %v212
    %v610 = vunpack.c.l.b16 %v213
    %v611 = vunpack.c.h.b16 %v213
    %v612 = vunpack.c.l.b16 %v214
    %v613 = vunpack.c.h.b16 %v214
    %v614 = vunpack.c.l.b16 %v215
    %v615 = vunpack.c.h.b16 %v215
    %v616 = vunpack.c.l.b16 %v216
    %v617 = vunpack.c.h.b16 %v216
    %v618 = vunpack.c.l.b16 %v217
    %v619 = vunpack.c.h.b16 %v217
    %v620 = vunpack.c.l.b16 %v218
    %v621 = vunpack.c.h.b16 %v218
    %v622 = vunpack.c.l.b16 %v219
    %v623 = vunpack.c.h.b16 %v219
    %v624 = vunpack.c.l.b16 %v220
    %v625 = vunpack.c.h.b16 %v220
    %v626 = vunpack.c.l.b16 %v221
    %v627 = vunpack.c.h.b16 %v221
    %v628 = vpack.c.b16 %v376, %v372
    %v629 = vpack.c.b16 %v377, %v373
    %v630 = vpack.c.b16 %v378, %v374
    %v631 = vpack.c.b16 %v379, %v375
    %v632 = vpack.c.b16 %v384, %v380
    %v633 = vpack.c.b16 %v385, %v381
    %v634 = vpack.c.b16 %v386, %v382
    %v635 = vpack.c.b16 %v387, %v383
    %v636 = vpack.c.b16 %v392, %v388
    %v637 = vpack.c.b16 %v393, %v389
    %v638 = vpack.c.b16 %v394, %v390
    %v639 = vpack.c.b16 %v395, %v391
    %v640 = vpack.c.b16 %v400, %v396
    %v641 = vpack.c.b16 %v401, %v397
    %v642 = vpack.c.b16 %v402, %v398
    %v643 = vpack.c.b16 %v403, %v399
    %v644 = vpack.c.b16 %v408, %v404
    %v645 = vpack.c.b16 %v409, %v405
    %v646 = vpack.c.b16 %v410, %v406
    %v647 = vpack.c.b16 %v411, %v407
    %v648 = vpack.c.b16 %v416, %v412
    %v649 = vpack.c.b16 %v417, %v413
    %v650 = vpack.c.b16 %v418, %v414
    %v651 = vpack.c.b16 %v419, %v415
    %v652 = vpack.c.b16 %v424, %v420
    %v653 = vpack.c.b16 %v425, %v421
    %v654 = vpack.c.b16 %v426, %v422
    %v655 = vpack.c.b16 %v427, %v423
    %v656 = vpack.c.b16 %v432, %v428
    %v657 = vpack.c.b16 %v433, %v429
    %v658 = vpack.c.b16 %v434, %v430
    %v659 = vpack.c.b16 %v435, %v431
    %v660 = vpack.c.b16 %v440, %v436
    %v661 = vpack.c.b16 %v441, %v437
    %v662 = vpack.c.b16 %v442, %v438
    %v663 = vpack.c.b16 %v443, %v439
    %v664 = vpack.c.b16 %v448, %v444
    %v665 = vpack.c.b16 %v449, %v445
    %v666 = vpack.c.b16 %v450, %v446
    %v667 = vpack.c.b16 %v451, %v447
    %v668 = vpack.c.b16 %v456, %v452
    %v669 = vpack.c.b16 %v457, %v453
    %v670 = vpack.c.b16 %v458, %v454
    %v671 = vpack.c.b16 %v459, %v455
    %v672 = vpack.c.b16 %v464, %v460
    %v673 = vpack.c.b16 %v465, %v461
    %v674 = vpack.c.b16 %v466, %v462
    %v675 = vpack.c.b16 %v467, %v463
    %v676 = vpack.c.b16 %v472, %v468
    %v677 = vpack.c.b16 %v473, %v469
    %v678 = vpack.c.b16 %v474, %v470
    %v679 = vpack.c.b16 %v475, %v471
    %v680 = vpack.c.b16 %v480, %v476
    %v681 = vpack.c.b16 %v481, %v477
    %v682 = vpack.c.b16 %v482, %v478
    %v683 = vpack.c.b16 %v483, %v479
    %v684 = vpack.c.b16 %v488, %v484
    %v685 = vpack.c.b16 %v489, %v485
    %v686 = vpack.c.b16 %v490, %v486
    %v687 = vpack.c.b16 %v491, %v487
    %v688 = vpack.c.b16 %v496, %v492
    %v689 = vpack.c.b16 %v497, %v493
    %v690 = vpack.c.b16 %v498, %v494
    %v691 = vpack.c.b16 %v499, %v495
    %v692 = vpack.c.b16 %v504, %v500
    %v693 = vpack.c.b16 %v505, %v501
    %v694 = vpack.c.b16 %v506, %v502
    %v695 = vpack.c.b16 %v507, %v503
    %v696 = vpack.c.b16 %v512, %v508
    %v697 = vpack.c.b16 %v513, %v509
    %v698 = vpack.c.b16 %v514, %v510
    %v699 = vpack.c.b16 %v515, %v511
    %v700 = vpack.c.b16 %v520, %v516
    %v701 = vpack.c.b16 %v521, %v517
    %v702 = vpack.c.b16 %v522, %v518
    %v703 = vpack.c.b16 %v523, %v519
    %v704 = vpack.c.b16 %v528, %v524
    %v705 = vpack.c.b16 %v529, %v525
    %v706 = vpack.c.b16 %v530, %v526
    %v707 = vpack.c.b16 %v531, %v527
    %v708 = vpack.c.b16 %v536, %v532
    %v709 = vpack.c.b16 %v537, %v533
    %v710 = vpack.c.b16 %v538, %v534
    %v711 = vpack.c.b16 %v539, %v535
    %v712 = vpack.c.b16 %v544, %v540
    %v713 = vpack.c.b16 %v545, %v541
    %v714 = vpack.c.b16 %v546, %v542
    %v715 = vpack.c.b16 %v547, %v543
    %v716 = vpack.c.b16 %v552, %v548
    %v717 = vpack.c.b16 %v553, %v549
    %v718 = vpack.c.b16 %v554, %v550
    %v719 = vpack.c.b16 %v555, %v551
    %v720 = vpack.c.b16 %v560, %v556
    %v721 = vpack.c.b16 %v561, %v557
    %v722 = vpack.c.b16 %v562, %v558
    %v723 = vpack.c.b16 %v563, %v559
    %v724 = vpack.c.b16 %v568, %v564
    %v725 = vpack.c.b16 %v569, %v565
    %v726 = vpack.c.b16 %v570, %v566
    %v727 = vpack.c.b16 %v571, %v567
    %v728 = vpack.c.b16 %v576, %v572
    %v729 = vpack.c.b16 %v577, %v573
    %v730 = vpack.c.b16 %v578, %v574
    %v731 = vpack.c.b16 %v579, %v575
    %v732 = vpack.c.b16 %v584, %v580
    %v733 = vpack.c.b16 %v585, %v581
    %v734 = vpack.c.b16 %v586, %v582
    %v735 = vpack.c.b16 %v587, %v583
    %v736 = vpack.c.b16 %v592, %v588
    %v737 = vpack.c.b16 %v593, %v589
    %v738 = vpack.c.b16 %v594, %v590
    %v739 = vpack.c.b16 %v595, %v591
    %v740 = vpack.c.b16 %v600, %v596
    %v741 = vpack.c.b16 %v601, %v597
    %v742 = vpack.c.b16 %v602, %v598
    %v743 = vpack.c.b16 %v603, %v599
    %v744 = vpack.c.b16 %v608, %v604
    %v745 = vpack.c.b16 %v609, %v605
    %v746 = vpack.c.b16 %v610, %v606
    %v747 = vpack.c.b16 %v611, %v607
    %v748 = vpack.c.b16 %v616, %v612
    %v749 = vpack.c.b16 %v617, %v613
    %v750 = vpack.c.b16 %v618, %v614
    %v751 = vpack.c.b16 %v619, %v615
    %v752 = vpack.c.b16 %v624, %v620
    %v753 = vpack.c.b16 %v625, %v621
    %v754 = vpack.c.b16 %v626, %v622
    %v755 = vpack.c.b16 %v627, %v623
    %884 = vmatprep.subr.bf16.mxu0 %v657
    %885 = vmatpush1.bf16.msra.mxu0 %v656
    %886 = vmatprep.subr.bf16.mxu0 %v653
    %887 = vmatpush1.bf16.msra.mxu0 %v652
    %888 = vmatprep.subr.bf16.mxu0 %v649
    %889 = vmatpush1.bf16.msra.mxu0 %v648
    %890 = vmatprep.subr.bf16.mxu0 %v645
    %891 = vmatpush1.bf16.msra.mxu0 %v644
    %892 = vmatprep.subr.bf16.mxu0 %v641
    %893 = vmatpush1.bf16.msra.mxu0 %v640
    %894 = vmatprep.subr.bf16.mxu0 %v637
    %895 = vmatpush1.bf16.msra.mxu0 %v636
    %896 = vmatprep.subr.bf16.mxu0 %v633
    %897 = vmatpush1.bf16.msra.mxu0 %v632
    %898 = vmatprep.subr.bf16.mxu0 %v629
    %899 = vmatpush1.bf16.msra.mxu0 %v628
    %900 = vmatprep.subr.bf16.mxu0 %v689
    %901 = vmatpush2.bf16.msra.mxu0 %v688
    %902 = vmatprep.subr.bf16.mxu0 %v685
    %903 = vmatpush2.bf16.msra.mxu0 %v684
    %904 = vmatprep.subr.bf16.mxu0 %v681
    %905 = vmatpush2.bf16.msra.mxu0 %v680
    %906 = vmatprep.subr.bf16.mxu0 %v677
    %907 = vmatpush2.bf16.msra.mxu0 %v676
    %908 = vmatprep.subr.bf16.mxu0 %v673
    %909 = vmatpush2.bf16.msra.mxu0 %v672
    %910 = vmatprep.subr.bf16.mxu0 %v669
    %911 = vmatpush2.bf16.msra.mxu0 %v668
    %912 = vmatprep.subr.bf16.mxu0 %v665
    %913 = vmatpush2.bf16.msra.mxu0 %v664
    %914 = vmatprep.subr.bf16.mxu0 %v661
    %915 = vmatpush2.bf16.msra.mxu0 %v660
    %916 = vmatprep.mubr.bf16.mxu0 %v91
    %917 = vmatmul.mubr.bf16.gmra.mxu0 %v90
    %v918 = vpop.f32.mrf.mxu0
    %v919 = vadd.f32 %v227, %v918
    %v920 = vpop.f32.mrf.mxu0
    %v921 = vadd.f32 %v231, %v920
    %v922 = vpop.f32.mrf.mxu0
    %v923 = vpop.f32.mrf.mxu0
    %924 = vdwg.mxu0
    %925 = vmatprep.subr.bf16.mxu0 %v721
    %926 = vmatpush1.bf16.msra.mxu0 %v720
    %927 = vmatprep.subr.bf16.mxu0 %v717
    %928 = vmatpush1.bf16.msra.mxu0 %v716
    %929 = vmatprep.subr.bf16.mxu0 %v713
    %930 = vmatpush1.bf16.msra.mxu0 %v712
    %931 = vmatprep.subr.bf16.mxu0 %v709
    %932 = vmatpush1.bf16.msra.mxu0 %v708
    %933 = vmatprep.subr.bf16.mxu0 %v705
    %934 = vmatpush1.bf16.msra.mxu0 %v704
    %935 = vmatprep.subr.bf16.mxu0 %v701
    %936 = vmatpush1.bf16.msra.mxu0 %v700
    %937 = vmatprep.subr.bf16.mxu0 %v697
    %938 = vmatpush1.bf16.msra.mxu0 %v696
    %939 = vmatprep.subr.bf16.mxu0 %v693
    %940 = vmatpush1.bf16.msra.mxu0 %v692
    %941 = vmatprep.subr.bf16.mxu0 %v753
    %942 = vmatpush2.bf16.msra.mxu0 %v752
    %943 = vmatprep.subr.bf16.mxu0 %v749
    %944 = vmatpush2.bf16.msra.mxu0 %v748
    %945 = vmatprep.subr.bf16.mxu0 %v745
    %946 = vmatpush2.bf16.msra.mxu0 %v744
    %947 = vmatprep.subr.bf16.mxu0 %v741
    %948 = vmatpush2.bf16.msra.mxu0 %v740
    %949 = vmatprep.subr.bf16.mxu0 %v737
    %950 = vmatpush2.bf16.msra.mxu0 %v736
    %951 = vmatprep.subr.bf16.mxu0 %v733
    %952 = vmatpush2.bf16.msra.mxu0 %v732
    %953 = vmatprep.subr.bf16.mxu0 %v729
    %954 = vmatpush2.bf16.msra.mxu0 %v728
    %955 = vmatprep.subr.bf16.mxu0 %v725
    %956 = vmatpush2.bf16.msra.mxu0 %v724
    %957 = vmatprep.mubr.bf16.mxu0 %v93
    %958 = vmatmul.mubr.bf16.gmra.mxu0 %v92
    %v959 = vpop.f32.mrf.mxu0
    %v960 = vadd.f32 %v919, %v959
    %v961 = vpop.f32.mrf.mxu0
    %v962 = vadd.f32 %v921, %v961
    %v963 = vpop.f32.mrf.mxu0
    %v964 = vpop.f32.mrf.mxu0
    %965 = vdwg.mxu0
    %966 = vmatprep.subr.bf16.mxu0 %v659
    %967 = vmatpush1.bf16.msra.mxu0 %v658
    %968 = vmatprep.subr.bf16.mxu0 %v655
    %969 = vmatpush1.bf16.msra.mxu0 %v654
    %970 = vmatprep.subr.bf16.mxu0 %v651
    %971 = vmatpush1.bf16.msra.mxu0 %v650
    %972 = vmatprep.subr.bf16.mxu0 %v647
    %973 = vmatpush1.bf16.msra.mxu0 %v646
    %974 = vmatprep.subr.bf16.mxu0 %v643
    %975 = vmatpush1.bf16.msra.mxu0 %v642
    %976 = vmatprep.subr.bf16.mxu0 %v639
    %977 = vmatpush1.bf16.msra.mxu0 %v638
    %978 = vmatprep.subr.bf16.mxu0 %v635
    %979 = vmatpush1.bf16.msra.mxu0 %v634
    %980 = vmatprep.subr.bf16.mxu0 %v631
    %981 = vmatpush1.bf16.msra.mxu0 %v630
    %982 = vmatprep.subr.bf16.mxu0 %v691
    %983 = vmatpush2.bf16.msra.mxu0 %v690
    %984 = vmatprep.subr.bf16.mxu0 %v687
    %985 = vmatpush2.bf16.msra.mxu0 %v686
    %986 = vmatprep.subr.bf16.mxu0 %v683
    %987 = vmatpush2.bf16.msra.mxu0 %v682
    %988 = vmatprep.subr.bf16.mxu0 %v679
    %989 = vmatpush2.bf16.msra.mxu0 %v678
    %990 = vmatprep.subr.bf16.mxu0 %v675
    %991 = vmatpush2.bf16.msra.mxu0 %v674
    %992 = vmatprep.subr.bf16.mxu0 %v671
    %993 = vmatpush2.bf16.msra.mxu0 %v670
    %994 = vmatprep.subr.bf16.mxu0 %v667
    %995 = vmatpush2.bf16.msra.mxu0 %v666
    %996 = vmatprep.subr.bf16.mxu0 %v663
    %997 = vmatpush2.bf16.msra.mxu0 %v662
    %998 = vmatprep.mubr.bf16.mxu0 %v91
    %999 = vmatmul.mubr.bf16.gmra.mxu0 %v90
    %v1000 = vpop.f32.mrf.mxu0
    %v1001 = vadd.f32 %v235, %v1000
    %v1002 = vpop.f32.mrf.mxu0
    %v1003 = vadd.f32 %v239, %v1002
    %v1004 = vpop.f32.mrf.mxu0
    %v1005 = vpop.f32.mrf.mxu0
    %1006 = vdwg.mxu0
    %1007 = vmatprep.subr.bf16.mxu0 %v723
    %1008 = vmatpush1.bf16.msra.mxu0 %v722
    %1009 = vmatprep.subr.bf16.mxu0 %v719
    %1010 = vmatpush1.bf16.msra.mxu0 %v718
    %1011 = vmatprep.subr.bf16.mxu0 %v715
    %1012 = vmatpush1.bf16.msra.mxu0 %v714
    %1013 = vmatprep.subr.bf16.mxu0 %v711
    %1014 = vmatpush1.bf16.msra.mxu0 %v710
    %1015 = vmatprep.subr.bf16.mxu0 %v707
    %1016 = vmatpush1.bf16.msra.mxu0 %v706
    %1017 = vmatprep.subr.bf16.mxu0 %v703
    %1018 = vmatpush1.bf16.msra.mxu0 %v702
    %1019 = vmatprep.subr.bf16.mxu0 %v699
    %1020 = vmatpush1.bf16.msra.mxu0 %v698
    %1021 = vmatprep.subr.bf16.mxu0 %v695
    %1022 = vmatpush1.bf16.msra.mxu0 %v694
    %1023 = vmatprep.subr.bf16.mxu0 %v755
    %1024 = vmatpush2.bf16.msra.mxu0 %v754
    %1025 = vmatprep.subr.bf16.mxu0 %v751
    %1026 = vmatpush2.bf16.msra.mxu0 %v750
    %1027 = vmatprep.subr.bf16.mxu0 %v747
    %1028 = vmatpush2.bf16.msra.mxu0 %v746
    %1029 = vmatprep.subr.bf16.mxu0 %v743
    %1030 = vmatpush2.bf16.msra.mxu0 %v742
    %1031 = vmatprep.subr.bf16.mxu0 %v739
    %1032 = vmatpush2.bf16.msra.mxu0 %v738
    %1033 = vmatprep.subr.bf16.mxu0 %v735
    %1034 = vmatpush2.bf16.msra.mxu0 %v734
    %1035 = vmatprep.subr.bf16.mxu0 %v731
    %1036 = vmatpush2.bf16.msra.mxu0 %v730
    %1037 = vmatprep.subr.bf16.mxu0 %v727
    %1038 = vmatpush2.bf16.msra.mxu0 %v726
    %1039 = vmatprep.mubr.bf16.mxu0 %v93
    %1040 = vmatmul.mubr.bf16.gmra.mxu0 %v92
    %v1041 = vpop.f32.mrf.mxu0
    %v1042 = vadd.f32 %v1001, %v1041
    %v1043 = vpop.f32.mrf.mxu0
    %v1044 = vadd.f32 %v1003, %v1043
    %v1045 = vpop.f32.mrf.mxu0
    %v1046 = vpop.f32.mrf.mxu0
    %1047 = vdwg.mxu0
    %vm1048 = vcmp.gt.f32.partialorder %v960, 0.0
    %vm1049 = vcmp.gt.f32.partialorder %v962, 0.0
    %vm1050 = vcmp.gt.f32.partialorder %v1042, 0.0
    %vm1051 = vcmp.gt.f32.partialorder %v1044, 0.0
    %v1052 = vmul.f32 %v960, 0.2
    %v1053 = vmul.f32 %v962, 0.2
    %v1054 = vmul.f32 %v1042, 0.2
    %v1055 = vmul.f32 %v1044, 0.2
    %v1056 = vsel %vm1048, %v960, %v1052
    %v1057 = vsel %vm1049, %v962, %v1053
    %v1058 = vsel %vm1050, %v1042, %v1054
    %v1059 = vsel %vm1051, %v1044, %v1055
    %v1060 = vpack.c.bf16 %v1056, %v1056
    %v1061 = vpack.c.bf16 %v1057, %v1057
    %v1062 = vpack.c.bf16 %v1058, %v1058
    %v1063 = vpack.c.bf16 %v1059, %v1059
    %s1064 = scalar_lea.vmem [#allocation5], 1024
    %v1065 = vld [vmem:[%s1064] sm:$0xff]
    %v1066 = vld [vmem:[%s1064 + $0x8] sm:$0xff]
    %v1067 = vld [vmem:[%s1064 + $0x10] sm:$0xff]
    %v1068 = vld [vmem:[%s1064 + $0x18] sm:$0xff]
    %v1069 = vld [vmem:[%s1064 + $0x20] sm:$0xff]
    %v1070 = vld [vmem:[%s1064 + $0x28] sm:$0xff]
    %v1071 = vld [vmem:[%s1064 + $0x30] sm:$0xff]
    %v1072 = vld [vmem:[%s1064 + $0x38] sm:$0xff]
    %v1073 = vld [vmem:[%s1064 + $0x40] sm:$0xff]
    %v1074 = vld [vmem:[%s1064 + $0x48] sm:$0xff]
    %v1075 = vld [vmem:[%s1064 + $0x50] sm:$0xff]
    %v1076 = vld [vmem:[%s1064 + $0x58] sm:$0xff]
    %v1077 = vld [vmem:[%s1064 + $0x60] sm:$0xff]
    %v1078 = vld [vmem:[%s1064 + $0x68] sm:$0xff]
    %v1079 = vld [vmem:[%s1064 + $0x70] sm:$0xff]
    %v1080 = vld [vmem:[%s1064 + $0x78] sm:$0xff]
    %v1081 = vld [vmem:[%s1064 + $0x80] sm:$0xff]
    %v1082 = vld [vmem:[%s1064 + $0x88] sm:$0xff]
    %v1083 = vld [vmem:[%s1064 + $0x90] sm:$0xff]
    %v1084 = vld [vmem:[%s1064 + $0x98] sm:$0xff]
    %v1085 = vld [vmem:[%s1064 + $0xa0] sm:$0xff]
    %v1086 = vld [vmem:[%s1064 + $0xa8] sm:$0xff]
    %v1087 = vld [vmem:[%s1064 + $0xb0] sm:$0xff]
    %v1088 = vld [vmem:[%s1064 + $0xb8] sm:$0xff]
    %v1089 = vld [vmem:[%s1064 + $0xc0] sm:$0xff]
    %v1090 = vld [vmem:[%s1064 + $0xc8] sm:$0xff]
    %v1091 = vld [vmem:[%s1064 + $0xd0] sm:$0xff]
    %v1092 = vld [vmem:[%s1064 + $0xd8] sm:$0xff]
    %v1093 = vld [vmem:[%s1064 + $0xe0] sm:$0xff]
    %v1094 = vld [vmem:[%s1064 + $0xe8] sm:$0xff]
    %v1095 = vld [vmem:[%s1064 + $0xf0] sm:$0xff]
    %v1096 = vld [vmem:[%s1064 + $0xf8] sm:$0xff]
    %v1097 = vld [vmem:[%s1064 + $0x100] sm:$0xff]
    %v1098 = vld [vmem:[%s1064 + $0x108] sm:$0xff]
    %v1099 = vld [vmem:[%s1064 + $0x110] sm:$0xff]
    %v1100 = vld [vmem:[%s1064 + $0x118] sm:$0xff]
    %v1101 = vld [vmem:[%s1064 + $0x120] sm:$0xff]
    %v1102 = vld [vmem:[%s1064 + $0x128] sm:$0xff]
    %v1103 = vld [vmem:[%s1064 + $0x130] sm:$0xff]
    %v1104 = vld [vmem:[%s1064 + $0x138] sm:$0xff]
    %v1105 = vld [vmem:[%s1064 + $0x140] sm:$0xff]
    %v1106 = vld [vmem:[%s1064 + $0x148] sm:$0xff]
    %v1107 = vld [vmem:[%s1064 + $0x150] sm:$0xff]
    %v1108 = vld [vmem:[%s1064 + $0x158] sm:$0xff]
    %v1109 = vld [vmem:[%s1064 + $0x160] sm:$0xff]
    %v1110 = vld [vmem:[%s1064 + $0x168] sm:$0xff]
    %v1111 = vld [vmem:[%s1064 + $0x170] sm:$0xff]
    %v1112 = vld [vmem:[%s1064 + $0x178] sm:$0xff]
    %v1113 = vld [vmem:[%s1064 + $0x180] sm:$0xff]
    %v1114 = vld [vmem:[%s1064 + $0x188] sm:$0xff]
    %v1115 = vld [vmem:[%s1064 + $0x190] sm:$0xff]
    %v1116 = vld [vmem:[%s1064 + $0x198] sm:$0xff]
    %v1117 = vld [vmem:[%s1064 + $0x1a0] sm:$0xff]
    %v1118 = vld [vmem:[%s1064 + $0x1a8] sm:$0xff]
    %v1119 = vld [vmem:[%s1064 + $0x1b0] sm:$0xff]
    %v1120 = vld [vmem:[%s1064 + $0x1b8] sm:$0xff]
    %v1121 = vld [vmem:[%s1064 + $0x1c0] sm:$0xff]
    %v1122 = vld [vmem:[%s1064 + $0x1c8] sm:$0xff]
    %v1123 = vld [vmem:[%s1064 + $0x1d0] sm:$0xff]
    %v1124 = vld [vmem:[%s1064 + $0x1d8] sm:$0xff]
    %v1125 = vld [vmem:[%s1064 + $0x1e0] sm:$0xff]
    %v1126 = vld [vmem:[%s1064 + $0x1e8] sm:$0xff]
    %v1127 = vld [vmem:[%s1064 + $0x1f0] sm:$0xff]
    %v1128 = vld [vmem:[%s1064 + $0x1f8] sm:$0xff]
    %v1129 = vld [vmem:[%s1064 + $0x200] sm:$0xff]
    %v1130 = vld [vmem:[%s1064 + $0x208] sm:$0xff]
    %v1131 = vld [vmem:[%s1064 + $0x210] sm:$0xff]
    %v1132 = vld [vmem:[%s1064 + $0x218] sm:$0xff]
    %v1133 = vld [vmem:[%s1064 + $0x220] sm:$0xff]
    %v1134 = vld [vmem:[%s1064 + $0x228] sm:$0xff]
    %v1135 = vld [vmem:[%s1064 + $0x230] sm:$0xff]
    %v1136 = vld [vmem:[%s1064 + $0x238] sm:$0xff]
    %v1137 = vld [vmem:[%s1064 + $0x240] sm:$0xff]
    %v1138 = vld [vmem:[%s1064 + $0x248] sm:$0xff]
    %v1139 = vld [vmem:[%s1064 + $0x250] sm:$0xff]
    %v1140 = vld [vmem:[%s1064 + $0x258] sm:$0xff]
    %v1141 = vld [vmem:[%s1064 + $0x260] sm:$0xff]
    %v1142 = vld [vmem:[%s1064 + $0x268] sm:$0xff]
    %v1143 = vld [vmem:[%s1064 + $0x270] sm:$0xff]
    %v1144 = vld [vmem:[%s1064 + $0x278] sm:$0xff]
    %v1145 = vld [vmem:[%s1064 + $0x280] sm:$0xff]
    %v1146 = vld [vmem:[%s1064 + $0x288] sm:$0xff]
    %v1147 = vld [vmem:[%s1064 + $0x290] sm:$0xff]
    %v1148 = vld [vmem:[%s1064 + $0x298] sm:$0xff]
    %v1149 = vld [vmem:[%s1064 + $0x2a0] sm:$0xff]
    %v1150 = vld [vmem:[%s1064 + $0x2a8] sm:$0xff]
    %v1151 = vld [vmem:[%s1064 + $0x2b0] sm:$0xff]
    %v1152 = vld [vmem:[%s1064 + $0x2b8] sm:$0xff]
    %v1153 = vld [vmem:[%s1064 + $0x2c0] sm:$0xff]
    %v1154 = vld [vmem:[%s1064 + $0x2c8] sm:$0xff]
    %v1155 = vld [vmem:[%s1064 + $0x2d0] sm:$0xff]
    %v1156 = vld [vmem:[%s1064 + $0x2d8] sm:$0xff]
    %v1157 = vld [vmem:[%s1064 + $0x2e0] sm:$0xff]
    %v1158 = vld [vmem:[%s1064 + $0x2e8] sm:$0xff]
    %v1159 = vld [vmem:[%s1064 + $0x2f0] sm:$0xff]
    %v1160 = vld [vmem:[%s1064 + $0x2f8] sm:$0xff]
    %v1161 = vld [vmem:[%s1064 + $0x300] sm:$0xff]
    %v1162 = vld [vmem:[%s1064 + $0x308] sm:$0xff]
    %v1163 = vld [vmem:[%s1064 + $0x310] sm:$0xff]
    %v1164 = vld [vmem:[%s1064 + $0x318] sm:$0xff]
    %v1165 = vld [vmem:[%s1064 + $0x320] sm:$0xff]
    %v1166 = vld [vmem:[%s1064 + $0x328] sm:$0xff]
    %v1167 = vld [vmem:[%s1064 + $0x330] sm:$0xff]
    %v1168 = vld [vmem:[%s1064 + $0x338] sm:$0xff]
    %v1169 = vld [vmem:[%s1064 + $0x340] sm:$0xff]
    %v1170 = vld [vmem:[%s1064 + $0x348] sm:$0xff]
    %v1171 = vld [vmem:[%s1064 + $0x350] sm:$0xff]
    %v1172 = vld [vmem:[%s1064 + $0x358] sm:$0xff]
    %v1173 = vld [vmem:[%s1064 + $0x360] sm:$0xff]
    %v1174 = vld [vmem:[%s1064 + $0x368] sm:$0xff]
    %v1175 = vld [vmem:[%s1064 + $0x370] sm:$0xff]
    %v1176 = vld [vmem:[%s1064 + $0x378] sm:$0xff]
    %v1177 = vld [vmem:[%s1064 + $0x380] sm:$0xff]
    %v1178 = vld [vmem:[%s1064 + $0x388] sm:$0xff]
    %v1179 = vld [vmem:[%s1064 + $0x390] sm:$0xff]
    %v1180 = vld [vmem:[%s1064 + $0x398] sm:$0xff]
    %v1181 = vld [vmem:[%s1064 + $0x3a0] sm:$0xff]
    %v1182 = vld [vmem:[%s1064 + $0x3a8] sm:$0xff]
    %v1183 = vld [vmem:[%s1064 + $0x3b0] sm:$0xff]
    %v1184 = vld [vmem:[%s1064 + $0x3b8] sm:$0xff]
    %v1185 = vld [vmem:[%s1064 + $0x3c0] sm:$0xff]
    %v1186 = vld [vmem:[%s1064 + $0x3c8] sm:$0xff]
    %v1187 = vld [vmem:[%s1064 + $0x3d0] sm:$0xff]
    %v1188 = vld [vmem:[%s1064 + $0x3d8] sm:$0xff]
    %v1189 = vld [vmem:[%s1064 + $0x3e0] sm:$0xff]
    %v1190 = vld [vmem:[%s1064 + $0x3e8] sm:$0xff]
    %v1191 = vld [vmem:[%s1064 + $0x3f0] sm:$0xff]
    %v1192 = vld [vmem:[%s1064 + $0x3f8] sm:$0xff]
    %s1193 = scalar_lea.vmem [#allocation7], 4
    %v1194 = vld [vmem:[%s1193] sm:$0xf]
    %v1196 = vlaneseq
    %v1197 = vshrl.u32 %v1196, 7
    %v1198 = vsub.s32 0, %v1197
    %v1199 = vrot.slane %v1194, %v1198
    %v1200 = vlaneseq
    %v1201 = vshrl.u32 %v1200, 7
    %v1202 = vsub.s32 1, %v1201
    %v1203 = vrot.slane %v1194, %v1202
    %v1204 = vlaneseq
    %v1205 = vshrl.u32 %v1204, 7
    %v1206 = vsub.s32 2, %v1205
    %v1207 = vrot.slane %v1194, %v1206
    %v1208 = vlaneseq
    %v1209 = vshrl.u32 %v1208, 7
    %v1210 = vsub.s32 3, %v1209
    %v1211 = vrot.slane %v1194, %v1210
    %v1344 = vunpack.c.l.b16 %v1065
    %v1345 = vunpack.c.h.b16 %v1065
    %v1346 = vunpack.c.l.b16 %v1066
    %v1347 = vunpack.c.h.b16 %v1066
    %v1348 = vunpack.c.l.b16 %v1067
    %v1349 = vunpack.c.h.b16 %v1067
    %v1350 = vunpack.c.l.b16 %v1068
    %v1351 = vunpack.c.h.b16 %v1068
    %v1352 = vunpack.c.l.b16 %v1069
    %v1353 = vunpack.c.h.b16 %v1069
    %v1354 = vunpack.c.l.b16 %v1070
    %v1355 = vunpack.c.h.b16 %v1070
    %v1356 = vunpack.c.l.b16 %v1071
    %v1357 = vunpack.c.h.b16 %v1071
    %v1358 = vunpack.c.l.b16 %v1072
    %v1359 = vunpack.c.h.b16 %v1072
    %v1360 = vunpack.c.l.b16 %v1073
    %v1361 = vunpack.c.h.b16 %v1073
    %v1362 = vunpack.c.l.b16 %v1074
    %v1363 = vunpack.c.h.b16 %v1074
    %v1364 = vunpack.c.l.b16 %v1075
    %v1365 = vunpack.c.h.b16 %v1075
    %v1366 = vunpack.c.l.b16 %v1076
    %v1367 = vunpack.c.h.b16 %v1076
    %v1368 = vunpack.c.l.b16 %v1077
    %v1369 = vunpack.c.h.b16 %v1077
    %v1370 = vunpack.c.l.b16 %v1078
    %v1371 = vunpack.c.h.b16 %v1078
    %v1372 = vunpack.c.l.b16 %v1079
    %v1373 = vunpack.c.h.b16 %v1079
    %v1374 = vunpack.c.l.b16 %v1080
    %v1375 = vunpack.c.h.b16 %v1080
    %v1376 = vunpack.c.l.b16 %v1081
    %v1377 = vunpack.c.h.b16 %v1081
    %v1378 = vunpack.c.l.b16 %v1082
    %v1379 = vunpack.c.h.b16 %v1082
    %v1380 = vunpack.c.l.b16 %v1083
    %v1381 = vunpack.c.h.b16 %v1083
    %v1382 = vunpack.c.l.b16 %v1084
    %v1383 = vunpack.c.h.b16 %v1084
    %v1384 = vunpack.c.l.b16 %v1085
    %v1385 = vunpack.c.h.b16 %v1085
    %v1386 = vunpack.c.l.b16 %v1086
    %v1387 = vunpack.c.h.b16 %v1086
    %v1388 = vunpack.c.l.b16 %v1087
    %v1389 = vunpack.c.h.b16 %v1087
    %v1390 = vunpack.c.l.b16 %v1088
    %v1391 = vunpack.c.h.b16 %v1088
    %v1392 = vunpack.c.l.b16 %v1089
    %v1393 = vunpack.c.h.b16 %v1089
    %v1394 = vunpack.c.l.b16 %v1090
    %v1395 = vunpack.c.h.b16 %v1090
    %v1396 = vunpack.c.l.b16 %v1091
    %v1397 = vunpack.c.h.b16 %v1091
    %v1398 = vunpack.c.l.b16 %v1092
    %v1399 = vunpack.c.h.b16 %v1092
    %v1400 = vunpack.c.l.b16 %v1093
    %v1401 = vunpack.c.h.b16 %v1093
    %v1402 = vunpack.c.l.b16 %v1094
    %v1403 = vunpack.c.h.b16 %v1094
    %v1404 = vunpack.c.l.b16 %v1095
    %v1405 = vunpack.c.h.b16 %v1095
    %v1406 = vunpack.c.l.b16 %v1096
    %v1407 = vunpack.c.h.b16 %v1096
    %v1408 = vunpack.c.l.b16 %v1097
    %v1409 = vunpack.c.h.b16 %v1097
    %v1410 = vunpack.c.l.b16 %v1098
    %v1411 = vunpack.c.h.b16 %v1098
    %v1412 = vunpack.c.l.b16 %v1099
    %v1413 = vunpack.c.h.b16 %v1099
    %v1414 = vunpack.c.l.b16 %v1100
    %v1415 = vunpack.c.h.b16 %v1100
    %v1416 = vunpack.c.l.b16 %v1101
    %v1417 = vunpack.c.h.b16 %v1101
    %v1418 = vunpack.c.l.b16 %v1102
    %v1419 = vunpack.c.h.b16 %v1102
    %v1420 = vunpack.c.l.b16 %v1103
    %v1421 = vunpack.c.h.b16 %v1103
    %v1422 = vunpack.c.l.b16 %v1104
    %v1423 = vunpack.c.h.b16 %v1104
    %v1424 = vunpack.c.l.b16 %v1105
    %v1425 = vunpack.c.h.b16 %v1105
    %v1426 = vunpack.c.l.b16 %v1106
    %v1427 = vunpack.c.h.b16 %v1106
    %v1428 = vunpack.c.l.b16 %v1107
    %v1429 = vunpack.c.h.b16 %v1107
    %v1430 = vunpack.c.l.b16 %v1108
    %v1431 = vunpack.c.h.b16 %v1108
    %v1432 = vunpack.c.l.b16 %v1109
    %v1433 = vunpack.c.h.b16 %v1109
    %v1434 = vunpack.c.l.b16 %v1110
    %v1435 = vunpack.c.h.b16 %v1110
    %v1436 = vunpack.c.l.b16 %v1111
    %v1437 = vunpack.c.h.b16 %v1111
    %v1438 = vunpack.c.l.b16 %v1112
    %v1439 = vunpack.c.h.b16 %v1112
    %v1440 = vunpack.c.l.b16 %v1113
    %v1441 = vunpack.c.h.b16 %v1113
    %v1442 = vunpack.c.l.b16 %v1114
    %v1443 = vunpack.c.h.b16 %v1114
    %v1444 = vunpack.c.l.b16 %v1115
    %v1445 = vunpack.c.h.b16 %v1115
    %v1446 = vunpack.c.l.b16 %v1116
    %v1447 = vunpack.c.h.b16 %v1116
    %v1448 = vunpack.c.l.b16 %v1117
    %v1449 = vunpack.c.h.b16 %v1117
    %v1450 = vunpack.c.l.b16 %v1118
    %v1451 = vunpack.c.h.b16 %v1118
    %v1452 = vunpack.c.l.b16 %v1119
    %v1453 = vunpack.c.h.b16 %v1119
    %v1454 = vunpack.c.l.b16 %v1120
    %v1455 = vunpack.c.h.b16 %v1120
    %v1456 = vunpack.c.l.b16 %v1121
    %v1457 = vunpack.c.h.b16 %v1121
    %v1458 = vunpack.c.l.b16 %v1122
    %v1459 = vunpack.c.h.b16 %v1122
    %v1460 = vunpack.c.l.b16 %v1123
    %v1461 = vunpack.c.h.b16 %v1123
    %v1462 = vunpack.c.l.b16 %v1124
    %v1463 = vunpack.c.h.b16 %v1124
    %v1464 = vunpack.c.l.b16 %v1125
    %v1465 = vunpack.c.h.b16 %v1125
    %v1466 = vunpack.c.l.b16 %v1126
    %v1467 = vunpack.c.h.b16 %v1126
    %v1468 = vunpack.c.l.b16 %v1127
    %v1469 = vunpack.c.h.b16 %v1127
    %v1470 = vunpack.c.l.b16 %v1128
    %v1471 = vunpack.c.h.b16 %v1128
    %v1472 = vunpack.c.l.b16 %v1129
    %v1473 = vunpack.c.h.b16 %v1129
    %v1474 = vunpack.c.l.b16 %v1130
    %v1475 = vunpack.c.h.b16 %v1130
    %v1476 = vunpack.c.l.b16 %v1131
    %v1477 = vunpack.c.h.b16 %v1131
    %v1478 = vunpack.c.l.b16 %v1132
    %v1479 = vunpack.c.h.b16 %v1132
    %v1480 = vunpack.c.l.b16 %v1133
    %v1481 = vunpack.c.h.b16 %v1133
    %v1482 = vunpack.c.l.b16 %v1134
    %v1483 = vunpack.c.h.b16 %v1134
    %v1484 = vunpack.c.l.b16 %v1135
    %v1485 = vunpack.c.h.b16 %v1135
    %v1486 = vunpack.c.l.b16 %v1136
    %v1487 = vunpack.c.h.b16 %v1136
    %v1488 = vunpack.c.l.b16 %v1137
    %v1489 = vunpack.c.h.b16 %v1137
    %v1490 = vunpack.c.l.b16 %v1138
    %v1491 = vunpack.c.h.b16 %v1138
    %v1492 = vunpack.c.l.b16 %v1139
    %v1493 = vunpack.c.h.b16 %v1139
    %v1494 = vunpack.c.l.b16 %v1140
    %v1495 = vunpack.c.h.b16 %v1140
    %v1496 = vunpack.c.l.b16 %v1141
    %v1497 = vunpack.c.h.b16 %v1141
    %v1498 = vunpack.c.l.b16 %v1142
    %v1499 = vunpack.c.h.b16 %v1142
    %v1500 = vunpack.c.l.b16 %v1143
    %v1501 = vunpack.c.h.b16 %v1143
    %v1502 = vunpack.c.l.b16 %v1144
    %v1503 = vunpack.c.h.b16 %v1144
    %v1504 = vunpack.c.l.b16 %v1145
    %v1505 = vunpack.c.h.b16 %v1145
    %v1506 = vunpack.c.l.b16 %v1146
    %v1507 = vunpack.c.h.b16 %v1146
    %v1508 = vunpack.c.l.b16 %v1147
    %v1509 = vunpack.c.h.b16 %v1147
    %v1510 = vunpack.c.l.b16 %v1148
    %v1511 = vunpack.c.h.b16 %v1148
    %v1512 = vunpack.c.l.b16 %v1149
    %v1513 = vunpack.c.h.b16 %v1149
    %v1514 = vunpack.c.l.b16 %v1150
    %v1515 = vunpack.c.h.b16 %v1150
    %v1516 = vunpack.c.l.b16 %v1151
    %v1517 = vunpack.c.h.b16 %v1151
    %v1518 = vunpack.c.l.b16 %v1152
    %v1519 = vunpack.c.h.b16 %v1152
    %v1520 = vunpack.c.l.b16 %v1153
    %v1521 = vunpack.c.h.b16 %v1153
    %v1522 = vunpack.c.l.b16 %v1154
    %v1523 = vunpack.c.h.b16 %v1154
    %v1524 = vunpack.c.l.b16 %v1155
    %v1525 = vunpack.c.h.b16 %v1155
    %v1526 = vunpack.c.l.b16 %v1156
    %v1527 = vunpack.c.h.b16 %v1156
    %v1528 = vunpack.c.l.b16 %v1157
    %v1529 = vunpack.c.h.b16 %v1157
    %v1530 = vunpack.c.l.b16 %v1158
    %v1531 = vunpack.c.h.b16 %v1158
    %v1532 = vunpack.c.l.b16 %v1159
    %v1533 = vunpack.c.h.b16 %v1159
    %v1534 = vunpack.c.l.b16 %v1160
    %v1535 = vunpack.c.h.b16 %v1160
    %v1536 = vunpack.c.l.b16 %v1161
    %v1537 = vunpack.c.h.b16 %v1161
    %v1538 = vunpack.c.l.b16 %v1162
    %v1539 = vunpack.c.h.b16 %v1162
    %v1540 = vunpack.c.l.b16 %v1163
    %v1541 = vunpack.c.h.b16 %v1163
    %v1542 = vunpack.c.l.b16 %v1164
    %v1543 = vunpack.c.h.b16 %v1164
    %v1544 = vunpack.c.l.b16 %v1165
    %v1545 = vunpack.c.h.b16 %v1165
    %v1546 = vunpack.c.l.b16 %v1166
    %v1547 = vunpack.c.h.b16 %v1166
    %v1548 = vunpack.c.l.b16 %v1167
    %v1549 = vunpack.c.h.b16 %v1167
    %v1550 = vunpack.c.l.b16 %v1168
    %v1551 = vunpack.c.h.b16 %v1168
    %v1552 = vunpack.c.l.b16 %v1169
    %v1553 = vunpack.c.h.b16 %v1169
    %v1554 = vunpack.c.l.b16 %v1170
    %v1555 = vunpack.c.h.b16 %v1170
    %v1556 = vunpack.c.l.b16 %v1171
    %v1557 = vunpack.c.h.b16 %v1171
    %v1558 = vunpack.c.l.b16 %v1172
    %v1559 = vunpack.c.h.b16 %v1172
    %v1560 = vunpack.c.l.b16 %v1173
    %v1561 = vunpack.c.h.b16 %v1173
    %v1562 = vunpack.c.l.b16 %v1174
    %v1563 = vunpack.c.h.b16 %v1174
    %v1564 = vunpack.c.l.b16 %v1175
    %v1565 = vunpack.c.h.b16 %v1175
    %v1566 = vunpack.c.l.b16 %v1176
    %v1567 = vunpack.c.h.b16 %v1176
    %v1568 = vunpack.c.l.b16 %v1177
    %v1569 = vunpack.c.h.b16 %v1177
    %v1570 = vunpack.c.l.b16 %v1178
    %v1571 = vunpack.c.h.b16 %v1178
    %v1572 = vunpack.c.l.b16 %v1179
    %v1573 = vunpack.c.h.b16 %v1179
    %v1574 = vunpack.c.l.b16 %v1180
    %v1575 = vunpack.c.h.b16 %v1180
    %v1576 = vunpack.c.l.b16 %v1181
    %v1577 = vunpack.c.h.b16 %v1181
    %v1578 = vunpack.c.l.b16 %v1182
    %v1579 = vunpack.c.h.b16 %v1182
    %v1580 = vunpack.c.l.b16 %v1183
    %v1581 = vunpack.c.h.b16 %v1183
    %v1582 = vunpack.c.l.b16 %v1184
    %v1583 = vunpack.c.h.b16 %v1184
    %v1584 = vunpack.c.l.b16 %v1185
    %v1585 = vunpack.c.h.b16 %v1185
    %v1586 = vunpack.c.l.b16 %v1186
    %v1587 = vunpack.c.h.b16 %v1186
    %v1588 = vunpack.c.l.b16 %v1187
    %v1589 = vunpack.c.h.b16 %v1187
    %v1590 = vunpack.c.l.b16 %v1188
    %v1591 = vunpack.c.h.b16 %v1188
    %v1592 = vunpack.c.l.b16 %v1189
    %v1593 = vunpack.c.h.b16 %v1189
    %v1594 = vunpack.c.l.b16 %v1190
    %v1595 = vunpack.c.h.b16 %v1190
    %v1596 = vunpack.c.l.b16 %v1191
    %v1597 = vunpack.c.h.b16 %v1191
    %v1598 = vunpack.c.l.b16 %v1192
    %v1599 = vunpack.c.h.b16 %v1192
    %v1600 = vpack.c.b16 %v1348, %v1344
    %v1601 = vpack.c.b16 %v1349, %v1345
    %v1602 = vpack.c.b16 %v1350, %v1346
    %v1603 = vpack.c.b16 %v1351, %v1347
    %v1604 = vpack.c.b16 %v1356, %v1352
    %v1605 = vpack.c.b16 %v1357, %v1353
    %v1606 = vpack.c.b16 %v1358, %v1354
    %v1607 = vpack.c.b16 %v1359, %v1355
    %v1608 = vpack.c.b16 %v1364, %v1360
    %v1609 = vpack.c.b16 %v1365, %v1361
    %v1610 = vpack.c.b16 %v1366, %v1362
    %v1611 = vpack.c.b16 %v1367, %v1363
    %v1612 = vpack.c.b16 %v1372, %v1368
    %v1613 = vpack.c.b16 %v1373, %v1369
    %v1614 = vpack.c.b16 %v1374, %v1370
    %v1615 = vpack.c.b16 %v1375, %v1371
    %v1616 = vpack.c.b16 %v1380, %v1376
    %v1617 = vpack.c.b16 %v1381, %v1377
    %v1618 = vpack.c.b16 %v1382, %v1378
    %v1619 = vpack.c.b16 %v1383, %v1379
    %v1620 = vpack.c.b16 %v1388, %v1384
    %v1621 = vpack.c.b16 %v1389, %v1385
    %v1622 = vpack.c.b16 %v1390, %v1386
    %v1623 = vpack.c.b16 %v1391, %v1387
    %v1624 = vpack.c.b16 %v1396, %v1392
    %v1625 = vpack.c.b16 %v1397, %v1393
    %v1626 = vpack.c.b16 %v1398, %v1394
    %v1627 = vpack.c.b16 %v1399, %v1395
    %v1628 = vpack.c.b16 %v1404, %v1400
    %v1629 = vpack.c.b16 %v1405, %v1401
    %v1630 = vpack.c.b16 %v1406, %v1402
    %v1631 = vpack.c.b16 %v1407, %v1403
    %v1632 = vpack.c.b16 %v1412, %v1408
    %v1633 = vpack.c.b16 %v1413, %v1409
    %v1634 = vpack.c.b16 %v1414, %v1410
    %v1635 = vpack.c.b16 %v1415, %v1411
    %v1636 = vpack.c.b16 %v1420, %v1416
    %v1637 = vpack.c.b16 %v1421, %v1417
    %v1638 = vpack.c.b16 %v1422, %v1418
    %v1639 = vpack.c.b16 %v1423, %v1419
    %v1640 = vpack.c.b16 %v1428, %v1424
    %v1641 = vpack.c.b16 %v1429, %v1425
    %v1642 = vpack.c.b16 %v1430, %v1426
    %v1643 = vpack.c.b16 %v1431, %v1427
    %v1644 = vpack.c.b16 %v1436, %v1432
    %v1645 = vpack.c.b16 %v1437, %v1433
    %v1646 = vpack.c.b16 %v1438, %v1434
    %v1647 = vpack.c.b16 %v1439, %v1435
    %v1648 = vpack.c.b16 %v1444, %v1440
    %v1649 = vpack.c.b16 %v1445, %v1441
    %v1650 = vpack.c.b16 %v1446, %v1442
    %v1651 = vpack.c.b16 %v1447, %v1443
    %v1652 = vpack.c.b16 %v1452, %v1448
    %v1653 = vpack.c.b16 %v1453, %v1449
    %v1654 = vpack.c.b16 %v1454, %v1450
    %v1655 = vpack.c.b16 %v1455, %v1451
    %v1656 = vpack.c.b16 %v1460, %v1456
    %v1657 = vpack.c.b16 %v1461, %v1457
    %v1658 = vpack.c.b16 %v1462, %v1458
    %v1659 = vpack.c.b16 %v1463, %v1459
    %v1660 = vpack.c.b16 %v1468, %v1464
    %v1661 = vpack.c.b16 %v1469, %v1465
    %v1662 = vpack.c.b16 %v1470, %v1466
    %v1663 = vpack.c.b16 %v1471, %v1467
    %v1664 = vpack.c.b16 %v1476, %v1472
    %v1665 = vpack.c.b16 %v1477, %v1473
    %v1666 = vpack.c.b16 %v1478, %v1474
    %v1667 = vpack.c.b16 %v1479, %v1475
    %v1668 = vpack.c.b16 %v1484, %v1480
    %v1669 = vpack.c.b16 %v1485, %v1481
    %v1670 = vpack.c.b16 %v1486, %v1482
    %v1671 = vpack.c.b16 %v1487, %v1483
    %v1672 = vpack.c.b16 %v1492, %v1488
    %v1673 = vpack.c.b16 %v1493, %v1489
    %v1674 = vpack.c.b16 %v1494, %v1490
    %v1675 = vpack.c.b16 %v1495, %v1491
    %v1676 = vpack.c.b16 %v1500, %v1496
    %v1677 = vpack.c.b16 %v1501, %v1497
    %v1678 = vpack.c.b16 %v1502, %v1498
    %v1679 = vpack.c.b16 %v1503, %v1499
    %v1680 = vpack.c.b16 %v1508, %v1504
    %v1681 = vpack.c.b16 %v1509, %v1505
    %v1682 = vpack.c.b16 %v1510, %v1506
    %v1683 = vpack.c.b16 %v1511, %v1507
    %v1684 = vpack.c.b16 %v1516, %v1512
    %v1685 = vpack.c.b16 %v1517, %v1513
    %v1686 = vpack.c.b16 %v1518, %v1514
    %v1687 = vpack.c.b16 %v1519, %v1515
    %v1688 = vpack.c.b16 %v1524, %v1520
    %v1689 = vpack.c.b16 %v1525, %v1521
    %v1690 = vpack.c.b16 %v1526, %v1522
    %v1691 = vpack.c.b16 %v1527, %v1523
    %v1692 = vpack.c.b16 %v1532, %v1528
    %v1693 = vpack.c.b16 %v1533, %v1529
    %v1694 = vpack.c.b16 %v1534, %v1530
    %v1695 = vpack.c.b16 %v1535, %v1531
    %v1696 = vpack.c.b16 %v1540, %v1536
    %v1697 = vpack.c.b16 %v1541, %v1537
    %v1698 = vpack.c.b16 %v1542, %v1538
    %v1699 = vpack.c.b16 %v1543, %v1539
    %v1700 = vpack.c.b16 %v1548, %v1544
    %v1701 = vpack.c.b16 %v1549, %v1545
    %v1702 = vpack.c.b16 %v1550, %v1546
    %v1703 = vpack.c.b16 %v1551, %v1547
    %v1704 = vpack.c.b16 %v1556, %v1552
    %v1705 = vpack.c.b16 %v1557, %v1553
    %v1706 = vpack.c.b16 %v1558, %v1554
    %v1707 = vpack.c.b16 %v1559, %v1555
    %v1708 = vpack.c.b16 %v1564, %v1560
    %v1709 = vpack.c.b16 %v1565, %v1561
    %v1710 = vpack.c.b16 %v1566, %v1562
    %v1711 = vpack.c.b16 %v1567, %v1563
    %v1712 = vpack.c.b16 %v1572, %v1568
    %v1713 = vpack.c.b16 %v1573, %v1569
    %v1714 = vpack.c.b16 %v1574, %v1570
    %v1715 = vpack.c.b16 %v1575, %v1571
    %v1716 = vpack.c.b16 %v1580, %v1576
    %v1717 = vpack.c.b16 %v1581, %v1577
    %v1718 = vpack.c.b16 %v1582, %v1578
    %v1719 = vpack.c.b16 %v1583, %v1579
    %v1720 = vpack.c.b16 %v1588, %v1584
    %v1721 = vpack.c.b16 %v1589, %v1585
    %v1722 = vpack.c.b16 %v1590, %v1586
    %v1723 = vpack.c.b16 %v1591, %v1587
    %v1724 = vpack.c.b16 %v1596, %v1592
    %v1725 = vpack.c.b16 %v1597, %v1593
    %v1726 = vpack.c.b16 %v1598, %v1594
    %v1727 = vpack.c.b16 %v1599, %v1595
    %1856 = vmatprep.subr.bf16.mxu0 %v1629
    %1857 = vmatpush1.bf16.msra.mxu0 %v1628
    %1858 = vmatprep.subr.bf16.mxu0 %v1625
    %1859 = vmatpush1.bf16.msra.mxu0 %v1624
    %1860 = vmatprep.subr.bf16.mxu0 %v1621
    %1861 = vmatpush1.bf16.msra.mxu0 %v1620
    %1862 = vmatprep.subr.bf16.mxu0 %v1617
    %1863 = vmatpush1.bf16.msra.mxu0 %v1616
    %1864 = vmatprep.subr.bf16.mxu0 %v1613
    %1865 = vmatpush1.bf16.msra.mxu0 %v1612
    %1866 = vmatprep.subr.bf16.mxu0 %v1609
    %1867 = vmatpush1.bf16.msra.mxu0 %v1608
    %1868 = vmatprep.subr.bf16.mxu0 %v1605
    %1869 = vmatpush1.bf16.msra.mxu0 %v1604
    %1870 = vmatprep.subr.bf16.mxu0 %v1601
    %1871 = vmatpush1.bf16.msra.mxu0 %v1600
    %1872 = vmatprep.subr.bf16.mxu0 %v1661
    %1873 = vmatpush2.bf16.msra.mxu0 %v1660
    %1874 = vmatprep.subr.bf16.mxu0 %v1657
    %1875 = vmatpush2.bf16.msra.mxu0 %v1656
    %1876 = vmatprep.subr.bf16.mxu0 %v1653
    %1877 = vmatpush2.bf16.msra.mxu0 %v1652
    %1878 = vmatprep.subr.bf16.mxu0 %v1649
    %1879 = vmatpush2.bf16.msra.mxu0 %v1648
    %1880 = vmatprep.subr.bf16.mxu0 %v1645
    %1881 = vmatpush2.bf16.msra.mxu0 %v1644
    %1882 = vmatprep.subr.bf16.mxu0 %v1641
    %1883 = vmatpush2.bf16.msra.mxu0 %v1640
    %1884 = vmatprep.subr.bf16.mxu0 %v1637
    %1885 = vmatpush2.bf16.msra.mxu0 %v1636
    %1886 = vmatprep.subr.bf16.mxu0 %v1633
    %1887 = vmatpush2.bf16.msra.mxu0 %v1632
    %1888 = vmatprep.mubr.bf16.mxu0 %v1061
    %1889 = vmatmul.mubr.bf16.gmra.mxu0 %v1060
    %v1890 = vpop.f32.mrf.mxu0
    %v1891 = vadd.f32 %v1199, %v1890
    %v1892 = vpop.f32.mrf.mxu0
    %v1893 = vadd.f32 %v1203, %v1892
    %v1894 = vpop.f32.mrf.mxu0
    %v1895 = vpop.f32.mrf.mxu0
    %1896 = vdwg.mxu0
    %1897 = vmatprep.subr.bf16.mxu0 %v1693
    %1898 = vmatpush1.bf16.msra.mxu0 %v1692
    %1899 = vmatprep.subr.bf16.mxu0 %v1689
    %1900 = vmatpush1.bf16.msra.mxu0 %v1688
    %1901 = vmatprep.subr.bf16.mxu0 %v1685
    %1902 = vmatpush1.bf16.msra.mxu0 %v1684
    %1903 = vmatprep.subr.bf16.mxu0 %v1681
    %1904 = vmatpush1.bf16.msra.mxu0 %v1680
    %1905 = vmatprep.subr.bf16.mxu0 %v1677
    %1906 = vmatpush1.bf16.msra.mxu0 %v1676
    %1907 = vmatprep.subr.bf16.mxu0 %v1673
    %1908 = vmatpush1.bf16.msra.mxu0 %v1672
    %1909 = vmatprep.subr.bf16.mxu0 %v1669
    %1910 = vmatpush1.bf16.msra.mxu0 %v1668
    %1911 = vmatprep.subr.bf16.mxu0 %v1665
    %1912 = vmatpush1.bf16.msra.mxu0 %v1664
    %1913 = vmatprep.subr.bf16.mxu0 %v1725
    %1914 = vmatpush2.bf16.msra.mxu0 %v1724
    %1915 = vmatprep.subr.bf16.mxu0 %v1721
    %1916 = vmatpush2.bf16.msra.mxu0 %v1720
    %1917 = vmatprep.subr.bf16.mxu0 %v1717
    %1918 = vmatpush2.bf16.msra.mxu0 %v1716
    %1919 = vmatprep.subr.bf16.mxu0 %v1713
    %1920 = vmatpush2.bf16.msra.mxu0 %v1712
    %1921 = vmatprep.subr.bf16.mxu0 %v1709
    %1922 = vmatpush2.bf16.msra.mxu0 %v1708
    %1923 = vmatprep.subr.bf16.mxu0 %v1705
    %1924 = vmatpush2.bf16.msra.mxu0 %v1704
    %1925 = vmatprep.subr.bf16.mxu0 %v1701
    %1926 = vmatpush2.bf16.msra.mxu0 %v1700
    %1927 = vmatprep.subr.bf16.mxu0 %v1697
    %1928 = vmatpush2.bf16.msra.mxu0 %v1696
    %1929 = vmatprep.mubr.bf16.mxu0 %v1063
    %1930 = vmatmul.mubr.bf16.gmra.mxu0 %v1062
    %v1931 = vpop.f32.mrf.mxu0
    %v1932 = vadd.f32 %v1891, %v1931
    %v1933 = vpop.f32.mrf.mxu0
    %v1934 = vadd.f32 %v1893, %v1933
    %v1935 = vpop.f32.mrf.mxu0
    %v1936 = vpop.f32.mrf.mxu0
    %1937 = vdwg.mxu0
    %1938 = vmatprep.subr.bf16.mxu0 %v1631
    %1939 = vmatpush1.bf16.msra.mxu0 %v1630
    %1940 = vmatprep.subr.bf16.mxu0 %v1627
    %1941 = vmatpush1.bf16.msra.mxu0 %v1626
    %1942 = vmatprep.subr.bf16.mxu0 %v1623
    %1943 = vmatpush1.bf16.msra.mxu0 %v1622
    %1944 = vmatprep.subr.bf16.mxu0 %v1619
    %1945 = vmatpush1.bf16.msra.mxu0 %v1618
    %1946 = vmatprep.subr.bf16.mxu0 %v1615
    %1947 = vmatpush1.bf16.msra.mxu0 %v1614
    %1948 = vmatprep.subr.bf16.mxu0 %v1611
    %1949 = vmatpush1.bf16.msra.mxu0 %v1610
    %1950 = vmatprep.subr.bf16.mxu0 %v1607
    %1951 = vmatpush1.bf16.msra.mxu0 %v1606
    %1952 = vmatprep.subr.bf16.mxu0 %v1603
    %1953 = vmatpush1.bf16.msra.mxu0 %v1602
    %1954 = vmatprep.subr.bf16.mxu0 %v1663
    %1955 = vmatpush2.bf16.msra.mxu0 %v1662
    %1956 = vmatprep.subr.bf16.mxu0 %v1659
    %1957 = vmatpush2.bf16.msra.mxu0 %v1658
    %1958 = vmatprep.subr.bf16.mxu0 %v1655
    %1959 = vmatpush2.bf16.msra.mxu0 %v1654
    %1960 = vmatprep.subr.bf16.mxu0 %v1651
    %1961 = vmatpush2.bf16.msra.mxu0 %v1650
    %1962 = vmatprep.subr.bf16.mxu0 %v1647
    %1963 = vmatpush2.bf16.msra.mxu0 %v1646
    %1964 = vmatprep.subr.bf16.mxu0 %v1643
    %1965 = vmatpush2.bf16.msra.mxu0 %v1642
    %1966 = vmatprep.subr.bf16.mxu0 %v1639
    %1967 = vmatpush2.bf16.msra.mxu0 %v1638
    %1968 = vmatprep.subr.bf16.mxu0 %v1635
    %1969 = vmatpush2.bf16.msra.mxu0 %v1634
    %1970 = vmatprep.mubr.bf16.mxu0 %v1061
    %1971 = vmatmul.mubr.bf16.gmra.mxu0 %v1060
    %v1972 = vpop.f32.mrf.mxu0
    %v1973 = vadd.f32 %v1207, %v1972
    %v1974 = vpop.f32.mrf.mxu0
    %v1975 = vadd.f32 %v1211, %v1974
    %v1976 = vpop.f32.mrf.mxu0
    %v1977 = vpop.f32.mrf.mxu0
    %1978 = vdwg.mxu0
    %1979 = vmatprep.subr.bf16.mxu0 %v1695
    %1980 = vmatpush1.bf16.msra.mxu0 %v1694
    %1981 = vmatprep.subr.bf16.mxu0 %v1691
    %1982 = vmatpush1.bf16.msra.mxu0 %v1690
    %1983 = vmatprep.subr.bf16.mxu0 %v1687
    %1984 = vmatpush1.bf16.msra.mxu0 %v1686
    %1985 = vmatprep.subr.bf16.mxu0 %v1683
    %1986 = vmatpush1.bf16.msra.mxu0 %v1682
    %1987 = vmatprep.subr.bf16.mxu0 %v1679
    %1988 = vmatpush1.bf16.msra.mxu0 %v1678
    %1989 = vmatprep.subr.bf16.mxu0 %v1675
    %1990 = vmatpush1.bf16.msra.mxu0 %v1674
    %1991 = vmatprep.subr.bf16.mxu0 %v1671
    %1992 = vmatpush1.bf16.msra.mxu0 %v1670
    %1993 = vmatprep.subr.bf16.mxu0 %v1667
    %1994 = vmatpush1.bf16.msra.mxu0 %v1666
    %1995 = vmatprep.subr.bf16.mxu0 %v1727
    %1996 = vmatpush2.bf16.msra.mxu0 %v1726
    %1997 = vmatprep.subr.bf16.mxu0 %v1723
    %1998 = vmatpush2.bf16.msra.mxu0 %v1722
    %1999 = vmatprep.subr.bf16.mxu0 %v1719
    %2000 = vmatpush2.bf16.msra.mxu0 %v1718
    %2001 = vmatprep.subr.bf16.mxu0 %v1715
    %2002 = vmatpush2.bf16.msra.mxu0 %v1714
    %2003 = vmatprep.subr.bf16.mxu0 %v1711
    %2004 = vmatpush2.bf16.msra.mxu0 %v1710
    %2005 = vmatprep.subr.bf16.mxu0 %v1707
    %2006 = vmatpush2.bf16.msra.mxu0 %v1706
    %2007 = vmatprep.subr.bf16.mxu0 %v1703
    %2008 = vmatpush2.bf16.msra.mxu0 %v1702
    %2009 = vmatprep.subr.bf16.mxu0 %v1699
    %2010 = vmatpush2.bf16.msra.mxu0 %v1698
    %2011 = vmatprep.mubr.bf16.mxu0 %v1063
    %2012 = vmatmul.mubr.bf16.gmra.mxu0 %v1062
    %v2013 = vpop.f32.mrf.mxu0
    %v2014 = vadd.f32 %v1973, %v2013
    %v2015 = vpop.f32.mrf.mxu0
    %v2016 = vadd.f32 %v1975, %v2015
    %v2017 = vpop.f32.mrf.mxu0
    %v2018 = vpop.f32.mrf.mxu0
    %2019 = vdwg.mxu0
    %vm2020 = vcmp.gt.f32.partialorder %v1932, 0.0
    %vm2021 = vcmp.gt.f32.partialorder %v1934, 0.0
    %vm2022 = vcmp.gt.f32.partialorder %v2014, 0.0
    %vm2023 = vcmp.gt.f32.partialorder %v2016, 0.0
    %v2024 = vmul.f32 %v1932, 0.2
    %v2025 = vmul.f32 %v1934, 0.2
    %v2026 = vmul.f32 %v2014, 0.2
    %v2027 = vmul.f32 %v2016, 0.2
    %v2028 = vsel %vm2020, %v1932, %v2024
    %v2029 = vsel %vm2021, %v1934, %v2025
    %v2030 = vsel %vm2022, %v2014, %v2026
    %v2031 = vsel %vm2023, %v2016, %v2027
    %v2032 = vpack.c.bf16 %v2028, %v2028
    %v2033 = vpack.c.bf16 %v2029, %v2029
    %v2034 = vpack.c.bf16 %v2030, %v2030
    %v2035 = vpack.c.bf16 %v2031, %v2031
    %s2036 = scalar_lea.vmem [#allocation5], 2048
    %v2037 = vld [vmem:[%s2036] sm:$0xff]
    %v2038 = vld [vmem:[%s2036 + $0x8] sm:$0xff]
    %v2039 = vld [vmem:[%s2036 + $0x10] sm:$0xff]
    %v2040 = vld [vmem:[%s2036 + $0x18] sm:$0xff]
    %v2041 = vld [vmem:[%s2036 + $0x20] sm:$0xff]
    %v2042 = vld [vmem:[%s2036 + $0x28] sm:$0xff]
    %v2043 = vld [vmem:[%s2036 + $0x30] sm:$0xff]
    %v2044 = vld [vmem:[%s2036 + $0x38] sm:$0xff]
    %v2045 = vld [vmem:[%s2036 + $0x40] sm:$0xff]
    %v2046 = vld [vmem:[%s2036 + $0x48] sm:$0xff]
    %v2047 = vld [vmem:[%s2036 + $0x50] sm:$0xff]
    %v2048 = vld [vmem:[%s2036 + $0x58] sm:$0xff]
    %v2049 = vld [vmem:[%s2036 + $0x60] sm:$0xff]
    %v2050 = vld [vmem:[%s2036 + $0x68] sm:$0xff]
    %v2051 = vld [vmem:[%s2036 + $0x70] sm:$0xff]
    %v2052 = vld [vmem:[%s2036 + $0x78] sm:$0xff]
    %v2053 = vld [vmem:[%s2036 + $0x80] sm:$0xff]
    %v2054 = vld [vmem:[%s2036 + $0x88] sm:$0xff]
    %v2055 = vld [vmem:[%s2036 + $0x90] sm:$0xff]
    %v2056 = vld [vmem:[%s2036 + $0x98] sm:$0xff]
    %v2057 = vld [vmem:[%s2036 + $0xa0] sm:$0xff]
    %v2058 = vld [vmem:[%s2036 + $0xa8] sm:$0xff]
    %v2059 = vld [vmem:[%s2036 + $0xb0] sm:$0xff]
    %v2060 = vld [vmem:[%s2036 + $0xb8] sm:$0xff]
    %v2061 = vld [vmem:[%s2036 + $0xc0] sm:$0xff]
    %v2062 = vld [vmem:[%s2036 + $0xc8] sm:$0xff]
    %v2063 = vld [vmem:[%s2036 + $0xd0] sm:$0xff]
    %v2064 = vld [vmem:[%s2036 + $0xd8] sm:$0xff]
    %v2065 = vld [vmem:[%s2036 + $0xe0] sm:$0xff]
    %v2066 = vld [vmem:[%s2036 + $0xe8] sm:$0xff]
    %v2067 = vld [vmem:[%s2036 + $0xf0] sm:$0xff]
    %v2068 = vld [vmem:[%s2036 + $0xf8] sm:$0xff]
    %v2069 = vld [vmem:[%s2036 + $0x100] sm:$0xff]
    %v2070 = vld [vmem:[%s2036 + $0x108] sm:$0xff]
    %v2071 = vld [vmem:[%s2036 + $0x110] sm:$0xff]
    %v2072 = vld [vmem:[%s2036 + $0x118] sm:$0xff]
    %v2073 = vld [vmem:[%s2036 + $0x120] sm:$0xff]
    %v2074 = vld [vmem:[%s2036 + $0x128] sm:$0xff]
    %v2075 = vld [vmem:[%s2036 + $0x130] sm:$0xff]
    %v2076 = vld [vmem:[%s2036 + $0x138] sm:$0xff]
    %v2077 = vld [vmem:[%s2036 + $0x140] sm:$0xff]
    %v2078 = vld [vmem:[%s2036 + $0x148] sm:$0xff]
    %v2079 = vld [vmem:[%s2036 + $0x150] sm:$0xff]
    %v2080 = vld [vmem:[%s2036 + $0x158] sm:$0xff]
    %v2081 = vld [vmem:[%s2036 + $0x160] sm:$0xff]
    %v2082 = vld [vmem:[%s2036 + $0x168] sm:$0xff]
    %v2083 = vld [vmem:[%s2036 + $0x170] sm:$0xff]
    %v2084 = vld [vmem:[%s2036 + $0x178] sm:$0xff]
    %v2085 = vld [vmem:[%s2036 + $0x180] sm:$0xff]
    %v2086 = vld [vmem:[%s2036 + $0x188] sm:$0xff]
    %v2087 = vld [vmem:[%s2036 + $0x190] sm:$0xff]
    %v2088 = vld [vmem:[%s2036 + $0x198] sm:$0xff]
    %v2089 = vld [vmem:[%s2036 + $0x1a0] sm:$0xff]
    %v2090 = vld [vmem:[%s2036 + $0x1a8] sm:$0xff]
    %v2091 = vld [vmem:[%s2036 + $0x1b0] sm:$0xff]
    %v2092 = vld [vmem:[%s2036 + $0x1b8] sm:$0xff]
    %v2093 = vld [vmem:[%s2036 + $0x1c0] sm:$0xff]
    %v2094 = vld [vmem:[%s2036 + $0x1c8] sm:$0xff]
    %v2095 = vld [vmem:[%s2036 + $0x1d0] sm:$0xff]
    %v2096 = vld [vmem:[%s2036 + $0x1d8] sm:$0xff]
    %v2097 = vld [vmem:[%s2036 + $0x1e0] sm:$0xff]
    %v2098 = vld [vmem:[%s2036 + $0x1e8] sm:$0xff]
    %v2099 = vld [vmem:[%s2036 + $0x1f0] sm:$0xff]
    %v2100 = vld [vmem:[%s2036 + $0x1f8] sm:$0xff]
    %v2101 = vld [vmem:[%s2036 + $0x200] sm:$0xff]
    %v2102 = vld [vmem:[%s2036 + $0x208] sm:$0xff]
    %v2103 = vld [vmem:[%s2036 + $0x210] sm:$0xff]
    %v2104 = vld [vmem:[%s2036 + $0x218] sm:$0xff]
    %v2105 = vld [vmem:[%s2036 + $0x220] sm:$0xff]
    %v2106 = vld [vmem:[%s2036 + $0x228] sm:$0xff]
    %v2107 = vld [vmem:[%s2036 + $0x230] sm:$0xff]
    %v2108 = vld [vmem:[%s2036 + $0x238] sm:$0xff]
    %v2109 = vld [vmem:[%s2036 + $0x240] sm:$0xff]
    %v2110 = vld [vmem:[%s2036 + $0x248] sm:$0xff]
    %v2111 = vld [vmem:[%s2036 + $0x250] sm:$0xff]
    %v2112 = vld [vmem:[%s2036 + $0x258] sm:$0xff]
    %v2113 = vld [vmem:[%s2036 + $0x260] sm:$0xff]
    %v2114 = vld [vmem:[%s2036 + $0x268] sm:$0xff]
    %v2115 = vld [vmem:[%s2036 + $0x270] sm:$0xff]
    %v2116 = vld [vmem:[%s2036 + $0x278] sm:$0xff]
    %v2117 = vld [vmem:[%s2036 + $0x280] sm:$0xff]
    %v2118 = vld [vmem:[%s2036 + $0x288] sm:$0xff]
    %v2119 = vld [vmem:[%s2036 + $0x290] sm:$0xff]
    %v2120 = vld [vmem:[%s2036 + $0x298] sm:$0xff]
    %v2121 = vld [vmem:[%s2036 + $0x2a0] sm:$0xff]
    %v2122 = vld [vmem:[%s2036 + $0x2a8] sm:$0xff]
    %v2123 = vld [vmem:[%s2036 + $0x2b0] sm:$0xff]
    %v2124 = vld [vmem:[%s2036 + $0x2b8] sm:$0xff]
    %v2125 = vld [vmem:[%s2036 + $0x2c0] sm:$0xff]
    %v2126 = vld [vmem:[%s2036 + $0x2c8] sm:$0xff]
    %v2127 = vld [vmem:[%s2036 + $0x2d0] sm:$0xff]
    %v2128 = vld [vmem:[%s2036 + $0x2d8] sm:$0xff]
    %v2129 = vld [vmem:[%s2036 + $0x2e0] sm:$0xff]
    %v2130 = vld [vmem:[%s2036 + $0x2e8] sm:$0xff]
    %v2131 = vld [vmem:[%s2036 + $0x2f0] sm:$0xff]
    %v2132 = vld [vmem:[%s2036 + $0x2f8] sm:$0xff]
    %v2133 = vld [vmem:[%s2036 + $0x300] sm:$0xff]
    %v2134 = vld [vmem:[%s2036 + $0x308] sm:$0xff]
    %v2135 = vld [vmem:[%s2036 + $0x310] sm:$0xff]
    %v2136 = vld [vmem:[%s2036 + $0x318] sm:$0xff]
    %v2137 = vld [vmem:[%s2036 + $0x320] sm:$0xff]
    %v2138 = vld [vmem:[%s2036 + $0x328] sm:$0xff]
    %v2139 = vld [vmem:[%s2036 + $0x330] sm:$0xff]
    %v2140 = vld [vmem:[%s2036 + $0x338] sm:$0xff]
    %v2141 = vld [vmem:[%s2036 + $0x340] sm:$0xff]
    %v2142 = vld [vmem:[%s2036 + $0x348] sm:$0xff]
    %v2143 = vld [vmem:[%s2036 + $0x350] sm:$0xff]
    %v2144 = vld [vmem:[%s2036 + $0x358] sm:$0xff]
    %v2145 = vld [vmem:[%s2036 + $0x360] sm:$0xff]
    %v2146 = vld [vmem:[%s2036 + $0x368] sm:$0xff]
    %v2147 = vld [vmem:[%s2036 + $0x370] sm:$0xff]
    %v2148 = vld [vmem:[%s2036 + $0x378] sm:$0xff]
    %v2149 = vld [vmem:[%s2036 + $0x380] sm:$0xff]
    %v2150 = vld [vmem:[%s2036 + $0x388] sm:$0xff]
    %v2151 = vld [vmem:[%s2036 + $0x390] sm:$0xff]
    %v2152 = vld [vmem:[%s2036 + $0x398] sm:$0xff]
    %v2153 = vld [vmem:[%s2036 + $0x3a0] sm:$0xff]
    %v2154 = vld [vmem:[%s2036 + $0x3a8] sm:$0xff]
    %v2155 = vld [vmem:[%s2036 + $0x3b0] sm:$0xff]
    %v2156 = vld [vmem:[%s2036 + $0x3b8] sm:$0xff]
    %v2157 = vld [vmem:[%s2036 + $0x3c0] sm:$0xff]
    %v2158 = vld [vmem:[%s2036 + $0x3c8] sm:$0xff]
    %v2159 = vld [vmem:[%s2036 + $0x3d0] sm:$0xff]
    %v2160 = vld [vmem:[%s2036 + $0x3d8] sm:$0xff]
    %v2161 = vld [vmem:[%s2036 + $0x3e0] sm:$0xff]
    %v2162 = vld [vmem:[%s2036 + $0x3e8] sm:$0xff]
    %v2163 = vld [vmem:[%s2036 + $0x3f0] sm:$0xff]
    %v2164 = vld [vmem:[%s2036 + $0x3f8] sm:$0xff]
    %s2165 = scalar_lea.vmem [#allocation7], 8
    %v2166 = vld [vmem:[%s2165] sm:$0xf]
    %v2168 = vlaneseq
    %v2169 = vshrl.u32 %v2168, 7
    %v2170 = vsub.s32 0, %v2169
    %v2171 = vrot.slane %v2166, %v2170
    %v2172 = vlaneseq
    %v2173 = vshrl.u32 %v2172, 7
    %v2174 = vsub.s32 1, %v2173
    %v2175 = vrot.slane %v2166, %v2174
    %v2176 = vlaneseq
    %v2177 = vshrl.u32 %v2176, 7
    %v2178 = vsub.s32 2, %v2177
    %v2179 = vrot.slane %v2166, %v2178
    %v2180 = vlaneseq
    %v2181 = vshrl.u32 %v2180, 7
    %v2182 = vsub.s32 3, %v2181
    %v2183 = vrot.slane %v2166, %v2182
    %v2316 = vunpack.c.l.b16 %v2037
    %v2317 = vunpack.c.h.b16 %v2037
    %v2318 = vunpack.c.l.b16 %v2038
    %v2319 = vunpack.c.h.b16 %v2038
    %v2320 = vunpack.c.l.b16 %v2039
    %v2321 = vunpack.c.h.b16 %v2039
    %v2322 = vunpack.c.l.b16 %v2040
    %v2323 = vunpack.c.h.b16 %v2040
    %v2324 = vunpack.c.l.b16 %v2041
    %v2325 = vunpack.c.h.b16 %v2041
    %v2326 = vunpack.c.l.b16 %v2042
    %v2327 = vunpack.c.h.b16 %v2042
    %v2328 = vunpack.c.l.b16 %v2043
    %v2329 = vunpack.c.h.b16 %v2043
    %v2330 = vunpack.c.l.b16 %v2044
    %v2331 = vunpack.c.h.b16 %v2044
    %v2332 = vunpack.c.l.b16 %v2045
    %v2333 = vunpack.c.h.b16 %v2045
    %v2334 = vunpack.c.l.b16 %v2046
    %v2335 = vunpack.c.h.b16 %v2046
    %v2336 = vunpack.c.l.b16 %v2047
    %v2337 = vunpack.c.h.b16 %v2047
    %v2338 = vunpack.c.l.b16 %v2048
    %v2339 = vunpack.c.h.b16 %v2048
    %v2340 = vunpack.c.l.b16 %v2049
    %v2341 = vunpack.c.h.b16 %v2049
    %v2342 = vunpack.c.l.b16 %v2050
    %v2343 = vunpack.c.h.b16 %v2050
    %v2344 = vunpack.c.l.b16 %v2051
    %v2345 = vunpack.c.h.b16 %v2051
    %v2346 = vunpack.c.l.b16 %v2052
    %v2347 = vunpack.c.h.b16 %v2052
    %v2348 = vunpack.c.l.b16 %v2053
    %v2349 = vunpack.c.h.b16 %v2053
    %v2350 = vunpack.c.l.b16 %v2054
    %v2351 = vunpack.c.h.b16 %v2054
    %v2352 = vunpack.c.l.b16 %v2055
    %v2353 = vunpack.c.h.b16 %v2055
    %v2354 = vunpack.c.l.b16 %v2056
    %v2355 = vunpack.c.h.b16 %v2056
    %v2356 = vunpack.c.l.b16 %v2057
    %v2357 = vunpack.c.h.b16 %v2057
    %v2358 = vunpack.c.l.b16 %v2058
    %v2359 = vunpack.c.h.b16 %v2058
    %v2360 = vunpack.c.l.b16 %v2059
    %v2361 = vunpack.c.h.b16 %v2059
    %v2362 = vunpack.c.l.b16 %v2060
    %v2363 = vunpack.c.h.b16 %v2060
    %v2364 = vunpack.c.l.b16 %v2061
    %v2365 = vunpack.c.h.b16 %v2061
    %v2366 = vunpack.c.l.b16 %v2062
    %v2367 = vunpack.c.h.b16 %v2062
    %v2368 = vunpack.c.l.b16 %v2063
    %v2369 = vunpack.c.h.b16 %v2063
    %v2370 = vunpack.c.l.b16 %v2064
    %v2371 = vunpack.c.h.b16 %v2064
    %v2372 = vunpack.c.l.b16 %v2065
    %v2373 = vunpack.c.h.b16 %v2065
    %v2374 = vunpack.c.l.b16 %v2066
    %v2375 = vunpack.c.h.b16 %v2066
    %v2376 = vunpack.c.l.b16 %v2067
    %v2377 = vunpack.c.h.b16 %v2067
    %v2378 = vunpack.c.l.b16 %v2068
    %v2379 = vunpack.c.h.b16 %v2068
    %v2380 = vunpack.c.l.b16 %v2069
    %v2381 = vunpack.c.h.b16 %v2069
    %v2382 = vunpack.c.l.b16 %v2070
    %v2383 = vunpack.c.h.b16 %v2070
    %v2384 = vunpack.c.l.b16 %v2071
    %v2385 = vunpack.c.h.b16 %v2071
    %v2386 = vunpack.c.l.b16 %v2072
    %v2387 = vunpack.c.h.b16 %v2072
    %v2388 = vunpack.c.l.b16 %v2073
    %v2389 = vunpack.c.h.b16 %v2073
    %v2390 = vunpack.c.l.b16 %v2074
    %v2391 = vunpack.c.h.b16 %v2074
    %v2392 = vunpack.c.l.b16 %v2075
    %v2393 = vunpack.c.h.b16 %v2075
    %v2394 = vunpack.c.l.b16 %v2076
    %v2395 = vunpack.c.h.b16 %v2076
    %v2396 = vunpack.c.l.b16 %v2077
    %v2397 = vunpack.c.h.b16 %v2077
    %v2398 = vunpack.c.l.b16 %v2078
    %v2399 = vunpack.c.h.b16 %v2078
    %v2400 = vunpack.c.l.b16 %v2079
    %v2401 = vunpack.c.h.b16 %v2079
    %v2402 = vunpack.c.l.b16 %v2080
    %v2403 = vunpack.c.h.b16 %v2080
    %v2404 = vunpack.c.l.b16 %v2081
    %v2405 = vunpack.c.h.b16 %v2081
    %v2406 = vunpack.c.l.b16 %v2082
    %v2407 = vunpack.c.h.b16 %v2082
    %v2408 = vunpack.c.l.b16 %v2083
    %v2409 = vunpack.c.h.b16 %v2083
    %v2410 = vunpack.c.l.b16 %v2084
    %v2411 = vunpack.c.h.b16 %v2084
    %v2412 = vunpack.c.l.b16 %v2085
    %v2413 = vunpack.c.h.b16 %v2085
    %v2414 = vunpack.c.l.b16 %v2086
    %v2415 = vunpack.c.h.b16 %v2086
    %v2416 = vunpack.c.l.b16 %v2087
    %v2417 = vunpack.c.h.b16 %v2087
    %v2418 = vunpack.c.l.b16 %v2088
    %v2419 = vunpack.c.h.b16 %v2088
    %v2420 = vunpack.c.l.b16 %v2089
    %v2421 = vunpack.c.h.b16 %v2089
    %v2422 = vunpack.c.l.b16 %v2090
    %v2423 = vunpack.c.h.b16 %v2090
    %v2424 = vunpack.c.l.b16 %v2091
    %v2425 = vunpack.c.h.b16 %v2091
    %v2426 = vunpack.c.l.b16 %v2092
    %v2427 = vunpack.c.h.b16 %v2092
    %v2428 = vunpack.c.l.b16 %v2093
    %v2429 = vunpack.c.h.b16 %v2093
    %v2430 = vunpack.c.l.b16 %v2094
    %v2431 = vunpack.c.h.b16 %v2094
    %v2432 = vunpack.c.l.b16 %v2095
    %v2433 = vunpack.c.h.b16 %v2095
    %v2434 = vunpack.c.l.b16 %v2096
    %v2435 = vunpack.c.h.b16 %v2096
    %v2436 = vunpack.c.l.b16 %v2097
    %v2437 = vunpack.c.h.b16 %v2097
    %v2438 = vunpack.c.l.b16 %v2098
    %v2439 = vunpack.c.h.b16 %v2098
    %v2440 = vunpack.c.l.b16 %v2099
    %v2441 = vunpack.c.h.b16 %v2099
    %v2442 = vunpack.c.l.b16 %v2100
    %v2443 = vunpack.c.h.b16 %v2100
    %v2444 = vunpack.c.l.b16 %v2101
    %v2445 = vunpack.c.h.b16 %v2101
    %v2446 = vunpack.c.l.b16 %v2102
    %v2447 = vunpack.c.h.b16 %v2102
    %v2448 = vunpack.c.l.b16 %v2103
    %v2449 = vunpack.c.h.b16 %v2103
    %v2450 = vunpack.c.l.b16 %v2104
    %v2451 = vunpack.c.h.b16 %v2104
    %v2452 = vunpack.c.l.b16 %v2105
    %v2453 = vunpack.c.h.b16 %v2105
    %v2454 = vunpack.c.l.b16 %v2106
    %v2455 = vunpack.c.h.b16 %v2106
    %v2456 = vunpack.c.l.b16 %v2107
    %v2457 = vunpack.c.h.b16 %v2107
    %v2458 = vunpack.c.l.b16 %v2108
    %v2459 = vunpack.c.h.b16 %v2108
    %v2460 = vunpack.c.l.b16 %v2109
    %v2461 = vunpack.c.h.b16 %v2109
    %v2462 = vunpack.c.l.b16 %v2110
    %v2463 = vunpack.c.h.b16 %v2110
    %v2464 = vunpack.c.l.b16 %v2111
    %v2465 = vunpack.c.h.b16 %v2111
    %v2466 = vunpack.c.l.b16 %v2112
    %v2467 = vunpack.c.h.b16 %v2112
    %v2468 = vunpack.c.l.b16 %v2113
    %v2469 = vunpack.c.h.b16 %v2113
    %v2470 = vunpack.c.l.b16 %v2114
    %v2471 = vunpack.c.h.b16 %v2114
    %v2472 = vunpack.c.l.b16 %v2115
    %v2473 = vunpack.c.h.b16 %v2115
    %v2474 = vunpack.c.l.b16 %v2116
    %v2475 = vunpack.c.h.b16 %v2116
    %v2476 = vunpack.c.l.b16 %v2117
    %v2477 = vunpack.c.h.b16 %v2117
    %v2478 = vunpack.c.l.b16 %v2118
    %v2479 = vunpack.c.h.b16 %v2118
    %v2480 = vunpack.c.l.b16 %v2119
    %v2481 = vunpack.c.h.b16 %v2119
    %v2482 = vunpack.c.l.b16 %v2120
    %v2483 = vunpack.c.h.b16 %v2120
    %v2484 = vunpack.c.l.b16 %v2121
    %v2485 = vunpack.c.h.b16 %v2121
    %v2486 = vunpack.c.l.b16 %v2122
    %v2487 = vunpack.c.h.b16 %v2122
    %v2488 = vunpack.c.l.b16 %v2123
    %v2489 = vunpack.c.h.b16 %v2123
    %v2490 = vunpack.c.l.b16 %v2124
    %v2491 = vunpack.c.h.b16 %v2124
    %v2492 = vunpack.c.l.b16 %v2125
    %v2493 = vunpack.c.h.b16 %v2125
    %v2494 = vunpack.c.l.b16 %v2126
    %v2495 = vunpack.c.h.b16 %v2126
    %v2496 = vunpack.c.l.b16 %v2127
    %v2497 = vunpack.c.h.b16 %v2127
    %v2498 = vunpack.c.l.b16 %v2128
    %v2499 = vunpack.c.h.b16 %v2128
    %v2500 = vunpack.c.l.b16 %v2129
    %v2501 = vunpack.c.h.b16 %v2129
    %v2502 = vunpack.c.l.b16 %v2130
    %v2503 = vunpack.c.h.b16 %v2130
    %v2504 = vunpack.c.l.b16 %v2131
    %v2505 = vunpack.c.h.b16 %v2131
    %v2506 = vunpack.c.l.b16 %v2132
    %v2507 = vunpack.c.h.b16 %v2132
    %v2508 = vunpack.c.l.b16 %v2133
    %v2509 = vunpack.c.h.b16 %v2133
    %v2510 = vunpack.c.l.b16 %v2134
    %v2511 = vunpack.c.h.b16 %v2134
    %v2512 = vunpack.c.l.b16 %v2135
    %v2513 = vunpack.c.h.b16 %v2135
    %v2514 = vunpack.c.l.b16 %v2136
    %v2515 = vunpack.c.h.b16 %v2136
    %v2516 = vunpack.c.l.b16 %v2137
    %v2517 = vunpack.c.h.b16 %v2137
    %v2518 = vunpack.c.l.b16 %v2138
    %v2519 = vunpack.c.h.b16 %v2138
    %v2520 = vunpack.c.l.b16 %v2139
    %v2521 = vunpack.c.h.b16 %v2139
    %v2522 = vunpack.c.l.b16 %v2140
    %v2523 = vunpack.c.h.b16 %v2140
    %v2524 = vunpack.c.l.b16 %v2141
    %v2525 = vunpack.c.h.b16 %v2141
    %v2526 = vunpack.c.l.b16 %v2142
    %v2527 = vunpack.c.h.b16 %v2142
    %v2528 = vunpack.c.l.b16 %v2143
    %v2529 = vunpack.c.h.b16 %v2143
    %v2530 = vunpack.c.l.b16 %v2144
    %v2531 = vunpack.c.h.b16 %v2144
    %v2532 = vunpack.c.l.b16 %v2145
    %v2533 = vunpack.c.h.b16 %v2145
    %v2534 = vunpack.c.l.b16 %v2146
    %v2535 = vunpack.c.h.b16 %v2146
    %v2536 = vunpack.c.l.b16 %v2147
    %v2537 = vunpack.c.h.b16 %v2147
    %v2538 = vunpack.c.l.b16 %v2148
    %v2539 = vunpack.c.h.b16 %v2148
    %v2540 = vunpack.c.l.b16 %v2149
    %v2541 = vunpack.c.h.b16 %v2149
    %v2542 = vunpack.c.l.b16 %v2150
    %v2543 = vunpack.c.h.b16 %v2150
    %v2544 = vunpack.c.l.b16 %v2151
    %v2545 = vunpack.c.h.b16 %v2151
    %v2546 = vunpack.c.l.b16 %v2152
    %v2547 = vunpack.c.h.b16 %v2152
    %v2548 = vunpack.c.l.b16 %v2153
    %v2549 = vunpack.c.h.b16 %v2153
    %v2550 = vunpack.c.l.b16 %v2154
    %v2551 = vunpack.c.h.b16 %v2154
    %v2552 = vunpack.c.l.b16 %v2155
    %v2553 = vunpack.c.h.b16 %v2155
    %v2554 = vunpack.c.l.b16 %v2156
    %v2555 = vunpack.c.h.b16 %v2156
    %v2556 = vunpack.c.l.b16 %v2157
    %v2557 = vunpack.c.h.b16 %v2157
    %v2558 = vunpack.c.l.b16 %v2158
    %v2559 = vunpack.c.h.b16 %v2158
    %v2560 = vunpack.c.l.b16 %v2159
    %v2561 = vunpack.c.h.b16 %v2159
    %v2562 = vunpack.c.l.b16 %v2160
    %v2563 = vunpack.c.h.b16 %v2160
    %v2564 = vunpack.c.l.b16 %v2161
    %v2565 = vunpack.c.h.b16 %v2161
    %v2566 = vunpack.c.l.b16 %v2162
    %v2567 = vunpack.c.h.b16 %v2162
    %v2568 = vunpack.c.l.b16 %v2163
    %v2569 = vunpack.c.h.b16 %v2163
    %v2570 = vunpack.c.l.b16 %v2164
    %v2571 = vunpack.c.h.b16 %v2164
    %v2572 = vpack.c.b16 %v2320, %v2316
    %v2573 = vpack.c.b16 %v2321, %v2317
    %v2574 = vpack.c.b16 %v2322, %v2318
    %v2575 = vpack.c.b16 %v2323, %v2319
    %v2576 = vpack.c.b16 %v2328, %v2324
    %v2577 = vpack.c.b16 %v2329, %v2325
    %v2578 = vpack.c.b16 %v2330, %v2326
    %v2579 = vpack.c.b16 %v2331, %v2327
    %v2580 = vpack.c.b16 %v2336, %v2332
    %v2581 = vpack.c.b16 %v2337, %v2333
    %v2582 = vpack.c.b16 %v2338, %v2334
    %v2583 = vpack.c.b16 %v2339, %v2335
    %v2584 = vpack.c.b16 %v2344, %v2340
    %v2585 = vpack.c.b16 %v2345, %v2341
    %v2586 = vpack.c.b16 %v2346, %v2342
    %v2587 = vpack.c.b16 %v2347, %v2343
    %v2588 = vpack.c.b16 %v2352, %v2348
    %v2589 = vpack.c.b16 %v2353, %v2349
    %v2590 = vpack.c.b16 %v2354, %v2350
    %v2591 = vpack.c.b16 %v2355, %v2351
    %v2592 = vpack.c.b16 %v2360, %v2356
    %v2593 = vpack.c.b16 %v2361, %v2357
    %v2594 = vpack.c.b16 %v2362, %v2358
    %v2595 = vpack.c.b16 %v2363, %v2359
    %v2596 = vpack.c.b16 %v2368, %v2364
    %v2597 = vpack.c.b16 %v2369, %v2365
    %v2598 = vpack.c.b16 %v2370, %v2366
    %v2599 = vpack.c.b16 %v2371, %v2367
    %v2600 = vpack.c.b16 %v2376, %v2372
    %v2601 = vpack.c.b16 %v2377, %v2373
    %v2602 = vpack.c.b16 %v2378, %v2374
    %v2603 = vpack.c.b16 %v2379, %v2375
    %v2604 = vpack.c.b16 %v2384, %v2380
    %v2605 = vpack.c.b16 %v2385, %v2381
    %v2606 = vpack.c.b16 %v2386, %v2382
    %v2607 = vpack.c.b16 %v2387, %v2383
    %v2608 = vpack.c.b16 %v2392, %v2388
    %v2609 = vpack.c.b16 %v2393, %v2389
    %v2610 = vpack.c.b16 %v2394, %v2390
    %v2611 = vpack.c.b16 %v2395, %v2391
    %v2612 = vpack.c.b16 %v2400, %v2396
    %v2613 = vpack.c.b16 %v2401, %v2397
    %v2614 = vpack.c.b16 %v2402, %v2398
    %v2615 = vpack.c.b16 %v2403, %v2399
    %v2616 = vpack.c.b16 %v2408, %v2404
    %v2617 = vpack.c.b16 %v2409, %v2405
    %v2618 = vpack.c.b16 %v2410, %v2406
    %v2619 = vpack.c.b16 %v2411, %v2407
    %v2620 = vpack.c.b16 %v2416, %v2412
    %v2621 = vpack.c.b16 %v2417, %v2413
    %v2622 = vpack.c.b16 %v2418, %v2414
    %v2623 = vpack.c.b16 %v2419, %v2415
    %v2624 = vpack.c.b16 %v2424, %v2420
    %v2625 = vpack.c.b16 %v2425, %v2421
    %v2626 = vpack.c.b16 %v2426, %v2422
    %v2627 = vpack.c.b16 %v2427, %v2423
    %v2628 = vpack.c.b16 %v2432, %v2428
    %v2629 = vpack.c.b16 %v2433, %v2429
    %v2630 = vpack.c.b16 %v2434, %v2430
    %v2631 = vpack.c.b16 %v2435, %v2431
    %v2632 = vpack.c.b16 %v2440, %v2436
    %v2633 = vpack.c.b16 %v2441, %v2437
    %v2634 = vpack.c.b16 %v2442, %v2438
    %v2635 = vpack.c.b16 %v2443, %v2439
    %v2636 = vpack.c.b16 %v2448, %v2444
    %v2637 = vpack.c.b16 %v2449, %v2445
    %v2638 = vpack.c.b16 %v2450, %v2446
    %v2639 = vpack.c.b16 %v2451, %v2447
    %v2640 = vpack.c.b16 %v2456, %v2452
    %v2641 = vpack.c.b16 %v2457, %v2453
    %v2642 = vpack.c.b16 %v2458, %v2454
    %v2643 = vpack.c.b16 %v2459, %v2455
    %v2644 = vpack.c.b16 %v2464, %v2460
    %v2645 = vpack.c.b16 %v2465, %v2461
    %v2646 = vpack.c.b16 %v2466, %v2462
    %v2647 = vpack.c.b16 %v2467, %v2463
    %v2648 = vpack.c.b16 %v2472, %v2468
    %v2649 = vpack.c.b16 %v2473, %v2469
    %v2650 = vpack.c.b16 %v2474, %v2470
    %v2651 = vpack.c.b16 %v2475, %v2471
    %v2652 = vpack.c.b16 %v2480, %v2476
    %v2653 = vpack.c.b16 %v2481, %v2477
    %v2654 = vpack.c.b16 %v2482, %v2478
    %v2655 = vpack.c.b16 %v2483, %v2479
    %v2656 = vpack.c.b16 %v2488, %v2484
    %v2657 = vpack.c.b16 %v2489, %v2485
    %v2658 = vpack.c.b16 %v2490, %v2486
    %v2659 = vpack.c.b16 %v2491, %v2487
    %v2660 = vpack.c.b16 %v2496, %v2492
    %v2661 = vpack.c.b16 %v2497, %v2493
    %v2662 = vpack.c.b16 %v2498, %v2494
    %v2663 = vpack.c.b16 %v2499, %v2495
    %v2664 = vpack.c.b16 %v2504, %v2500
    %v2665 = vpack.c.b16 %v2505, %v2501
    %v2666 = vpack.c.b16 %v2506, %v2502
    %v2667 = vpack.c.b16 %v2507, %v2503
    %v2668 = vpack.c.b16 %v2512, %v2508
    %v2669 = vpack.c.b16 %v2513, %v2509
    %v2670 = vpack.c.b16 %v2514, %v2510
    %v2671 = vpack.c.b16 %v2515, %v2511
    %v2672 = vpack.c.b16 %v2520, %v2516
    %v2673 = vpack.c.b16 %v2521, %v2517
    %v2674 = vpack.c.b16 %v2522, %v2518
    %v2675 = vpack.c.b16 %v2523, %v2519
    %v2676 = vpack.c.b16 %v2528, %v2524
    %v2677 = vpack.c.b16 %v2529, %v2525
    %v2678 = vpack.c.b16 %v2530, %v2526
    %v2679 = vpack.c.b16 %v2531, %v2527
    %v2680 = vpack.c.b16 %v2536, %v2532
    %v2681 = vpack.c.b16 %v2537, %v2533
    %v2682 = vpack.c.b16 %v2538, %v2534
    %v2683 = vpack.c.b16 %v2539, %v2535
    %v2684 = vpack.c.b16 %v2544, %v2540
    %v2685 = vpack.c.b16 %v2545, %v2541
    %v2686 = vpack.c.b16 %v2546, %v2542
    %v2687 = vpack.c.b16 %v2547, %v2543
    %v2688 = vpack.c.b16 %v2552, %v2548
    %v2689 = vpack.c.b16 %v2553, %v2549
    %v2690 = vpack.c.b16 %v2554, %v2550
    %v2691 = vpack.c.b16 %v2555, %v2551
    %v2692 = vpack.c.b16 %v2560, %v2556
    %v2693 = vpack.c.b16 %v2561, %v2557
    %v2694 = vpack.c.b16 %v2562, %v2558
    %v2695 = vpack.c.b16 %v2563, %v2559
    %v2696 = vpack.c.b16 %v2568, %v2564
    %v2697 = vpack.c.b16 %v2569, %v2565
    %v2698 = vpack.c.b16 %v2570, %v2566
    %v2699 = vpack.c.b16 %v2571, %v2567
    %2828 = vmatprep.subr.bf16.mxu0 %v2601
    %2829 = vmatpush1.bf16.msra.mxu0 %v2600
    %2830 = vmatprep.subr.bf16.mxu0 %v2597
    %2831 = vmatpush1.bf16.msra.mxu0 %v2596
    %2832 = vmatprep.subr.bf16.mxu0 %v2593
    %2833 = vmatpush1.bf16.msra.mxu0 %v2592
    %2834 = vmatprep.subr.bf16.mxu0 %v2589
    %2835 = vmatpush1.bf16.msra.mxu0 %v2588
    %2836 = vmatprep.subr.bf16.mxu0 %v2585
    %2837 = vmatpush1.bf16.msra.mxu0 %v2584
    %2838 = vmatprep.subr.bf16.mxu0 %v2581
    %2839 = vmatpush1.bf16.msra.mxu0 %v2580
    %2840 = vmatprep.subr.bf16.mxu0 %v2577
    %2841 = vmatpush1.bf16.msra.mxu0 %v2576
    %2842 = vmatprep.subr.bf16.mxu0 %v2573
    %2843 = vmatpush1.bf16.msra.mxu0 %v2572
    %2844 = vmatprep.subr.bf16.mxu0 %v2633
    %2845 = vmatpush2.bf16.msra.mxu0 %v2632
    %2846 = vmatprep.subr.bf16.mxu0 %v2629
    %2847 = vmatpush2.bf16.msra.mxu0 %v2628
    %2848 = vmatprep.subr.bf16.mxu0 %v2625
    %2849 = vmatpush2.bf16.msra.mxu0 %v2624
    %2850 = vmatprep.subr.bf16.mxu0 %v2621
    %2851 = vmatpush2.bf16.msra.mxu0 %v2620
    %2852 = vmatprep.subr.bf16.mxu0 %v2617
    %2853 = vmatpush2.bf16.msra.mxu0 %v2616
    %2854 = vmatprep.subr.bf16.mxu0 %v2613
    %2855 = vmatpush2.bf16.msra.mxu0 %v2612
    %2856 = vmatprep.subr.bf16.mxu0 %v2609
    %2857 = vmatpush2.bf16.msra.mxu0 %v2608
    %2858 = vmatprep.subr.bf16.mxu0 %v2605
    %2859 = vmatpush2.bf16.msra.mxu0 %v2604
    %2860 = vmatprep.mubr.bf16.mxu0 %v2033
    %2861 = vmatmul.mubr.bf16.gmra.mxu0 %v2032
    %v2862 = vpop.f32.mrf.mxu0
    %v2863 = vadd.f32 %v2171, %v2862
    %v2864 = vpop.f32.mrf.mxu0
    %v2865 = vadd.f32 %v2175, %v2864
    %v2866 = vpop.f32.mrf.mxu0
    %v2867 = vpop.f32.mrf.mxu0
    %2868 = vdwg.mxu0
    %2869 = vmatprep.subr.bf16.mxu0 %v2665
    %2870 = vmatpush1.bf16.msra.mxu0 %v2664
    %2871 = vmatprep.subr.bf16.mxu0 %v2661
    %2872 = vmatpush1.bf16.msra.mxu0 %v2660
    %2873 = vmatprep.subr.bf16.mxu0 %v2657
    %2874 = vmatpush1.bf16.msra.mxu0 %v2656
    %2875 = vmatprep.subr.bf16.mxu0 %v2653
    %2876 = vmatpush1.bf16.msra.mxu0 %v2652
    %2877 = vmatprep.subr.bf16.mxu0 %v2649
    %2878 = vmatpush1.bf16.msra.mxu0 %v2648
    %2879 = vmatprep.subr.bf16.mxu0 %v2645
    %2880 = vmatpush1.bf16.msra.mxu0 %v2644
    %2881 = vmatprep.subr.bf16.mxu0 %v2641
    %2882 = vmatpush1.bf16.msra.mxu0 %v2640
    %2883 = vmatprep.subr.bf16.mxu0 %v2637
    %2884 = vmatpush1.bf16.msra.mxu0 %v2636
    %2885 = vmatprep.subr.bf16.mxu0 %v2697
    %2886 = vmatpush2.bf16.msra.mxu0 %v2696
    %2887 = vmatprep.subr.bf16.mxu0 %v2693
    %2888 = vmatpush2.bf16.msra.mxu0 %v2692
    %2889 = vmatprep.subr.bf16.mxu0 %v2689
    %2890 = vmatpush2.bf16.msra.mxu0 %v2688
    %2891 = vmatprep.subr.bf16.mxu0 %v2685
    %2892 = vmatpush2.bf16.msra.mxu0 %v2684
    %2893 = vmatprep.subr.bf16.mxu0 %v2681
    %2894 = vmatpush2.bf16.msra.mxu0 %v2680
    %2895 = vmatprep.subr.bf16.mxu0 %v2677
    %2896 = vmatpush2.bf16.msra.mxu0 %v2676
    %2897 = vmatprep.subr.bf16.mxu0 %v2673
    %2898 = vmatpush2.bf16.msra.mxu0 %v2672
    %2899 = vmatprep.subr.bf16.mxu0 %v2669
    %2900 = vmatpush2.bf16.msra.mxu0 %v2668
    %2901 = vmatprep.mubr.bf16.mxu0 %v2035
    %2902 = vmatmul.mubr.bf16.gmra.mxu0 %v2034
    %v2903 = vpop.f32.mrf.mxu0
    %v2904 = vadd.f32 %v2863, %v2903
    %v2905 = vpop.f32.mrf.mxu0
    %v2906 = vadd.f32 %v2865, %v2905
    %v2907 = vpop.f32.mrf.mxu0
    %v2908 = vpop.f32.mrf.mxu0
    %2909 = vdwg.mxu0
    %2910 = vmatprep.subr.bf16.mxu0 %v2603
    %2911 = vmatpush1.bf16.msra.mxu0 %v2602
    %2912 = vmatprep.subr.bf16.mxu0 %v2599
    %2913 = vmatpush1.bf16.msra.mxu0 %v2598
    %2914 = vmatprep.subr.bf16.mxu0 %v2595
    %2915 = vmatpush1.bf16.msra.mxu0 %v2594
    %2916 = vmatprep.subr.bf16.mxu0 %v2591
    %2917 = vmatpush1.bf16.msra.mxu0 %v2590
    %2918 = vmatprep.subr.bf16.mxu0 %v2587
    %2919 = vmatpush1.bf16.msra.mxu0 %v2586
    %2920 = vmatprep.subr.bf16.mxu0 %v2583
    %2921 = vmatpush1.bf16.msra.mxu0 %v2582
    %2922 = vmatprep.subr.bf16.mxu0 %v2579
    %2923 = vmatpush1.bf16.msra.mxu0 %v2578
    %2924 = vmatprep.subr.bf16.mxu0 %v2575
    %2925 = vmatpush1.bf16.msra.mxu0 %v2574
    %2926 = vmatprep.subr.bf16.mxu0 %v2635
    %2927 = vmatpush2.bf16.msra.mxu0 %v2634
    %2928 = vmatprep.subr.bf16.mxu0 %v2631
    %2929 = vmatpush2.bf16.msra.mxu0 %v2630
    %2930 = vmatprep.subr.bf16.mxu0 %v2627
    %2931 = vmatpush2.bf16.msra.mxu0 %v2626
    %2932 = vmatprep.subr.bf16.mxu0 %v2623
    %2933 = vmatpush2.bf16.msra.mxu0 %v2622
    %2934 = vmatprep.subr.bf16.mxu0 %v2619
    %2935 = vmatpush2.bf16.msra.mxu0 %v2618
    %2936 = vmatprep.subr.bf16.mxu0 %v2615
    %2937 = vmatpush2.bf16.msra.mxu0 %v2614
    %2938 = vmatprep.subr.bf16.mxu0 %v2611
    %2939 = vmatpush2.bf16.msra.mxu0 %v2610
    %2940 = vmatprep.subr.bf16.mxu0 %v2607
    %2941 = vmatpush2.bf16.msra.mxu0 %v2606
    %2942 = vmatprep.mubr.bf16.mxu0 %v2033
    %2943 = vmatmul.mubr.bf16.gmra.mxu0 %v2032
    %v2944 = vpop.f32.mrf.mxu0
    %v2945 = vadd.f32 %v2179, %v2944
    %v2946 = vpop.f32.mrf.mxu0
    %v2947 = vadd.f32 %v2183, %v2946
    %v2948 = vpop.f32.mrf.mxu0
    %v2949 = vpop.f32.mrf.mxu0
    %2950 = vdwg.mxu0
    %2951 = vmatprep.subr.bf16.mxu0 %v2667
    %2952 = vmatpush1.bf16.msra.mxu0 %v2666
    %2953 = vmatprep.subr.bf16.mxu0 %v2663
    %2954 = vmatpush1.bf16.msra.mxu0 %v2662
    %2955 = vmatprep.subr.bf16.mxu0 %v2659
    %2956 = vmatpush1.bf16.msra.mxu0 %v2658
    %2957 = vmatprep.subr.bf16.mxu0 %v2655
    %2958 = vmatpush1.bf16.msra.mxu0 %v2654
    %2959 = vmatprep.subr.bf16.mxu0 %v2651
    %2960 = vmatpush1.bf16.msra.mxu0 %v2650
    %2961 = vmatprep.subr.bf16.mxu0 %v2647
    %2962 = vmatpush1.bf16.msra.mxu0 %v2646
    %2963 = vmatprep.subr.bf16.mxu0 %v2643
    %2964 = vmatpush1.bf16.msra.mxu0 %v2642
    %2965 = vmatprep.subr.bf16.mxu0 %v2639
    %2966 = vmatpush1.bf16.msra.mxu0 %v2638
    %2967 = vmatprep.subr.bf16.mxu0 %v2699
    %2968 = vmatpush2.bf16.msra.mxu0 %v2698
    %2969 = vmatprep.subr.bf16.mxu0 %v2695
    %2970 = vmatpush2.bf16.msra.mxu0 %v2694
    %2971 = vmatprep.subr.bf16.mxu0 %v2691
    %2972 = vmatpush2.bf16.msra.mxu0 %v2690
    %2973 = vmatprep.subr.bf16.mxu0 %v2687
    %2974 = vmatpush2.bf16.msra.mxu0 %v2686
    %2975 = vmatprep.subr.bf16.mxu0 %v2683
    %2976 = vmatpush2.bf16.msra.mxu0 %v2682
    %2977 = vmatprep.subr.bf16.mxu0 %v2679
    %2978 = vmatpush2.bf16.msra.mxu0 %v2678
    %2979 = vmatprep.subr.bf16.mxu0 %v2675
    %2980 = vmatpush2.bf16.msra.mxu0 %v2674
    %2981 = vmatprep.subr.bf16.mxu0 %v2671
    %2982 = vmatpush2.bf16.msra.mxu0 %v2670
    %2983 = vmatprep.mubr.bf16.mxu0 %v2035
    %2984 = vmatmul.mubr.bf16.gmra.mxu0 %v2034
    %v2985 = vpop.f32.mrf.mxu0
    %v2986 = vadd.f32 %v2945, %v2985
    %v2987 = vpop.f32.mrf.mxu0
    %v2988 = vadd.f32 %v2947, %v2987
    %v2989 = vpop.f32.mrf.mxu0
    %v2990 = vpop.f32.mrf.mxu0
    %2991 = vdwg.mxu0
    %vm2992 = vcmp.gt.f32.partialorder %v2904, 0.0
    %vm2993 = vcmp.gt.f32.partialorder %v2906, 0.0
    %vm2994 = vcmp.gt.f32.partialorder %v2986, 0.0
    %vm2995 = vcmp.gt.f32.partialorder %v2988, 0.0
    %v2996 = vmul.f32 %v2904, 0.2
    %v2997 = vmul.f32 %v2906, 0.2
    %v2998 = vmul.f32 %v2986, 0.2
    %v2999 = vmul.f32 %v2988, 0.2
    %v3000 = vsel %vm2992, %v2904, %v2996
    %v3001 = vsel %vm2993, %v2906, %v2997
    %v3002 = vsel %vm2994, %v2986, %v2998
    %v3003 = vsel %vm2995, %v2988, %v2999
    %v3004 = vpack.c.bf16 %v3000, %v3000
    %v3005 = vpack.c.bf16 %v3001, %v3001
    %v3006 = vpack.c.bf16 %v3002, %v3002
    %v3007 = vpack.c.bf16 %v3003, %v3003
    %s3008 = scalar_lea.vmem [#allocation5], 3072
    %v3009 = vld [vmem:[%s3008] sm:$0xff]
    %v3010 = vld [vmem:[%s3008 + $0x8] sm:$0xff]
    %v3011 = vld [vmem:[%s3008 + $0x10] sm:$0xff]
    %v3012 = vld [vmem:[%s3008 + $0x18] sm:$0xff]
    %v3013 = vld [vmem:[%s3008 + $0x20] sm:$0xff]
    %v3014 = vld [vmem:[%s3008 + $0x28] sm:$0xff]
    %v3015 = vld [vmem:[%s3008 + $0x30] sm:$0xff]
    %v3016 = vld [vmem:[%s3008 + $0x38] sm:$0xff]
    %v3017 = vld [vmem:[%s3008 + $0x40] sm:$0xff]
    %v3018 = vld [vmem:[%s3008 + $0x48] sm:$0xff]
    %v3019 = vld [vmem:[%s3008 + $0x50] sm:$0xff]
    %v3020 = vld [vmem:[%s3008 + $0x58] sm:$0xff]
    %v3021 = vld [vmem:[%s3008 + $0x60] sm:$0xff]
    %v3022 = vld [vmem:[%s3008 + $0x68] sm:$0xff]
    %v3023 = vld [vmem:[%s3008 + $0x70] sm:$0xff]
    %v3024 = vld [vmem:[%s3008 + $0x78] sm:$0xff]
    %v3025 = vld [vmem:[%s3008 + $0x80] sm:$0xff]
    %v3026 = vld [vmem:[%s3008 + $0x88] sm:$0xff]
    %v3027 = vld [vmem:[%s3008 + $0x90] sm:$0xff]
    %v3028 = vld [vmem:[%s3008 + $0x98] sm:$0xff]
    %v3029 = vld [vmem:[%s3008 + $0xa0] sm:$0xff]
    %v3030 = vld [vmem:[%s3008 + $0xa8] sm:$0xff]
    %v3031 = vld [vmem:[%s3008 + $0xb0] sm:$0xff]
    %v3032 = vld [vmem:[%s3008 + $0xb8] sm:$0xff]
    %v3033 = vld [vmem:[%s3008 + $0xc0] sm:$0xff]
    %v3034 = vld [vmem:[%s3008 + $0xc8] sm:$0xff]
    %v3035 = vld [vmem:[%s3008 + $0xd0] sm:$0xff]
    %v3036 = vld [vmem:[%s3008 + $0xd8] sm:$0xff]
    %v3037 = vld [vmem:[%s3008 + $0xe0] sm:$0xff]
    %v3038 = vld [vmem:[%s3008 + $0xe8] sm:$0xff]
    %v3039 = vld [vmem:[%s3008 + $0xf0] sm:$0xff]
    %v3040 = vld [vmem:[%s3008 + $0xf8] sm:$0xff]
    %v3041 = vld [vmem:[%s3008 + $0x100] sm:$0xff]
    %v3042 = vld [vmem:[%s3008 + $0x108] sm:$0xff]
    %v3043 = vld [vmem:[%s3008 + $0x110] sm:$0xff]
    %v3044 = vld [vmem:[%s3008 + $0x118] sm:$0xff]
    %v3045 = vld [vmem:[%s3008 + $0x120] sm:$0xff]
    %v3046 = vld [vmem:[%s3008 + $0x128] sm:$0xff]
    %v3047 = vld [vmem:[%s3008 + $0x130] sm:$0xff]
    %v3048 = vld [vmem:[%s3008 + $0x138] sm:$0xff]
    %v3049 = vld [vmem:[%s3008 + $0x140] sm:$0xff]
    %v3050 = vld [vmem:[%s3008 + $0x148] sm:$0xff]
    %v3051 = vld [vmem:[%s3008 + $0x150] sm:$0xff]
    %v3052 = vld [vmem:[%s3008 + $0x158] sm:$0xff]
    %v3053 = vld [vmem:[%s3008 + $0x160] sm:$0xff]
    %v3054 = vld [vmem:[%s3008 + $0x168] sm:$0xff]
    %v3055 = vld [vmem:[%s3008 + $0x170] sm:$0xff]
    %v3056 = vld [vmem:[%s3008 + $0x178] sm:$0xff]
    %v3057 = vld [vmem:[%s3008 + $0x180] sm:$0xff]
    %v3058 = vld [vmem:[%s3008 + $0x188] sm:$0xff]
    %v3059 = vld [vmem:[%s3008 + $0x190] sm:$0xff]
    %v3060 = vld [vmem:[%s3008 + $0x198] sm:$0xff]
    %v3061 = vld [vmem:[%s3008 + $0x1a0] sm:$0xff]
    %v3062 = vld [vmem:[%s3008 + $0x1a8] sm:$0xff]
    %v3063 = vld [vmem:[%s3008 + $0x1b0] sm:$0xff]
    %v3064 = vld [vmem:[%s3008 + $0x1b8] sm:$0xff]
    %v3065 = vld [vmem:[%s3008 + $0x1c0] sm:$0xff]
    %v3066 = vld [vmem:[%s3008 + $0x1c8] sm:$0xff]
    %v3067 = vld [vmem:[%s3008 + $0x1d0] sm:$0xff]
    %v3068 = vld [vmem:[%s3008 + $0x1d8] sm:$0xff]
    %v3069 = vld [vmem:[%s3008 + $0x1e0] sm:$0xff]
    %v3070 = vld [vmem:[%s3008 + $0x1e8] sm:$0xff]
    %v3071 = vld [vmem:[%s3008 + $0x1f0] sm:$0xff]
    %v3072 = vld [vmem:[%s3008 + $0x1f8] sm:$0xff]
    %v3073 = vld [vmem:[%s3008 + $0x200] sm:$0xff]
    %v3074 = vld [vmem:[%s3008 + $0x208] sm:$0xff]
    %v3075 = vld [vmem:[%s3008 + $0x210] sm:$0xff]
    %v3076 = vld [vmem:[%s3008 + $0x218] sm:$0xff]
    %v3077 = vld [vmem:[%s3008 + $0x220] sm:$0xff]
    %v3078 = vld [vmem:[%s3008 + $0x228] sm:$0xff]
    %v3079 = vld [vmem:[%s3008 + $0x230] sm:$0xff]
    %v3080 = vld [vmem:[%s3008 + $0x238] sm:$0xff]
    %v3081 = vld [vmem:[%s3008 + $0x240] sm:$0xff]
    %v3082 = vld [vmem:[%s3008 + $0x248] sm:$0xff]
    %v3083 = vld [vmem:[%s3008 + $0x250] sm:$0xff]
    %v3084 = vld [vmem:[%s3008 + $0x258] sm:$0xff]
    %v3085 = vld [vmem:[%s3008 + $0x260] sm:$0xff]
    %v3086 = vld [vmem:[%s3008 + $0x268] sm:$0xff]
    %v3087 = vld [vmem:[%s3008 + $0x270] sm:$0xff]
    %v3088 = vld [vmem:[%s3008 + $0x278] sm:$0xff]
    %v3089 = vld [vmem:[%s3008 + $0x280] sm:$0xff]
    %v3090 = vld [vmem:[%s3008 + $0x288] sm:$0xff]
    %v3091 = vld [vmem:[%s3008 + $0x290] sm:$0xff]
    %v3092 = vld [vmem:[%s3008 + $0x298] sm:$0xff]
    %v3093 = vld [vmem:[%s3008 + $0x2a0] sm:$0xff]
    %v3094 = vld [vmem:[%s3008 + $0x2a8] sm:$0xff]
    %v3095 = vld [vmem:[%s3008 + $0x2b0] sm:$0xff]
    %v3096 = vld [vmem:[%s3008 + $0x2b8] sm:$0xff]
    %v3097 = vld [vmem:[%s3008 + $0x2c0] sm:$0xff]
    %v3098 = vld [vmem:[%s3008 + $0x2c8] sm:$0xff]
    %v3099 = vld [vmem:[%s3008 + $0x2d0] sm:$0xff]
    %v3100 = vld [vmem:[%s3008 + $0x2d8] sm:$0xff]
    %v3101 = vld [vmem:[%s3008 + $0x2e0] sm:$0xff]
    %v3102 = vld [vmem:[%s3008 + $0x2e8] sm:$0xff]
    %v3103 = vld [vmem:[%s3008 + $0x2f0] sm:$0xff]
    %v3104 = vld [vmem:[%s3008 + $0x2f8] sm:$0xff]
    %v3105 = vld [vmem:[%s3008 + $0x300] sm:$0xff]
    %v3106 = vld [vmem:[%s3008 + $0x308] sm:$0xff]
    %v3107 = vld [vmem:[%s3008 + $0x310] sm:$0xff]
    %v3108 = vld [vmem:[%s3008 + $0x318] sm:$0xff]
    %v3109 = vld [vmem:[%s3008 + $0x320] sm:$0xff]
    %v3110 = vld [vmem:[%s3008 + $0x328] sm:$0xff]
    %v3111 = vld [vmem:[%s3008 + $0x330] sm:$0xff]
    %v3112 = vld [vmem:[%s3008 + $0x338] sm:$0xff]
    %v3113 = vld [vmem:[%s3008 + $0x340] sm:$0xff]
    %v3114 = vld [vmem:[%s3008 + $0x348] sm:$0xff]
    %v3115 = vld [vmem:[%s3008 + $0x350] sm:$0xff]
    %v3116 = vld [vmem:[%s3008 + $0x358] sm:$0xff]
    %v3117 = vld [vmem:[%s3008 + $0x360] sm:$0xff]
    %v3118 = vld [vmem:[%s3008 + $0x368] sm:$0xff]
    %v3119 = vld [vmem:[%s3008 + $0x370] sm:$0xff]
    %v3120 = vld [vmem:[%s3008 + $0x378] sm:$0xff]
    %v3121 = vld [vmem:[%s3008 + $0x380] sm:$0xff]
    %v3122 = vld [vmem:[%s3008 + $0x388] sm:$0xff]
    %v3123 = vld [vmem:[%s3008 + $0x390] sm:$0xff]
    %v3124 = vld [vmem:[%s3008 + $0x398] sm:$0xff]
    %v3125 = vld [vmem:[%s3008 + $0x3a0] sm:$0xff]
    %v3126 = vld [vmem:[%s3008 + $0x3a8] sm:$0xff]
    %v3127 = vld [vmem:[%s3008 + $0x3b0] sm:$0xff]
    %v3128 = vld [vmem:[%s3008 + $0x3b8] sm:$0xff]
    %v3129 = vld [vmem:[%s3008 + $0x3c0] sm:$0xff]
    %v3130 = vld [vmem:[%s3008 + $0x3c8] sm:$0xff]
    %v3131 = vld [vmem:[%s3008 + $0x3d0] sm:$0xff]
    %v3132 = vld [vmem:[%s3008 + $0x3d8] sm:$0xff]
    %v3133 = vld [vmem:[%s3008 + $0x3e0] sm:$0xff]
    %v3134 = vld [vmem:[%s3008 + $0x3e8] sm:$0xff]
    %v3135 = vld [vmem:[%s3008 + $0x3f0] sm:$0xff]
    %v3136 = vld [vmem:[%s3008 + $0x3f8] sm:$0xff]
    %s3137 = scalar_lea.vmem [#allocation7], 12
    %v3138 = vld [vmem:[%s3137] sm:$0xf]
    %v3140 = vlaneseq
    %v3141 = vshrl.u32 %v3140, 7
    %v3142 = vsub.s32 0, %v3141
    %v3143 = vrot.slane %v3138, %v3142
    %v3144 = vlaneseq
    %v3145 = vshrl.u32 %v3144, 7
    %v3146 = vsub.s32 1, %v3145
    %v3147 = vrot.slane %v3138, %v3146
    %v3148 = vlaneseq
    %v3149 = vshrl.u32 %v3148, 7
    %v3150 = vsub.s32 2, %v3149
    %v3151 = vrot.slane %v3138, %v3150
    %v3152 = vlaneseq
    %v3153 = vshrl.u32 %v3152, 7
    %v3154 = vsub.s32 3, %v3153
    %v3155 = vrot.slane %v3138, %v3154
    %v3288 = vunpack.c.l.b16 %v3009
    %v3289 = vunpack.c.h.b16 %v3009
    %v3290 = vunpack.c.l.b16 %v3010
    %v3291 = vunpack.c.h.b16 %v3010
    %v3292 = vunpack.c.l.b16 %v3011
    %v3293 = vunpack.c.h.b16 %v3011
    %v3294 = vunpack.c.l.b16 %v3012
    %v3295 = vunpack.c.h.b16 %v3012
    %v3296 = vunpack.c.l.b16 %v3013
    %v3297 = vunpack.c.h.b16 %v3013
    %v3298 = vunpack.c.l.b16 %v3014
    %v3299 = vunpack.c.h.b16 %v3014
    %v3300 = vunpack.c.l.b16 %v3015
    %v3301 = vunpack.c.h.b16 %v3015
    %v3302 = vunpack.c.l.b16 %v3016
    %v3303 = vunpack.c.h.b16 %v3016
    %v3304 = vunpack.c.l.b16 %v3017
    %v3305 = vunpack.c.h.b16 %v3017
    %v3306 = vunpack.c.l.b16 %v3018
    %v3307 = vunpack.c.h.b16 %v3018
    %v3308 = vunpack.c.l.b16 %v3019
    %v3309 = vunpack.c.h.b16 %v3019
    %v3310 = vunpack.c.l.b16 %v3020
    %v3311 = vunpack.c.h.b16 %v3020
    %v3312 = vunpack.c.l.b16 %v3021
    %v3313 = vunpack.c.h.b16 %v3021
    %v3314 = vunpack.c.l.b16 %v3022
    %v3315 = vunpack.c.h.b16 %v3022
    %v3316 = vunpack.c.l.b16 %v3023
    %v3317 = vunpack.c.h.b16 %v3023
    %v3318 = vunpack.c.l.b16 %v3024
    %v3319 = vunpack.c.h.b16 %v3024
    %v3320 = vunpack.c.l.b16 %v3025
    %v3321 = vunpack.c.h.b16 %v3025
    %v3322 = vunpack.c.l.b16 %v3026
    %v3323 = vunpack.c.h.b16 %v3026
    %v3324 = vunpack.c.l.b16 %v3027
    %v3325 = vunpack.c.h.b16 %v3027
    %v3326 = vunpack.c.l.b16 %v3028
    %v3327 = vunpack.c.h.b16 %v3028
    %v3328 = vunpack.c.l.b16 %v3029
    %v3329 = vunpack.c.h.b16 %v3029
    %v3330 = vunpack.c.l.b16 %v3030
    %v3331 = vunpack.c.h.b16 %v3030
    %v3332 = vunpack.c.l.b16 %v3031
    %v3333 = vunpack.c.h.b16 %v3031
    %v3334 = vunpack.c.l.b16 %v3032
    %v3335 = vunpack.c.h.b16 %v3032
    %v3336 = vunpack.c.l.b16 %v3033
    %v3337 = vunpack.c.h.b16 %v3033
    %v3338 = vunpack.c.l.b16 %v3034
    %v3339 = vunpack.c.h.b16 %v3034
    %v3340 = vunpack.c.l.b16 %v3035
    %v3341 = vunpack.c.h.b16 %v3035
    %v3342 = vunpack.c.l.b16 %v3036
    %v3343 = vunpack.c.h.b16 %v3036
    %v3344 = vunpack.c.l.b16 %v3037
    %v3345 = vunpack.c.h.b16 %v3037
    %v3346 = vunpack.c.l.b16 %v3038
    %v3347 = vunpack.c.h.b16 %v3038
    %v3348 = vunpack.c.l.b16 %v3039
    %v3349 = vunpack.c.h.b16 %v3039
    %v3350 = vunpack.c.l.b16 %v3040
    %v3351 = vunpack.c.h.b16 %v3040
    %v3352 = vunpack.c.l.b16 %v3041
    %v3353 = vunpack.c.h.b16 %v3041
    %v3354 = vunpack.c.l.b16 %v3042
    %v3355 = vunpack.c.h.b16 %v3042
    %v3356 = vunpack.c.l.b16 %v3043
    %v3357 = vunpack.c.h.b16 %v3043
    %v3358 = vunpack.c.l.b16 %v3044
    %v3359 = vunpack.c.h.b16 %v3044
    %v3360 = vunpack.c.l.b16 %v3045
    %v3361 = vunpack.c.h.b16 %v3045
    %v3362 = vunpack.c.l.b16 %v3046
    %v3363 = vunpack.c.h.b16 %v3046
    %v3364 = vunpack.c.l.b16 %v3047
    %v3365 = vunpack.c.h.b16 %v3047
    %v3366 = vunpack.c.l.b16 %v3048
    %v3367 = vunpack.c.h.b16 %v3048
    %v3368 = vunpack.c.l.b16 %v3049
    %v3369 = vunpack.c.h.b16 %v3049
    %v3370 = vunpack.c.l.b16 %v3050
    %v3371 = vunpack.c.h.b16 %v3050
    %v3372 = vunpack.c.l.b16 %v3051
    %v3373 = vunpack.c.h.b16 %v3051
    %v3374 = vunpack.c.l.b16 %v3052
    %v3375 = vunpack.c.h.b16 %v3052
    %v3376 = vunpack.c.l.b16 %v3053
    %v3377 = vunpack.c.h.b16 %v3053
    %v3378 = vunpack.c.l.b16 %v3054
    %v3379 = vunpack.c.h.b16 %v3054
    %v3380 = vunpack.c.l.b16 %v3055
    %v3381 = vunpack.c.h.b16 %v3055
    %v3382 = vunpack.c.l.b16 %v3056
    %v3383 = vunpack.c.h.b16 %v3056
    %v3384 = vunpack.c.l.b16 %v3057
    %v3385 = vunpack.c.h.b16 %v3057
    %v3386 = vunpack.c.l.b16 %v3058
    %v3387 = vunpack.c.h.b16 %v3058
    %v3388 = vunpack.c.l.b16 %v3059
    %v3389 = vunpack.c.h.b16 %v3059
    %v3390 = vunpack.c.l.b16 %v3060
    %v3391 = vunpack.c.h.b16 %v3060
    %v3392 = vunpack.c.l.b16 %v3061
    %v3393 = vunpack.c.h.b16 %v3061
    %v3394 = vunpack.c.l.b16 %v3062
    %v3395 = vunpack.c.h.b16 %v3062
    %v3396 = vunpack.c.l.b16 %v3063
    %v3397 = vunpack.c.h.b16 %v3063
    %v3398 = vunpack.c.l.b16 %v3064
    %v3399 = vunpack.c.h.b16 %v3064
    %v3400 = vunpack.c.l.b16 %v3065
    %v3401 = vunpack.c.h.b16 %v3065
    %v3402 = vunpack.c.l.b16 %v3066
    %v3403 = vunpack.c.h.b16 %v3066
    %v3404 = vunpack.c.l.b16 %v3067
    %v3405 = vunpack.c.h.b16 %v3067
    %v3406 = vunpack.c.l.b16 %v3068
    %v3407 = vunpack.c.h.b16 %v3068
    %v3408 = vunpack.c.l.b16 %v3069
    %v3409 = vunpack.c.h.b16 %v3069
    %v3410 = vunpack.c.l.b16 %v3070
    %v3411 = vunpack.c.h.b16 %v3070
    %v3412 = vunpack.c.l.b16 %v3071
    %v3413 = vunpack.c.h.b16 %v3071
    %v3414 = vunpack.c.l.b16 %v3072
    %v3415 = vunpack.c.h.b16 %v3072
    %v3416 = vunpack.c.l.b16 %v3073
    %v3417 = vunpack.c.h.b16 %v3073
    %v3418 = vunpack.c.l.b16 %v3074
    %v3419 = vunpack.c.h.b16 %v3074
    %v3420 = vunpack.c.l.b16 %v3075
    %v3421 = vunpack.c.h.b16 %v3075
    %v3422 = vunpack.c.l.b16 %v3076
    %v3423 = vunpack.c.h.b16 %v3076
    %v3424 = vunpack.c.l.b16 %v3077
    %v3425 = vunpack.c.h.b16 %v3077
    %v3426 = vunpack.c.l.b16 %v3078
    %v3427 = vunpack.c.h.b16 %v3078
    %v3428 = vunpack.c.l.b16 %v3079
    %v3429 = vunpack.c.h.b16 %v3079
    %v3430 = vunpack.c.l.b16 %v3080
    %v3431 = vunpack.c.h.b16 %v3080
    %v3432 = vunpack.c.l.b16 %v3081
    %v3433 = vunpack.c.h.b16 %v3081
    %v3434 = vunpack.c.l.b16 %v3082
    %v3435 = vunpack.c.h.b16 %v3082
    %v3436 = vunpack.c.l.b16 %v3083
    %v3437 = vunpack.c.h.b16 %v3083
    %v3438 = vunpack.c.l.b16 %v3084
    %v3439 = vunpack.c.h.b16 %v3084
    %v3440 = vunpack.c.l.b16 %v3085
    %v3441 = vunpack.c.h.b16 %v3085
    %v3442 = vunpack.c.l.b16 %v3086
    %v3443 = vunpack.c.h.b16 %v3086
    %v3444 = vunpack.c.l.b16 %v3087
    %v3445 = vunpack.c.h.b16 %v3087
    %v3446 = vunpack.c.l.b16 %v3088
    %v3447 = vunpack.c.h.b16 %v3088
    %v3448 = vunpack.c.l.b16 %v3089
    %v3449 = vunpack.c.h.b16 %v3089
    %v3450 = vunpack.c.l.b16 %v3090
    %v3451 = vunpack.c.h.b16 %v3090
    %v3452 = vunpack.c.l.b16 %v3091
    %v3453 = vunpack.c.h.b16 %v3091
    %v3454 = vunpack.c.l.b16 %v3092
    %v3455 = vunpack.c.h.b16 %v3092
    %v3456 = vunpack.c.l.b16 %v3093
    %v3457 = vunpack.c.h.b16 %v3093
    %v3458 = vunpack.c.l.b16 %v3094
    %v3459 = vunpack.c.h.b16 %v3094
    %v3460 = vunpack.c.l.b16 %v3095
    %v3461 = vunpack.c.h.b16 %v3095
    %v3462 = vunpack.c.l.b16 %v3096
    %v3463 = vunpack.c.h.b16 %v3096
    %v3464 = vunpack.c.l.b16 %v3097
    %v3465 = vunpack.c.h.b16 %v3097
    %v3466 = vunpack.c.l.b16 %v3098
    %v3467 = vunpack.c.h.b16 %v3098
    %v3468 = vunpack.c.l.b16 %v3099
    %v3469 = vunpack.c.h.b16 %v3099
    %v3470 = vunpack.c.l.b16 %v3100
    %v3471 = vunpack.c.h.b16 %v3100
    %v3472 = vunpack.c.l.b16 %v3101
    %v3473 = vunpack.c.h.b16 %v3101
    %v3474 = vunpack.c.l.b16 %v3102
    %v3475 = vunpack.c.h.b16 %v3102
    %v3476 = vunpack.c.l.b16 %v3103
    %v3477 = vunpack.c.h.b16 %v3103
    %v3478 = vunpack.c.l.b16 %v3104
    %v3479 = vunpack.c.h.b16 %v3104
    %v3480 = vunpack.c.l.b16 %v3105
    %v3481 = vunpack.c.h.b16 %v3105
    %v3482 = vunpack.c.l.b16 %v3106
    %v3483 = vunpack.c.h.b16 %v3106
    %v3484 = vunpack.c.l.b16 %v3107
    %v3485 = vunpack.c.h.b16 %v3107
    %v3486 = vunpack.c.l.b16 %v3108
    %v3487 = vunpack.c.h.b16 %v3108
    %v3488 = vunpack.c.l.b16 %v3109
    %v3489 = vunpack.c.h.b16 %v3109
    %v3490 = vunpack.c.l.b16 %v3110
    %v3491 = vunpack.c.h.b16 %v3110
    %v3492 = vunpack.c.l.b16 %v3111
    %v3493 = vunpack.c.h.b16 %v3111
    %v3494 = vunpack.c.l.b16 %v3112
    %v3495 = vunpack.c.h.b16 %v3112
    %v3496 = vunpack.c.l.b16 %v3113
    %v3497 = vunpack.c.h.b16 %v3113
    %v3498 = vunpack.c.l.b16 %v3114
    %v3499 = vunpack.c.h.b16 %v3114
    %v3500 = vunpack.c.l.b16 %v3115
    %v3501 = vunpack.c.h.b16 %v3115
    %v3502 = vunpack.c.l.b16 %v3116
    %v3503 = vunpack.c.h.b16 %v3116
    %v3504 = vunpack.c.l.b16 %v3117
    %v3505 = vunpack.c.h.b16 %v3117
    %v3506 = vunpack.c.l.b16 %v3118
    %v3507 = vunpack.c.h.b16 %v3118
    %v3508 = vunpack.c.l.b16 %v3119
    %v3509 = vunpack.c.h.b16 %v3119
    %v3510 = vunpack.c.l.b16 %v3120
    %v3511 = vunpack.c.h.b16 %v3120
    %v3512 = vunpack.c.l.b16 %v3121
    %v3513 = vunpack.c.h.b16 %v3121
    %v3514 = vunpack.c.l.b16 %v3122
    %v3515 = vunpack.c.h.b16 %v3122
    %v3516 = vunpack.c.l.b16 %v3123
    %v3517 = vunpack.c.h.b16 %v3123
    %v3518 = vunpack.c.l.b16 %v3124
    %v3519 = vunpack.c.h.b16 %v3124
    %v3520 = vunpack.c.l.b16 %v3125
    %v3521 = vunpack.c.h.b16 %v3125
    %v3522 = vunpack.c.l.b16 %v3126
    %v3523 = vunpack.c.h.b16 %v3126
    %v3524 = vunpack.c.l.b16 %v3127
    %v3525 = vunpack.c.h.b16 %v3127
    %v3526 = vunpack.c.l.b16 %v3128
    %v3527 = vunpack.c.h.b16 %v3128
    %v3528 = vunpack.c.l.b16 %v3129
    %v3529 = vunpack.c.h.b16 %v3129
    %v3530 = vunpack.c.l.b16 %v3130
    %v3531 = vunpack.c.h.b16 %v3130
    %v3532 = vunpack.c.l.b16 %v3131
    %v3533 = vunpack.c.h.b16 %v3131
    %v3534 = vunpack.c.l.b16 %v3132
    %v3535 = vunpack.c.h.b16 %v3132
    %v3536 = vunpack.c.l.b16 %v3133
    %v3537 = vunpack.c.h.b16 %v3133
    %v3538 = vunpack.c.l.b16 %v3134
    %v3539 = vunpack.c.h.b16 %v3134
    %v3540 = vunpack.c.l.b16 %v3135
    %v3541 = vunpack.c.h.b16 %v3135
    %v3542 = vunpack.c.l.b16 %v3136
    %v3543 = vunpack.c.h.b16 %v3136
    %v3544 = vpack.c.b16 %v3292, %v3288
    %v3545 = vpack.c.b16 %v3293, %v3289
    %v3546 = vpack.c.b16 %v3294, %v3290
    %v3547 = vpack.c.b16 %v3295, %v3291
    %v3548 = vpack.c.b16 %v3300, %v3296
    %v3549 = vpack.c.b16 %v3301, %v3297
    %v3550 = vpack.c.b16 %v3302, %v3298
    %v3551 = vpack.c.b16 %v3303, %v3299
    %v3552 = vpack.c.b16 %v3308, %v3304
    %v3553 = vpack.c.b16 %v3309, %v3305
    %v3554 = vpack.c.b16 %v3310, %v3306
    %v3555 = vpack.c.b16 %v3311, %v3307
    %v3556 = vpack.c.b16 %v3316, %v3312
    %v3557 = vpack.c.b16 %v3317, %v3313
    %v3558 = vpack.c.b16 %v3318, %v3314
    %v3559 = vpack.c.b16 %v3319, %v3315
    %v3560 = vpack.c.b16 %v3324, %v3320
    %v3561 = vpack.c.b16 %v3325, %v3321
    %v3562 = vpack.c.b16 %v3326, %v3322
    %v3563 = vpack.c.b16 %v3327, %v3323
    %v3564 = vpack.c.b16 %v3332, %v3328
    %v3565 = vpack.c.b16 %v3333, %v3329
    %v3566 = vpack.c.b16 %v3334, %v3330
    %v3567 = vpack.c.b16 %v3335, %v3331
    %v3568 = vpack.c.b16 %v3340, %v3336
    %v3569 = vpack.c.b16 %v3341, %v3337
    %v3570 = vpack.c.b16 %v3342, %v3338
    %v3571 = vpack.c.b16 %v3343, %v3339
    %v3572 = vpack.c.b16 %v3348, %v3344
    %v3573 = vpack.c.b16 %v3349, %v3345
    %v3574 = vpack.c.b16 %v3350, %v3346
    %v3575 = vpack.c.b16 %v3351, %v3347
    %v3576 = vpack.c.b16 %v3356, %v3352
    %v3577 = vpack.c.b16 %v3357, %v3353
    %v3578 = vpack.c.b16 %v3358, %v3354
    %v3579 = vpack.c.b16 %v3359, %v3355
    %v3580 = vpack.c.b16 %v3364, %v3360
    %v3581 = vpack.c.b16 %v3365, %v3361
    %v3582 = vpack.c.b16 %v3366, %v3362
    %v3583 = vpack.c.b16 %v3367, %v3363
    %v3584 = vpack.c.b16 %v3372, %v3368
    %v3585 = vpack.c.b16 %v3373, %v3369
    %v3586 = vpack.c.b16 %v3374, %v3370
    %v3587 = vpack.c.b16 %v3375, %v3371
    %v3588 = vpack.c.b16 %v3380, %v3376
    %v3589 = vpack.c.b16 %v3381, %v3377
    %v3590 = vpack.c.b16 %v3382, %v3378
    %v3591 = vpack.c.b16 %v3383, %v3379
    %v3592 = vpack.c.b16 %v3388, %v3384
    %v3593 = vpack.c.b16 %v3389, %v3385
    %v3594 = vpack.c.b16 %v3390, %v3386
    %v3595 = vpack.c.b16 %v3391, %v3387
    %v3596 = vpack.c.b16 %v3396, %v3392
    %v3597 = vpack.c.b16 %v3397, %v3393
    %v3598 = vpack.c.b16 %v3398, %v3394
    %v3599 = vpack.c.b16 %v3399, %v3395
    %v3600 = vpack.c.b16 %v3404, %v3400
    %v3601 = vpack.c.b16 %v3405, %v3401
    %v3602 = vpack.c.b16 %v3406, %v3402
    %v3603 = vpack.c.b16 %v3407, %v3403
    %v3604 = vpack.c.b16 %v3412, %v3408
    %v3605 = vpack.c.b16 %v3413, %v3409
    %v3606 = vpack.c.b16 %v3414, %v3410
    %v3607 = vpack.c.b16 %v3415, %v3411
    %v3608 = vpack.c.b16 %v3420, %v3416
    %v3609 = vpack.c.b16 %v3421, %v3417
    %v3610 = vpack.c.b16 %v3422, %v3418
    %v3611 = vpack.c.b16 %v3423, %v3419
    %v3612 = vpack.c.b16 %v3428, %v3424
    %v3613 = vpack.c.b16 %v3429, %v3425
    %v3614 = vpack.c.b16 %v3430, %v3426
    %v3615 = vpack.c.b16 %v3431, %v3427
    %v3616 = vpack.c.b16 %v3436, %v3432
    %v3617 = vpack.c.b16 %v3437, %v3433
    %v3618 = vpack.c.b16 %v3438, %v3434
    %v3619 = vpack.c.b16 %v3439, %v3435
    %v3620 = vpack.c.b16 %v3444, %v3440
    %v3621 = vpack.c.b16 %v3445, %v3441
    %v3622 = vpack.c.b16 %v3446, %v3442
    %v3623 = vpack.c.b16 %v3447, %v3443
    %v3624 = vpack.c.b16 %v3452, %v3448
    %v3625 = vpack.c.b16 %v3453, %v3449
    %v3626 = vpack.c.b16 %v3454, %v3450
    %v3627 = vpack.c.b16 %v3455, %v3451
    %v3628 = vpack.c.b16 %v3460, %v3456
    %v3629 = vpack.c.b16 %v3461, %v3457
    %v3630 = vpack.c.b16 %v3462, %v3458
    %v3631 = vpack.c.b16 %v3463, %v3459
    %v3632 = vpack.c.b16 %v3468, %v3464
    %v3633 = vpack.c.b16 %v3469, %v3465
    %v3634 = vpack.c.b16 %v3470, %v3466
    %v3635 = vpack.c.b16 %v3471, %v3467
    %v3636 = vpack.c.b16 %v3476, %v3472
    %v3637 = vpack.c.b16 %v3477, %v3473
    %v3638 = vpack.c.b16 %v3478, %v3474
    %v3639 = vpack.c.b16 %v3479, %v3475
    %v3640 = vpack.c.b16 %v3484, %v3480
    %v3641 = vpack.c.b16 %v3485, %v3481
    %v3642 = vpack.c.b16 %v3486, %v3482
    %v3643 = vpack.c.b16 %v3487, %v3483
    %v3644 = vpack.c.b16 %v3492, %v3488
    %v3645 = vpack.c.b16 %v3493, %v3489
    %v3646 = vpack.c.b16 %v3494, %v3490
    %v3647 = vpack.c.b16 %v3495, %v3491
    %v3648 = vpack.c.b16 %v3500, %v3496
    %v3649 = vpack.c.b16 %v3501, %v3497
    %v3650 = vpack.c.b16 %v3502, %v3498
    %v3651 = vpack.c.b16 %v3503, %v3499
    %v3652 = vpack.c.b16 %v3508, %v3504
    %v3653 = vpack.c.b16 %v3509, %v3505
    %v3654 = vpack.c.b16 %v3510, %v3506
    %v3655 = vpack.c.b16 %v3511, %v3507
    %v3656 = vpack.c.b16 %v3516, %v3512
    %v3657 = vpack.c.b16 %v3517, %v3513
    %v3658 = vpack.c.b16 %v3518, %v3514
    %v3659 = vpack.c.b16 %v3519, %v3515
    %v3660 = vpack.c.b16 %v3524, %v3520
    %v3661 = vpack.c.b16 %v3525, %v3521
    %v3662 = vpack.c.b16 %v3526, %v3522
    %v3663 = vpack.c.b16 %v3527, %v3523
    %v3664 = vpack.c.b16 %v3532, %v3528
    %v3665 = vpack.c.b16 %v3533, %v3529
    %v3666 = vpack.c.b16 %v3534, %v3530
    %v3667 = vpack.c.b16 %v3535, %v3531
    %v3668 = vpack.c.b16 %v3540, %v3536
    %v3669 = vpack.c.b16 %v3541, %v3537
    %v3670 = vpack.c.b16 %v3542, %v3538
    %v3671 = vpack.c.b16 %v3543, %v3539
    %3800 = vmatprep.subr.bf16.mxu0 %v3573
    %3801 = vmatpush1.bf16.msra.mxu0 %v3572
    %3802 = vmatprep.subr.bf16.mxu0 %v3569
    %3803 = vmatpush1.bf16.msra.mxu0 %v3568
    %3804 = vmatprep.subr.bf16.mxu0 %v3565
    %3805 = vmatpush1.bf16.msra.mxu0 %v3564
    %3806 = vmatprep.subr.bf16.mxu0 %v3561
    %3807 = vmatpush1.bf16.msra.mxu0 %v3560
    %3808 = vmatprep.subr.bf16.mxu0 %v3557
    %3809 = vmatpush1.bf16.msra.mxu0 %v3556
    %3810 = vmatprep.subr.bf16.mxu0 %v3553
    %3811 = vmatpush1.bf16.msra.mxu0 %v3552
    %3812 = vmatprep.subr.bf16.mxu0 %v3549
    %3813 = vmatpush1.bf16.msra.mxu0 %v3548
    %3814 = vmatprep.subr.bf16.mxu0 %v3545
    %3815 = vmatpush1.bf16.msra.mxu0 %v3544
    %3816 = vmatprep.subr.bf16.mxu0 %v3605
    %3817 = vmatpush2.bf16.msra.mxu0 %v3604
    %3818 = vmatprep.subr.bf16.mxu0 %v3601
    %3819 = vmatpush2.bf16.msra.mxu0 %v3600
    %3820 = vmatprep.subr.bf16.mxu0 %v3597
    %3821 = vmatpush2.bf16.msra.mxu0 %v3596
    %3822 = vmatprep.subr.bf16.mxu0 %v3593
    %3823 = vmatpush2.bf16.msra.mxu0 %v3592
    %3824 = vmatprep.subr.bf16.mxu0 %v3589
    %3825 = vmatpush2.bf16.msra.mxu0 %v3588
    %3826 = vmatprep.subr.bf16.mxu0 %v3585
    %3827 = vmatpush2.bf16.msra.mxu0 %v3584
    %3828 = vmatprep.subr.bf16.mxu0 %v3581
    %3829 = vmatpush2.bf16.msra.mxu0 %v3580
    %3830 = vmatprep.subr.bf16.mxu0 %v3577
    %3831 = vmatpush2.bf16.msra.mxu0 %v3576
    %3832 = vmatprep.mubr.bf16.mxu0 %v3005
    %3833 = vmatmul.mubr.bf16.gmra.mxu0 %v3004
    %v3834 = vpop.f32.mrf.mxu0
    %v3835 = vadd.f32 %v3143, %v3834
    %v3836 = vpop.f32.mrf.mxu0
    %v3837 = vadd.f32 %v3147, %v3836
    %v3838 = vpop.f32.mrf.mxu0
    %v3839 = vpop.f32.mrf.mxu0
    %3840 = vdwg.mxu0
    %3841 = vmatprep.subr.bf16.mxu0 %v3637
    %3842 = vmatpush1.bf16.msra.mxu0 %v3636
    %3843 = vmatprep.subr.bf16.mxu0 %v3633
    %3844 = vmatpush1.bf16.msra.mxu0 %v3632
    %3845 = vmatprep.subr.bf16.mxu0 %v3629
    %3846 = vmatpush1.bf16.msra.mxu0 %v3628
    %3847 = vmatprep.subr.bf16.mxu0 %v3625
    %3848 = vmatpush1.bf16.msra.mxu0 %v3624
    %3849 = vmatprep.subr.bf16.mxu0 %v3621
    %3850 = vmatpush1.bf16.msra.mxu0 %v3620
    %3851 = vmatprep.subr.bf16.mxu0 %v3617
    %3852 = vmatpush1.bf16.msra.mxu0 %v3616
    %3853 = vmatprep.subr.bf16.mxu0 %v3613
    %3854 = vmatpush1.bf16.msra.mxu0 %v3612
    %3855 = vmatprep.subr.bf16.mxu0 %v3609
    %3856 = vmatpush1.bf16.msra.mxu0 %v3608
    %3857 = vmatprep.subr.bf16.mxu0 %v3669
    %3858 = vmatpush2.bf16.msra.mxu0 %v3668
    %3859 = vmatprep.subr.bf16.mxu0 %v3665
    %3860 = vmatpush2.bf16.msra.mxu0 %v3664
    %3861 = vmatprep.subr.bf16.mxu0 %v3661
    %3862 = vmatpush2.bf16.msra.mxu0 %v3660
    %3863 = vmatprep.subr.bf16.mxu0 %v3657
    %3864 = vmatpush2.bf16.msra.mxu0 %v3656
    %3865 = vmatprep.subr.bf16.mxu0 %v3653
    %3866 = vmatpush2.bf16.msra.mxu0 %v3652
    %3867 = vmatprep.subr.bf16.mxu0 %v3649
    %3868 = vmatpush2.bf16.msra.mxu0 %v3648
    %3869 = vmatprep.subr.bf16.mxu0 %v3645
    %3870 = vmatpush2.bf16.msra.mxu0 %v3644
    %3871 = vmatprep.subr.bf16.mxu0 %v3641
    %3872 = vmatpush2.bf16.msra.mxu0 %v3640
    %3873 = vmatprep.mubr.bf16.mxu0 %v3007
    %3874 = vmatmul.mubr.bf16.gmra.mxu0 %v3006
    %v3875 = vpop.f32.mrf.mxu0
    %v3876 = vadd.f32 %v3835, %v3875
    %v3877 = vpop.f32.mrf.mxu0
    %v3878 = vadd.f32 %v3837, %v3877
    %v3879 = vpop.f32.mrf.mxu0
    %v3880 = vpop.f32.mrf.mxu0
    %3881 = vdwg.mxu0
    %3882 = vmatprep.subr.bf16.mxu0 %v3575
    %3883 = vmatpush1.bf16.msra.mxu0 %v3574
    %3884 = vmatprep.subr.bf16.mxu0 %v3571
    %3885 = vmatpush1.bf16.msra.mxu0 %v3570
    %3886 = vmatprep.subr.bf16.mxu0 %v3567
    %3887 = vmatpush1.bf16.msra.mxu0 %v3566
    %3888 = vmatprep.subr.bf16.mxu0 %v3563
    %3889 = vmatpush1.bf16.msra.mxu0 %v3562
    %3890 = vmatprep.subr.bf16.mxu0 %v3559
    %3891 = vmatpush1.bf16.msra.mxu0 %v3558
    %3892 = vmatprep.subr.bf16.mxu0 %v3555
    %3893 = vmatpush1.bf16.msra.mxu0 %v3554
    %3894 = vmatprep.subr.bf16.mxu0 %v3551
    %3895 = vmatpush1.bf16.msra.mxu0 %v3550
    %3896 = vmatprep.subr.bf16.mxu0 %v3547
    %3897 = vmatpush1.bf16.msra.mxu0 %v3546
    %3898 = vmatprep.subr.bf16.mxu0 %v3607
    %3899 = vmatpush2.bf16.msra.mxu0 %v3606
    %3900 = vmatprep.subr.bf16.mxu0 %v3603
    %3901 = vmatpush2.bf16.msra.mxu0 %v3602
    %3902 = vmatprep.subr.bf16.mxu0 %v3599
    %3903 = vmatpush2.bf16.msra.mxu0 %v3598
    %3904 = vmatprep.subr.bf16.mxu0 %v3595
    %3905 = vmatpush2.bf16.msra.mxu0 %v3594
    %3906 = vmatprep.subr.bf16.mxu0 %v3591
    %3907 = vmatpush2.bf16.msra.mxu0 %v3590
    %3908 = vmatprep.subr.bf16.mxu0 %v3587
    %3909 = vmatpush2.bf16.msra.mxu0 %v3586
    %3910 = vmatprep.subr.bf16.mxu0 %v3583
    %3911 = vmatpush2.bf16.msra.mxu0 %v3582
    %3912 = vmatprep.subr.bf16.mxu0 %v3579
    %3913 = vmatpush2.bf16.msra.mxu0 %v3578
    %3914 = vmatprep.mubr.bf16.mxu0 %v3005
    %3915 = vmatmul.mubr.bf16.gmra.mxu0 %v3004
    %v3916 = vpop.f32.mrf.mxu0
    %v3917 = vadd.f32 %v3151, %v3916
    %v3918 = vpop.f32.mrf.mxu0
    %v3919 = vadd.f32 %v3155, %v3918
    %v3920 = vpop.f32.mrf.mxu0
    %v3921 = vpop.f32.mrf.mxu0
    %3922 = vdwg.mxu0
    %3923 = vmatprep.subr.bf16.mxu0 %v3639
    %3924 = vmatpush1.bf16.msra.mxu0 %v3638
    %3925 = vmatprep.subr.bf16.mxu0 %v3635
    %3926 = vmatpush1.bf16.msra.mxu0 %v3634
    %3927 = vmatprep.subr.bf16.mxu0 %v3631
    %3928 = vmatpush1.bf16.msra.mxu0 %v3630
    %3929 = vmatprep.subr.bf16.mxu0 %v3627
    %3930 = vmatpush1.bf16.msra.mxu0 %v3626
    %3931 = vmatprep.subr.bf16.mxu0 %v3623
    %3932 = vmatpush1.bf16.msra.mxu0 %v3622
    %3933 = vmatprep.subr.bf16.mxu0 %v3619
    %3934 = vmatpush1.bf16.msra.mxu0 %v3618
    %3935 = vmatprep.subr.bf16.mxu0 %v3615
    %3936 = vmatpush1.bf16.msra.mxu0 %v3614
    %3937 = vmatprep.subr.bf16.mxu0 %v3611
    %3938 = vmatpush1.bf16.msra.mxu0 %v3610
    %3939 = vmatprep.subr.bf16.mxu0 %v3671
    %3940 = vmatpush2.bf16.msra.mxu0 %v3670
    %3941 = vmatprep.subr.bf16.mxu0 %v3667
    %3942 = vmatpush2.bf16.msra.mxu0 %v3666
    %3943 = vmatprep.subr.bf16.mxu0 %v3663
    %3944 = vmatpush2.bf16.msra.mxu0 %v3662
    %3945 = vmatprep.subr.bf16.mxu0 %v3659
    %3946 = vmatpush2.bf16.msra.mxu0 %v3658
    %3947 = vmatprep.subr.bf16.mxu0 %v3655
    %3948 = vmatpush2.bf16.msra.mxu0 %v3654
    %3949 = vmatprep.subr.bf16.mxu0 %v3651
    %3950 = vmatpush2.bf16.msra.mxu0 %v3650
    %3951 = vmatprep.subr.bf16.mxu0 %v3647
    %3952 = vmatpush2.bf16.msra.mxu0 %v3646
    %3953 = vmatprep.subr.bf16.mxu0 %v3643
    %3954 = vmatpush2.bf16.msra.mxu0 %v3642
    %3955 = vmatprep.mubr.bf16.mxu0 %v3007
    %3956 = vmatmul.mubr.bf16.gmra.mxu0 %v3006
    %v3957 = vpop.f32.mrf.mxu0
    %v3958 = vadd.f32 %v3917, %v3957
    %v3959 = vpop.f32.mrf.mxu0
    %v3960 = vadd.f32 %v3919, %v3959
    %v3961 = vpop.f32.mrf.mxu0
    %v3962 = vpop.f32.mrf.mxu0
    %3963 = vdwg.mxu0
    %vm3964 = vcmp.gt.f32.partialorder %v3876, 0.0
    %vm3965 = vcmp.gt.f32.partialorder %v3878, 0.0
    %vm3966 = vcmp.gt.f32.partialorder %v3958, 0.0
    %vm3967 = vcmp.gt.f32.partialorder %v3960, 0.0
    %v3968 = vmul.f32 %v3876, 0.2
    %v3969 = vmul.f32 %v3878, 0.2
    %v3970 = vmul.f32 %v3958, 0.2
    %v3971 = vmul.f32 %v3960, 0.2
    %v3972 = vsel %vm3964, %v3876, %v3968
    %v3973 = vsel %vm3965, %v3878, %v3969
    %v3974 = vsel %vm3966, %v3958, %v3970
    %v3975 = vsel %vm3967, %v3960, %v3971
    %v3976 = vpack.c.bf16 %v3972, %v3972
    %v3977 = vpack.c.bf16 %v3973, %v3973
    %v3978 = vpack.c.bf16 %v3974, %v3974
    %v3979 = vpack.c.bf16 %v3975, %v3975
    %s3980 = scalar_lea.vmem [#allocation5], 4096
    %v3981 = vld [vmem:[%s3980] sm:$0xff]
    %v3982 = vld [vmem:[%s3980 + $0x8] sm:$0xff]
    %v3983 = vld [vmem:[%s3980 + $0x10] sm:$0xff]
    %v3984 = vld [vmem:[%s3980 + $0x18] sm:$0xff]
    %v3985 = vld [vmem:[%s3980 + $0x20] sm:$0xff]
    %v3986 = vld [vmem:[%s3980 + $0x28] sm:$0xff]
    %v3987 = vld [vmem:[%s3980 + $0x30] sm:$0xff]
    %v3988 = vld [vmem:[%s3980 + $0x38] sm:$0xff]
    %v3989 = vld [vmem:[%s3980 + $0x40] sm:$0xff]
    %v3990 = vld [vmem:[%s3980 + $0x48] sm:$0xff]
    %v3991 = vld [vmem:[%s3980 + $0x50] sm:$0xff]
    %v3992 = vld [vmem:[%s3980 + $0x58] sm:$0xff]
    %v3993 = vld [vmem:[%s3980 + $0x60] sm:$0xff]
    %v3994 = vld [vmem:[%s3980 + $0x68] sm:$0xff]
    %v3995 = vld [vmem:[%s3980 + $0x70] sm:$0xff]
    %v3996 = vld [vmem:[%s3980 + $0x78] sm:$0xff]
    %v3997 = vld [vmem:[%s3980 + $0x80] sm:$0xff]
    %v3998 = vld [vmem:[%s3980 + $0x88] sm:$0xff]
    %v3999 = vld [vmem:[%s3980 + $0x90] sm:$0xff]
    %v4000 = vld [vmem:[%s3980 + $0x98] sm:$0xff]
    %v4001 = vld [vmem:[%s3980 + $0xa0] sm:$0xff]
    %v4002 = vld [vmem:[%s3980 + $0xa8] sm:$0xff]
    %v4003 = vld [vmem:[%s3980 + $0xb0] sm:$0xff]
    %v4004 = vld [vmem:[%s3980 + $0xb8] sm:$0xff]
    %v4005 = vld [vmem:[%s3980 + $0xc0] sm:$0xff]
    %v4006 = vld [vmem:[%s3980 + $0xc8] sm:$0xff]
    %v4007 = vld [vmem:[%s3980 + $0xd0] sm:$0xff]
    %v4008 = vld [vmem:[%s3980 + $0xd8] sm:$0xff]
    %v4009 = vld [vmem:[%s3980 + $0xe0] sm:$0xff]
    %v4010 = vld [vmem:[%s3980 + $0xe8] sm:$0xff]
    %v4011 = vld [vmem:[%s3980 + $0xf0] sm:$0xff]
    %v4012 = vld [vmem:[%s3980 + $0xf8] sm:$0xff]
    %v4013 = vld [vmem:[%s3980 + $0x100] sm:$0xff]
    %v4014 = vld [vmem:[%s3980 + $0x108] sm:$0xff]
    %v4015 = vld [vmem:[%s3980 + $0x110] sm:$0xff]
    %v4016 = vld [vmem:[%s3980 + $0x118] sm:$0xff]
    %v4017 = vld [vmem:[%s3980 + $0x120] sm:$0xff]
    %v4018 = vld [vmem:[%s3980 + $0x128] sm:$0xff]
    %v4019 = vld [vmem:[%s3980 + $0x130] sm:$0xff]
    %v4020 = vld [vmem:[%s3980 + $0x138] sm:$0xff]
    %v4021 = vld [vmem:[%s3980 + $0x140] sm:$0xff]
    %v4022 = vld [vmem:[%s3980 + $0x148] sm:$0xff]
    %v4023 = vld [vmem:[%s3980 + $0x150] sm:$0xff]
    %v4024 = vld [vmem:[%s3980 + $0x158] sm:$0xff]
    %v4025 = vld [vmem:[%s3980 + $0x160] sm:$0xff]
    %v4026 = vld [vmem:[%s3980 + $0x168] sm:$0xff]
    %v4027 = vld [vmem:[%s3980 + $0x170] sm:$0xff]
    %v4028 = vld [vmem:[%s3980 + $0x178] sm:$0xff]
    %v4029 = vld [vmem:[%s3980 + $0x180] sm:$0xff]
    %v4030 = vld [vmem:[%s3980 + $0x188] sm:$0xff]
    %v4031 = vld [vmem:[%s3980 + $0x190] sm:$0xff]
    %v4032 = vld [vmem:[%s3980 + $0x198] sm:$0xff]
    %v4033 = vld [vmem:[%s3980 + $0x1a0] sm:$0xff]
    %v4034 = vld [vmem:[%s3980 + $0x1a8] sm:$0xff]
    %v4035 = vld [vmem:[%s3980 + $0x1b0] sm:$0xff]
    %v4036 = vld [vmem:[%s3980 + $0x1b8] sm:$0xff]
    %v4037 = vld [vmem:[%s3980 + $0x1c0] sm:$0xff]
    %v4038 = vld [vmem:[%s3980 + $0x1c8] sm:$0xff]
    %v4039 = vld [vmem:[%s3980 + $0x1d0] sm:$0xff]
    %v4040 = vld [vmem:[%s3980 + $0x1d8] sm:$0xff]
    %v4041 = vld [vmem:[%s3980 + $0x1e0] sm:$0xff]
    %v4042 = vld [vmem:[%s3980 + $0x1e8] sm:$0xff]
    %v4043 = vld [vmem:[%s3980 + $0x1f0] sm:$0xff]
    %v4044 = vld [vmem:[%s3980 + $0x1f8] sm:$0xff]
    %v4045 = vld [vmem:[%s3980 + $0x200] sm:$0xff]
    %v4046 = vld [vmem:[%s3980 + $0x208] sm:$0xff]
    %v4047 = vld [vmem:[%s3980 + $0x210] sm:$0xff]
    %v4048 = vld [vmem:[%s3980 + $0x218] sm:$0xff]
    %v4049 = vld [vmem:[%s3980 + $0x220] sm:$0xff]
    %v4050 = vld [vmem:[%s3980 + $0x228] sm:$0xff]
    %v4051 = vld [vmem:[%s3980 + $0x230] sm:$0xff]
    %v4052 = vld [vmem:[%s3980 + $0x238] sm:$0xff]
    %v4053 = vld [vmem:[%s3980 + $0x240] sm:$0xff]
    %v4054 = vld [vmem:[%s3980 + $0x248] sm:$0xff]
    %v4055 = vld [vmem:[%s3980 + $0x250] sm:$0xff]
    %v4056 = vld [vmem:[%s3980 + $0x258] sm:$0xff]
    %v4057 = vld [vmem:[%s3980 + $0x260] sm:$0xff]
    %v4058 = vld [vmem:[%s3980 + $0x268] sm:$0xff]
    %v4059 = vld [vmem:[%s3980 + $0x270] sm:$0xff]
    %v4060 = vld [vmem:[%s3980 + $0x278] sm:$0xff]
    %v4061 = vld [vmem:[%s3980 + $0x280] sm:$0xff]
    %v4062 = vld [vmem:[%s3980 + $0x288] sm:$0xff]
    %v4063 = vld [vmem:[%s3980 + $0x290] sm:$0xff]
    %v4064 = vld [vmem:[%s3980 + $0x298] sm:$0xff]
    %v4065 = vld [vmem:[%s3980 + $0x2a0] sm:$0xff]
    %v4066 = vld [vmem:[%s3980 + $0x2a8] sm:$0xff]
    %v4067 = vld [vmem:[%s3980 + $0x2b0] sm:$0xff]
    %v4068 = vld [vmem:[%s3980 + $0x2b8] sm:$0xff]
    %v4069 = vld [vmem:[%s3980 + $0x2c0] sm:$0xff]
    %v4070 = vld [vmem:[%s3980 + $0x2c8] sm:$0xff]
    %v4071 = vld [vmem:[%s3980 + $0x2d0] sm:$0xff]
    %v4072 = vld [vmem:[%s3980 + $0x2d8] sm:$0xff]
    %v4073 = vld [vmem:[%s3980 + $0x2e0] sm:$0xff]
    %v4074 = vld [vmem:[%s3980 + $0x2e8] sm:$0xff]
    %v4075 = vld [vmem:[%s3980 + $0x2f0] sm:$0xff]
    %v4076 = vld [vmem:[%s3980 + $0x2f8] sm:$0xff]
    %v4077 = vld [vmem:[%s3980 + $0x300] sm:$0xff]
    %v4078 = vld [vmem:[%s3980 + $0x308] sm:$0xff]
    %v4079 = vld [vmem:[%s3980 + $0x310] sm:$0xff]
    %v4080 = vld [vmem:[%s3980 + $0x318] sm:$0xff]
    %v4081 = vld [vmem:[%s3980 + $0x320] sm:$0xff]
    %v4082 = vld [vmem:[%s3980 + $0x328] sm:$0xff]
    %v4083 = vld [vmem:[%s3980 + $0x330] sm:$0xff]
    %v4084 = vld [vmem:[%s3980 + $0x338] sm:$0xff]
    %v4085 = vld [vmem:[%s3980 + $0x340] sm:$0xff]
    %v4086 = vld [vmem:[%s3980 + $0x348] sm:$0xff]
    %v4087 = vld [vmem:[%s3980 + $0x350] sm:$0xff]
    %v4088 = vld [vmem:[%s3980 + $0x358] sm:$0xff]
    %v4089 = vld [vmem:[%s3980 + $0x360] sm:$0xff]
    %v4090 = vld [vmem:[%s3980 + $0x368] sm:$0xff]
    %v4091 = vld [vmem:[%s3980 + $0x370] sm:$0xff]
    %v4092 = vld [vmem:[%s3980 + $0x378] sm:$0xff]
    %v4093 = vld [vmem:[%s3980 + $0x380] sm:$0xff]
    %v4094 = vld [vmem:[%s3980 + $0x388] sm:$0xff]
    %v4095 = vld [vmem:[%s3980 + $0x390] sm:$0xff]
    %v4096 = vld [vmem:[%s3980 + $0x398] sm:$0xff]
    %v4097 = vld [vmem:[%s3980 + $0x3a0] sm:$0xff]
    %v4098 = vld [vmem:[%s3980 + $0x3a8] sm:$0xff]
    %v4099 = vld [vmem:[%s3980 + $0x3b0] sm:$0xff]
    %v4100 = vld [vmem:[%s3980 + $0x3b8] sm:$0xff]
    %v4101 = vld [vmem:[%s3980 + $0x3c0] sm:$0xff]
    %v4102 = vld [vmem:[%s3980 + $0x3c8] sm:$0xff]
    %v4103 = vld [vmem:[%s3980 + $0x3d0] sm:$0xff]
    %v4104 = vld [vmem:[%s3980 + $0x3d8] sm:$0xff]
    %v4105 = vld [vmem:[%s3980 + $0x3e0] sm:$0xff]
    %v4106 = vld [vmem:[%s3980 + $0x3e8] sm:$0xff]
    %v4107 = vld [vmem:[%s3980 + $0x3f0] sm:$0xff]
    %v4108 = vld [vmem:[%s3980 + $0x3f8] sm:$0xff]
    %s4109 = scalar_lea.vmem [#allocation7], 16
    %v4110 = vld [vmem:[%s4109] sm:$0xf]
    %v4112 = vlaneseq
    %v4113 = vshrl.u32 %v4112, 7
    %v4114 = vsub.s32 0, %v4113
    %v4115 = vrot.slane %v4110, %v4114
    %v4116 = vlaneseq
    %v4117 = vshrl.u32 %v4116, 7
    %v4118 = vsub.s32 1, %v4117
    %v4119 = vrot.slane %v4110, %v4118
    %v4120 = vlaneseq
    %v4121 = vshrl.u32 %v4120, 7
    %v4122 = vsub.s32 2, %v4121
    %v4123 = vrot.slane %v4110, %v4122
    %v4124 = vlaneseq
    %v4125 = vshrl.u32 %v4124, 7
    %v4126 = vsub.s32 3, %v4125
    %v4127 = vrot.slane %v4110, %v4126
    %v4260 = vunpack.c.l.b16 %v3981
    %v4261 = vunpack.c.h.b16 %v3981
    %v4262 = vunpack.c.l.b16 %v3982
    %v4263 = vunpack.c.h.b16 %v3982
    %v4264 = vunpack.c.l.b16 %v3983
    %v4265 = vunpack.c.h.b16 %v3983
    %v4266 = vunpack.c.l.b16 %v3984
    %v4267 = vunpack.c.h.b16 %v3984
    %v4268 = vunpack.c.l.b16 %v3985
    %v4269 = vunpack.c.h.b16 %v3985
    %v4270 = vunpack.c.l.b16 %v3986
    %v4271 = vunpack.c.h.b16 %v3986
    %v4272 = vunpack.c.l.b16 %v3987
    %v4273 = vunpack.c.h.b16 %v3987
    %v4274 = vunpack.c.l.b16 %v3988
    %v4275 = vunpack.c.h.b16 %v3988
    %v4276 = vunpack.c.l.b16 %v3989
    %v4277 = vunpack.c.h.b16 %v3989
    %v4278 = vunpack.c.l.b16 %v3990
    %v4279 = vunpack.c.h.b16 %v3990
    %v4280 = vunpack.c.l.b16 %v3991
    %v4281 = vunpack.c.h.b16 %v3991
    %v4282 = vunpack.c.l.b16 %v3992
    %v4283 = vunpack.c.h.b16 %v3992
    %v4284 = vunpack.c.l.b16 %v3993
    %v4285 = vunpack.c.h.b16 %v3993
    %v4286 = vunpack.c.l.b16 %v3994
    %v4287 = vunpack.c.h.b16 %v3994
    %v4288 = vunpack.c.l.b16 %v3995
    %v4289 = vunpack.c.h.b16 %v3995
    %v4290 = vunpack.c.l.b16 %v3996
    %v4291 = vunpack.c.h.b16 %v3996
    %v4292 = vunpack.c.l.b16 %v3997
    %v4293 = vunpack.c.h.b16 %v3997
    %v4294 = vunpack.c.l.b16 %v3998
    %v4295 = vunpack.c.h.b16 %v3998
    %v4296 = vunpack.c.l.b16 %v3999
    %v4297 = vunpack.c.h.b16 %v3999
    %v4298 = vunpack.c.l.b16 %v4000
    %v4299 = vunpack.c.h.b16 %v4000
    %v4300 = vunpack.c.l.b16 %v4001
    %v4301 = vunpack.c.h.b16 %v4001
    %v4302 = vunpack.c.l.b16 %v4002
    %v4303 = vunpack.c.h.b16 %v4002
    %v4304 = vunpack.c.l.b16 %v4003
    %v4305 = vunpack.c.h.b16 %v4003
    %v4306 = vunpack.c.l.b16 %v4004
    %v4307 = vunpack.c.h.b16 %v4004
    %v4308 = vunpack.c.l.b16 %v4005
    %v4309 = vunpack.c.h.b16 %v4005
    %v4310 = vunpack.c.l.b16 %v4006
    %v4311 = vunpack.c.h.b16 %v4006
    %v4312 = vunpack.c.l.b16 %v4007
    %v4313 = vunpack.c.h.b16 %v4007
    %v4314 = vunpack.c.l.b16 %v4008
    %v4315 = vunpack.c.h.b16 %v4008
    %v4316 = vunpack.c.l.b16 %v4009
    %v4317 = vunpack.c.h.b16 %v4009
    %v4318 = vunpack.c.l.b16 %v4010
    %v4319 = vunpack.c.h.b16 %v4010
    %v4320 = vunpack.c.l.b16 %v4011
    %v4321 = vunpack.c.h.b16 %v4011
    %v4322 = vunpack.c.l.b16 %v4012
    %v4323 = vunpack.c.h.b16 %v4012
    %v4324 = vunpack.c.l.b16 %v4013
    %v4325 = vunpack.c.h.b16 %v4013
    %v4326 = vunpack.c.l.b16 %v4014
    %v4327 = vunpack.c.h.b16 %v4014
    %v4328 = vunpack.c.l.b16 %v4015
    %v4329 = vunpack.c.h.b16 %v4015
    %v4330 = vunpack.c.l.b16 %v4016
    %v4331 = vunpack.c.h.b16 %v4016
    %v4332 = vunpack.c.l.b16 %v4017
    %v4333 = vunpack.c.h.b16 %v4017
    %v4334 = vunpack.c.l.b16 %v4018
    %v4335 = vunpack.c.h.b16 %v4018
    %v4336 = vunpack.c.l.b16 %v4019
    %v4337 = vunpack.c.h.b16 %v4019
    %v4338 = vunpack.c.l.b16 %v4020
    %v4339 = vunpack.c.h.b16 %v4020
    %v4340 = vunpack.c.l.b16 %v4021
    %v4341 = vunpack.c.h.b16 %v4021
    %v4342 = vunpack.c.l.b16 %v4022
    %v4343 = vunpack.c.h.b16 %v4022
    %v4344 = vunpack.c.l.b16 %v4023
    %v4345 = vunpack.c.h.b16 %v4023
    %v4346 = vunpack.c.l.b16 %v4024
    %v4347 = vunpack.c.h.b16 %v4024
    %v4348 = vunpack.c.l.b16 %v4025
    %v4349 = vunpack.c.h.b16 %v4025
    %v4350 = vunpack.c.l.b16 %v4026
    %v4351 = vunpack.c.h.b16 %v4026
    %v4352 = vunpack.c.l.b16 %v4027
    %v4353 = vunpack.c.h.b16 %v4027
    %v4354 = vunpack.c.l.b16 %v4028
    %v4355 = vunpack.c.h.b16 %v4028
    %v4356 = vunpack.c.l.b16 %v4029
    %v4357 = vunpack.c.h.b16 %v4029
    %v4358 = vunpack.c.l.b16 %v4030
    %v4359 = vunpack.c.h.b16 %v4030
    %v4360 = vunpack.c.l.b16 %v4031
    %v4361 = vunpack.c.h.b16 %v4031
    %v4362 = vunpack.c.l.b16 %v4032
    %v4363 = vunpack.c.h.b16 %v4032
    %v4364 = vunpack.c.l.b16 %v4033
    %v4365 = vunpack.c.h.b16 %v4033
    %v4366 = vunpack.c.l.b16 %v4034
    %v4367 = vunpack.c.h.b16 %v4034
    %v4368 = vunpack.c.l.b16 %v4035
    %v4369 = vunpack.c.h.b16 %v4035
    %v4370 = vunpack.c.l.b16 %v4036
    %v4371 = vunpack.c.h.b16 %v4036
    %v4372 = vunpack.c.l.b16 %v4037
    %v4373 = vunpack.c.h.b16 %v4037
    %v4374 = vunpack.c.l.b16 %v4038
    %v4375 = vunpack.c.h.b16 %v4038
    %v4376 = vunpack.c.l.b16 %v4039
    %v4377 = vunpack.c.h.b16 %v4039
    %v4378 = vunpack.c.l.b16 %v4040
    %v4379 = vunpack.c.h.b16 %v4040
    %v4380 = vunpack.c.l.b16 %v4041
    %v4381 = vunpack.c.h.b16 %v4041
    %v4382 = vunpack.c.l.b16 %v4042
    %v4383 = vunpack.c.h.b16 %v4042
    %v4384 = vunpack.c.l.b16 %v4043
    %v4385 = vunpack.c.h.b16 %v4043
    %v4386 = vunpack.c.l.b16 %v4044
    %v4387 = vunpack.c.h.b16 %v4044
    %v4388 = vunpack.c.l.b16 %v4045
    %v4389 = vunpack.c.h.b16 %v4045
    %v4390 = vunpack.c.l.b16 %v4046
    %v4391 = vunpack.c.h.b16 %v4046
    %v4392 = vunpack.c.l.b16 %v4047
    %v4393 = vunpack.c.h.b16 %v4047
    %v4394 = vunpack.c.l.b16 %v4048
    %v4395 = vunpack.c.h.b16 %v4048
    %v4396 = vunpack.c.l.b16 %v4049
    %v4397 = vunpack.c.h.b16 %v4049
    %v4398 = vunpack.c.l.b16 %v4050
    %v4399 = vunpack.c.h.b16 %v4050
    %v4400 = vunpack.c.l.b16 %v4051
    %v4401 = vunpack.c.h.b16 %v4051
    %v4402 = vunpack.c.l.b16 %v4052
    %v4403 = vunpack.c.h.b16 %v4052
    %v4404 = vunpack.c.l.b16 %v4053
    %v4405 = vunpack.c.h.b16 %v4053
    %v4406 = vunpack.c.l.b16 %v4054
    %v4407 = vunpack.c.h.b16 %v4054
    %v4408 = vunpack.c.l.b16 %v4055
    %v4409 = vunpack.c.h.b16 %v4055
    %v4410 = vunpack.c.l.b16 %v4056
    %v4411 = vunpack.c.h.b16 %v4056
    %v4412 = vunpack.c.l.b16 %v4057
    %v4413 = vunpack.c.h.b16 %v4057
    %v4414 = vunpack.c.l.b16 %v4058
    %v4415 = vunpack.c.h.b16 %v4058
    %v4416 = vunpack.c.l.b16 %v4059
    %v4417 = vunpack.c.h.b16 %v4059
    %v4418 = vunpack.c.l.b16 %v4060
    %v4419 = vunpack.c.h.b16 %v4060
    %v4420 = vunpack.c.l.b16 %v4061
    %v4421 = vunpack.c.h.b16 %v4061
    %v4422 = vunpack.c.l.b16 %v4062
    %v4423 = vunpack.c.h.b16 %v4062
    %v4424 = vunpack.c.l.b16 %v4063
    %v4425 = vunpack.c.h.b16 %v4063
    %v4426 = vunpack.c.l.b16 %v4064
    %v4427 = vunpack.c.h.b16 %v4064
    %v4428 = vunpack.c.l.b16 %v4065
    %v4429 = vunpack.c.h.b16 %v4065
    %v4430 = vunpack.c.l.b16 %v4066
    %v4431 = vunpack.c.h.b16 %v4066
    %v4432 = vunpack.c.l.b16 %v4067
    %v4433 = vunpack.c.h.b16 %v4067
    %v4434 = vunpack.c.l.b16 %v4068
    %v4435 = vunpack.c.h.b16 %v4068
    %v4436 = vunpack.c.l.b16 %v4069
    %v4437 = vunpack.c.h.b16 %v4069
    %v4438 = vunpack.c.l.b16 %v4070
    %v4439 = vunpack.c.h.b16 %v4070
    %v4440 = vunpack.c.l.b16 %v4071
    %v4441 = vunpack.c.h.b16 %v4071
    %v4442 = vunpack.c.l.b16 %v4072
    %v4443 = vunpack.c.h.b16 %v4072
    %v4444 = vunpack.c.l.b16 %v4073
    %v4445 = vunpack.c.h.b16 %v4073
    %v4446 = vunpack.c.l.b16 %v4074
    %v4447 = vunpack.c.h.b16 %v4074
    %v4448 = vunpack.c.l.b16 %v4075
    %v4449 = vunpack.c.h.b16 %v4075
    %v4450 = vunpack.c.l.b16 %v4076
    %v4451 = vunpack.c.h.b16 %v4076
    %v4452 = vunpack.c.l.b16 %v4077
    %v4453 = vunpack.c.h.b16 %v4077
    %v4454 = vunpack.c.l.b16 %v4078
    %v4455 = vunpack.c.h.b16 %v4078
    %v4456 = vunpack.c.l.b16 %v4079
    %v4457 = vunpack.c.h.b16 %v4079
    %v4458 = vunpack.c.l.b16 %v4080
    %v4459 = vunpack.c.h.b16 %v4080
    %v4460 = vunpack.c.l.b16 %v4081
    %v4461 = vunpack.c.h.b16 %v4081
    %v4462 = vunpack.c.l.b16 %v4082
    %v4463 = vunpack.c.h.b16 %v4082
    %v4464 = vunpack.c.l.b16 %v4083
    %v4465 = vunpack.c.h.b16 %v4083
    %v4466 = vunpack.c.l.b16 %v4084
    %v4467 = vunpack.c.h.b16 %v4084
    %v4468 = vunpack.c.l.b16 %v4085
    %v4469 = vunpack.c.h.b16 %v4085
    %v4470 = vunpack.c.l.b16 %v4086
    %v4471 = vunpack.c.h.b16 %v4086
    %v4472 = vunpack.c.l.b16 %v4087
    %v4473 = vunpack.c.h.b16 %v4087
    %v4474 = vunpack.c.l.b16 %v4088
    %v4475 = vunpack.c.h.b16 %v4088
    %v4476 = vunpack.c.l.b16 %v4089
    %v4477 = vunpack.c.h.b16 %v4089
    %v4478 = vunpack.c.l.b16 %v4090
    %v4479 = vunpack.c.h.b16 %v4090
    %v4480 = vunpack.c.l.b16 %v4091
    %v4481 = vunpack.c.h.b16 %v4091
    %v4482 = vunpack.c.l.b16 %v4092
    %v4483 = vunpack.c.h.b16 %v4092
    %v4484 = vunpack.c.l.b16 %v4093
    %v4485 = vunpack.c.h.b16 %v4093
    %v4486 = vunpack.c.l.b16 %v4094
    %v4487 = vunpack.c.h.b16 %v4094
    %v4488 = vunpack.c.l.b16 %v4095
    %v4489 = vunpack.c.h.b16 %v4095
    %v4490 = vunpack.c.l.b16 %v4096
    %v4491 = vunpack.c.h.b16 %v4096
    %v4492 = vunpack.c.l.b16 %v4097
    %v4493 = vunpack.c.h.b16 %v4097
    %v4494 = vunpack.c.l.b16 %v4098
    %v4495 = vunpack.c.h.b16 %v4098
    %v4496 = vunpack.c.l.b16 %v4099
    %v4497 = vunpack.c.h.b16 %v4099
    %v4498 = vunpack.c.l.b16 %v4100
    %v4499 = vunpack.c.h.b16 %v4100
    %v4500 = vunpack.c.l.b16 %v4101
    %v4501 = vunpack.c.h.b16 %v4101
    %v4502 = vunpack.c.l.b16 %v4102
    %v4503 = vunpack.c.h.b16 %v4102
    %v4504 = vunpack.c.l.b16 %v4103
    %v4505 = vunpack.c.h.b16 %v4103
    %v4506 = vunpack.c.l.b16 %v4104
    %v4507 = vunpack.c.h.b16 %v4104
    %v4508 = vunpack.c.l.b16 %v4105
    %v4509 = vunpack.c.h.b16 %v4105
    %v4510 = vunpack.c.l.b16 %v4106
    %v4511 = vunpack.c.h.b16 %v4106
    %v4512 = vunpack.c.l.b16 %v4107
    %v4513 = vunpack.c.h.b16 %v4107
    %v4514 = vunpack.c.l.b16 %v4108
    %v4515 = vunpack.c.h.b16 %v4108
    %v4516 = vpack.c.b16 %v4264, %v4260
    %v4517 = vpack.c.b16 %v4265, %v4261
    %v4518 = vpack.c.b16 %v4266, %v4262
    %v4519 = vpack.c.b16 %v4267, %v4263
    %v4520 = vpack.c.b16 %v4272, %v4268
    %v4521 = vpack.c.b16 %v4273, %v4269
    %v4522 = vpack.c.b16 %v4274, %v4270
    %v4523 = vpack.c.b16 %v4275, %v4271
    %v4524 = vpack.c.b16 %v4280, %v4276
    %v4525 = vpack.c.b16 %v4281, %v4277
    %v4526 = vpack.c.b16 %v4282, %v4278
    %v4527 = vpack.c.b16 %v4283, %v4279
    %v4528 = vpack.c.b16 %v4288, %v4284
    %v4529 = vpack.c.b16 %v4289, %v4285
    %v4530 = vpack.c.b16 %v4290, %v4286
    %v4531 = vpack.c.b16 %v4291, %v4287
    %v4532 = vpack.c.b16 %v4296, %v4292
    %v4533 = vpack.c.b16 %v4297, %v4293
    %v4534 = vpack.c.b16 %v4298, %v4294
    %v4535 = vpack.c.b16 %v4299, %v4295
    %v4536 = vpack.c.b16 %v4304, %v4300
    %v4537 = vpack.c.b16 %v4305, %v4301
    %v4538 = vpack.c.b16 %v4306, %v4302
    %v4539 = vpack.c.b16 %v4307, %v4303
    %v4540 = vpack.c.b16 %v4312, %v4308
    %v4541 = vpack.c.b16 %v4313, %v4309
    %v4542 = vpack.c.b16 %v4314, %v4310
    %v4543 = vpack.c.b16 %v4315, %v4311
    %v4544 = vpack.c.b16 %v4320, %v4316
    %v4545 = vpack.c.b16 %v4321, %v4317
    %v4546 = vpack.c.b16 %v4322, %v4318
    %v4547 = vpack.c.b16 %v4323, %v4319
    %v4548 = vpack.c.b16 %v4328, %v4324
    %v4549 = vpack.c.b16 %v4329, %v4325
    %v4550 = vpack.c.b16 %v4330, %v4326
    %v4551 = vpack.c.b16 %v4331, %v4327
    %v4552 = vpack.c.b16 %v4336, %v4332
    %v4553 = vpack.c.b16 %v4337, %v4333
    %v4554 = vpack.c.b16 %v4338, %v4334
    %v4555 = vpack.c.b16 %v4339, %v4335
    %v4556 = vpack.c.b16 %v4344, %v4340
    %v4557 = vpack.c.b16 %v4345, %v4341
    %v4558 = vpack.c.b16 %v4346, %v4342
    %v4559 = vpack.c.b16 %v4347, %v4343
    %v4560 = vpack.c.b16 %v4352, %v4348
    %v4561 = vpack.c.b16 %v4353, %v4349
    %v4562 = vpack.c.b16 %v4354, %v4350
    %v4563 = vpack.c.b16 %v4355, %v4351
    %v4564 = vpack.c.b16 %v4360, %v4356
    %v4565 = vpack.c.b16 %v4361, %v4357
    %v4566 = vpack.c.b16 %v4362, %v4358
    %v4567 = vpack.c.b16 %v4363, %v4359
    %v4568 = vpack.c.b16 %v4368, %v4364
    %v4569 = vpack.c.b16 %v4369, %v4365
    %v4570 = vpack.c.b16 %v4370, %v4366
    %v4571 = vpack.c.b16 %v4371, %v4367
    %v4572 = vpack.c.b16 %v4376, %v4372
    %v4573 = vpack.c.b16 %v4377, %v4373
    %v4574 = vpack.c.b16 %v4378, %v4374
    %v4575 = vpack.c.b16 %v4379, %v4375
    %v4576 = vpack.c.b16 %v4384, %v4380
    %v4577 = vpack.c.b16 %v4385, %v4381
    %v4578 = vpack.c.b16 %v4386, %v4382
    %v4579 = vpack.c.b16 %v4387, %v4383
    %v4580 = vpack.c.b16 %v4392, %v4388
    %v4581 = vpack.c.b16 %v4393, %v4389
    %v4582 = vpack.c.b16 %v4394, %v4390
    %v4583 = vpack.c.b16 %v4395, %v4391
    %v4584 = vpack.c.b16 %v4400, %v4396
    %v4585 = vpack.c.b16 %v4401, %v4397
    %v4586 = vpack.c.b16 %v4402, %v4398
    %v4587 = vpack.c.b16 %v4403, %v4399
    %v4588 = vpack.c.b16 %v4408, %v4404
    %v4589 = vpack.c.b16 %v4409, %v4405
    %v4590 = vpack.c.b16 %v4410, %v4406
    %v4591 = vpack.c.b16 %v4411, %v4407
    %v4592 = vpack.c.b16 %v4416, %v4412
    %v4593 = vpack.c.b16 %v4417, %v4413
    %v4594 = vpack.c.b16 %v4418, %v4414
    %v4595 = vpack.c.b16 %v4419, %v4415
    %v4596 = vpack.c.b16 %v4424, %v4420
    %v4597 = vpack.c.b16 %v4425, %v4421
    %v4598 = vpack.c.b16 %v4426, %v4422
    %v4599 = vpack.c.b16 %v4427, %v4423
    %v4600 = vpack.c.b16 %v4432, %v4428
    %v4601 = vpack.c.b16 %v4433, %v4429
    %v4602 = vpack.c.b16 %v4434, %v4430
    %v4603 = vpack.c.b16 %v4435, %v4431
    %v4604 = vpack.c.b16 %v4440, %v4436
    %v4605 = vpack.c.b16 %v4441, %v4437
    %v4606 = vpack.c.b16 %v4442, %v4438
    %v4607 = vpack.c.b16 %v4443, %v4439
    %v4608 = vpack.c.b16 %v4448, %v4444
    %v4609 = vpack.c.b16 %v4449, %v4445
    %v4610 = vpack.c.b16 %v4450, %v4446
    %v4611 = vpack.c.b16 %v4451, %v4447
    %v4612 = vpack.c.b16 %v4456, %v4452
    %v4613 = vpack.c.b16 %v4457, %v4453
    %v4614 = vpack.c.b16 %v4458, %v4454
    %v4615 = vpack.c.b16 %v4459, %v4455
    %v4616 = vpack.c.b16 %v4464, %v4460
    %v4617 = vpack.c.b16 %v4465, %v4461
    %v4618 = vpack.c.b16 %v4466, %v4462
    %v4619 = vpack.c.b16 %v4467, %v4463
    %v4620 = vpack.c.b16 %v4472, %v4468
    %v4621 = vpack.c.b16 %v4473, %v4469
    %v4622 = vpack.c.b16 %v4474, %v4470
    %v4623 = vpack.c.b16 %v4475, %v4471
    %v4624 = vpack.c.b16 %v4480, %v4476
    %v4625 = vpack.c.b16 %v4481, %v4477
    %v4626 = vpack.c.b16 %v4482, %v4478
    %v4627 = vpack.c.b16 %v4483, %v4479
    %v4628 = vpack.c.b16 %v4488, %v4484
    %v4629 = vpack.c.b16 %v4489, %v4485
    %v4630 = vpack.c.b16 %v4490, %v4486
    %v4631 = vpack.c.b16 %v4491, %v4487
    %v4632 = vpack.c.b16 %v4496, %v4492
    %v4633 = vpack.c.b16 %v4497, %v4493
    %v4634 = vpack.c.b16 %v4498, %v4494
    %v4635 = vpack.c.b16 %v4499, %v4495
    %v4636 = vpack.c.b16 %v4504, %v4500
    %v4637 = vpack.c.b16 %v4505, %v4501
    %v4638 = vpack.c.b16 %v4506, %v4502
    %v4639 = vpack.c.b16 %v4507, %v4503
    %v4640 = vpack.c.b16 %v4512, %v4508
    %v4641 = vpack.c.b16 %v4513, %v4509
    %v4642 = vpack.c.b16 %v4514, %v4510
    %v4643 = vpack.c.b16 %v4515, %v4511
    %4772 = vmatprep.subr.bf16.mxu0 %v4545
    %4773 = vmatpush1.bf16.msra.mxu0 %v4544
    %4774 = vmatprep.subr.bf16.mxu0 %v4541
    %4775 = vmatpush1.bf16.msra.mxu0 %v4540
    %4776 = vmatprep.subr.bf16.mxu0 %v4537
    %4777 = vmatpush1.bf16.msra.mxu0 %v4536
    %4778 = vmatprep.subr.bf16.mxu0 %v4533
    %4779 = vmatpush1.bf16.msra.mxu0 %v4532
    %4780 = vmatprep.subr.bf16.mxu0 %v4529
    %4781 = vmatpush1.bf16.msra.mxu0 %v4528
    %4782 = vmatprep.subr.bf16.mxu0 %v4525
    %4783 = vmatpush1.bf16.msra.mxu0 %v4524
    %4784 = vmatprep.subr.bf16.mxu0 %v4521
    %4785 = vmatpush1.bf16.msra.mxu0 %v4520
    %4786 = vmatprep.subr.bf16.mxu0 %v4517
    %4787 = vmatpush1.bf16.msra.mxu0 %v4516
    %4788 = vmatprep.subr.bf16.mxu0 %v4577
    %4789 = vmatpush2.bf16.msra.mxu0 %v4576
    %4790 = vmatprep.subr.bf16.mxu0 %v4573
    %4791 = vmatpush2.bf16.msra.mxu0 %v4572
    %4792 = vmatprep.subr.bf16.mxu0 %v4569
    %4793 = vmatpush2.bf16.msra.mxu0 %v4568
    %4794 = vmatprep.subr.bf16.mxu0 %v4565
    %4795 = vmatpush2.bf16.msra.mxu0 %v4564
    %4796 = vmatprep.subr.bf16.mxu0 %v4561
    %4797 = vmatpush2.bf16.msra.mxu0 %v4560
    %4798 = vmatprep.subr.bf16.mxu0 %v4557
    %4799 = vmatpush2.bf16.msra.mxu0 %v4556
    %4800 = vmatprep.subr.bf16.mxu0 %v4553
    %4801 = vmatpush2.bf16.msra.mxu0 %v4552
    %4802 = vmatprep.subr.bf16.mxu0 %v4549
    %4803 = vmatpush2.bf16.msra.mxu0 %v4548
    %4804 = vmatprep.mubr.bf16.mxu0 %v3977
    %4805 = vmatmul.mubr.bf16.gmra.mxu0 %v3976
    %v4806 = vpop.f32.mrf.mxu0
    %v4807 = vadd.f32 %v4115, %v4806
    %v4808 = vpop.f32.mrf.mxu0
    %v4809 = vadd.f32 %v4119, %v4808
    %v4810 = vpop.f32.mrf.mxu0
    %v4811 = vpop.f32.mrf.mxu0
    %4812 = vdwg.mxu0
    %4813 = vmatprep.subr.bf16.mxu0 %v4609
    %4814 = vmatpush1.bf16.msra.mxu0 %v4608
    %4815 = vmatprep.subr.bf16.mxu0 %v4605
    %4816 = vmatpush1.bf16.msra.mxu0 %v4604
    %4817 = vmatprep.subr.bf16.mxu0 %v4601
    %4818 = vmatpush1.bf16.msra.mxu0 %v4600
    %4819 = vmatprep.subr.bf16.mxu0 %v4597
    %4820 = vmatpush1.bf16.msra.mxu0 %v4596
    %4821 = vmatprep.subr.bf16.mxu0 %v4593
    %4822 = vmatpush1.bf16.msra.mxu0 %v4592
    %4823 = vmatprep.subr.bf16.mxu0 %v4589
    %4824 = vmatpush1.bf16.msra.mxu0 %v4588
    %4825 = vmatprep.subr.bf16.mxu0 %v4585
    %4826 = vmatpush1.bf16.msra.mxu0 %v4584
    %4827 = vmatprep.subr.bf16.mxu0 %v4581
    %4828 = vmatpush1.bf16.msra.mxu0 %v4580
    %4829 = vmatprep.subr.bf16.mxu0 %v4641
    %4830 = vmatpush2.bf16.msra.mxu0 %v4640
    %4831 = vmatprep.subr.bf16.mxu0 %v4637
    %4832 = vmatpush2.bf16.msra.mxu0 %v4636
    %4833 = vmatprep.subr.bf16.mxu0 %v4633
    %4834 = vmatpush2.bf16.msra.mxu0 %v4632
    %4835 = vmatprep.subr.bf16.mxu0 %v4629
    %4836 = vmatpush2.bf16.msra.mxu0 %v4628
    %4837 = vmatprep.subr.bf16.mxu0 %v4625
    %4838 = vmatpush2.bf16.msra.mxu0 %v4624
    %4839 = vmatprep.subr.bf16.mxu0 %v4621
    %4840 = vmatpush2.bf16.msra.mxu0 %v4620
    %4841 = vmatprep.subr.bf16.mxu0 %v4617
    %4842 = vmatpush2.bf16.msra.mxu0 %v4616
    %4843 = vmatprep.subr.bf16.mxu0 %v4613
    %4844 = vmatpush2.bf16.msra.mxu0 %v4612
    %4845 = vmatprep.mubr.bf16.mxu0 %v3979
    %4846 = vmatmul.mubr.bf16.gmra.mxu0 %v3978
    %v4847 = vpop.f32.mrf.mxu0
    %v4848 = vadd.f32 %v4807, %v4847
    %v4849 = vpop.f32.mrf.mxu0
    %v4850 = vadd.f32 %v4809, %v4849
    %v4851 = vpop.f32.mrf.mxu0
    %v4852 = vpop.f32.mrf.mxu0
    %4853 = vdwg.mxu0
    %4854 = vmatprep.subr.bf16.mxu0 %v4547
    %4855 = vmatpush1.bf16.msra.mxu0 %v4546
    %4856 = vmatprep.subr.bf16.mxu0 %v4543
    %4857 = vmatpush1.bf16.msra.mxu0 %v4542
    %4858 = vmatprep.subr.bf16.mxu0 %v4539
    %4859 = vmatpush1.bf16.msra.mxu0 %v4538
    %4860 = vmatprep.subr.bf16.mxu0 %v4535
    %4861 = vmatpush1.bf16.msra.mxu0 %v4534
    %4862 = vmatprep.subr.bf16.mxu0 %v4531
    %4863 = vmatpush1.bf16.msra.mxu0 %v4530
    %4864 = vmatprep.subr.bf16.mxu0 %v4527
    %4865 = vmatpush1.bf16.msra.mxu0 %v4526
    %4866 = vmatprep.subr.bf16.mxu0 %v4523
    %4867 = vmatpush1.bf16.msra.mxu0 %v4522
    %4868 = vmatprep.subr.bf16.mxu0 %v4519
    %4869 = vmatpush1.bf16.msra.mxu0 %v4518
    %4870 = vmatprep.subr.bf16.mxu0 %v4579
    %4871 = vmatpush2.bf16.msra.mxu0 %v4578
    %4872 = vmatprep.subr.bf16.mxu0 %v4575
    %4873 = vmatpush2.bf16.msra.mxu0 %v4574
    %4874 = vmatprep.subr.bf16.mxu0 %v4571
    %4875 = vmatpush2.bf16.msra.mxu0 %v4570
    %4876 = vmatprep.subr.bf16.mxu0 %v4567
    %4877 = vmatpush2.bf16.msra.mxu0 %v4566
    %4878 = vmatprep.subr.bf16.mxu0 %v4563
    %4879 = vmatpush2.bf16.msra.mxu0 %v4562
    %4880 = vmatprep.subr.bf16.mxu0 %v4559
    %4881 = vmatpush2.bf16.msra.mxu0 %v4558
    %4882 = vmatprep.subr.bf16.mxu0 %v4555
    %4883 = vmatpush2.bf16.msra.mxu0 %v4554
    %4884 = vmatprep.subr.bf16.mxu0 %v4551
    %4885 = vmatpush2.bf16.msra.mxu0 %v4550
    %4886 = vmatprep.mubr.bf16.mxu0 %v3977
    %4887 = vmatmul.mubr.bf16.gmra.mxu0 %v3976
    %v4888 = vpop.f32.mrf.mxu0
    %v4889 = vadd.f32 %v4123, %v4888
    %v4890 = vpop.f32.mrf.mxu0
    %v4891 = vadd.f32 %v4127, %v4890
    %v4892 = vpop.f32.mrf.mxu0
    %v4893 = vpop.f32.mrf.mxu0
    %4894 = vdwg.mxu0
    %4895 = vmatprep.subr.bf16.mxu0 %v4611
    %4896 = vmatpush1.bf16.msra.mxu0 %v4610
    %4897 = vmatprep.subr.bf16.mxu0 %v4607
    %4898 = vmatpush1.bf16.msra.mxu0 %v4606
    %4899 = vmatprep.subr.bf16.mxu0 %v4603
    %4900 = vmatpush1.bf16.msra.mxu0 %v4602
    %4901 = vmatprep.subr.bf16.mxu0 %v4599
    %4902 = vmatpush1.bf16.msra.mxu0 %v4598
    %4903 = vmatprep.subr.bf16.mxu0 %v4595
    %4904 = vmatpush1.bf16.msra.mxu0 %v4594
    %4905 = vmatprep.subr.bf16.mxu0 %v4591
    %4906 = vmatpush1.bf16.msra.mxu0 %v4590
    %4907 = vmatprep.subr.bf16.mxu0 %v4587
    %4908 = vmatpush1.bf16.msra.mxu0 %v4586
    %4909 = vmatprep.subr.bf16.mxu0 %v4583
    %4910 = vmatpush1.bf16.msra.mxu0 %v4582
    %4911 = vmatprep.subr.bf16.mxu0 %v4643
    %4912 = vmatpush2.bf16.msra.mxu0 %v4642
    %4913 = vmatprep.subr.bf16.mxu0 %v4639
    %4914 = vmatpush2.bf16.msra.mxu0 %v4638
    %4915 = vmatprep.subr.bf16.mxu0 %v4635
    %4916 = vmatpush2.bf16.msra.mxu0 %v4634
    %4917 = vmatprep.subr.bf16.mxu0 %v4631
    %4918 = vmatpush2.bf16.msra.mxu0 %v4630
    %4919 = vmatprep.subr.bf16.mxu0 %v4627
    %4920 = vmatpush2.bf16.msra.mxu0 %v4626
    %4921 = vmatprep.subr.bf16.mxu0 %v4623
    %4922 = vmatpush2.bf16.msra.mxu0 %v4622
    %4923 = vmatprep.subr.bf16.mxu0 %v4619
    %4924 = vmatpush2.bf16.msra.mxu0 %v4618
    %4925 = vmatprep.subr.bf16.mxu0 %v4615
    %4926 = vmatpush2.bf16.msra.mxu0 %v4614
    %4927 = vmatprep.mubr.bf16.mxu0 %v3979
    %4928 = vmatmul.mubr.bf16.gmra.mxu0 %v3978
    %v4929 = vpop.f32.mrf.mxu0
    %v4930 = vadd.f32 %v4889, %v4929
    %v4931 = vpop.f32.mrf.mxu0
    %v4932 = vadd.f32 %v4891, %v4931
    %v4933 = vpop.f32.mrf.mxu0
    %v4934 = vpop.f32.mrf.mxu0
    %4935 = vdwg.mxu0
    %vm4936 = vcmp.gt.f32.partialorder %v4848, 0.0
    %vm4937 = vcmp.gt.f32.partialorder %v4850, 0.0
    %vm4938 = vcmp.gt.f32.partialorder %v4930, 0.0
    %vm4939 = vcmp.gt.f32.partialorder %v4932, 0.0
    %v4940 = vmul.f32 %v4848, 0.2
    %v4941 = vmul.f32 %v4850, 0.2
    %v4942 = vmul.f32 %v4930, 0.2
    %v4943 = vmul.f32 %v4932, 0.2
    %v4944 = vsel %vm4936, %v4848, %v4940
    %v4945 = vsel %vm4937, %v4850, %v4941
    %v4946 = vsel %vm4938, %v4930, %v4942
    %v4947 = vsel %vm4939, %v4932, %v4943
    %v4948 = vpack.c.bf16 %v4944, %v4944
    %v4949 = vpack.c.bf16 %v4945, %v4945
    %v4950 = vpack.c.bf16 %v4946, %v4946
    %v4951 = vpack.c.bf16 %v4947, %v4947
    %s4952 = scalar_lea.vmem [#allocation5], 5120
    %v4953 = vld [vmem:[%s4952] sm:$0xff]
    %v4954 = vld [vmem:[%s4952 + $0x8] sm:$0xff]
    %v4955 = vld [vmem:[%s4952 + $0x10] sm:$0xff]
    %v4956 = vld [vmem:[%s4952 + $0x18] sm:$0xff]
    %v4957 = vld [vmem:[%s4952 + $0x20] sm:$0xff]
    %v4958 = vld [vmem:[%s4952 + $0x28] sm:$0xff]
    %v4959 = vld [vmem:[%s4952 + $0x30] sm:$0xff]
    %v4960 = vld [vmem:[%s4952 + $0x38] sm:$0xff]
    %v4961 = vld [vmem:[%s4952 + $0x40] sm:$0xff]
    %v4962 = vld [vmem:[%s4952 + $0x48] sm:$0xff]
    %v4963 = vld [vmem:[%s4952 + $0x50] sm:$0xff]
    %v4964 = vld [vmem:[%s4952 + $0x58] sm:$0xff]
    %v4965 = vld [vmem:[%s4952 + $0x60] sm:$0xff]
    %v4966 = vld [vmem:[%s4952 + $0x68] sm:$0xff]
    %v4967 = vld [vmem:[%s4952 + $0x70] sm:$0xff]
    %v4968 = vld [vmem:[%s4952 + $0x78] sm:$0xff]
    %v4969 = vld [vmem:[%s4952 + $0x80] sm:$0xff]
    %v4970 = vld [vmem:[%s4952 + $0x88] sm:$0xff]
    %v4971 = vld [vmem:[%s4952 + $0x90] sm:$0xff]
    %v4972 = vld [vmem:[%s4952 + $0x98] sm:$0xff]
    %v4973 = vld [vmem:[%s4952 + $0xa0] sm:$0xff]
    %v4974 = vld [vmem:[%s4952 + $0xa8] sm:$0xff]
    %v4975 = vld [vmem:[%s4952 + $0xb0] sm:$0xff]
    %v4976 = vld [vmem:[%s4952 + $0xb8] sm:$0xff]
    %v4977 = vld [vmem:[%s4952 + $0xc0] sm:$0xff]
    %v4978 = vld [vmem:[%s4952 + $0xc8] sm:$0xff]
    %v4979 = vld [vmem:[%s4952 + $0xd0] sm:$0xff]
    %v4980 = vld [vmem:[%s4952 + $0xd8] sm:$0xff]
    %v4981 = vld [vmem:[%s4952 + $0xe0] sm:$0xff]
    %v4982 = vld [vmem:[%s4952 + $0xe8] sm:$0xff]
    %v4983 = vld [vmem:[%s4952 + $0xf0] sm:$0xff]
    %v4984 = vld [vmem:[%s4952 + $0xf8] sm:$0xff]
    %v4985 = vld [vmem:[%s4952 + $0x100] sm:$0xff]
    %v4986 = vld [vmem:[%s4952 + $0x108] sm:$0xff]
    %v4987 = vld [vmem:[%s4952 + $0x110] sm:$0xff]
    %v4988 = vld [vmem:[%s4952 + $0x118] sm:$0xff]
    %v4989 = vld [vmem:[%s4952 + $0x120] sm:$0xff]
    %v4990 = vld [vmem:[%s4952 + $0x128] sm:$0xff]
    %v4991 = vld [vmem:[%s4952 + $0x130] sm:$0xff]
    %v4992 = vld [vmem:[%s4952 + $0x138] sm:$0xff]
    %v4993 = vld [vmem:[%s4952 + $0x140] sm:$0xff]
    %v4994 = vld [vmem:[%s4952 + $0x148] sm:$0xff]
    %v4995 = vld [vmem:[%s4952 + $0x150] sm:$0xff]
    %v4996 = vld [vmem:[%s4952 + $0x158] sm:$0xff]
    %v4997 = vld [vmem:[%s4952 + $0x160] sm:$0xff]
    %v4998 = vld [vmem:[%s4952 + $0x168] sm:$0xff]
    %v4999 = vld [vmem:[%s4952 + $0x170] sm:$0xff]
    %v5000 = vld [vmem:[%s4952 + $0x178] sm:$0xff]
    %v5001 = vld [vmem:[%s4952 + $0x180] sm:$0xff]
    %v5002 = vld [vmem:[%s4952 + $0x188] sm:$0xff]
    %v5003 = vld [vmem:[%s4952 + $0x190] sm:$0xff]
    %v5004 = vld [vmem:[%s4952 + $0x198] sm:$0xff]
    %v5005 = vld [vmem:[%s4952 + $0x1a0] sm:$0xff]
    %v5006 = vld [vmem:[%s4952 + $0x1a8] sm:$0xff]
    %v5007 = vld [vmem:[%s4952 + $0x1b0] sm:$0xff]
    %v5008 = vld [vmem:[%s4952 + $0x1b8] sm:$0xff]
    %v5009 = vld [vmem:[%s4952 + $0x1c0] sm:$0xff]
    %v5010 = vld [vmem:[%s4952 + $0x1c8] sm:$0xff]
    %v5011 = vld [vmem:[%s4952 + $0x1d0] sm:$0xff]
    %v5012 = vld [vmem:[%s4952 + $0x1d8] sm:$0xff]
    %v5013 = vld [vmem:[%s4952 + $0x1e0] sm:$0xff]
    %v5014 = vld [vmem:[%s4952 + $0x1e8] sm:$0xff]
    %v5015 = vld [vmem:[%s4952 + $0x1f0] sm:$0xff]
    %v5016 = vld [vmem:[%s4952 + $0x1f8] sm:$0xff]
    %v5017 = vld [vmem:[%s4952 + $0x200] sm:$0xff]
    %v5018 = vld [vmem:[%s4952 + $0x208] sm:$0xff]
    %v5019 = vld [vmem:[%s4952 + $0x210] sm:$0xff]
    %v5020 = vld [vmem:[%s4952 + $0x218] sm:$0xff]
    %v5021 = vld [vmem:[%s4952 + $0x220] sm:$0xff]
    %v5022 = vld [vmem:[%s4952 + $0x228] sm:$0xff]
    %v5023 = vld [vmem:[%s4952 + $0x230] sm:$0xff]
    %v5024 = vld [vmem:[%s4952 + $0x238] sm:$0xff]
    %v5025 = vld [vmem:[%s4952 + $0x240] sm:$0xff]
    %v5026 = vld [vmem:[%s4952 + $0x248] sm:$0xff]
    %v5027 = vld [vmem:[%s4952 + $0x250] sm:$0xff]
    %v5028 = vld [vmem:[%s4952 + $0x258] sm:$0xff]
    %v5029 = vld [vmem:[%s4952 + $0x260] sm:$0xff]
    %v5030 = vld [vmem:[%s4952 + $0x268] sm:$0xff]
    %v5031 = vld [vmem:[%s4952 + $0x270] sm:$0xff]
    %v5032 = vld [vmem:[%s4952 + $0x278] sm:$0xff]
    %v5033 = vld [vmem:[%s4952 + $0x280] sm:$0xff]
    %v5034 = vld [vmem:[%s4952 + $0x288] sm:$0xff]
    %v5035 = vld [vmem:[%s4952 + $0x290] sm:$0xff]
    %v5036 = vld [vmem:[%s4952 + $0x298] sm:$0xff]
    %v5037 = vld [vmem:[%s4952 + $0x2a0] sm:$0xff]
    %v5038 = vld [vmem:[%s4952 + $0x2a8] sm:$0xff]
    %v5039 = vld [vmem:[%s4952 + $0x2b0] sm:$0xff]
    %v5040 = vld [vmem:[%s4952 + $0x2b8] sm:$0xff]
    %v5041 = vld [vmem:[%s4952 + $0x2c0] sm:$0xff]
    %v5042 = vld [vmem:[%s4952 + $0x2c8] sm:$0xff]
    %v5043 = vld [vmem:[%s4952 + $0x2d0] sm:$0xff]
    %v5044 = vld [vmem:[%s4952 + $0x2d8] sm:$0xff]
    %v5045 = vld [vmem:[%s4952 + $0x2e0] sm:$0xff]
    %v5046 = vld [vmem:[%s4952 + $0x2e8] sm:$0xff]
    %v5047 = vld [vmem:[%s4952 + $0x2f0] sm:$0xff]
    %v5048 = vld [vmem:[%s4952 + $0x2f8] sm:$0xff]
    %v5049 = vld [vmem:[%s4952 + $0x300] sm:$0xff]
    %v5050 = vld [vmem:[%s4952 + $0x308] sm:$0xff]
    %v5051 = vld [vmem:[%s4952 + $0x310] sm:$0xff]
    %v5052 = vld [vmem:[%s4952 + $0x318] sm:$0xff]
    %v5053 = vld [vmem:[%s4952 + $0x320] sm:$0xff]
    %v5054 = vld [vmem:[%s4952 + $0x328] sm:$0xff]
    %v5055 = vld [vmem:[%s4952 + $0x330] sm:$0xff]
    %v5056 = vld [vmem:[%s4952 + $0x338] sm:$0xff]
    %v5057 = vld [vmem:[%s4952 + $0x340] sm:$0xff]
    %v5058 = vld [vmem:[%s4952 + $0x348] sm:$0xff]
    %v5059 = vld [vmem:[%s4952 + $0x350] sm:$0xff]
    %v5060 = vld [vmem:[%s4952 + $0x358] sm:$0xff]
    %v5061 = vld [vmem:[%s4952 + $0x360] sm:$0xff]
    %v5062 = vld [vmem:[%s4952 + $0x368] sm:$0xff]
    %v5063 = vld [vmem:[%s4952 + $0x370] sm:$0xff]
    %v5064 = vld [vmem:[%s4952 + $0x378] sm:$0xff]
    %v5065 = vld [vmem:[%s4952 + $0x380] sm:$0xff]
    %v5066 = vld [vmem:[%s4952 + $0x388] sm:$0xff]
    %v5067 = vld [vmem:[%s4952 + $0x390] sm:$0xff]
    %v5068 = vld [vmem:[%s4952 + $0x398] sm:$0xff]
    %v5069 = vld [vmem:[%s4952 + $0x3a0] sm:$0xff]
    %v5070 = vld [vmem:[%s4952 + $0x3a8] sm:$0xff]
    %v5071 = vld [vmem:[%s4952 + $0x3b0] sm:$0xff]
    %v5072 = vld [vmem:[%s4952 + $0x3b8] sm:$0xff]
    %v5073 = vld [vmem:[%s4952 + $0x3c0] sm:$0xff]
    %v5074 = vld [vmem:[%s4952 + $0x3c8] sm:$0xff]
    %v5075 = vld [vmem:[%s4952 + $0x3d0] sm:$0xff]
    %v5076 = vld [vmem:[%s4952 + $0x3d8] sm:$0xff]
    %v5077 = vld [vmem:[%s4952 + $0x3e0] sm:$0xff]
    %v5078 = vld [vmem:[%s4952 + $0x3e8] sm:$0xff]
    %v5079 = vld [vmem:[%s4952 + $0x3f0] sm:$0xff]
    %v5080 = vld [vmem:[%s4952 + $0x3f8] sm:$0xff]
    %s5081 = scalar_lea.vmem [#allocation7], 20
    %v5082 = vld [vmem:[%s5081] sm:$0xf]
    %v5084 = vlaneseq
    %v5085 = vshrl.u32 %v5084, 7
    %v5086 = vsub.s32 0, %v5085
    %v5087 = vrot.slane %v5082, %v5086
    %v5088 = vlaneseq
    %v5089 = vshrl.u32 %v5088, 7
    %v5090 = vsub.s32 1, %v5089
    %v5091 = vrot.slane %v5082, %v5090
    %v5092 = vlaneseq
    %v5093 = vshrl.u32 %v5092, 7
    %v5094 = vsub.s32 2, %v5093
    %v5095 = vrot.slane %v5082, %v5094
    %v5096 = vlaneseq
    %v5097 = vshrl.u32 %v5096, 7
    %v5098 = vsub.s32 3, %v5097
    %v5099 = vrot.slane %v5082, %v5098
    %v5232 = vunpack.c.l.b16 %v4953
    %v5233 = vunpack.c.h.b16 %v4953
    %v5234 = vunpack.c.l.b16 %v4954
    %v5235 = vunpack.c.h.b16 %v4954
    %v5236 = vunpack.c.l.b16 %v4955
    %v5237 = vunpack.c.h.b16 %v4955
    %v5238 = vunpack.c.l.b16 %v4956
    %v5239 = vunpack.c.h.b16 %v4956
    %v5240 = vunpack.c.l.b16 %v4957
    %v5241 = vunpack.c.h.b16 %v4957
    %v5242 = vunpack.c.l.b16 %v4958
    %v5243 = vunpack.c.h.b16 %v4958
    %v5244 = vunpack.c.l.b16 %v4959
    %v5245 = vunpack.c.h.b16 %v4959
    %v5246 = vunpack.c.l.b16 %v4960
    %v5247 = vunpack.c.h.b16 %v4960
    %v5248 = vunpack.c.l.b16 %v4961
    %v5249 = vunpack.c.h.b16 %v4961
    %v5250 = vunpack.c.l.b16 %v4962
    %v5251 = vunpack.c.h.b16 %v4962
    %v5252 = vunpack.c.l.b16 %v4963
    %v5253 = vunpack.c.h.b16 %v4963
    %v5254 = vunpack.c.l.b16 %v4964
    %v5255 = vunpack.c.h.b16 %v4964
    %v5256 = vunpack.c.l.b16 %v4965
    %v5257 = vunpack.c.h.b16 %v4965
    %v5258 = vunpack.c.l.b16 %v4966
    %v5259 = vunpack.c.h.b16 %v4966
    %v5260 = vunpack.c.l.b16 %v4967
    %v5261 = vunpack.c.h.b16 %v4967
    %v5262 = vunpack.c.l.b16 %v4968
    %v5263 = vunpack.c.h.b16 %v4968
    %v5264 = vunpack.c.l.b16 %v4969
    %v5265 = vunpack.c.h.b16 %v4969
    %v5266 = vunpack.c.l.b16 %v4970
    %v5267 = vunpack.c.h.b16 %v4970
    %v5268 = vunpack.c.l.b16 %v4971
    %v5269 = vunpack.c.h.b16 %v4971
    %v5270 = vunpack.c.l.b16 %v4972
    %v5271 = vunpack.c.h.b16 %v4972
    %v5272 = vunpack.c.l.b16 %v4973
    %v5273 = vunpack.c.h.b16 %v4973
    %v5274 = vunpack.c.l.b16 %v4974
    %v5275 = vunpack.c.h.b16 %v4974
    %v5276 = vunpack.c.l.b16 %v4975
    %v5277 = vunpack.c.h.b16 %v4975
    %v5278 = vunpack.c.l.b16 %v4976
    %v5279 = vunpack.c.h.b16 %v4976
    %v5280 = vunpack.c.l.b16 %v4977
    %v5281 = vunpack.c.h.b16 %v4977
    %v5282 = vunpack.c.l.b16 %v4978
    %v5283 = vunpack.c.h.b16 %v4978
    %v5284 = vunpack.c.l.b16 %v4979
    %v5285 = vunpack.c.h.b16 %v4979
    %v5286 = vunpack.c.l.b16 %v4980
    %v5287 = vunpack.c.h.b16 %v4980
    %v5288 = vunpack.c.l.b16 %v4981
    %v5289 = vunpack.c.h.b16 %v4981
    %v5290 = vunpack.c.l.b16 %v4982
    %v5291 = vunpack.c.h.b16 %v4982
    %v5292 = vunpack.c.l.b16 %v4983
    %v5293 = vunpack.c.h.b16 %v4983
    %v5294 = vunpack.c.l.b16 %v4984
    %v5295 = vunpack.c.h.b16 %v4984
    %v5296 = vunpack.c.l.b16 %v4985
    %v5297 = vunpack.c.h.b16 %v4985
    %v5298 = vunpack.c.l.b16 %v4986
    %v5299 = vunpack.c.h.b16 %v4986
    %v5300 = vunpack.c.l.b16 %v4987
    %v5301 = vunpack.c.h.b16 %v4987
    %v5302 = vunpack.c.l.b16 %v4988
    %v5303 = vunpack.c.h.b16 %v4988
    %v5304 = vunpack.c.l.b16 %v4989
    %v5305 = vunpack.c.h.b16 %v4989
    %v5306 = vunpack.c.l.b16 %v4990
    %v5307 = vunpack.c.h.b16 %v4990
    %v5308 = vunpack.c.l.b16 %v4991
    %v5309 = vunpack.c.h.b16 %v4991
    %v5310 = vunpack.c.l.b16 %v4992
    %v5311 = vunpack.c.h.b16 %v4992
    %v5312 = vunpack.c.l.b16 %v4993
    %v5313 = vunpack.c.h.b16 %v4993
    %v5314 = vunpack.c.l.b16 %v4994
    %v5315 = vunpack.c.h.b16 %v4994
    %v5316 = vunpack.c.l.b16 %v4995
    %v5317 = vunpack.c.h.b16 %v4995
    %v5318 = vunpack.c.l.b16 %v4996
    %v5319 = vunpack.c.h.b16 %v4996
    %v5320 = vunpack.c.l.b16 %v4997
    %v5321 = vunpack.c.h.b16 %v4997
    %v5322 = vunpack.c.l.b16 %v4998
    %v5323 = vunpack.c.h.b16 %v4998
    %v5324 = vunpack.c.l.b16 %v4999
    %v5325 = vunpack.c.h.b16 %v4999
    %v5326 = vunpack.c.l.b16 %v5000
    %v5327 = vunpack.c.h.b16 %v5000
    %v5328 = vunpack.c.l.b16 %v5001
    %v5329 = vunpack.c.h.b16 %v5001
    %v5330 = vunpack.c.l.b16 %v5002
    %v5331 = vunpack.c.h.b16 %v5002
    %v5332 = vunpack.c.l.b16 %v5003
    %v5333 = vunpack.c.h.b16 %v5003
    %v5334 = vunpack.c.l.b16 %v5004
    %v5335 = vunpack.c.h.b16 %v5004
    %v5336 = vunpack.c.l.b16 %v5005
    %v5337 = vunpack.c.h.b16 %v5005
    %v5338 = vunpack.c.l.b16 %v5006
    %v5339 = vunpack.c.h.b16 %v5006
    %v5340 = vunpack.c.l.b16 %v5007
    %v5341 = vunpack.c.h.b16 %v5007
    %v5342 = vunpack.c.l.b16 %v5008
    %v5343 = vunpack.c.h.b16 %v5008
    %v5344 = vunpack.c.l.b16 %v5009
    %v5345 = vunpack.c.h.b16 %v5009
    %v5346 = vunpack.c.l.b16 %v5010
    %v5347 = vunpack.c.h.b16 %v5010
    %v5348 = vunpack.c.l.b16 %v5011
    %v5349 = vunpack.c.h.b16 %v5011
    %v5350 = vunpack.c.l.b16 %v5012
    %v5351 = vunpack.c.h.b16 %v5012
    %v5352 = vunpack.c.l.b16 %v5013
    %v5353 = vunpack.c.h.b16 %v5013
    %v5354 = vunpack.c.l.b16 %v5014
    %v5355 = vunpack.c.h.b16 %v5014
    %v5356 = vunpack.c.l.b16 %v5015
    %v5357 = vunpack.c.h.b16 %v5015
    %v5358 = vunpack.c.l.b16 %v5016
    %v5359 = vunpack.c.h.b16 %v5016
    %v5360 = vunpack.c.l.b16 %v5017
    %v5361 = vunpack.c.h.b16 %v5017
    %v5362 = vunpack.c.l.b16 %v5018
    %v5363 = vunpack.c.h.b16 %v5018
    %v5364 = vunpack.c.l.b16 %v5019
    %v5365 = vunpack.c.h.b16 %v5019
    %v5366 = vunpack.c.l.b16 %v5020
    %v5367 = vunpack.c.h.b16 %v5020
    %v5368 = vunpack.c.l.b16 %v5021
    %v5369 = vunpack.c.h.b16 %v5021
    %v5370 = vunpack.c.l.b16 %v5022
    %v5371 = vunpack.c.h.b16 %v5022
    %v5372 = vunpack.c.l.b16 %v5023
    %v5373 = vunpack.c.h.b16 %v5023
    %v5374 = vunpack.c.l.b16 %v5024
    %v5375 = vunpack.c.h.b16 %v5024
    %v5376 = vunpack.c.l.b16 %v5025
    %v5377 = vunpack.c.h.b16 %v5025
    %v5378 = vunpack.c.l.b16 %v5026
    %v5379 = vunpack.c.h.b16 %v5026
    %v5380 = vunpack.c.l.b16 %v5027
    %v5381 = vunpack.c.h.b16 %v5027
    %v5382 = vunpack.c.l.b16 %v5028
    %v5383 = vunpack.c.h.b16 %v5028
    %v5384 = vunpack.c.l.b16 %v5029
    %v5385 = vunpack.c.h.b16 %v5029
    %v5386 = vunpack.c.l.b16 %v5030
    %v5387 = vunpack.c.h.b16 %v5030
    %v5388 = vunpack.c.l.b16 %v5031
    %v5389 = vunpack.c.h.b16 %v5031
    %v5390 = vunpack.c.l.b16 %v5032
    %v5391 = vunpack.c.h.b16 %v5032
    %v5392 = vunpack.c.l.b16 %v5033
    %v5393 = vunpack.c.h.b16 %v5033
    %v5394 = vunpack.c.l.b16 %v5034
    %v5395 = vunpack.c.h.b16 %v5034
    %v5396 = vunpack.c.l.b16 %v5035
    %v5397 = vunpack.c.h.b16 %v5035
    %v5398 = vunpack.c.l.b16 %v5036
    %v5399 = vunpack.c.h.b16 %v5036
    %v5400 = vunpack.c.l.b16 %v5037
    %v5401 = vunpack.c.h.b16 %v5037
    %v5402 = vunpack.c.l.b16 %v5038
    %v5403 = vunpack.c.h.b16 %v5038
    %v5404 = vunpack.c.l.b16 %v5039
    %v5405 = vunpack.c.h.b16 %v5039
    %v5406 = vunpack.c.l.b16 %v5040
    %v5407 = vunpack.c.h.b16 %v5040
    %v5408 = vunpack.c.l.b16 %v5041
    %v5409 = vunpack.c.h.b16 %v5041
    %v5410 = vunpack.c.l.b16 %v5042
    %v5411 = vunpack.c.h.b16 %v5042
    %v5412 = vunpack.c.l.b16 %v5043
    %v5413 = vunpack.c.h.b16 %v5043
    %v5414 = vunpack.c.l.b16 %v5044
    %v5415 = vunpack.c.h.b16 %v5044
    %v5416 = vunpack.c.l.b16 %v5045
    %v5417 = vunpack.c.h.b16 %v5045
    %v5418 = vunpack.c.l.b16 %v5046
    %v5419 = vunpack.c.h.b16 %v5046
    %v5420 = vunpack.c.l.b16 %v5047
    %v5421 = vunpack.c.h.b16 %v5047
    %v5422 = vunpack.c.l.b16 %v5048
    %v5423 = vunpack.c.h.b16 %v5048
    %v5424 = vunpack.c.l.b16 %v5049
    %v5425 = vunpack.c.h.b16 %v5049
    %v5426 = vunpack.c.l.b16 %v5050
    %v5427 = vunpack.c.h.b16 %v5050
    %v5428 = vunpack.c.l.b16 %v5051
    %v5429 = vunpack.c.h.b16 %v5051
    %v5430 = vunpack.c.l.b16 %v5052
    %v5431 = vunpack.c.h.b16 %v5052
    %v5432 = vunpack.c.l.b16 %v5053
    %v5433 = vunpack.c.h.b16 %v5053
    %v5434 = vunpack.c.l.b16 %v5054
    %v5435 = vunpack.c.h.b16 %v5054
    %v5436 = vunpack.c.l.b16 %v5055
    %v5437 = vunpack.c.h.b16 %v5055
    %v5438 = vunpack.c.l.b16 %v5056
    %v5439 = vunpack.c.h.b16 %v5056
    %v5440 = vunpack.c.l.b16 %v5057
    %v5441 = vunpack.c.h.b16 %v5057
    %v5442 = vunpack.c.l.b16 %v5058
    %v5443 = vunpack.c.h.b16 %v5058
    %v5444 = vunpack.c.l.b16 %v5059
    %v5445 = vunpack.c.h.b16 %v5059
    %v5446 = vunpack.c.l.b16 %v5060
    %v5447 = vunpack.c.h.b16 %v5060
    %v5448 = vunpack.c.l.b16 %v5061
    %v5449 = vunpack.c.h.b16 %v5061
    %v5450 = vunpack.c.l.b16 %v5062
    %v5451 = vunpack.c.h.b16 %v5062
    %v5452 = vunpack.c.l.b16 %v5063
    %v5453 = vunpack.c.h.b16 %v5063
    %v5454 = vunpack.c.l.b16 %v5064
    %v5455 = vunpack.c.h.b16 %v5064
    %v5456 = vunpack.c.l.b16 %v5065
    %v5457 = vunpack.c.h.b16 %v5065
    %v5458 = vunpack.c.l.b16 %v5066
    %v5459 = vunpack.c.h.b16 %v5066
    %v5460 = vunpack.c.l.b16 %v5067
    %v5461 = vunpack.c.h.b16 %v5067
    %v5462 = vunpack.c.l.b16 %v5068
    %v5463 = vunpack.c.h.b16 %v5068
    %v5464 = vunpack.c.l.b16 %v5069
    %v5465 = vunpack.c.h.b16 %v5069
    %v5466 = vunpack.c.l.b16 %v5070
    %v5467 = vunpack.c.h.b16 %v5070
    %v5468 = vunpack.c.l.b16 %v5071
    %v5469 = vunpack.c.h.b16 %v5071
    %v5470 = vunpack.c.l.b16 %v5072
    %v5471 = vunpack.c.h.b16 %v5072
    %v5472 = vunpack.c.l.b16 %v5073
    %v5473 = vunpack.c.h.b16 %v5073
    %v5474 = vunpack.c.l.b16 %v5074
    %v5475 = vunpack.c.h.b16 %v5074
    %v5476 = vunpack.c.l.b16 %v5075
    %v5477 = vunpack.c.h.b16 %v5075
    %v5478 = vunpack.c.l.b16 %v5076
    %v5479 = vunpack.c.h.b16 %v5076
    %v5480 = vunpack.c.l.b16 %v5077
    %v5481 = vunpack.c.h.b16 %v5077
    %v5482 = vunpack.c.l.b16 %v5078
    %v5483 = vunpack.c.h.b16 %v5078
    %v5484 = vunpack.c.l.b16 %v5079
    %v5485 = vunpack.c.h.b16 %v5079
    %v5486 = vunpack.c.l.b16 %v5080
    %v5487 = vunpack.c.h.b16 %v5080
    %v5488 = vpack.c.b16 %v5236, %v5232
    %v5489 = vpack.c.b16 %v5237, %v5233
    %v5490 = vpack.c.b16 %v5238, %v5234
    %v5491 = vpack.c.b16 %v5239, %v5235
    %v5492 = vpack.c.b16 %v5244, %v5240
    %v5493 = vpack.c.b16 %v5245, %v5241
    %v5494 = vpack.c.b16 %v5246, %v5242
    %v5495 = vpack.c.b16 %v5247, %v5243
    %v5496 = vpack.c.b16 %v5252, %v5248
    %v5497 = vpack.c.b16 %v5253, %v5249
    %v5498 = vpack.c.b16 %v5254, %v5250
    %v5499 = vpack.c.b16 %v5255, %v5251
    %v5500 = vpack.c.b16 %v5260, %v5256
    %v5501 = vpack.c.b16 %v5261, %v5257
    %v5502 = vpack.c.b16 %v5262, %v5258
    %v5503 = vpack.c.b16 %v5263, %v5259
    %v5504 = vpack.c.b16 %v5268, %v5264
    %v5505 = vpack.c.b16 %v5269, %v5265
    %v5506 = vpack.c.b16 %v5270, %v5266
    %v5507 = vpack.c.b16 %v5271, %v5267
    %v5508 = vpack.c.b16 %v5276, %v5272
    %v5509 = vpack.c.b16 %v5277, %v5273
    %v5510 = vpack.c.b16 %v5278, %v5274
    %v5511 = vpack.c.b16 %v5279, %v5275
    %v5512 = vpack.c.b16 %v5284, %v5280
    %v5513 = vpack.c.b16 %v5285, %v5281
    %v5514 = vpack.c.b16 %v5286, %v5282
    %v5515 = vpack.c.b16 %v5287, %v5283
    %v5516 = vpack.c.b16 %v5292, %v5288
    %v5517 = vpack.c.b16 %v5293, %v5289
    %v5518 = vpack.c.b16 %v5294, %v5290
    %v5519 = vpack.c.b16 %v5295, %v5291
    %v5520 = vpack.c.b16 %v5300, %v5296
    %v5521 = vpack.c.b16 %v5301, %v5297
    %v5522 = vpack.c.b16 %v5302, %v5298
    %v5523 = vpack.c.b16 %v5303, %v5299
    %v5524 = vpack.c.b16 %v5308, %v5304
    %v5525 = vpack.c.b16 %v5309, %v5305
    %v5526 = vpack.c.b16 %v5310, %v5306
    %v5527 = vpack.c.b16 %v5311, %v5307
    %v5528 = vpack.c.b16 %v5316, %v5312
    %v5529 = vpack.c.b16 %v5317, %v5313
    %v5530 = vpack.c.b16 %v5318, %v5314
    %v5531 = vpack.c.b16 %v5319, %v5315
    %v5532 = vpack.c.b16 %v5324, %v5320
    %v5533 = vpack.c.b16 %v5325, %v5321
    %v5534 = vpack.c.b16 %v5326, %v5322
    %v5535 = vpack.c.b16 %v5327, %v5323
    %v5536 = vpack.c.b16 %v5332, %v5328
    %v5537 = vpack.c.b16 %v5333, %v5329
    %v5538 = vpack.c.b16 %v5334, %v5330
    %v5539 = vpack.c.b16 %v5335, %v5331
    %v5540 = vpack.c.b16 %v5340, %v5336
    %v5541 = vpack.c.b16 %v5341, %v5337
    %v5542 = vpack.c.b16 %v5342, %v5338
    %v5543 = vpack.c.b16 %v5343, %v5339
    %v5544 = vpack.c.b16 %v5348, %v5344
    %v5545 = vpack.c.b16 %v5349, %v5345
    %v5546 = vpack.c.b16 %v5350, %v5346
    %v5547 = vpack.c.b16 %v5351, %v5347
    %v5548 = vpack.c.b16 %v5356, %v5352
    %v5549 = vpack.c.b16 %v5357, %v5353
    %v5550 = vpack.c.b16 %v5358, %v5354
    %v5551 = vpack.c.b16 %v5359, %v5355
    %v5552 = vpack.c.b16 %v5364, %v5360
    %v5553 = vpack.c.b16 %v5365, %v5361
    %v5554 = vpack.c.b16 %v5366, %v5362
    %v5555 = vpack.c.b16 %v5367, %v5363
    %v5556 = vpack.c.b16 %v5372, %v5368
    %v5557 = vpack.c.b16 %v5373, %v5369
    %v5558 = vpack.c.b16 %v5374, %v5370
    %v5559 = vpack.c.b16 %v5375, %v5371
    %v5560 = vpack.c.b16 %v5380, %v5376
    %v5561 = vpack.c.b16 %v5381, %v5377
    %v5562 = vpack.c.b16 %v5382, %v5378
    %v5563 = vpack.c.b16 %v5383, %v5379
    %v5564 = vpack.c.b16 %v5388, %v5384
    %v5565 = vpack.c.b16 %v5389, %v5385
    %v5566 = vpack.c.b16 %v5390, %v5386
    %v5567 = vpack.c.b16 %v5391, %v5387
    %v5568 = vpack.c.b16 %v5396, %v5392
    %v5569 = vpack.c.b16 %v5397, %v5393
    %v5570 = vpack.c.b16 %v5398, %v5394
    %v5571 = vpack.c.b16 %v5399, %v5395
    %v5572 = vpack.c.b16 %v5404, %v5400
    %v5573 = vpack.c.b16 %v5405, %v5401
    %v5574 = vpack.c.b16 %v5406, %v5402
    %v5575 = vpack.c.b16 %v5407, %v5403
    %v5576 = vpack.c.b16 %v5412, %v5408
    %v5577 = vpack.c.b16 %v5413, %v5409
    %v5578 = vpack.c.b16 %v5414, %v5410
    %v5579 = vpack.c.b16 %v5415, %v5411
    %v5580 = vpack.c.b16 %v5420, %v5416
    %v5581 = vpack.c.b16 %v5421, %v5417
    %v5582 = vpack.c.b16 %v5422, %v5418
    %v5583 = vpack.c.b16 %v5423, %v5419
    %v5584 = vpack.c.b16 %v5428, %v5424
    %v5585 = vpack.c.b16 %v5429, %v5425
    %v5586 = vpack.c.b16 %v5430, %v5426
    %v5587 = vpack.c.b16 %v5431, %v5427
    %v5588 = vpack.c.b16 %v5436, %v5432
    %v5589 = vpack.c.b16 %v5437, %v5433
    %v5590 = vpack.c.b16 %v5438, %v5434
    %v5591 = vpack.c.b16 %v5439, %v5435
    %v5592 = vpack.c.b16 %v5444, %v5440
    %v5593 = vpack.c.b16 %v5445, %v5441
    %v5594 = vpack.c.b16 %v5446, %v5442
    %v5595 = vpack.c.b16 %v5447, %v5443
    %v5596 = vpack.c.b16 %v5452, %v5448
    %v5597 = vpack.c.b16 %v5453, %v5449
    %v5598 = vpack.c.b16 %v5454, %v5450
    %v5599 = vpack.c.b16 %v5455, %v5451
    %v5600 = vpack.c.b16 %v5460, %v5456
    %v5601 = vpack.c.b16 %v5461, %v5457
    %v5602 = vpack.c.b16 %v5462, %v5458
    %v5603 = vpack.c.b16 %v5463, %v5459
    %v5604 = vpack.c.b16 %v5468, %v5464
    %v5605 = vpack.c.b16 %v5469, %v5465
    %v5606 = vpack.c.b16 %v5470, %v5466
    %v5607 = vpack.c.b16 %v5471, %v5467
    %v5608 = vpack.c.b16 %v5476, %v5472
    %v5609 = vpack.c.b16 %v5477, %v5473
    %v5610 = vpack.c.b16 %v5478, %v5474
    %v5611 = vpack.c.b16 %v5479, %v5475
    %v5612 = vpack.c.b16 %v5484, %v5480
    %v5613 = vpack.c.b16 %v5485, %v5481
    %v5614 = vpack.c.b16 %v5486, %v5482
    %v5615 = vpack.c.b16 %v5487, %v5483
    %5744 = vmatprep.subr.bf16.mxu0 %v5517
    %5745 = vmatpush1.bf16.msra.mxu0 %v5516
    %5746 = vmatprep.subr.bf16.mxu0 %v5513
    %5747 = vmatpush1.bf16.msra.mxu0 %v5512
    %5748 = vmatprep.subr.bf16.mxu0 %v5509
    %5749 = vmatpush1.bf16.msra.mxu0 %v5508
    %5750 = vmatprep.subr.bf16.mxu0 %v5505
    %5751 = vmatpush1.bf16.msra.mxu0 %v5504
    %5752 = vmatprep.subr.bf16.mxu0 %v5501
    %5753 = vmatpush1.bf16.msra.mxu0 %v5500
    %5754 = vmatprep.subr.bf16.mxu0 %v5497
    %5755 = vmatpush1.bf16.msra.mxu0 %v5496
    %5756 = vmatprep.subr.bf16.mxu0 %v5493
    %5757 = vmatpush1.bf16.msra.mxu0 %v5492
    %5758 = vmatprep.subr.bf16.mxu0 %v5489
    %5759 = vmatpush1.bf16.msra.mxu0 %v5488
    %5760 = vmatprep.subr.bf16.mxu0 %v5549
    %5761 = vmatpush2.bf16.msra.mxu0 %v5548
    %5762 = vmatprep.subr.bf16.mxu0 %v5545
    %5763 = vmatpush2.bf16.msra.mxu0 %v5544
    %5764 = vmatprep.subr.bf16.mxu0 %v5541
    %5765 = vmatpush2.bf16.msra.mxu0 %v5540
    %5766 = vmatprep.subr.bf16.mxu0 %v5537
    %5767 = vmatpush2.bf16.msra.mxu0 %v5536
    %5768 = vmatprep.subr.bf16.mxu0 %v5533
    %5769 = vmatpush2.bf16.msra.mxu0 %v5532
    %5770 = vmatprep.subr.bf16.mxu0 %v5529
    %5771 = vmatpush2.bf16.msra.mxu0 %v5528
    %5772 = vmatprep.subr.bf16.mxu0 %v5525
    %5773 = vmatpush2.bf16.msra.mxu0 %v5524
    %5774 = vmatprep.subr.bf16.mxu0 %v5521
    %5775 = vmatpush2.bf16.msra.mxu0 %v5520
    %5776 = vmatprep.mubr.bf16.mxu0 %v4949
    %5777 = vmatmul.mubr.bf16.gmra.mxu0 %v4948
    %v5778 = vpop.f32.mrf.mxu0
    %v5779 = vadd.f32 %v5087, %v5778
    %v5780 = vpop.f32.mrf.mxu0
    %v5781 = vadd.f32 %v5091, %v5780
    %v5782 = vpop.f32.mrf.mxu0
    %v5783 = vpop.f32.mrf.mxu0
    %5784 = vdwg.mxu0
    %5785 = vmatprep.subr.bf16.mxu0 %v5581
    %5786 = vmatpush1.bf16.msra.mxu0 %v5580
    %5787 = vmatprep.subr.bf16.mxu0 %v5577
    %5788 = vmatpush1.bf16.msra.mxu0 %v5576
    %5789 = vmatprep.subr.bf16.mxu0 %v5573
    %5790 = vmatpush1.bf16.msra.mxu0 %v5572
    %5791 = vmatprep.subr.bf16.mxu0 %v5569
    %5792 = vmatpush1.bf16.msra.mxu0 %v5568
    %5793 = vmatprep.subr.bf16.mxu0 %v5565
    %5794 = vmatpush1.bf16.msra.mxu0 %v5564
    %5795 = vmatprep.subr.bf16.mxu0 %v5561
    %5796 = vmatpush1.bf16.msra.mxu0 %v5560
    %5797 = vmatprep.subr.bf16.mxu0 %v5557
    %5798 = vmatpush1.bf16.msra.mxu0 %v5556
    %5799 = vmatprep.subr.bf16.mxu0 %v5553
    %5800 = vmatpush1.bf16.msra.mxu0 %v5552
    %5801 = vmatprep.subr.bf16.mxu0 %v5613
    %5802 = vmatpush2.bf16.msra.mxu0 %v5612
    %5803 = vmatprep.subr.bf16.mxu0 %v5609
    %5804 = vmatpush2.bf16.msra.mxu0 %v5608
    %5805 = vmatprep.subr.bf16.mxu0 %v5605
    %5806 = vmatpush2.bf16.msra.mxu0 %v5604
    %5807 = vmatprep.subr.bf16.mxu0 %v5601
    %5808 = vmatpush2.bf16.msra.mxu0 %v5600
    %5809 = vmatprep.subr.bf16.mxu0 %v5597
    %5810 = vmatpush2.bf16.msra.mxu0 %v5596
    %5811 = vmatprep.subr.bf16.mxu0 %v5593
    %5812 = vmatpush2.bf16.msra.mxu0 %v5592
    %5813 = vmatprep.subr.bf16.mxu0 %v5589
    %5814 = vmatpush2.bf16.msra.mxu0 %v5588
    %5815 = vmatprep.subr.bf16.mxu0 %v5585
    %5816 = vmatpush2.bf16.msra.mxu0 %v5584
    %5817 = vmatprep.mubr.bf16.mxu0 %v4951
    %5818 = vmatmul.mubr.bf16.gmra.mxu0 %v4950
    %v5819 = vpop.f32.mrf.mxu0
    %v5820 = vadd.f32 %v5779, %v5819
    %v5821 = vpop.f32.mrf.mxu0
    %v5822 = vadd.f32 %v5781, %v5821
    %v5823 = vpop.f32.mrf.mxu0
    %v5824 = vpop.f32.mrf.mxu0
    %5825 = vdwg.mxu0
    %5826 = vmatprep.subr.bf16.mxu0 %v5519
    %5827 = vmatpush1.bf16.msra.mxu0 %v5518
    %5828 = vmatprep.subr.bf16.mxu0 %v5515
    %5829 = vmatpush1.bf16.msra.mxu0 %v5514
    %5830 = vmatprep.subr.bf16.mxu0 %v5511
    %5831 = vmatpush1.bf16.msra.mxu0 %v5510
    %5832 = vmatprep.subr.bf16.mxu0 %v5507
    %5833 = vmatpush1.bf16.msra.mxu0 %v5506
    %5834 = vmatprep.subr.bf16.mxu0 %v5503
    %5835 = vmatpush1.bf16.msra.mxu0 %v5502
    %5836 = vmatprep.subr.bf16.mxu0 %v5499
    %5837 = vmatpush1.bf16.msra.mxu0 %v5498
    %5838 = vmatprep.subr.bf16.mxu0 %v5495
    %5839 = vmatpush1.bf16.msra.mxu0 %v5494
    %5840 = vmatprep.subr.bf16.mxu0 %v5491
    %5841 = vmatpush1.bf16.msra.mxu0 %v5490
    %5842 = vmatprep.subr.bf16.mxu0 %v5551
    %5843 = vmatpush2.bf16.msra.mxu0 %v5550
    %5844 = vmatprep.subr.bf16.mxu0 %v5547
    %5845 = vmatpush2.bf16.msra.mxu0 %v5546
    %5846 = vmatprep.subr.bf16.mxu0 %v5543
    %5847 = vmatpush2.bf16.msra.mxu0 %v5542
    %5848 = vmatprep.subr.bf16.mxu0 %v5539
    %5849 = vmatpush2.bf16.msra.mxu0 %v5538
    %5850 = vmatprep.subr.bf16.mxu0 %v5535
    %5851 = vmatpush2.bf16.msra.mxu0 %v5534
    %5852 = vmatprep.subr.bf16.mxu0 %v5531
    %5853 = vmatpush2.bf16.msra.mxu0 %v5530
    %5854 = vmatprep.subr.bf16.mxu0 %v5527
    %5855 = vmatpush2.bf16.msra.mxu0 %v5526
    %5856 = vmatprep.subr.bf16.mxu0 %v5523
    %5857 = vmatpush2.bf16.msra.mxu0 %v5522
    %5858 = vmatprep.mubr.bf16.mxu0 %v4949
    %5859 = vmatmul.mubr.bf16.gmra.mxu0 %v4948
    %v5860 = vpop.f32.mrf.mxu0
    %v5861 = vadd.f32 %v5095, %v5860
    %v5862 = vpop.f32.mrf.mxu0
    %v5863 = vadd.f32 %v5099, %v5862
    %v5864 = vpop.f32.mrf.mxu0
    %v5865 = vpop.f32.mrf.mxu0
    %5866 = vdwg.mxu0
    %5867 = vmatprep.subr.bf16.mxu0 %v5583
    %5868 = vmatpush1.bf16.msra.mxu0 %v5582
    %5869 = vmatprep.subr.bf16.mxu0 %v5579
    %5870 = vmatpush1.bf16.msra.mxu0 %v5578
    %5871 = vmatprep.subr.bf16.mxu0 %v5575
    %5872 = vmatpush1.bf16.msra.mxu0 %v5574
    %5873 = vmatprep.subr.bf16.mxu0 %v5571
    %5874 = vmatpush1.bf16.msra.mxu0 %v5570
    %5875 = vmatprep.subr.bf16.mxu0 %v5567
    %5876 = vmatpush1.bf16.msra.mxu0 %v5566
    %5877 = vmatprep.subr.bf16.mxu0 %v5563
    %5878 = vmatpush1.bf16.msra.mxu0 %v5562
    %5879 = vmatprep.subr.bf16.mxu0 %v5559
    %5880 = vmatpush1.bf16.msra.mxu0 %v5558
    %5881 = vmatprep.subr.bf16.mxu0 %v5555
    %5882 = vmatpush1.bf16.msra.mxu0 %v5554
    %5883 = vmatprep.subr.bf16.mxu0 %v5615
    %5884 = vmatpush2.bf16.msra.mxu0 %v5614
    %5885 = vmatprep.subr.bf16.mxu0 %v5611
    %5886 = vmatpush2.bf16.msra.mxu0 %v5610
    %5887 = vmatprep.subr.bf16.mxu0 %v5607
    %5888 = vmatpush2.bf16.msra.mxu0 %v5606
    %5889 = vmatprep.subr.bf16.mxu0 %v5603
    %5890 = vmatpush2.bf16.msra.mxu0 %v5602
    %5891 = vmatprep.subr.bf16.mxu0 %v5599
    %5892 = vmatpush2.bf16.msra.mxu0 %v5598
    %5893 = vmatprep.subr.bf16.mxu0 %v5595
    %5894 = vmatpush2.bf16.msra.mxu0 %v5594
    %5895 = vmatprep.subr.bf16.mxu0 %v5591
    %5896 = vmatpush2.bf16.msra.mxu0 %v5590
    %5897 = vmatprep.subr.bf16.mxu0 %v5587
    %5898 = vmatpush2.bf16.msra.mxu0 %v5586
    %5899 = vmatprep.mubr.bf16.mxu0 %v4951
    %5900 = vmatmul.mubr.bf16.gmra.mxu0 %v4950
    %v5901 = vpop.f32.mrf.mxu0
    %v5902 = vadd.f32 %v5861, %v5901
    %v5903 = vpop.f32.mrf.mxu0
    %v5904 = vadd.f32 %v5863, %v5903
    %v5905 = vpop.f32.mrf.mxu0
    %v5906 = vpop.f32.mrf.mxu0
    %5907 = vdwg.mxu0
    %vm5908 = vcmp.gt.f32.partialorder %v5820, 0.0
    %vm5909 = vcmp.gt.f32.partialorder %v5822, 0.0
    %vm5910 = vcmp.gt.f32.partialorder %v5902, 0.0
    %vm5911 = vcmp.gt.f32.partialorder %v5904, 0.0
    %v5912 = vmul.f32 %v5820, 0.2
    %v5913 = vmul.f32 %v5822, 0.2
    %v5914 = vmul.f32 %v5902, 0.2
    %v5915 = vmul.f32 %v5904, 0.2
    %v5916 = vsel %vm5908, %v5820, %v5912
    %v5917 = vsel %vm5909, %v5822, %v5913
    %v5918 = vsel %vm5910, %v5902, %v5914
    %v5919 = vsel %vm5911, %v5904, %v5915
    %v5920 = vpack.c.bf16 %v5916, %v5916
    %v5921 = vpack.c.bf16 %v5917, %v5917
    %v5922 = vpack.c.bf16 %v5918, %v5918
    %v5923 = vpack.c.bf16 %v5919, %v5919
    %s5924 = scalar_lea.vmem [#allocation5], 6144
    %v5925 = vld [vmem:[%s5924] sm:$0xff]
    %v5926 = vld [vmem:[%s5924 + $0x8] sm:$0xff]
    %v5927 = vld [vmem:[%s5924 + $0x10] sm:$0xff]
    %v5928 = vld [vmem:[%s5924 + $0x18] sm:$0xff]
    %v5929 = vld [vmem:[%s5924 + $0x20] sm:$0xff]
    %v5930 = vld [vmem:[%s5924 + $0x28] sm:$0xff]
    %v5931 = vld [vmem:[%s5924 + $0x30] sm:$0xff]
    %v5932 = vld [vmem:[%s5924 + $0x38] sm:$0xff]
    %v5933 = vld [vmem:[%s5924 + $0x40] sm:$0xff]
    %v5934 = vld [vmem:[%s5924 + $0x48] sm:$0xff]
    %v5935 = vld [vmem:[%s5924 + $0x50] sm:$0xff]
    %v5936 = vld [vmem:[%s5924 + $0x58] sm:$0xff]
    %v5937 = vld [vmem:[%s5924 + $0x60] sm:$0xff]
    %v5938 = vld [vmem:[%s5924 + $0x68] sm:$0xff]
    %v5939 = vld [vmem:[%s5924 + $0x70] sm:$0xff]
    %v5940 = vld [vmem:[%s5924 + $0x78] sm:$0xff]
    %v5941 = vld [vmem:[%s5924 + $0x80] sm:$0xff]
    %v5942 = vld [vmem:[%s5924 + $0x88] sm:$0xff]
    %v5943 = vld [vmem:[%s5924 + $0x90] sm:$0xff]
    %v5944 = vld [vmem:[%s5924 + $0x98] sm:$0xff]
    %v5945 = vld [vmem:[%s5924 + $0xa0] sm:$0xff]
    %v5946 = vld [vmem:[%s5924 + $0xa8] sm:$0xff]
    %v5947 = vld [vmem:[%s5924 + $0xb0] sm:$0xff]
    %v5948 = vld [vmem:[%s5924 + $0xb8] sm:$0xff]
    %v5949 = vld [vmem:[%s5924 + $0xc0] sm:$0xff]
    %v5950 = vld [vmem:[%s5924 + $0xc8] sm:$0xff]
    %v5951 = vld [vmem:[%s5924 + $0xd0] sm:$0xff]
    %v5952 = vld [vmem:[%s5924 + $0xd8] sm:$0xff]
    %v5953 = vld [vmem:[%s5924 + $0xe0] sm:$0xff]
    %v5954 = vld [vmem:[%s5924 + $0xe8] sm:$0xff]
    %v5955 = vld [vmem:[%s5924 + $0xf0] sm:$0xff]
    %v5956 = vld [vmem:[%s5924 + $0xf8] sm:$0xff]
    %v5957 = vld [vmem:[%s5924 + $0x100] sm:$0xff]
    %v5958 = vld [vmem:[%s5924 + $0x108] sm:$0xff]
    %v5959 = vld [vmem:[%s5924 + $0x110] sm:$0xff]
    %v5960 = vld [vmem:[%s5924 + $0x118] sm:$0xff]
    %v5961 = vld [vmem:[%s5924 + $0x120] sm:$0xff]
    %v5962 = vld [vmem:[%s5924 + $0x128] sm:$0xff]
    %v5963 = vld [vmem:[%s5924 + $0x130] sm:$0xff]
    %v5964 = vld [vmem:[%s5924 + $0x138] sm:$0xff]
    %v5965 = vld [vmem:[%s5924 + $0x140] sm:$0xff]
    %v5966 = vld [vmem:[%s5924 + $0x148] sm:$0xff]
    %v5967 = vld [vmem:[%s5924 + $0x150] sm:$0xff]
    %v5968 = vld [vmem:[%s5924 + $0x158] sm:$0xff]
    %v5969 = vld [vmem:[%s5924 + $0x160] sm:$0xff]
    %v5970 = vld [vmem:[%s5924 + $0x168] sm:$0xff]
    %v5971 = vld [vmem:[%s5924 + $0x170] sm:$0xff]
    %v5972 = vld [vmem:[%s5924 + $0x178] sm:$0xff]
    %v5973 = vld [vmem:[%s5924 + $0x180] sm:$0xff]
    %v5974 = vld [vmem:[%s5924 + $0x188] sm:$0xff]
    %v5975 = vld [vmem:[%s5924 + $0x190] sm:$0xff]
    %v5976 = vld [vmem:[%s5924 + $0x198] sm:$0xff]
    %v5977 = vld [vmem:[%s5924 + $0x1a0] sm:$0xff]
    %v5978 = vld [vmem:[%s5924 + $0x1a8] sm:$0xff]
    %v5979 = vld [vmem:[%s5924 + $0x1b0] sm:$0xff]
    %v5980 = vld [vmem:[%s5924 + $0x1b8] sm:$0xff]
    %v5981 = vld [vmem:[%s5924 + $0x1c0] sm:$0xff]
    %v5982 = vld [vmem:[%s5924 + $0x1c8] sm:$0xff]
    %v5983 = vld [vmem:[%s5924 + $0x1d0] sm:$0xff]
    %v5984 = vld [vmem:[%s5924 + $0x1d8] sm:$0xff]
    %v5985 = vld [vmem:[%s5924 + $0x1e0] sm:$0xff]
    %v5986 = vld [vmem:[%s5924 + $0x1e8] sm:$0xff]
    %v5987 = vld [vmem:[%s5924 + $0x1f0] sm:$0xff]
    %v5988 = vld [vmem:[%s5924 + $0x1f8] sm:$0xff]
    %v5989 = vld [vmem:[%s5924 + $0x200] sm:$0xff]
    %v5990 = vld [vmem:[%s5924 + $0x208] sm:$0xff]
    %v5991 = vld [vmem:[%s5924 + $0x210] sm:$0xff]
    %v5992 = vld [vmem:[%s5924 + $0x218] sm:$0xff]
    %v5993 = vld [vmem:[%s5924 + $0x220] sm:$0xff]
    %v5994 = vld [vmem:[%s5924 + $0x228] sm:$0xff]
    %v5995 = vld [vmem:[%s5924 + $0x230] sm:$0xff]
    %v5996 = vld [vmem:[%s5924 + $0x238] sm:$0xff]
    %v5997 = vld [vmem:[%s5924 + $0x240] sm:$0xff]
    %v5998 = vld [vmem:[%s5924 + $0x248] sm:$0xff]
    %v5999 = vld [vmem:[%s5924 + $0x250] sm:$0xff]
    %v6000 = vld [vmem:[%s5924 + $0x258] sm:$0xff]
    %v6001 = vld [vmem:[%s5924 + $0x260] sm:$0xff]
    %v6002 = vld [vmem:[%s5924 + $0x268] sm:$0xff]
    %v6003 = vld [vmem:[%s5924 + $0x270] sm:$0xff]
    %v6004 = vld [vmem:[%s5924 + $0x278] sm:$0xff]
    %v6005 = vld [vmem:[%s5924 + $0x280] sm:$0xff]
    %v6006 = vld [vmem:[%s5924 + $0x288] sm:$0xff]
    %v6007 = vld [vmem:[%s5924 + $0x290] sm:$0xff]
    %v6008 = vld [vmem:[%s5924 + $0x298] sm:$0xff]
    %v6009 = vld [vmem:[%s5924 + $0x2a0] sm:$0xff]
    %v6010 = vld [vmem:[%s5924 + $0x2a8] sm:$0xff]
    %v6011 = vld [vmem:[%s5924 + $0x2b0] sm:$0xff]
    %v6012 = vld [vmem:[%s5924 + $0x2b8] sm:$0xff]
    %v6013 = vld [vmem:[%s5924 + $0x2c0] sm:$0xff]
    %v6014 = vld [vmem:[%s5924 + $0x2c8] sm:$0xff]
    %v6015 = vld [vmem:[%s5924 + $0x2d0] sm:$0xff]
    %v6016 = vld [vmem:[%s5924 + $0x2d8] sm:$0xff]
    %v6017 = vld [vmem:[%s5924 + $0x2e0] sm:$0xff]
    %v6018 = vld [vmem:[%s5924 + $0x2e8] sm:$0xff]
    %v6019 = vld [vmem:[%s5924 + $0x2f0] sm:$0xff]
    %v6020 = vld [vmem:[%s5924 + $0x2f8] sm:$0xff]
    %v6021 = vld [vmem:[%s5924 + $0x300] sm:$0xff]
    %v6022 = vld [vmem:[%s5924 + $0x308] sm:$0xff]
    %v6023 = vld [vmem:[%s5924 + $0x310] sm:$0xff]
    %v6024 = vld [vmem:[%s5924 + $0x318] sm:$0xff]
    %v6025 = vld [vmem:[%s5924 + $0x320] sm:$0xff]
    %v6026 = vld [vmem:[%s5924 + $0x328] sm:$0xff]
    %v6027 = vld [vmem:[%s5924 + $0x330] sm:$0xff]
    %v6028 = vld [vmem:[%s5924 + $0x338] sm:$0xff]
    %v6029 = vld [vmem:[%s5924 + $0x340] sm:$0xff]
    %v6030 = vld [vmem:[%s5924 + $0x348] sm:$0xff]
    %v6031 = vld [vmem:[%s5924 + $0x350] sm:$0xff]
    %v6032 = vld [vmem:[%s5924 + $0x358] sm:$0xff]
    %v6033 = vld [vmem:[%s5924 + $0x360] sm:$0xff]
    %v6034 = vld [vmem:[%s5924 + $0x368] sm:$0xff]
    %v6035 = vld [vmem:[%s5924 + $0x370] sm:$0xff]
    %v6036 = vld [vmem:[%s5924 + $0x378] sm:$0xff]
    %v6037 = vld [vmem:[%s5924 + $0x380] sm:$0xff]
    %v6038 = vld [vmem:[%s5924 + $0x388] sm:$0xff]
    %v6039 = vld [vmem:[%s5924 + $0x390] sm:$0xff]
    %v6040 = vld [vmem:[%s5924 + $0x398] sm:$0xff]
    %v6041 = vld [vmem:[%s5924 + $0x3a0] sm:$0xff]
    %v6042 = vld [vmem:[%s5924 + $0x3a8] sm:$0xff]
    %v6043 = vld [vmem:[%s5924 + $0x3b0] sm:$0xff]
    %v6044 = vld [vmem:[%s5924 + $0x3b8] sm:$0xff]
    %v6045 = vld [vmem:[%s5924 + $0x3c0] sm:$0xff]
    %v6046 = vld [vmem:[%s5924 + $0x3c8] sm:$0xff]
    %v6047 = vld [vmem:[%s5924 + $0x3d0] sm:$0xff]
    %v6048 = vld [vmem:[%s5924 + $0x3d8] sm:$0xff]
    %v6049 = vld [vmem:[%s5924 + $0x3e0] sm:$0xff]
    %v6050 = vld [vmem:[%s5924 + $0x3e8] sm:$0xff]
    %v6051 = vld [vmem:[%s5924 + $0x3f0] sm:$0xff]
    %v6052 = vld [vmem:[%s5924 + $0x3f8] sm:$0xff]
    %s6053 = scalar_lea.vmem [#allocation7], 24
    %v6054 = vld [vmem:[%s6053] sm:$0xf]
    %v6056 = vlaneseq
    %v6057 = vshrl.u32 %v6056, 7
    %v6058 = vsub.s32 0, %v6057
    %v6059 = vrot.slane %v6054, %v6058
    %v6060 = vlaneseq
    %v6061 = vshrl.u32 %v6060, 7
    %v6062 = vsub.s32 1, %v6061
    %v6063 = vrot.slane %v6054, %v6062
    %v6064 = vlaneseq
    %v6065 = vshrl.u32 %v6064, 7
    %v6066 = vsub.s32 2, %v6065
    %v6067 = vrot.slane %v6054, %v6066
    %v6068 = vlaneseq
    %v6069 = vshrl.u32 %v6068, 7
    %v6070 = vsub.s32 3, %v6069
    %v6071 = vrot.slane %v6054, %v6070
    %v6204 = vunpack.c.l.b16 %v5925
    %v6205 = vunpack.c.h.b16 %v5925
    %v6206 = vunpack.c.l.b16 %v5926
    %v6207 = vunpack.c.h.b16 %v5926
    %v6208 = vunpack.c.l.b16 %v5927
    %v6209 = vunpack.c.h.b16 %v5927
    %v6210 = vunpack.c.l.b16 %v5928
    %v6211 = vunpack.c.h.b16 %v5928
    %v6212 = vunpack.c.l.b16 %v5929
    %v6213 = vunpack.c.h.b16 %v5929
    %v6214 = vunpack.c.l.b16 %v5930
    %v6215 = vunpack.c.h.b16 %v5930
    %v6216 = vunpack.c.l.b16 %v5931
    %v6217 = vunpack.c.h.b16 %v5931
    %v6218 = vunpack.c.l.b16 %v5932
    %v6219 = vunpack.c.h.b16 %v5932
    %v6220 = vunpack.c.l.b16 %v5933
    %v6221 = vunpack.c.h.b16 %v5933
    %v6222 = vunpack.c.l.b16 %v5934
    %v6223 = vunpack.c.h.b16 %v5934
    %v6224 = vunpack.c.l.b16 %v5935
    %v6225 = vunpack.c.h.b16 %v5935
    %v6226 = vunpack.c.l.b16 %v5936
    %v6227 = vunpack.c.h.b16 %v5936
    %v6228 = vunpack.c.l.b16 %v5937
    %v6229 = vunpack.c.h.b16 %v5937
    %v6230 = vunpack.c.l.b16 %v5938
    %v6231 = vunpack.c.h.b16 %v5938
    %v6232 = vunpack.c.l.b16 %v5939
    %v6233 = vunpack.c.h.b16 %v5939
    %v6234 = vunpack.c.l.b16 %v5940
    %v6235 = vunpack.c.h.b16 %v5940
    %v6236 = vunpack.c.l.b16 %v5941
    %v6237 = vunpack.c.h.b16 %v5941
    %v6238 = vunpack.c.l.b16 %v5942
    %v6239 = vunpack.c.h.b16 %v5942
    %v6240 = vunpack.c.l.b16 %v5943
    %v6241 = vunpack.c.h.b16 %v5943
    %v6242 = vunpack.c.l.b16 %v5944
    %v6243 = vunpack.c.h.b16 %v5944
    %v6244 = vunpack.c.l.b16 %v5945
    %v6245 = vunpack.c.h.b16 %v5945
    %v6246 = vunpack.c.l.b16 %v5946
    %v6247 = vunpack.c.h.b16 %v5946
    %v6248 = vunpack.c.l.b16 %v5947
    %v6249 = vunpack.c.h.b16 %v5947
    %v6250 = vunpack.c.l.b16 %v5948
    %v6251 = vunpack.c.h.b16 %v5948
    %v6252 = vunpack.c.l.b16 %v5949
    %v6253 = vunpack.c.h.b16 %v5949
    %v6254 = vunpack.c.l.b16 %v5950
    %v6255 = vunpack.c.h.b16 %v5950
    %v6256 = vunpack.c.l.b16 %v5951
    %v6257 = vunpack.c.h.b16 %v5951
    %v6258 = vunpack.c.l.b16 %v5952
    %v6259 = vunpack.c.h.b16 %v5952
    %v6260 = vunpack.c.l.b16 %v5953
    %v6261 = vunpack.c.h.b16 %v5953
    %v6262 = vunpack.c.l.b16 %v5954
    %v6263 = vunpack.c.h.b16 %v5954
    %v6264 = vunpack.c.l.b16 %v5955
    %v6265 = vunpack.c.h.b16 %v5955
    %v6266 = vunpack.c.l.b16 %v5956
    %v6267 = vunpack.c.h.b16 %v5956
    %v6268 = vunpack.c.l.b16 %v5957
    %v6269 = vunpack.c.h.b16 %v5957
    %v6270 = vunpack.c.l.b16 %v5958
    %v6271 = vunpack.c.h.b16 %v5958
    %v6272 = vunpack.c.l.b16 %v5959
    %v6273 = vunpack.c.h.b16 %v5959
    %v6274 = vunpack.c.l.b16 %v5960
    %v6275 = vunpack.c.h.b16 %v5960
    %v6276 = vunpack.c.l.b16 %v5961
    %v6277 = vunpack.c.h.b16 %v5961
    %v6278 = vunpack.c.l.b16 %v5962
    %v6279 = vunpack.c.h.b16 %v5962
    %v6280 = vunpack.c.l.b16 %v5963
    %v6281 = vunpack.c.h.b16 %v5963
    %v6282 = vunpack.c.l.b16 %v5964
    %v6283 = vunpack.c.h.b16 %v5964
    %v6284 = vunpack.c.l.b16 %v5965
    %v6285 = vunpack.c.h.b16 %v5965
    %v6286 = vunpack.c.l.b16 %v5966
    %v6287 = vunpack.c.h.b16 %v5966
    %v6288 = vunpack.c.l.b16 %v5967
    %v6289 = vunpack.c.h.b16 %v5967
    %v6290 = vunpack.c.l.b16 %v5968
    %v6291 = vunpack.c.h.b16 %v5968
    %v6292 = vunpack.c.l.b16 %v5969
    %v6293 = vunpack.c.h.b16 %v5969
    %v6294 = vunpack.c.l.b16 %v5970
    %v6295 = vunpack.c.h.b16 %v5970
    %v6296 = vunpack.c.l.b16 %v5971
    %v6297 = vunpack.c.h.b16 %v5971
    %v6298 = vunpack.c.l.b16 %v5972
    %v6299 = vunpack.c.h.b16 %v5972
    %v6300 = vunpack.c.l.b16 %v5973
    %v6301 = vunpack.c.h.b16 %v5973
    %v6302 = vunpack.c.l.b16 %v5974
    %v6303 = vunpack.c.h.b16 %v5974
    %v6304 = vunpack.c.l.b16 %v5975
    %v6305 = vunpack.c.h.b16 %v5975
    %v6306 = vunpack.c.l.b16 %v5976
    %v6307 = vunpack.c.h.b16 %v5976
    %v6308 = vunpack.c.l.b16 %v5977
    %v6309 = vunpack.c.h.b16 %v5977
    %v6310 = vunpack.c.l.b16 %v5978
    %v6311 = vunpack.c.h.b16 %v5978
    %v6312 = vunpack.c.l.b16 %v5979
    %v6313 = vunpack.c.h.b16 %v5979
    %v6314 = vunpack.c.l.b16 %v5980
    %v6315 = vunpack.c.h.b16 %v5980
    %v6316 = vunpack.c.l.b16 %v5981
    %v6317 = vunpack.c.h.b16 %v5981
    %v6318 = vunpack.c.l.b16 %v5982
    %v6319 = vunpack.c.h.b16 %v5982
    %v6320 = vunpack.c.l.b16 %v5983
    %v6321 = vunpack.c.h.b16 %v5983
    %v6322 = vunpack.c.l.b16 %v5984
    %v6323 = vunpack.c.h.b16 %v5984
    %v6324 = vunpack.c.l.b16 %v5985
    %v6325 = vunpack.c.h.b16 %v5985
    %v6326 = vunpack.c.l.b16 %v5986
    %v6327 = vunpack.c.h.b16 %v5986
    %v6328 = vunpack.c.l.b16 %v5987
    %v6329 = vunpack.c.h.b16 %v5987
    %v6330 = vunpack.c.l.b16 %v5988
    %v6331 = vunpack.c.h.b16 %v5988
    %v6332 = vunpack.c.l.b16 %v5989
    %v6333 = vunpack.c.h.b16 %v5989
    %v6334 = vunpack.c.l.b16 %v5990
    %v6335 = vunpack.c.h.b16 %v5990
    %v6336 = vunpack.c.l.b16 %v5991
    %v6337 = vunpack.c.h.b16 %v5991
    %v6338 = vunpack.c.l.b16 %v5992
    %v6339 = vunpack.c.h.b16 %v5992
    %v6340 = vunpack.c.l.b16 %v5993
    %v6341 = vunpack.c.h.b16 %v5993
    %v6342 = vunpack.c.l.b16 %v5994
    %v6343 = vunpack.c.h.b16 %v5994
    %v6344 = vunpack.c.l.b16 %v5995
    %v6345 = vunpack.c.h.b16 %v5995
    %v6346 = vunpack.c.l.b16 %v5996
    %v6347 = vunpack.c.h.b16 %v5996
    %v6348 = vunpack.c.l.b16 %v5997
    %v6349 = vunpack.c.h.b16 %v5997
    %v6350 = vunpack.c.l.b16 %v5998
    %v6351 = vunpack.c.h.b16 %v5998
    %v6352 = vunpack.c.l.b16 %v5999
    %v6353 = vunpack.c.h.b16 %v5999
    %v6354 = vunpack.c.l.b16 %v6000
    %v6355 = vunpack.c.h.b16 %v6000
    %v6356 = vunpack.c.l.b16 %v6001
    %v6357 = vunpack.c.h.b16 %v6001
    %v6358 = vunpack.c.l.b16 %v6002
    %v6359 = vunpack.c.h.b16 %v6002
    %v6360 = vunpack.c.l.b16 %v6003
    %v6361 = vunpack.c.h.b16 %v6003
    %v6362 = vunpack.c.l.b16 %v6004
    %v6363 = vunpack.c.h.b16 %v6004
    %v6364 = vunpack.c.l.b16 %v6005
    %v6365 = vunpack.c.h.b16 %v6005
    %v6366 = vunpack.c.l.b16 %v6006
    %v6367 = vunpack.c.h.b16 %v6006
    %v6368 = vunpack.c.l.b16 %v6007
    %v6369 = vunpack.c.h.b16 %v6007
    %v6370 = vunpack.c.l.b16 %v6008
    %v6371 = vunpack.c.h.b16 %v6008
    %v6372 = vunpack.c.l.b16 %v6009
    %v6373 = vunpack.c.h.b16 %v6009
    %v6374 = vunpack.c.l.b16 %v6010
    %v6375 = vunpack.c.h.b16 %v6010
    %v6376 = vunpack.c.l.b16 %v6011
    %v6377 = vunpack.c.h.b16 %v6011
    %v6378 = vunpack.c.l.b16 %v6012
    %v6379 = vunpack.c.h.b16 %v6012
    %v6380 = vunpack.c.l.b16 %v6013
    %v6381 = vunpack.c.h.b16 %v6013
    %v6382 = vunpack.c.l.b16 %v6014
    %v6383 = vunpack.c.h.b16 %v6014
    %v6384 = vunpack.c.l.b16 %v6015
    %v6385 = vunpack.c.h.b16 %v6015
    %v6386 = vunpack.c.l.b16 %v6016
    %v6387 = vunpack.c.h.b16 %v6016
    %v6388 = vunpack.c.l.b16 %v6017
    %v6389 = vunpack.c.h.b16 %v6017
    %v6390 = vunpack.c.l.b16 %v6018
    %v6391 = vunpack.c.h.b16 %v6018
    %v6392 = vunpack.c.l.b16 %v6019
    %v6393 = vunpack.c.h.b16 %v6019
    %v6394 = vunpack.c.l.b16 %v6020
    %v6395 = vunpack.c.h.b16 %v6020
    %v6396 = vunpack.c.l.b16 %v6021
    %v6397 = vunpack.c.h.b16 %v6021
    %v6398 = vunpack.c.l.b16 %v6022
    %v6399 = vunpack.c.h.b16 %v6022
    %v6400 = vunpack.c.l.b16 %v6023
    %v6401 = vunpack.c.h.b16 %v6023
    %v6402 = vunpack.c.l.b16 %v6024
    %v6403 = vunpack.c.h.b16 %v6024
    %v6404 = vunpack.c.l.b16 %v6025
    %v6405 = vunpack.c.h.b16 %v6025
    %v6406 = vunpack.c.l.b16 %v6026
    %v6407 = vunpack.c.h.b16 %v6026
    %v6408 = vunpack.c.l.b16 %v6027
    %v6409 = vunpack.c.h.b16 %v6027
    %v6410 = vunpack.c.l.b16 %v6028
    %v6411 = vunpack.c.h.b16 %v6028
    %v6412 = vunpack.c.l.b16 %v6029
    %v6413 = vunpack.c.h.b16 %v6029
    %v6414 = vunpack.c.l.b16 %v6030
    %v6415 = vunpack.c.h.b16 %v6030
    %v6416 = vunpack.c.l.b16 %v6031
    %v6417 = vunpack.c.h.b16 %v6031
    %v6418 = vunpack.c.l.b16 %v6032
    %v6419 = vunpack.c.h.b16 %v6032
    %v6420 = vunpack.c.l.b16 %v6033
    %v6421 = vunpack.c.h.b16 %v6033
    %v6422 = vunpack.c.l.b16 %v6034
    %v6423 = vunpack.c.h.b16 %v6034
    %v6424 = vunpack.c.l.b16 %v6035
    %v6425 = vunpack.c.h.b16 %v6035
    %v6426 = vunpack.c.l.b16 %v6036
    %v6427 = vunpack.c.h.b16 %v6036
    %v6428 = vunpack.c.l.b16 %v6037
    %v6429 = vunpack.c.h.b16 %v6037
    %v6430 = vunpack.c.l.b16 %v6038
    %v6431 = vunpack.c.h.b16 %v6038
    %v6432 = vunpack.c.l.b16 %v6039
    %v6433 = vunpack.c.h.b16 %v6039
    %v6434 = vunpack.c.l.b16 %v6040
    %v6435 = vunpack.c.h.b16 %v6040
    %v6436 = vunpack.c.l.b16 %v6041
    %v6437 = vunpack.c.h.b16 %v6041
    %v6438 = vunpack.c.l.b16 %v6042
    %v6439 = vunpack.c.h.b16 %v6042
    %v6440 = vunpack.c.l.b16 %v6043
    %v6441 = vunpack.c.h.b16 %v6043
    %v6442 = vunpack.c.l.b16 %v6044
    %v6443 = vunpack.c.h.b16 %v6044
    %v6444 = vunpack.c.l.b16 %v6045
    %v6445 = vunpack.c.h.b16 %v6045
    %v6446 = vunpack.c.l.b16 %v6046
    %v6447 = vunpack.c.h.b16 %v6046
    %v6448 = vunpack.c.l.b16 %v6047
    %v6449 = vunpack.c.h.b16 %v6047
    %v6450 = vunpack.c.l.b16 %v6048
    %v6451 = vunpack.c.h.b16 %v6048
    %v6452 = vunpack.c.l.b16 %v6049
    %v6453 = vunpack.c.h.b16 %v6049
    %v6454 = vunpack.c.l.b16 %v6050
    %v6455 = vunpack.c.h.b16 %v6050
    %v6456 = vunpack.c.l.b16 %v6051
    %v6457 = vunpack.c.h.b16 %v6051
    %v6458 = vunpack.c.l.b16 %v6052
    %v6459 = vunpack.c.h.b16 %v6052
    %v6460 = vpack.c.b16 %v6208, %v6204
    %v6461 = vpack.c.b16 %v6209, %v6205
    %v6462 = vpack.c.b16 %v6210, %v6206
    %v6463 = vpack.c.b16 %v6211, %v6207
    %v6464 = vpack.c.b16 %v6216, %v6212
    %v6465 = vpack.c.b16 %v6217, %v6213
    %v6466 = vpack.c.b16 %v6218, %v6214
    %v6467 = vpack.c.b16 %v6219, %v6215
    %v6468 = vpack.c.b16 %v6224, %v6220
    %v6469 = vpack.c.b16 %v6225, %v6221
    %v6470 = vpack.c.b16 %v6226, %v6222
    %v6471 = vpack.c.b16 %v6227, %v6223
    %v6472 = vpack.c.b16 %v6232, %v6228
    %v6473 = vpack.c.b16 %v6233, %v6229
    %v6474 = vpack.c.b16 %v6234, %v6230
    %v6475 = vpack.c.b16 %v6235, %v6231
    %v6476 = vpack.c.b16 %v6240, %v6236
    %v6477 = vpack.c.b16 %v6241, %v6237
    %v6478 = vpack.c.b16 %v6242, %v6238
    %v6479 = vpack.c.b16 %v6243, %v6239
    %v6480 = vpack.c.b16 %v6248, %v6244
    %v6481 = vpack.c.b16 %v6249, %v6245
    %v6482 = vpack.c.b16 %v6250, %v6246
    %v6483 = vpack.c.b16 %v6251, %v6247
    %v6484 = vpack.c.b16 %v6256, %v6252
    %v6485 = vpack.c.b16 %v6257, %v6253
    %v6486 = vpack.c.b16 %v6258, %v6254
    %v6487 = vpack.c.b16 %v6259, %v6255
    %v6488 = vpack.c.b16 %v6264, %v6260
    %v6489 = vpack.c.b16 %v6265, %v6261
    %v6490 = vpack.c.b16 %v6266, %v6262
    %v6491 = vpack.c.b16 %v6267, %v6263
    %v6492 = vpack.c.b16 %v6272, %v6268
    %v6493 = vpack.c.b16 %v6273, %v6269
    %v6494 = vpack.c.b16 %v6274, %v6270
    %v6495 = vpack.c.b16 %v6275, %v6271
    %v6496 = vpack.c.b16 %v6280, %v6276
    %v6497 = vpack.c.b16 %v6281, %v6277
    %v6498 = vpack.c.b16 %v6282, %v6278
    %v6499 = vpack.c.b16 %v6283, %v6279
    %v6500 = vpack.c.b16 %v6288, %v6284
    %v6501 = vpack.c.b16 %v6289, %v6285
    %v6502 = vpack.c.b16 %v6290, %v6286
    %v6503 = vpack.c.b16 %v6291, %v6287
    %v6504 = vpack.c.b16 %v6296, %v6292
    %v6505 = vpack.c.b16 %v6297, %v6293
    %v6506 = vpack.c.b16 %v6298, %v6294
    %v6507 = vpack.c.b16 %v6299, %v6295
    %v6508 = vpack.c.b16 %v6304, %v6300
    %v6509 = vpack.c.b16 %v6305, %v6301
    %v6510 = vpack.c.b16 %v6306, %v6302
    %v6511 = vpack.c.b16 %v6307, %v6303
    %v6512 = vpack.c.b16 %v6312, %v6308
    %v6513 = vpack.c.b16 %v6313, %v6309
    %v6514 = vpack.c.b16 %v6314, %v6310
    %v6515 = vpack.c.b16 %v6315, %v6311
    %v6516 = vpack.c.b16 %v6320, %v6316
    %v6517 = vpack.c.b16 %v6321, %v6317
    %v6518 = vpack.c.b16 %v6322, %v6318
    %v6519 = vpack.c.b16 %v6323, %v6319
    %v6520 = vpack.c.b16 %v6328, %v6324
    %v6521 = vpack.c.b16 %v6329, %v6325
    %v6522 = vpack.c.b16 %v6330, %v6326
    %v6523 = vpack.c.b16 %v6331, %v6327
    %v6524 = vpack.c.b16 %v6336, %v6332
    %v6525 = vpack.c.b16 %v6337, %v6333
    %v6526 = vpack.c.b16 %v6338, %v6334
    %v6527 = vpack.c.b16 %v6339, %v6335
    %v6528 = vpack.c.b16 %v6344, %v6340
    %v6529 = vpack.c.b16 %v6345, %v6341
    %v6530 = vpack.c.b16 %v6346, %v6342
    %v6531 = vpack.c.b16 %v6347, %v6343
    %v6532 = vpack.c.b16 %v6352, %v6348
    %v6533 = vpack.c.b16 %v6353, %v6349
    %v6534 = vpack.c.b16 %v6354, %v6350
    %v6535 = vpack.c.b16 %v6355, %v6351
    %v6536 = vpack.c.b16 %v6360, %v6356
    %v6537 = vpack.c.b16 %v6361, %v6357
    %v6538 = vpack.c.b16 %v6362, %v6358
    %v6539 = vpack.c.b16 %v6363, %v6359
    %v6540 = vpack.c.b16 %v6368, %v6364
    %v6541 = vpack.c.b16 %v6369, %v6365
    %v6542 = vpack.c.b16 %v6370, %v6366
    %v6543 = vpack.c.b16 %v6371, %v6367
    %v6544 = vpack.c.b16 %v6376, %v6372
    %v6545 = vpack.c.b16 %v6377, %v6373
    %v6546 = vpack.c.b16 %v6378, %v6374
    %v6547 = vpack.c.b16 %v6379, %v6375
    %v6548 = vpack.c.b16 %v6384, %v6380
    %v6549 = vpack.c.b16 %v6385, %v6381
    %v6550 = vpack.c.b16 %v6386, %v6382
    %v6551 = vpack.c.b16 %v6387, %v6383
    %v6552 = vpack.c.b16 %v6392, %v6388
    %v6553 = vpack.c.b16 %v6393, %v6389
    %v6554 = vpack.c.b16 %v6394, %v6390
    %v6555 = vpack.c.b16 %v6395, %v6391
    %v6556 = vpack.c.b16 %v6400, %v6396
    %v6557 = vpack.c.b16 %v6401, %v6397
    %v6558 = vpack.c.b16 %v6402, %v6398
    %v6559 = vpack.c.b16 %v6403, %v6399
    %v6560 = vpack.c.b16 %v6408, %v6404
    %v6561 = vpack.c.b16 %v6409, %v6405
    %v6562 = vpack.c.b16 %v6410, %v6406
    %v6563 = vpack.c.b16 %v6411, %v6407
    %v6564 = vpack.c.b16 %v6416, %v6412
    %v6565 = vpack.c.b16 %v6417, %v6413
    %v6566 = vpack.c.b16 %v6418, %v6414
    %v6567 = vpack.c.b16 %v6419, %v6415
    %v6568 = vpack.c.b16 %v6424, %v6420
    %v6569 = vpack.c.b16 %v6425, %v6421
    %v6570 = vpack.c.b16 %v6426, %v6422
    %v6571 = vpack.c.b16 %v6427, %v6423
    %v6572 = vpack.c.b16 %v6432, %v6428
    %v6573 = vpack.c.b16 %v6433, %v6429
    %v6574 = vpack.c.b16 %v6434, %v6430
    %v6575 = vpack.c.b16 %v6435, %v6431
    %v6576 = vpack.c.b16 %v6440, %v6436
    %v6577 = vpack.c.b16 %v6441, %v6437
    %v6578 = vpack.c.b16 %v6442, %v6438
    %v6579 = vpack.c.b16 %v6443, %v6439
    %v6580 = vpack.c.b16 %v6448, %v6444
    %v6581 = vpack.c.b16 %v6449, %v6445
    %v6582 = vpack.c.b16 %v6450, %v6446
    %v6583 = vpack.c.b16 %v6451, %v6447
    %v6584 = vpack.c.b16 %v6456, %v6452
    %v6585 = vpack.c.b16 %v6457, %v6453
    %v6586 = vpack.c.b16 %v6458, %v6454
    %v6587 = vpack.c.b16 %v6459, %v6455
    %6716 = vmatprep.subr.bf16.mxu0 %v6489
    %6717 = vmatpush1.bf16.msra.mxu0 %v6488
    %6718 = vmatprep.subr.bf16.mxu0 %v6485
    %6719 = vmatpush1.bf16.msra.mxu0 %v6484
    %6720 = vmatprep.subr.bf16.mxu0 %v6481
    %6721 = vmatpush1.bf16.msra.mxu0 %v6480
    %6722 = vmatprep.subr.bf16.mxu0 %v6477
    %6723 = vmatpush1.bf16.msra.mxu0 %v6476
    %6724 = vmatprep.subr.bf16.mxu0 %v6473
    %6725 = vmatpush1.bf16.msra.mxu0 %v6472
    %6726 = vmatprep.subr.bf16.mxu0 %v6469
    %6727 = vmatpush1.bf16.msra.mxu0 %v6468
    %6728 = vmatprep.subr.bf16.mxu0 %v6465
    %6729 = vmatpush1.bf16.msra.mxu0 %v6464
    %6730 = vmatprep.subr.bf16.mxu0 %v6461
    %6731 = vmatpush1.bf16.msra.mxu0 %v6460
    %6732 = vmatprep.subr.bf16.mxu0 %v6521
    %6733 = vmatpush2.bf16.msra.mxu0 %v6520
    %6734 = vmatprep.subr.bf16.mxu0 %v6517
    %6735 = vmatpush2.bf16.msra.mxu0 %v6516
    %6736 = vmatprep.subr.bf16.mxu0 %v6513
    %6737 = vmatpush2.bf16.msra.mxu0 %v6512
    %6738 = vmatprep.subr.bf16.mxu0 %v6509
    %6739 = vmatpush2.bf16.msra.mxu0 %v6508
    %6740 = vmatprep.subr.bf16.mxu0 %v6505
    %6741 = vmatpush2.bf16.msra.mxu0 %v6504
    %6742 = vmatprep.subr.bf16.mxu0 %v6501
    %6743 = vmatpush2.bf16.msra.mxu0 %v6500
    %6744 = vmatprep.subr.bf16.mxu0 %v6497
    %6745 = vmatpush2.bf16.msra.mxu0 %v6496
    %6746 = vmatprep.subr.bf16.mxu0 %v6493
    %6747 = vmatpush2.bf16.msra.mxu0 %v6492
    %6748 = vmatprep.mubr.bf16.mxu0 %v5921
    %6749 = vmatmul.mubr.bf16.gmra.mxu0 %v5920
    %v6750 = vpop.f32.mrf.mxu0
    %v6751 = vadd.f32 %v6059, %v6750
    %v6752 = vpop.f32.mrf.mxu0
    %v6753 = vadd.f32 %v6063, %v6752
    %v6754 = vpop.f32.mrf.mxu0
    %v6755 = vpop.f32.mrf.mxu0
    %6756 = vdwg.mxu0
    %6757 = vmatprep.subr.bf16.mxu0 %v6553
    %6758 = vmatpush1.bf16.msra.mxu0 %v6552
    %6759 = vmatprep.subr.bf16.mxu0 %v6549
    %6760 = vmatpush1.bf16.msra.mxu0 %v6548
    %6761 = vmatprep.subr.bf16.mxu0 %v6545
    %6762 = vmatpush1.bf16.msra.mxu0 %v6544
    %6763 = vmatprep.subr.bf16.mxu0 %v6541
    %6764 = vmatpush1.bf16.msra.mxu0 %v6540
    %6765 = vmatprep.subr.bf16.mxu0 %v6537
    %6766 = vmatpush1.bf16.msra.mxu0 %v6536
    %6767 = vmatprep.subr.bf16.mxu0 %v6533
    %6768 = vmatpush1.bf16.msra.mxu0 %v6532
    %6769 = vmatprep.subr.bf16.mxu0 %v6529
    %6770 = vmatpush1.bf16.msra.mxu0 %v6528
    %6771 = vmatprep.subr.bf16.mxu0 %v6525
    %6772 = vmatpush1.bf16.msra.mxu0 %v6524
    %6773 = vmatprep.subr.bf16.mxu0 %v6585
    %6774 = vmatpush2.bf16.msra.mxu0 %v6584
    %6775 = vmatprep.subr.bf16.mxu0 %v6581
    %6776 = vmatpush2.bf16.msra.mxu0 %v6580
    %6777 = vmatprep.subr.bf16.mxu0 %v6577
    %6778 = vmatpush2.bf16.msra.mxu0 %v6576
    %6779 = vmatprep.subr.bf16.mxu0 %v6573
    %6780 = vmatpush2.bf16.msra.mxu0 %v6572
    %6781 = vmatprep.subr.bf16.mxu0 %v6569
    %6782 = vmatpush2.bf16.msra.mxu0 %v6568
    %6783 = vmatprep.subr.bf16.mxu0 %v6565
    %6784 = vmatpush2.bf16.msra.mxu0 %v6564
    %6785 = vmatprep.subr.bf16.mxu0 %v6561
    %6786 = vmatpush2.bf16.msra.mxu0 %v6560
    %6787 = vmatprep.subr.bf16.mxu0 %v6557
    %6788 = vmatpush2.bf16.msra.mxu0 %v6556
    %6789 = vmatprep.mubr.bf16.mxu0 %v5923
    %6790 = vmatmul.mubr.bf16.gmra.mxu0 %v5922
    %v6791 = vpop.f32.mrf.mxu0
    %v6792 = vadd.f32 %v6751, %v6791
    %v6793 = vpop.f32.mrf.mxu0
    %v6794 = vadd.f32 %v6753, %v6793
    %v6795 = vpop.f32.mrf.mxu0
    %v6796 = vpop.f32.mrf.mxu0
    %6797 = vdwg.mxu0
    %6798 = vmatprep.subr.bf16.mxu0 %v6491
    %6799 = vmatpush1.bf16.msra.mxu0 %v6490
    %6800 = vmatprep.subr.bf16.mxu0 %v6487
    %6801 = vmatpush1.bf16.msra.mxu0 %v6486
    %6802 = vmatprep.subr.bf16.mxu0 %v6483
    %6803 = vmatpush1.bf16.msra.mxu0 %v6482
    %6804 = vmatprep.subr.bf16.mxu0 %v6479
    %6805 = vmatpush1.bf16.msra.mxu0 %v6478
    %6806 = vmatprep.subr.bf16.mxu0 %v6475
    %6807 = vmatpush1.bf16.msra.mxu0 %v6474
    %6808 = vmatprep.subr.bf16.mxu0 %v6471
    %6809 = vmatpush1.bf16.msra.mxu0 %v6470
    %6810 = vmatprep.subr.bf16.mxu0 %v6467
    %6811 = vmatpush1.bf16.msra.mxu0 %v6466
    %6812 = vmatprep.subr.bf16.mxu0 %v6463
    %6813 = vmatpush1.bf16.msra.mxu0 %v6462
    %6814 = vmatprep.subr.bf16.mxu0 %v6523
    %6815 = vmatpush2.bf16.msra.mxu0 %v6522
    %6816 = vmatprep.subr.bf16.mxu0 %v6519
    %6817 = vmatpush2.bf16.msra.mxu0 %v6518
    %6818 = vmatprep.subr.bf16.mxu0 %v6515
    %6819 = vmatpush2.bf16.msra.mxu0 %v6514
    %6820 = vmatprep.subr.bf16.mxu0 %v6511
    %6821 = vmatpush2.bf16.msra.mxu0 %v6510
    %6822 = vmatprep.subr.bf16.mxu0 %v6507
    %6823 = vmatpush2.bf16.msra.mxu0 %v6506
    %6824 = vmatprep.subr.bf16.mxu0 %v6503
    %6825 = vmatpush2.bf16.msra.mxu0 %v6502
    %6826 = vmatprep.subr.bf16.mxu0 %v6499
    %6827 = vmatpush2.bf16.msra.mxu0 %v6498
    %6828 = vmatprep.subr.bf16.mxu0 %v6495
    %6829 = vmatpush2.bf16.msra.mxu0 %v6494
    %6830 = vmatprep.mubr.bf16.mxu0 %v5921
    %6831 = vmatmul.mubr.bf16.gmra.mxu0 %v5920
    %v6832 = vpop.f32.mrf.mxu0
    %v6833 = vadd.f32 %v6067, %v6832
    %v6834 = vpop.f32.mrf.mxu0
    %v6835 = vadd.f32 %v6071, %v6834
    %v6836 = vpop.f32.mrf.mxu0
    %v6837 = vpop.f32.mrf.mxu0
    %6838 = vdwg.mxu0
    %6839 = vmatprep.subr.bf16.mxu0 %v6555
    %6840 = vmatpush1.bf16.msra.mxu0 %v6554
    %6841 = vmatprep.subr.bf16.mxu0 %v6551
    %6842 = vmatpush1.bf16.msra.mxu0 %v6550
    %6843 = vmatprep.subr.bf16.mxu0 %v6547
    %6844 = vmatpush1.bf16.msra.mxu0 %v6546
    %6845 = vmatprep.subr.bf16.mxu0 %v6543
    %6846 = vmatpush1.bf16.msra.mxu0 %v6542
    %6847 = vmatprep.subr.bf16.mxu0 %v6539
    %6848 = vmatpush1.bf16.msra.mxu0 %v6538
    %6849 = vmatprep.subr.bf16.mxu0 %v6535
    %6850 = vmatpush1.bf16.msra.mxu0 %v6534
    %6851 = vmatprep.subr.bf16.mxu0 %v6531
    %6852 = vmatpush1.bf16.msra.mxu0 %v6530
    %6853 = vmatprep.subr.bf16.mxu0 %v6527
    %6854 = vmatpush1.bf16.msra.mxu0 %v6526
    %6855 = vmatprep.subr.bf16.mxu0 %v6587
    %6856 = vmatpush2.bf16.msra.mxu0 %v6586
    %6857 = vmatprep.subr.bf16.mxu0 %v6583
    %6858 = vmatpush2.bf16.msra.mxu0 %v6582
    %6859 = vmatprep.subr.bf16.mxu0 %v6579
    %6860 = vmatpush2.bf16.msra.mxu0 %v6578
    %6861 = vmatprep.subr.bf16.mxu0 %v6575
    %6862 = vmatpush2.bf16.msra.mxu0 %v6574
    %6863 = vmatprep.subr.bf16.mxu0 %v6571
    %6864 = vmatpush2.bf16.msra.mxu0 %v6570
    %6865 = vmatprep.subr.bf16.mxu0 %v6567
    %6866 = vmatpush2.bf16.msra.mxu0 %v6566
    %6867 = vmatprep.subr.bf16.mxu0 %v6563
    %6868 = vmatpush2.bf16.msra.mxu0 %v6562
    %6869 = vmatprep.subr.bf16.mxu0 %v6559
    %6870 = vmatpush2.bf16.msra.mxu0 %v6558
    %6871 = vmatprep.mubr.bf16.mxu0 %v5923
    %6872 = vmatmul.mubr.bf16.gmra.mxu0 %v5922
    %v6873 = vpop.f32.mrf.mxu0
    %v6874 = vadd.f32 %v6833, %v6873
    %v6875 = vpop.f32.mrf.mxu0
    %v6876 = vadd.f32 %v6835, %v6875
    %v6877 = vpop.f32.mrf.mxu0
    %v6878 = vpop.f32.mrf.mxu0
    %6879 = vdwg.mxu0
    %vm6880 = vcmp.gt.f32.partialorder %v6792, 0.0
    %vm6881 = vcmp.gt.f32.partialorder %v6794, 0.0
    %vm6882 = vcmp.gt.f32.partialorder %v6874, 0.0
    %vm6883 = vcmp.gt.f32.partialorder %v6876, 0.0
    %v6884 = vmul.f32 %v6792, 0.2
    %v6885 = vmul.f32 %v6794, 0.2
    %v6886 = vmul.f32 %v6874, 0.2
    %v6887 = vmul.f32 %v6876, 0.2
    %v6888 = vsel %vm6880, %v6792, %v6884
    %v6889 = vsel %vm6881, %v6794, %v6885
    %v6890 = vsel %vm6882, %v6874, %v6886
    %v6891 = vsel %vm6883, %v6876, %v6887
    %v6892 = vpack.c.bf16 %v6888, %v6888
    %v6893 = vpack.c.bf16 %v6889, %v6889
    %v6894 = vpack.c.bf16 %v6890, %v6890
    %v6895 = vpack.c.bf16 %v6891, %v6891
    %s6896 = scalar_lea.vmem [#allocation5], 7168
    %v6897 = vld [vmem:[%s6896] sm:$0xff]
    %v6898 = vld [vmem:[%s6896 + $0x8] sm:$0xff]
    %v6899 = vld [vmem:[%s6896 + $0x10] sm:$0xff]
    %v6900 = vld [vmem:[%s6896 + $0x18] sm:$0xff]
    %v6901 = vld [vmem:[%s6896 + $0x20] sm:$0xff]
    %v6902 = vld [vmem:[%s6896 + $0x28] sm:$0xff]
    %v6903 = vld [vmem:[%s6896 + $0x30] sm:$0xff]
    %v6904 = vld [vmem:[%s6896 + $0x38] sm:$0xff]
    %v6905 = vld [vmem:[%s6896 + $0x40] sm:$0xff]
    %v6906 = vld [vmem:[%s6896 + $0x48] sm:$0xff]
    %v6907 = vld [vmem:[%s6896 + $0x50] sm:$0xff]
    %v6908 = vld [vmem:[%s6896 + $0x58] sm:$0xff]
    %v6909 = vld [vmem:[%s6896 + $0x60] sm:$0xff]
    %v6910 = vld [vmem:[%s6896 + $0x68] sm:$0xff]
    %v6911 = vld [vmem:[%s6896 + $0x70] sm:$0xff]
    %v6912 = vld [vmem:[%s6896 + $0x78] sm:$0xff]
    %v6913 = vld [vmem:[%s6896 + $0x80] sm:$0xff]
    %v6914 = vld [vmem:[%s6896 + $0x88] sm:$0xff]
    %v6915 = vld [vmem:[%s6896 + $0x90] sm:$0xff]
    %v6916 = vld [vmem:[%s6896 + $0x98] sm:$0xff]
    %v6917 = vld [vmem:[%s6896 + $0xa0] sm:$0xff]
    %v6918 = vld [vmem:[%s6896 + $0xa8] sm:$0xff]
    %v6919 = vld [vmem:[%s6896 + $0xb0] sm:$0xff]
    %v6920 = vld [vmem:[%s6896 + $0xb8] sm:$0xff]
    %v6921 = vld [vmem:[%s6896 + $0xc0] sm:$0xff]
    %v6922 = vld [vmem:[%s6896 + $0xc8] sm:$0xff]
    %v6923 = vld [vmem:[%s6896 + $0xd0] sm:$0xff]
    %v6924 = vld [vmem:[%s6896 + $0xd8] sm:$0xff]
    %v6925 = vld [vmem:[%s6896 + $0xe0] sm:$0xff]
    %v6926 = vld [vmem:[%s6896 + $0xe8] sm:$0xff]
    %v6927 = vld [vmem:[%s6896 + $0xf0] sm:$0xff]
    %v6928 = vld [vmem:[%s6896 + $0xf8] sm:$0xff]
    %v6929 = vld [vmem:[%s6896 + $0x100] sm:$0xff]
    %v6930 = vld [vmem:[%s6896 + $0x108] sm:$0xff]
    %v6931 = vld [vmem:[%s6896 + $0x110] sm:$0xff]
    %v6932 = vld [vmem:[%s6896 + $0x118] sm:$0xff]
    %v6933 = vld [vmem:[%s6896 + $0x120] sm:$0xff]
    %v6934 = vld [vmem:[%s6896 + $0x128] sm:$0xff]
    %v6935 = vld [vmem:[%s6896 + $0x130] sm:$0xff]
    %v6936 = vld [vmem:[%s6896 + $0x138] sm:$0xff]
    %v6937 = vld [vmem:[%s6896 + $0x140] sm:$0xff]
    %v6938 = vld [vmem:[%s6896 + $0x148] sm:$0xff]
    %v6939 = vld [vmem:[%s6896 + $0x150] sm:$0xff]
    %v6940 = vld [vmem:[%s6896 + $0x158] sm:$0xff]
    %v6941 = vld [vmem:[%s6896 + $0x160] sm:$0xff]
    %v6942 = vld [vmem:[%s6896 + $0x168] sm:$0xff]
    %v6943 = vld [vmem:[%s6896 + $0x170] sm:$0xff]
    %v6944 = vld [vmem:[%s6896 + $0x178] sm:$0xff]
    %v6945 = vld [vmem:[%s6896 + $0x180] sm:$0xff]
    %v6946 = vld [vmem:[%s6896 + $0x188] sm:$0xff]
    %v6947 = vld [vmem:[%s6896 + $0x190] sm:$0xff]
    %v6948 = vld [vmem:[%s6896 + $0x198] sm:$0xff]
    %v6949 = vld [vmem:[%s6896 + $0x1a0] sm:$0xff]
    %v6950 = vld [vmem:[%s6896 + $0x1a8] sm:$0xff]
    %v6951 = vld [vmem:[%s6896 + $0x1b0] sm:$0xff]
    %v6952 = vld [vmem:[%s6896 + $0x1b8] sm:$0xff]
    %v6953 = vld [vmem:[%s6896 + $0x1c0] sm:$0xff]
    %v6954 = vld [vmem:[%s6896 + $0x1c8] sm:$0xff]
    %v6955 = vld [vmem:[%s6896 + $0x1d0] sm:$0xff]
    %v6956 = vld [vmem:[%s6896 + $0x1d8] sm:$0xff]
    %v6957 = vld [vmem:[%s6896 + $0x1e0] sm:$0xff]
    %v6958 = vld [vmem:[%s6896 + $0x1e8] sm:$0xff]
    %v6959 = vld [vmem:[%s6896 + $0x1f0] sm:$0xff]
    %v6960 = vld [vmem:[%s6896 + $0x1f8] sm:$0xff]
    %v6961 = vld [vmem:[%s6896 + $0x200] sm:$0xff]
    %v6962 = vld [vmem:[%s6896 + $0x208] sm:$0xff]
    %v6963 = vld [vmem:[%s6896 + $0x210] sm:$0xff]
    %v6964 = vld [vmem:[%s6896 + $0x218] sm:$0xff]
    %v6965 = vld [vmem:[%s6896 + $0x220] sm:$0xff]
    %v6966 = vld [vmem:[%s6896 + $0x228] sm:$0xff]
    %v6967 = vld [vmem:[%s6896 + $0x230] sm:$0xff]
    %v6968 = vld [vmem:[%s6896 + $0x238] sm:$0xff]
    %v6969 = vld [vmem:[%s6896 + $0x240] sm:$0xff]
    %v6970 = vld [vmem:[%s6896 + $0x248] sm:$0xff]
    %v6971 = vld [vmem:[%s6896 + $0x250] sm:$0xff]
    %v6972 = vld [vmem:[%s6896 + $0x258] sm:$0xff]
    %v6973 = vld [vmem:[%s6896 + $0x260] sm:$0xff]
    %v6974 = vld [vmem:[%s6896 + $0x268] sm:$0xff]
    %v6975 = vld [vmem:[%s6896 + $0x270] sm:$0xff]
    %v6976 = vld [vmem:[%s6896 + $0x278] sm:$0xff]
    %v6977 = vld [vmem:[%s6896 + $0x280] sm:$0xff]
    %v6978 = vld [vmem:[%s6896 + $0x288] sm:$0xff]
    %v6979 = vld [vmem:[%s6896 + $0x290] sm:$0xff]
    %v6980 = vld [vmem:[%s6896 + $0x298] sm:$0xff]
    %v6981 = vld [vmem:[%s6896 + $0x2a0] sm:$0xff]
    %v6982 = vld [vmem:[%s6896 + $0x2a8] sm:$0xff]
    %v6983 = vld [vmem:[%s6896 + $0x2b0] sm:$0xff]
    %v6984 = vld [vmem:[%s6896 + $0x2b8] sm:$0xff]
    %v6985 = vld [vmem:[%s6896 + $0x2c0] sm:$0xff]
    %v6986 = vld [vmem:[%s6896 + $0x2c8] sm:$0xff]
    %v6987 = vld [vmem:[%s6896 + $0x2d0] sm:$0xff]
    %v6988 = vld [vmem:[%s6896 + $0x2d8] sm:$0xff]
    %v6989 = vld [vmem:[%s6896 + $0x2e0] sm:$0xff]
    %v6990 = vld [vmem:[%s6896 + $0x2e8] sm:$0xff]
    %v6991 = vld [vmem:[%s6896 + $0x2f0] sm:$0xff]
    %v6992 = vld [vmem:[%s6896 + $0x2f8] sm:$0xff]
    %v6993 = vld [vmem:[%s6896 + $0x300] sm:$0xff]
    %v6994 = vld [vmem:[%s6896 + $0x308] sm:$0xff]
    %v6995 = vld [vmem:[%s6896 + $0x310] sm:$0xff]
    %v6996 = vld [vmem:[%s6896 + $0x318] sm:$0xff]
    %v6997 = vld [vmem:[%s6896 + $0x320] sm:$0xff]
    %v6998 = vld [vmem:[%s6896 + $0x328] sm:$0xff]
    %v6999 = vld [vmem:[%s6896 + $0x330] sm:$0xff]
    %v7000 = vld [vmem:[%s6896 + $0x338] sm:$0xff]
    %v7001 = vld [vmem:[%s6896 + $0x340] sm:$0xff]
    %v7002 = vld [vmem:[%s6896 + $0x348] sm:$0xff]
    %v7003 = vld [vmem:[%s6896 + $0x350] sm:$0xff]
    %v7004 = vld [vmem:[%s6896 + $0x358] sm:$0xff]
    %v7005 = vld [vmem:[%s6896 + $0x360] sm:$0xff]
    %v7006 = vld [vmem:[%s6896 + $0x368] sm:$0xff]
    %v7007 = vld [vmem:[%s6896 + $0x370] sm:$0xff]
    %v7008 = vld [vmem:[%s6896 + $0x378] sm:$0xff]
    %v7009 = vld [vmem:[%s6896 + $0x380] sm:$0xff]
    %v7010 = vld [vmem:[%s6896 + $0x388] sm:$0xff]
    %v7011 = vld [vmem:[%s6896 + $0x390] sm:$0xff]
    %v7012 = vld [vmem:[%s6896 + $0x398] sm:$0xff]
    %v7013 = vld [vmem:[%s6896 + $0x3a0] sm:$0xff]
    %v7014 = vld [vmem:[%s6896 + $0x3a8] sm:$0xff]
    %v7015 = vld [vmem:[%s6896 + $0x3b0] sm:$0xff]
    %v7016 = vld [vmem:[%s6896 + $0x3b8] sm:$0xff]
    %v7017 = vld [vmem:[%s6896 + $0x3c0] sm:$0xff]
    %v7018 = vld [vmem:[%s6896 + $0x3c8] sm:$0xff]
    %v7019 = vld [vmem:[%s6896 + $0x3d0] sm:$0xff]
    %v7020 = vld [vmem:[%s6896 + $0x3d8] sm:$0xff]
    %v7021 = vld [vmem:[%s6896 + $0x3e0] sm:$0xff]
    %v7022 = vld [vmem:[%s6896 + $0x3e8] sm:$0xff]
    %v7023 = vld [vmem:[%s6896 + $0x3f0] sm:$0xff]
    %v7024 = vld [vmem:[%s6896 + $0x3f8] sm:$0xff]
    %s7025 = scalar_lea.vmem [#allocation7], 28
    %v7026 = vld [vmem:[%s7025] sm:$0xf]
    %v7028 = vlaneseq
    %v7029 = vshrl.u32 %v7028, 7
    %v7030 = vsub.s32 0, %v7029
    %v7031 = vrot.slane %v7026, %v7030
    %v7032 = vlaneseq
    %v7033 = vshrl.u32 %v7032, 7
    %v7034 = vsub.s32 1, %v7033
    %v7035 = vrot.slane %v7026, %v7034
    %v7036 = vlaneseq
    %v7037 = vshrl.u32 %v7036, 7
    %v7038 = vsub.s32 2, %v7037
    %v7039 = vrot.slane %v7026, %v7038
    %v7040 = vlaneseq
    %v7041 = vshrl.u32 %v7040, 7
    %v7042 = vsub.s32 3, %v7041
    %v7043 = vrot.slane %v7026, %v7042
    %v7176 = vunpack.c.l.b16 %v6897
    %v7177 = vunpack.c.h.b16 %v6897
    %v7178 = vunpack.c.l.b16 %v6898
    %v7179 = vunpack.c.h.b16 %v6898
    %v7180 = vunpack.c.l.b16 %v6899
    %v7181 = vunpack.c.h.b16 %v6899
    %v7182 = vunpack.c.l.b16 %v6900
    %v7183 = vunpack.c.h.b16 %v6900
    %v7184 = vunpack.c.l.b16 %v6901
    %v7185 = vunpack.c.h.b16 %v6901
    %v7186 = vunpack.c.l.b16 %v6902
    %v7187 = vunpack.c.h.b16 %v6902
    %v7188 = vunpack.c.l.b16 %v6903
    %v7189 = vunpack.c.h.b16 %v6903
    %v7190 = vunpack.c.l.b16 %v6904
    %v7191 = vunpack.c.h.b16 %v6904
    %v7192 = vunpack.c.l.b16 %v6905
    %v7193 = vunpack.c.h.b16 %v6905
    %v7194 = vunpack.c.l.b16 %v6906
    %v7195 = vunpack.c.h.b16 %v6906
    %v7196 = vunpack.c.l.b16 %v6907
    %v7197 = vunpack.c.h.b16 %v6907
    %v7198 = vunpack.c.l.b16 %v6908
    %v7199 = vunpack.c.h.b16 %v6908
    %v7200 = vunpack.c.l.b16 %v6909
    %v7201 = vunpack.c.h.b16 %v6909
    %v7202 = vunpack.c.l.b16 %v6910
    %v7203 = vunpack.c.h.b16 %v6910
    %v7204 = vunpack.c.l.b16 %v6911
    %v7205 = vunpack.c.h.b16 %v6911
    %v7206 = vunpack.c.l.b16 %v6912
    %v7207 = vunpack.c.h.b16 %v6912
    %v7208 = vunpack.c.l.b16 %v6913
    %v7209 = vunpack.c.h.b16 %v6913
    %v7210 = vunpack.c.l.b16 %v6914
    %v7211 = vunpack.c.h.b16 %v6914
    %v7212 = vunpack.c.l.b16 %v6915
    %v7213 = vunpack.c.h.b16 %v6915
    %v7214 = vunpack.c.l.b16 %v6916
    %v7215 = vunpack.c.h.b16 %v6916
    %v7216 = vunpack.c.l.b16 %v6917
    %v7217 = vunpack.c.h.b16 %v6917
    %v7218 = vunpack.c.l.b16 %v6918
    %v7219 = vunpack.c.h.b16 %v6918
    %v7220 = vunpack.c.l.b16 %v6919
    %v7221 = vunpack.c.h.b16 %v6919
    %v7222 = vunpack.c.l.b16 %v6920
    %v7223 = vunpack.c.h.b16 %v6920
    %v7224 = vunpack.c.l.b16 %v6921
    %v7225 = vunpack.c.h.b16 %v6921
    %v7226 = vunpack.c.l.b16 %v6922
    %v7227 = vunpack.c.h.b16 %v6922
    %v7228 = vunpack.c.l.b16 %v6923
    %v7229 = vunpack.c.h.b16 %v6923
    %v7230 = vunpack.c.l.b16 %v6924
    %v7231 = vunpack.c.h.b16 %v6924
    %v7232 = vunpack.c.l.b16 %v6925
    %v7233 = vunpack.c.h.b16 %v6925
    %v7234 = vunpack.c.l.b16 %v6926
    %v7235 = vunpack.c.h.b16 %v6926
    %v7236 = vunpack.c.l.b16 %v6927
    %v7237 = vunpack.c.h.b16 %v6927
    %v7238 = vunpack.c.l.b16 %v6928
    %v7239 = vunpack.c.h.b16 %v6928
    %v7240 = vunpack.c.l.b16 %v6929
    %v7241 = vunpack.c.h.b16 %v6929
    %v7242 = vunpack.c.l.b16 %v6930
    %v7243 = vunpack.c.h.b16 %v6930
    %v7244 = vunpack.c.l.b16 %v6931
    %v7245 = vunpack.c.h.b16 %v6931
    %v7246 = vunpack.c.l.b16 %v6932
    %v7247 = vunpack.c.h.b16 %v6932
    %v7248 = vunpack.c.l.b16 %v6933
    %v7249 = vunpack.c.h.b16 %v6933
    %v7250 = vunpack.c.l.b16 %v6934
    %v7251 = vunpack.c.h.b16 %v6934
    %v7252 = vunpack.c.l.b16 %v6935
    %v7253 = vunpack.c.h.b16 %v6935
    %v7254 = vunpack.c.l.b16 %v6936
    %v7255 = vunpack.c.h.b16 %v6936
    %v7256 = vunpack.c.l.b16 %v6937
    %v7257 = vunpack.c.h.b16 %v6937
    %v7258 = vunpack.c.l.b16 %v6938
    %v7259 = vunpack.c.h.b16 %v6938
    %v7260 = vunpack.c.l.b16 %v6939
    %v7261 = vunpack.c.h.b16 %v6939
    %v7262 = vunpack.c.l.b16 %v6940
    %v7263 = vunpack.c.h.b16 %v6940
    %v7264 = vunpack.c.l.b16 %v6941
    %v7265 = vunpack.c.h.b16 %v6941
    %v7266 = vunpack.c.l.b16 %v6942
    %v7267 = vunpack.c.h.b16 %v6942
    %v7268 = vunpack.c.l.b16 %v6943
    %v7269 = vunpack.c.h.b16 %v6943
    %v7270 = vunpack.c.l.b16 %v6944
    %v7271 = vunpack.c.h.b16 %v6944
    %v7272 = vunpack.c.l.b16 %v6945
    %v7273 = vunpack.c.h.b16 %v6945
    %v7274 = vunpack.c.l.b16 %v6946
    %v7275 = vunpack.c.h.b16 %v6946
    %v7276 = vunpack.c.l.b16 %v6947
    %v7277 = vunpack.c.h.b16 %v6947
    %v7278 = vunpack.c.l.b16 %v6948
    %v7279 = vunpack.c.h.b16 %v6948
    %v7280 = vunpack.c.l.b16 %v6949
    %v7281 = vunpack.c.h.b16 %v6949
    %v7282 = vunpack.c.l.b16 %v6950
    %v7283 = vunpack.c.h.b16 %v6950
    %v7284 = vunpack.c.l.b16 %v6951
    %v7285 = vunpack.c.h.b16 %v6951
    %v7286 = vunpack.c.l.b16 %v6952
    %v7287 = vunpack.c.h.b16 %v6952
    %v7288 = vunpack.c.l.b16 %v6953
    %v7289 = vunpack.c.h.b16 %v6953
    %v7290 = vunpack.c.l.b16 %v6954
    %v7291 = vunpack.c.h.b16 %v6954
    %v7292 = vunpack.c.l.b16 %v6955
    %v7293 = vunpack.c.h.b16 %v6955
    %v7294 = vunpack.c.l.b16 %v6956
    %v7295 = vunpack.c.h.b16 %v6956
    %v7296 = vunpack.c.l.b16 %v6957
    %v7297 = vunpack.c.h.b16 %v6957
    %v7298 = vunpack.c.l.b16 %v6958
    %v7299 = vunpack.c.h.b16 %v6958
    %v7300 = vunpack.c.l.b16 %v6959
    %v7301 = vunpack.c.h.b16 %v6959
    %v7302 = vunpack.c.l.b16 %v6960
    %v7303 = vunpack.c.h.b16 %v6960
    %v7304 = vunpack.c.l.b16 %v6961
    %v7305 = vunpack.c.h.b16 %v6961
    %v7306 = vunpack.c.l.b16 %v6962
    %v7307 = vunpack.c.h.b16 %v6962
    %v7308 = vunpack.c.l.b16 %v6963
    %v7309 = vunpack.c.h.b16 %v6963
    %v7310 = vunpack.c.l.b16 %v6964
    %v7311 = vunpack.c.h.b16 %v6964
    %v7312 = vunpack.c.l.b16 %v6965
    %v7313 = vunpack.c.h.b16 %v6965
    %v7314 = vunpack.c.l.b16 %v6966
    %v7315 = vunpack.c.h.b16 %v6966
    %v7316 = vunpack.c.l.b16 %v6967
    %v7317 = vunpack.c.h.b16 %v6967
    %v7318 = vunpack.c.l.b16 %v6968
    %v7319 = vunpack.c.h.b16 %v6968
    %v7320 = vunpack.c.l.b16 %v6969
    %v7321 = vunpack.c.h.b16 %v6969
    %v7322 = vunpack.c.l.b16 %v6970
    %v7323 = vunpack.c.h.b16 %v6970
    %v7324 = vunpack.c.l.b16 %v6971
    %v7325 = vunpack.c.h.b16 %v6971
    %v7326 = vunpack.c.l.b16 %v6972
    %v7327 = vunpack.c.h.b16 %v6972
    %v7328 = vunpack.c.l.b16 %v6973
    %v7329 = vunpack.c.h.b16 %v6973
    %v7330 = vunpack.c.l.b16 %v6974
    %v7331 = vunpack.c.h.b16 %v6974
    %v7332 = vunpack.c.l.b16 %v6975
    %v7333 = vunpack.c.h.b16 %v6975
    %v7334 = vunpack.c.l.b16 %v6976
    %v7335 = vunpack.c.h.b16 %v6976
    %v7336 = vunpack.c.l.b16 %v6977
    %v7337 = vunpack.c.h.b16 %v6977
    %v7338 = vunpack.c.l.b16 %v6978
    %v7339 = vunpack.c.h.b16 %v6978
    %v7340 = vunpack.c.l.b16 %v6979
    %v7341 = vunpack.c.h.b16 %v6979
    %v7342 = vunpack.c.l.b16 %v6980
    %v7343 = vunpack.c.h.b16 %v6980
    %v7344 = vunpack.c.l.b16 %v6981
    %v7345 = vunpack.c.h.b16 %v6981
    %v7346 = vunpack.c.l.b16 %v6982
    %v7347 = vunpack.c.h.b16 %v6982
    %v7348 = vunpack.c.l.b16 %v6983
    %v7349 = vunpack.c.h.b16 %v6983
    %v7350 = vunpack.c.l.b16 %v6984
    %v7351 = vunpack.c.h.b16 %v6984
    %v7352 = vunpack.c.l.b16 %v6985
    %v7353 = vunpack.c.h.b16 %v6985
    %v7354 = vunpack.c.l.b16 %v6986
    %v7355 = vunpack.c.h.b16 %v6986
    %v7356 = vunpack.c.l.b16 %v6987
    %v7357 = vunpack.c.h.b16 %v6987
    %v7358 = vunpack.c.l.b16 %v6988
    %v7359 = vunpack.c.h.b16 %v6988
    %v7360 = vunpack.c.l.b16 %v6989
    %v7361 = vunpack.c.h.b16 %v6989
    %v7362 = vunpack.c.l.b16 %v6990
    %v7363 = vunpack.c.h.b16 %v6990
    %v7364 = vunpack.c.l.b16 %v6991
    %v7365 = vunpack.c.h.b16 %v6991
    %v7366 = vunpack.c.l.b16 %v6992
    %v7367 = vunpack.c.h.b16 %v6992
    %v7368 = vunpack.c.l.b16 %v6993
    %v7369 = vunpack.c.h.b16 %v6993
    %v7370 = vunpack.c.l.b16 %v6994
    %v7371 = vunpack.c.h.b16 %v6994
    %v7372 = vunpack.c.l.b16 %v6995
    %v7373 = vunpack.c.h.b16 %v6995
    %v7374 = vunpack.c.l.b16 %v6996
    %v7375 = vunpack.c.h.b16 %v6996
    %v7376 = vunpack.c.l.b16 %v6997
    %v7377 = vunpack.c.h.b16 %v6997
    %v7378 = vunpack.c.l.b16 %v6998
    %v7379 = vunpack.c.h.b16 %v6998
    %v7380 = vunpack.c.l.b16 %v6999
    %v7381 = vunpack.c.h.b16 %v6999
    %v7382 = vunpack.c.l.b16 %v7000
    %v7383 = vunpack.c.h.b16 %v7000
    %v7384 = vunpack.c.l.b16 %v7001
    %v7385 = vunpack.c.h.b16 %v7001
    %v7386 = vunpack.c.l.b16 %v7002
    %v7387 = vunpack.c.h.b16 %v7002
    %v7388 = vunpack.c.l.b16 %v7003
    %v7389 = vunpack.c.h.b16 %v7003
    %v7390 = vunpack.c.l.b16 %v7004
    %v7391 = vunpack.c.h.b16 %v7004
    %v7392 = vunpack.c.l.b16 %v7005
    %v7393 = vunpack.c.h.b16 %v7005
    %v7394 = vunpack.c.l.b16 %v7006
    %v7395 = vunpack.c.h.b16 %v7006
    %v7396 = vunpack.c.l.b16 %v7007
    %v7397 = vunpack.c.h.b16 %v7007
    %v7398 = vunpack.c.l.b16 %v7008
    %v7399 = vunpack.c.h.b16 %v7008
    %v7400 = vunpack.c.l.b16 %v7009
    %v7401 = vunpack.c.h.b16 %v7009
    %v7402 = vunpack.c.l.b16 %v7010
    %v7403 = vunpack.c.h.b16 %v7010
    %v7404 = vunpack.c.l.b16 %v7011
    %v7405 = vunpack.c.h.b16 %v7011
    %v7406 = vunpack.c.l.b16 %v7012
    %v7407 = vunpack.c.h.b16 %v7012
    %v7408 = vunpack.c.l.b16 %v7013
    %v7409 = vunpack.c.h.b16 %v7013
    %v7410 = vunpack.c.l.b16 %v7014
    %v7411 = vunpack.c.h.b16 %v7014
    %v7412 = vunpack.c.l.b16 %v7015
    %v7413 = vunpack.c.h.b16 %v7015
    %v7414 = vunpack.c.l.b16 %v7016
    %v7415 = vunpack.c.h.b16 %v7016
    %v7416 = vunpack.c.l.b16 %v7017
    %v7417 = vunpack.c.h.b16 %v7017
    %v7418 = vunpack.c.l.b16 %v7018
    %v7419 = vunpack.c.h.b16 %v7018
    %v7420 = vunpack.c.l.b16 %v7019
    %v7421 = vunpack.c.h.b16 %v7019
    %v7422 = vunpack.c.l.b16 %v7020
    %v7423 = vunpack.c.h.b16 %v7020
    %v7424 = vunpack.c.l.b16 %v7021
    %v7425 = vunpack.c.h.b16 %v7021
    %v7426 = vunpack.c.l.b16 %v7022
    %v7427 = vunpack.c.h.b16 %v7022
    %v7428 = vunpack.c.l.b16 %v7023
    %v7429 = vunpack.c.h.b16 %v7023
    %v7430 = vunpack.c.l.b16 %v7024
    %v7431 = vunpack.c.h.b16 %v7024
    %v7432 = vpack.c.b16 %v7180, %v7176
    %v7433 = vpack.c.b16 %v7181, %v7177
    %v7434 = vpack.c.b16 %v7182, %v7178
    %v7435 = vpack.c.b16 %v7183, %v7179
    %v7436 = vpack.c.b16 %v7188, %v7184
    %v7437 = vpack.c.b16 %v7189, %v7185
    %v7438 = vpack.c.b16 %v7190, %v7186
    %v7439 = vpack.c.b16 %v7191, %v7187
    %v7440 = vpack.c.b16 %v7196, %v7192
    %v7441 = vpack.c.b16 %v7197, %v7193
    %v7442 = vpack.c.b16 %v7198, %v7194
    %v7443 = vpack.c.b16 %v7199, %v7195
    %v7444 = vpack.c.b16 %v7204, %v7200
    %v7445 = vpack.c.b16 %v7205, %v7201
    %v7446 = vpack.c.b16 %v7206, %v7202
    %v7447 = vpack.c.b16 %v7207, %v7203
    %v7448 = vpack.c.b16 %v7212, %v7208
    %v7449 = vpack.c.b16 %v7213, %v7209
    %v7450 = vpack.c.b16 %v7214, %v7210
    %v7451 = vpack.c.b16 %v7215, %v7211
    %v7452 = vpack.c.b16 %v7220, %v7216
    %v7453 = vpack.c.b16 %v7221, %v7217
    %v7454 = vpack.c.b16 %v7222, %v7218
    %v7455 = vpack.c.b16 %v7223, %v7219
    %v7456 = vpack.c.b16 %v7228, %v7224
    %v7457 = vpack.c.b16 %v7229, %v7225
    %v7458 = vpack.c.b16 %v7230, %v7226
    %v7459 = vpack.c.b16 %v7231, %v7227
    %v7460 = vpack.c.b16 %v7236, %v7232
    %v7461 = vpack.c.b16 %v7237, %v7233
    %v7462 = vpack.c.b16 %v7238, %v7234
    %v7463 = vpack.c.b16 %v7239, %v7235
    %v7464 = vpack.c.b16 %v7244, %v7240
    %v7465 = vpack.c.b16 %v7245, %v7241
    %v7466 = vpack.c.b16 %v7246, %v7242
    %v7467 = vpack.c.b16 %v7247, %v7243
    %v7468 = vpack.c.b16 %v7252, %v7248
    %v7469 = vpack.c.b16 %v7253, %v7249
    %v7470 = vpack.c.b16 %v7254, %v7250
    %v7471 = vpack.c.b16 %v7255, %v7251
    %v7472 = vpack.c.b16 %v7260, %v7256
    %v7473 = vpack.c.b16 %v7261, %v7257
    %v7474 = vpack.c.b16 %v7262, %v7258
    %v7475 = vpack.c.b16 %v7263, %v7259
    %v7476 = vpack.c.b16 %v7268, %v7264
    %v7477 = vpack.c.b16 %v7269, %v7265
    %v7478 = vpack.c.b16 %v7270, %v7266
    %v7479 = vpack.c.b16 %v7271, %v7267
    %v7480 = vpack.c.b16 %v7276, %v7272
    %v7481 = vpack.c.b16 %v7277, %v7273
    %v7482 = vpack.c.b16 %v7278, %v7274
    %v7483 = vpack.c.b16 %v7279, %v7275
    %v7484 = vpack.c.b16 %v7284, %v7280
    %v7485 = vpack.c.b16 %v7285, %v7281
    %v7486 = vpack.c.b16 %v7286, %v7282
    %v7487 = vpack.c.b16 %v7287, %v7283
    %v7488 = vpack.c.b16 %v7292, %v7288
    %v7489 = vpack.c.b16 %v7293, %v7289
    %v7490 = vpack.c.b16 %v7294, %v7290
    %v7491 = vpack.c.b16 %v7295, %v7291
    %v7492 = vpack.c.b16 %v7300, %v7296
    %v7493 = vpack.c.b16 %v7301, %v7297
    %v7494 = vpack.c.b16 %v7302, %v7298
    %v7495 = vpack.c.b16 %v7303, %v7299
    %v7496 = vpack.c.b16 %v7308, %v7304
    %v7497 = vpack.c.b16 %v7309, %v7305
    %v7498 = vpack.c.b16 %v7310, %v7306
    %v7499 = vpack.c.b16 %v7311, %v7307
    %v7500 = vpack.c.b16 %v7316, %v7312
    %v7501 = vpack.c.b16 %v7317, %v7313
    %v7502 = vpack.c.b16 %v7318, %v7314
    %v7503 = vpack.c.b16 %v7319, %v7315
    %v7504 = vpack.c.b16 %v7324, %v7320
    %v7505 = vpack.c.b16 %v7325, %v7321
    %v7506 = vpack.c.b16 %v7326, %v7322
    %v7507 = vpack.c.b16 %v7327, %v7323
    %v7508 = vpack.c.b16 %v7332, %v7328
    %v7509 = vpack.c.b16 %v7333, %v7329
    %v7510 = vpack.c.b16 %v7334, %v7330
    %v7511 = vpack.c.b16 %v7335, %v7331
    %v7512 = vpack.c.b16 %v7340, %v7336
    %v7513 = vpack.c.b16 %v7341, %v7337
    %v7514 = vpack.c.b16 %v7342, %v7338
    %v7515 = vpack.c.b16 %v7343, %v7339
    %v7516 = vpack.c.b16 %v7348, %v7344
    %v7517 = vpack.c.b16 %v7349, %v7345
    %v7518 = vpack.c.b16 %v7350, %v7346
    %v7519 = vpack.c.b16 %v7351, %v7347
    %v7520 = vpack.c.b16 %v7356, %v7352
    %v7521 = vpack.c.b16 %v7357, %v7353
    %v7522 = vpack.c.b16 %v7358, %v7354
    %v7523 = vpack.c.b16 %v7359, %v7355
    %v7524 = vpack.c.b16 %v7364, %v7360
    %v7525 = vpack.c.b16 %v7365, %v7361
    %v7526 = vpack.c.b16 %v7366, %v7362
    %v7527 = vpack.c.b16 %v7367, %v7363
    %v7528 = vpack.c.b16 %v7372, %v7368
    %v7529 = vpack.c.b16 %v7373, %v7369
    %v7530 = vpack.c.b16 %v7374, %v7370
    %v7531 = vpack.c.b16 %v7375, %v7371
    %v7532 = vpack.c.b16 %v7380, %v7376
    %v7533 = vpack.c.b16 %v7381, %v7377
    %v7534 = vpack.c.b16 %v7382, %v7378
    %v7535 = vpack.c.b16 %v7383, %v7379
    %v7536 = vpack.c.b16 %v7388, %v7384
    %v7537 = vpack.c.b16 %v7389, %v7385
    %v7538 = vpack.c.b16 %v7390, %v7386
    %v7539 = vpack.c.b16 %v7391, %v7387
    %v7540 = vpack.c.b16 %v7396, %v7392
    %v7541 = vpack.c.b16 %v7397, %v7393
    %v7542 = vpack.c.b16 %v7398, %v7394
    %v7543 = vpack.c.b16 %v7399, %v7395
    %v7544 = vpack.c.b16 %v7404, %v7400
    %v7545 = vpack.c.b16 %v7405, %v7401
    %v7546 = vpack.c.b16 %v7406, %v7402
    %v7547 = vpack.c.b16 %v7407, %v7403
    %v7548 = vpack.c.b16 %v7412, %v7408
    %v7549 = vpack.c.b16 %v7413, %v7409
    %v7550 = vpack.c.b16 %v7414, %v7410
    %v7551 = vpack.c.b16 %v7415, %v7411
    %v7552 = vpack.c.b16 %v7420, %v7416
    %v7553 = vpack.c.b16 %v7421, %v7417
    %v7554 = vpack.c.b16 %v7422, %v7418
    %v7555 = vpack.c.b16 %v7423, %v7419
    %v7556 = vpack.c.b16 %v7428, %v7424
    %v7557 = vpack.c.b16 %v7429, %v7425
    %v7558 = vpack.c.b16 %v7430, %v7426
    %v7559 = vpack.c.b16 %v7431, %v7427
    %7688 = vmatprep.subr.bf16.mxu0 %v7461
    %7689 = vmatpush1.bf16.msra.mxu0 %v7460
    %7690 = vmatprep.subr.bf16.mxu0 %v7457
    %7691 = vmatpush1.bf16.msra.mxu0 %v7456
    %7692 = vmatprep.subr.bf16.mxu0 %v7453
    %7693 = vmatpush1.bf16.msra.mxu0 %v7452
    %7694 = vmatprep.subr.bf16.mxu0 %v7449
    %7695 = vmatpush1.bf16.msra.mxu0 %v7448
    %7696 = vmatprep.subr.bf16.mxu0 %v7445
    %7697 = vmatpush1.bf16.msra.mxu0 %v7444
    %7698 = vmatprep.subr.bf16.mxu0 %v7441
    %7699 = vmatpush1.bf16.msra.mxu0 %v7440
    %7700 = vmatprep.subr.bf16.mxu0 %v7437
    %7701 = vmatpush1.bf16.msra.mxu0 %v7436
    %7702 = vmatprep.subr.bf16.mxu0 %v7433
    %7703 = vmatpush1.bf16.msra.mxu0 %v7432
    %7704 = vmatprep.subr.bf16.mxu0 %v7493
    %7705 = vmatpush2.bf16.msra.mxu0 %v7492
    %7706 = vmatprep.subr.bf16.mxu0 %v7489
    %7707 = vmatpush2.bf16.msra.mxu0 %v7488
    %7708 = vmatprep.subr.bf16.mxu0 %v7485
    %7709 = vmatpush2.bf16.msra.mxu0 %v7484
    %7710 = vmatprep.subr.bf16.mxu0 %v7481
    %7711 = vmatpush2.bf16.msra.mxu0 %v7480
    %7712 = vmatprep.subr.bf16.mxu0 %v7477
    %7713 = vmatpush2.bf16.msra.mxu0 %v7476
    %7714 = vmatprep.subr.bf16.mxu0 %v7473
    %7715 = vmatpush2.bf16.msra.mxu0 %v7472
    %7716 = vmatprep.subr.bf16.mxu0 %v7469
    %7717 = vmatpush2.bf16.msra.mxu0 %v7468
    %7718 = vmatprep.subr.bf16.mxu0 %v7465
    %7719 = vmatpush2.bf16.msra.mxu0 %v7464
    %7720 = vmatprep.mubr.bf16.mxu0 %v6893
    %7721 = vmatmul.mubr.bf16.gmra.mxu0 %v6892
    %v7722 = vpop.f32.mrf.mxu0
    %v7723 = vadd.f32 %v7031, %v7722
    %v7724 = vpop.f32.mrf.mxu0
    %v7725 = vadd.f32 %v7035, %v7724
    %v7726 = vpop.f32.mrf.mxu0
    %v7727 = vpop.f32.mrf.mxu0
    %7728 = vdwg.mxu0
    %7729 = vmatprep.subr.bf16.mxu0 %v7525
    %7730 = vmatpush1.bf16.msra.mxu0 %v7524
    %7731 = vmatprep.subr.bf16.mxu0 %v7521
    %7732 = vmatpush1.bf16.msra.mxu0 %v7520
    %7733 = vmatprep.subr.bf16.mxu0 %v7517
    %7734 = vmatpush1.bf16.msra.mxu0 %v7516
    %7735 = vmatprep.subr.bf16.mxu0 %v7513
    %7736 = vmatpush1.bf16.msra.mxu0 %v7512
    %7737 = vmatprep.subr.bf16.mxu0 %v7509
    %7738 = vmatpush1.bf16.msra.mxu0 %v7508
    %7739 = vmatprep.subr.bf16.mxu0 %v7505
    %7740 = vmatpush1.bf16.msra.mxu0 %v7504
    %7741 = vmatprep.subr.bf16.mxu0 %v7501
    %7742 = vmatpush1.bf16.msra.mxu0 %v7500
    %7743 = vmatprep.subr.bf16.mxu0 %v7497
    %7744 = vmatpush1.bf16.msra.mxu0 %v7496
    %7745 = vmatprep.subr.bf16.mxu0 %v7557
    %7746 = vmatpush2.bf16.msra.mxu0 %v7556
    %7747 = vmatprep.subr.bf16.mxu0 %v7553
    %7748 = vmatpush2.bf16.msra.mxu0 %v7552
    %7749 = vmatprep.subr.bf16.mxu0 %v7549
    %7750 = vmatpush2.bf16.msra.mxu0 %v7548
    %7751 = vmatprep.subr.bf16.mxu0 %v7545
    %7752 = vmatpush2.bf16.msra.mxu0 %v7544
    %7753 = vmatprep.subr.bf16.mxu0 %v7541
    %7754 = vmatpush2.bf16.msra.mxu0 %v7540
    %7755 = vmatprep.subr.bf16.mxu0 %v7537
    %7756 = vmatpush2.bf16.msra.mxu0 %v7536
    %7757 = vmatprep.subr.bf16.mxu0 %v7533
    %7758 = vmatpush2.bf16.msra.mxu0 %v7532
    %7759 = vmatprep.subr.bf16.mxu0 %v7529
    %7760 = vmatpush2.bf16.msra.mxu0 %v7528
    %7761 = vmatprep.mubr.bf16.mxu0 %v6895
    %7762 = vmatmul.mubr.bf16.gmra.mxu0 %v6894
    %v7763 = vpop.f32.mrf.mxu0
    %v7764 = vadd.f32 %v7723, %v7763
    %v7765 = vpop.f32.mrf.mxu0
    %v7766 = vadd.f32 %v7725, %v7765
    %v7767 = vpop.f32.mrf.mxu0
    %v7768 = vpop.f32.mrf.mxu0
    %7769 = vdwg.mxu0
    %7770 = vmatprep.subr.bf16.mxu0 %v7463
    %7771 = vmatpush1.bf16.msra.mxu0 %v7462
    %7772 = vmatprep.subr.bf16.mxu0 %v7459
    %7773 = vmatpush1.bf16.msra.mxu0 %v7458
    %7774 = vmatprep.subr.bf16.mxu0 %v7455
    %7775 = vmatpush1.bf16.msra.mxu0 %v7454
    %7776 = vmatprep.subr.bf16.mxu0 %v7451
    %7777 = vmatpush1.bf16.msra.mxu0 %v7450
    %7778 = vmatprep.subr.bf16.mxu0 %v7447
    %7779 = vmatpush1.bf16.msra.mxu0 %v7446
    %7780 = vmatprep.subr.bf16.mxu0 %v7443
    %7781 = vmatpush1.bf16.msra.mxu0 %v7442
    %7782 = vmatprep.subr.bf16.mxu0 %v7439
    %7783 = vmatpush1.bf16.msra.mxu0 %v7438
    %7784 = vmatprep.subr.bf16.mxu0 %v7435
    %7785 = vmatpush1.bf16.msra.mxu0 %v7434
    %7786 = vmatprep.subr.bf16.mxu0 %v7495
    %7787 = vmatpush2.bf16.msra.mxu0 %v7494
    %7788 = vmatprep.subr.bf16.mxu0 %v7491
    %7789 = vmatpush2.bf16.msra.mxu0 %v7490
    %7790 = vmatprep.subr.bf16.mxu0 %v7487
    %7791 = vmatpush2.bf16.msra.mxu0 %v7486
    %7792 = vmatprep.subr.bf16.mxu0 %v7483
    %7793 = vmatpush2.bf16.msra.mxu0 %v7482
    %7794 = vmatprep.subr.bf16.mxu0 %v7479
    %7795 = vmatpush2.bf16.msra.mxu0 %v7478
    %7796 = vmatprep.subr.bf16.mxu0 %v7475
    %7797 = vmatpush2.bf16.msra.mxu0 %v7474
    %7798 = vmatprep.subr.bf16.mxu0 %v7471
    %7799 = vmatpush2.bf16.msra.mxu0 %v7470
    %7800 = vmatprep.subr.bf16.mxu0 %v7467
    %7801 = vmatpush2.bf16.msra.mxu0 %v7466
    %7802 = vmatprep.mubr.bf16.mxu0 %v6893
    %7803 = vmatmul.mubr.bf16.gmra.mxu0 %v6892
    %v7804 = vpop.f32.mrf.mxu0
    %v7805 = vadd.f32 %v7039, %v7804
    %v7806 = vpop.f32.mrf.mxu0
    %v7807 = vadd.f32 %v7043, %v7806
    %v7808 = vpop.f32.mrf.mxu0
    %v7809 = vpop.f32.mrf.mxu0
    %7810 = vdwg.mxu0
    %7811 = vmatprep.subr.bf16.mxu0 %v7527
    %7812 = vmatpush1.bf16.msra.mxu0 %v7526
    %7813 = vmatprep.subr.bf16.mxu0 %v7523
    %7814 = vmatpush1.bf16.msra.mxu0 %v7522
    %7815 = vmatprep.subr.bf16.mxu0 %v7519
    %7816 = vmatpush1.bf16.msra.mxu0 %v7518
    %7817 = vmatprep.subr.bf16.mxu0 %v7515
    %7818 = vmatpush1.bf16.msra.mxu0 %v7514
    %7819 = vmatprep.subr.bf16.mxu0 %v7511
    %7820 = vmatpush1.bf16.msra.mxu0 %v7510
    %7821 = vmatprep.subr.bf16.mxu0 %v7507
    %7822 = vmatpush1.bf16.msra.mxu0 %v7506
    %7823 = vmatprep.subr.bf16.mxu0 %v7503
    %7824 = vmatpush1.bf16.msra.mxu0 %v7502
    %7825 = vmatprep.subr.bf16.mxu0 %v7499
    %7826 = vmatpush1.bf16.msra.mxu0 %v7498
    %7827 = vmatprep.subr.bf16.mxu0 %v7559
    %7828 = vmatpush2.bf16.msra.mxu0 %v7558
    %7829 = vmatprep.subr.bf16.mxu0 %v7555
    %7830 = vmatpush2.bf16.msra.mxu0 %v7554
    %7831 = vmatprep.subr.bf16.mxu0 %v7551
    %7832 = vmatpush2.bf16.msra.mxu0 %v7550
    %7833 = vmatprep.subr.bf16.mxu0 %v7547
    %7834 = vmatpush2.bf16.msra.mxu0 %v7546
    %7835 = vmatprep.subr.bf16.mxu0 %v7543
    %7836 = vmatpush2.bf16.msra.mxu0 %v7542
    %7837 = vmatprep.subr.bf16.mxu0 %v7539
    %7838 = vmatpush2.bf16.msra.mxu0 %v7538
    %7839 = vmatprep.subr.bf16.mxu0 %v7535
    %7840 = vmatpush2.bf16.msra.mxu0 %v7534
    %7841 = vmatprep.subr.bf16.mxu0 %v7531
    %7842 = vmatpush2.bf16.msra.mxu0 %v7530
    %7843 = vmatprep.mubr.bf16.mxu0 %v6895
    %7844 = vmatmul.mubr.bf16.gmra.mxu0 %v6894
    %v7845 = vpop.f32.mrf.mxu0
    %v7846 = vadd.f32 %v7805, %v7845
    %v7847 = vpop.f32.mrf.mxu0
    %v7848 = vadd.f32 %v7807, %v7847
    %v7849 = vpop.f32.mrf.mxu0
    %v7850 = vpop.f32.mrf.mxu0
    %7851 = vdwg.mxu0
    %vm7852 = vcmp.gt.f32.partialorder %v7764, 0.0
    %vm7853 = vcmp.gt.f32.partialorder %v7766, 0.0
    %vm7854 = vcmp.gt.f32.partialorder %v7846, 0.0
    %vm7855 = vcmp.gt.f32.partialorder %v7848, 0.0
    %v7856 = vmul.f32 %v7764, 0.2
    %v7857 = vmul.f32 %v7766, 0.2
    %v7858 = vmul.f32 %v7846, 0.2
    %v7859 = vmul.f32 %v7848, 0.2
    %v7860 = vsel %vm7852, %v7764, %v7856
    %v7861 = vsel %vm7853, %v7766, %v7857
    %v7862 = vsel %vm7854, %v7846, %v7858
    %v7863 = vsel %vm7855, %v7848, %v7859
    %v7864 = vpack.c.bf16 %v7860, %v7860
    %v7865 = vpack.c.bf16 %v7861, %v7861
    %v7866 = vpack.c.bf16 %v7862, %v7862
    %v7867 = vpack.c.bf16 %v7863, %v7863
    %v7868 = vld [vmem:[#allocation8] sm:$0xf]
    %v7869 = vld [vmem:[#allocation8 + $0x4] sm:$0xf]
    %v7870 = vld [vmem:[#allocation8 + $0x8] sm:$0xf]
    %v7871 = vld [vmem:[#allocation8 + $0xc] sm:$0xf]
    %v7872 = vld [vmem:[#allocation8 + $0x10] sm:$0xf]
    %v7873 = vld [vmem:[#allocation8 + $0x14] sm:$0xf]
    %v7874 = vld [vmem:[#allocation8 + $0x18] sm:$0xf]
    %v7875 = vld [vmem:[#allocation8 + $0x1c] sm:$0xf]
    %v7876 = vld [vmem:[#allocation8 + $0x20] sm:$0xf]
    %v7877 = vld [vmem:[#allocation8 + $0x24] sm:$0xf]
    %v7878 = vld [vmem:[#allocation8 + $0x28] sm:$0xf]
    %v7879 = vld [vmem:[#allocation8 + $0x2c] sm:$0xf]
    %v7880 = vld [vmem:[#allocation8 + $0x30] sm:$0xf]
    %v7881 = vld [vmem:[#allocation8 + $0x34] sm:$0xf]
    %v7882 = vld [vmem:[#allocation8 + $0x38] sm:$0xf]
    %v7883 = vld [vmem:[#allocation8 + $0x3c] sm:$0xf]
    %v7884 = vld [vmem:[#allocation8 + $0x40] sm:$0xf]
    %v7885 = vld [vmem:[#allocation8 + $0x44] sm:$0xf]
    %v7886 = vld [vmem:[#allocation8 + $0x48] sm:$0xf]
    %v7887 = vld [vmem:[#allocation8 + $0x4c] sm:$0xf]
    %v7888 = vld [vmem:[#allocation8 + $0x50] sm:$0xf]
    %v7889 = vld [vmem:[#allocation8 + $0x54] sm:$0xf]
    %v7890 = vld [vmem:[#allocation8 + $0x58] sm:$0xf]
    %v7891 = vld [vmem:[#allocation8 + $0x5c] sm:$0xf]
    %v7892 = vld [vmem:[#allocation8 + $0x60] sm:$0xf]
    %v7893 = vld [vmem:[#allocation8 + $0x64] sm:$0xf]
    %v7894 = vld [vmem:[#allocation8 + $0x68] sm:$0xf]
    %v7895 = vld [vmem:[#allocation8 + $0x6c] sm:$0xf]
    %v7896 = vld [vmem:[#allocation8 + $0x70] sm:$0xf]
    %v7897 = vld [vmem:[#allocation8 + $0x74] sm:$0xf]
    %v7898 = vld [vmem:[#allocation8 + $0x78] sm:$0xf]
    %v7899 = vld [vmem:[#allocation8 + $0x7c] sm:$0xf]
    %v7900 = vld [vmem:[#allocation8 + $0x80] sm:$0xf]
    %v7901 = vld [vmem:[#allocation8 + $0x84] sm:$0xf]
    %v7902 = vld [vmem:[#allocation8 + $0x88] sm:$0xf]
    %v7903 = vld [vmem:[#allocation8 + $0x8c] sm:$0xf]
    %v7904 = vld [vmem:[#allocation8 + $0x90] sm:$0xf]
    %v7905 = vld [vmem:[#allocation8 + $0x94] sm:$0xf]
    %v7906 = vld [vmem:[#allocation8 + $0x98] sm:$0xf]
    %v7907 = vld [vmem:[#allocation8 + $0x9c] sm:$0xf]
    %v7908 = vld [vmem:[#allocation8 + $0xa0] sm:$0xf]
    %v7909 = vld [vmem:[#allocation8 + $0xa4] sm:$0xf]
    %v7910 = vld [vmem:[#allocation8 + $0xa8] sm:$0xf]
    %v7911 = vld [vmem:[#allocation8 + $0xac] sm:$0xf]
    %v7912 = vld [vmem:[#allocation8 + $0xb0] sm:$0xf]
    %v7913 = vld [vmem:[#allocation8 + $0xb4] sm:$0xf]
    %v7914 = vld [vmem:[#allocation8 + $0xb8] sm:$0xf]
    %v7915 = vld [vmem:[#allocation8 + $0xbc] sm:$0xf]
    %v7916 = vld [vmem:[#allocation8 + $0xc0] sm:$0xf]
    %v7917 = vld [vmem:[#allocation8 + $0xc4] sm:$0xf]
    %v7918 = vld [vmem:[#allocation8 + $0xc8] sm:$0xf]
    %v7919 = vld [vmem:[#allocation8 + $0xcc] sm:$0xf]
    %v7920 = vld [vmem:[#allocation8 + $0xd0] sm:$0xf]
    %v7921 = vld [vmem:[#allocation8 + $0xd4] sm:$0xf]
    %v7922 = vld [vmem:[#allocation8 + $0xd8] sm:$0xf]
    %v7923 = vld [vmem:[#allocation8 + $0xdc] sm:$0xf]
    %v7924 = vld [vmem:[#allocation8 + $0xe0] sm:$0xf]
    %v7925 = vld [vmem:[#allocation8 + $0xe4] sm:$0xf]
    %v7926 = vld [vmem:[#allocation8 + $0xe8] sm:$0xf]
    %v7927 = vld [vmem:[#allocation8 + $0xec] sm:$0xf]
    %v7928 = vld [vmem:[#allocation8 + $0xf0] sm:$0xf]
    %v7929 = vld [vmem:[#allocation8 + $0xf4] sm:$0xf]
    %v7930 = vld [vmem:[#allocation8 + $0xf8] sm:$0xf]
    %v7931 = vld [vmem:[#allocation8 + $0xfc] sm:$0xf]
    %v7932 = vld [vmem:[#allocation10] sm:$0x1]
    %v7934 = vlaneseq
    %v7935 = vshrl.u32 %v7934, 7
    %v7936 = vsub.s32 0, %v7935
    %v7937 = vrot.slane %v7932, %v7936
    %v8003 = vunpack.c.l.b16 %v7868
    %v8004 = vunpack.c.l.b16 %v7869
    %v8005 = vunpack.c.l.b16 %v7870
    %v8006 = vunpack.c.l.b16 %v7871
    %v8007 = vunpack.c.l.b16 %v7872
    %v8008 = vunpack.c.l.b16 %v7873
    %v8009 = vunpack.c.l.b16 %v7874
    %v8010 = vunpack.c.l.b16 %v7875
    %v8011 = vunpack.c.l.b16 %v7876
    %v8012 = vunpack.c.l.b16 %v7877
    %v8013 = vunpack.c.l.b16 %v7878
    %v8014 = vunpack.c.l.b16 %v7879
    %v8015 = vunpack.c.l.b16 %v7880
    %v8016 = vunpack.c.l.b16 %v7881
    %v8017 = vunpack.c.l.b16 %v7882
    %v8018 = vunpack.c.l.b16 %v7883
    %v8019 = vunpack.c.l.b16 %v7884
    %v8020 = vunpack.c.l.b16 %v7885
    %v8021 = vunpack.c.l.b16 %v7886
    %v8022 = vunpack.c.l.b16 %v7887
    %v8023 = vunpack.c.l.b16 %v7888
    %v8024 = vunpack.c.l.b16 %v7889
    %v8025 = vunpack.c.l.b16 %v7890
    %v8026 = vunpack.c.l.b16 %v7891
    %v8027 = vunpack.c.l.b16 %v7892
    %v8028 = vunpack.c.l.b16 %v7893
    %v8029 = vunpack.c.l.b16 %v7894
    %v8030 = vunpack.c.l.b16 %v7895
    %v8031 = vunpack.c.l.b16 %v7896
    %v8032 = vunpack.c.l.b16 %v7897
    %v8033 = vunpack.c.l.b16 %v7898
    %v8034 = vunpack.c.l.b16 %v7899
    %v8035 = vunpack.c.l.b16 %v7900
    %v8036 = vunpack.c.l.b16 %v7901
    %v8037 = vunpack.c.l.b16 %v7902
    %v8038 = vunpack.c.l.b16 %v7903
    %v8039 = vunpack.c.l.b16 %v7904
    %v8040 = vunpack.c.l.b16 %v7905
    %v8041 = vunpack.c.l.b16 %v7906
    %v8042 = vunpack.c.l.b16 %v7907
    %v8043 = vunpack.c.l.b16 %v7908
    %v8044 = vunpack.c.l.b16 %v7909
    %v8045 = vunpack.c.l.b16 %v7910
    %v8046 = vunpack.c.l.b16 %v7911
    %v8047 = vunpack.c.l.b16 %v7912
    %v8048 = vunpack.c.l.b16 %v7913
    %v8049 = vunpack.c.l.b16 %v7914
    %v8050 = vunpack.c.l.b16 %v7915
    %v8051 = vunpack.c.l.b16 %v7916
    %v8052 = vunpack.c.l.b16 %v7917
    %v8053 = vunpack.c.l.b16 %v7918
    %v8054 = vunpack.c.l.b16 %v7919
    %v8055 = vunpack.c.l.b16 %v7920
    %v8056 = vunpack.c.l.b16 %v7921
    %v8057 = vunpack.c.l.b16 %v7922
    %v8058 = vunpack.c.l.b16 %v7923
    %v8059 = vunpack.c.l.b16 %v7924
    %v8060 = vunpack.c.l.b16 %v7925
    %v8061 = vunpack.c.l.b16 %v7926
    %v8062 = vunpack.c.l.b16 %v7927
    %v8063 = vunpack.c.l.b16 %v7928
    %v8064 = vunpack.c.l.b16 %v7929
    %v8065 = vunpack.c.l.b16 %v7930
    %v8066 = vunpack.c.l.b16 %v7931
    %v8067 = vpack.c.b16 %v8004, %v8003
    %v8068 = vpack.c.b16 %v8006, %v8005
    %v8069 = vpack.c.b16 %v8008, %v8007
    %v8070 = vpack.c.b16 %v8010, %v8009
    %v8071 = vpack.c.b16 %v8012, %v8011
    %v8072 = vpack.c.b16 %v8014, %v8013
    %v8073 = vpack.c.b16 %v8016, %v8015
    %v8074 = vpack.c.b16 %v8018, %v8017
    %v8075 = vpack.c.b16 %v8020, %v8019
    %v8076 = vpack.c.b16 %v8022, %v8021
    %v8077 = vpack.c.b16 %v8024, %v8023
    %v8078 = vpack.c.b16 %v8026, %v8025
    %v8079 = vpack.c.b16 %v8028, %v8027
    %v8080 = vpack.c.b16 %v8030, %v8029
    %v8081 = vpack.c.b16 %v8032, %v8031
    %v8082 = vpack.c.b16 %v8034, %v8033
    %v8083 = vpack.c.b16 %v8036, %v8035
    %v8084 = vpack.c.b16 %v8038, %v8037
    %v8085 = vpack.c.b16 %v8040, %v8039
    %v8086 = vpack.c.b16 %v8042, %v8041
    %v8087 = vpack.c.b16 %v8044, %v8043
    %v8088 = vpack.c.b16 %v8046, %v8045
    %v8089 = vpack.c.b16 %v8048, %v8047
    %v8090 = vpack.c.b16 %v8050, %v8049
    %v8091 = vpack.c.b16 %v8052, %v8051
    %v8092 = vpack.c.b16 %v8054, %v8053
    %v8093 = vpack.c.b16 %v8056, %v8055
    %v8094 = vpack.c.b16 %v8058, %v8057
    %v8095 = vpack.c.b16 %v8060, %v8059
    %v8096 = vpack.c.b16 %v8062, %v8061
    %v8097 = vpack.c.b16 %v8064, %v8063
    %v8098 = vpack.c.b16 %v8066, %v8065
    %8131 = vmatprep.subr.bf16.mxu0 0
    %8132 = vmatpush1.bf16.msra.mxu0 %v8074
    %8133 = vmatprep.subr.bf16.mxu0 0
    %8134 = vmatpush1.bf16.msra.mxu0 %v8073
    %8135 = vmatprep.subr.bf16.mxu0 0
    %8136 = vmatpush1.bf16.msra.mxu0 %v8072
    %8137 = vmatprep.subr.bf16.mxu0 0
    %8138 = vmatpush1.bf16.msra.mxu0 %v8071
    %8139 = vmatprep.subr.bf16.mxu0 0
    %8140 = vmatpush1.bf16.msra.mxu0 %v8070
    %8141 = vmatprep.subr.bf16.mxu0 0
    %8142 = vmatpush1.bf16.msra.mxu0 %v8069
    %8143 = vmatprep.subr.bf16.mxu0 0
    %8144 = vmatpush1.bf16.msra.mxu0 %v8068
    %8145 = vmatprep.subr.bf16.mxu0 0
    %8146 = vmatpush1.bf16.msra.mxu0 %v8067
    %8147 = vmatprep.subr.bf16.mxu0 0
    %8148 = vmatpush2.bf16.msra.mxu0 %v8082
    %8149 = vmatprep.subr.bf16.mxu0 0
    %8150 = vmatpush2.bf16.msra.mxu0 %v8081
    %8151 = vmatprep.subr.bf16.mxu0 0
    %8152 = vmatpush2.bf16.msra.mxu0 %v8080
    %8153 = vmatprep.subr.bf16.mxu0 0
    %8154 = vmatpush2.bf16.msra.mxu0 %v8079
    %8155 = vmatprep.subr.bf16.mxu0 0
    %8156 = vmatpush2.bf16.msra.mxu0 %v8078
    %8157 = vmatprep.subr.bf16.mxu0 0
    %8158 = vmatpush2.bf16.msra.mxu0 %v8077
    %8159 = vmatprep.subr.bf16.mxu0 0
    %8160 = vmatpush2.bf16.msra.mxu0 %v8076
    %8161 = vmatprep.subr.bf16.mxu0 0
    %8162 = vmatpush2.bf16.msra.mxu0 %v8075
    %8163 = vmatprep.mubr.bf16.mxu0 %v7865
    %8164 = vmatmul.mubr.bf16.gmra.mxu0 %v7864
    %v8165 = vpop.f32.mrf.mxu0
    %v8166 = vadd.f32 %v7937, %v8165
    %v8167 = vpop.f32.mrf.mxu0
    %v8168 = vpop.f32.mrf.mxu0
    %v8169 = vpop.f32.mrf.mxu0
    %8170 = vdwg.mxu0
    %8171 = vmatprep.subr.bf16.mxu0 0
    %8172 = vmatpush1.bf16.msra.mxu0 %v8090
    %8173 = vmatprep.subr.bf16.mxu0 0
    %8174 = vmatpush1.bf16.msra.mxu0 %v8089
    %8175 = vmatprep.subr.bf16.mxu0 0
    %8176 = vmatpush1.bf16.msra.mxu0 %v8088
    %8177 = vmatprep.subr.bf16.mxu0 0
    %8178 = vmatpush1.bf16.msra.mxu0 %v8087
    %8179 = vmatprep.subr.bf16.mxu0 0
    %8180 = vmatpush1.bf16.msra.mxu0 %v8086
    %8181 = vmatprep.subr.bf16.mxu0 0
    %8182 = vmatpush1.bf16.msra.mxu0 %v8085
    %8183 = vmatprep.subr.bf16.mxu0 0
    %8184 = vmatpush1.bf16.msra.mxu0 %v8084
    %8185 = vmatprep.subr.bf16.mxu0 0
    %8186 = vmatpush1.bf16.msra.mxu0 %v8083
    %8187 = vmatprep.subr.bf16.mxu0 0
    %8188 = vmatpush2.bf16.msra.mxu0 %v8098
    %8189 = vmatprep.subr.bf16.mxu0 0
    %8190 = vmatpush2.bf16.msra.mxu0 %v8097
    %8191 = vmatprep.subr.bf16.mxu0 0
    %8192 = vmatpush2.bf16.msra.mxu0 %v8096
    %8193 = vmatprep.subr.bf16.mxu0 0
    %8194 = vmatpush2.bf16.msra.mxu0 %v8095
    %8195 = vmatprep.subr.bf16.mxu0 0
    %8196 = vmatpush2.bf16.msra.mxu0 %v8094
    %8197 = vmatprep.subr.bf16.mxu0 0
    %8198 = vmatpush2.bf16.msra.mxu0 %v8093
    %8199 = vmatprep.subr.bf16.mxu0 0
    %8200 = vmatpush2.bf16.msra.mxu0 %v8092
    %8201 = vmatprep.subr.bf16.mxu0 0
    %8202 = vmatpush2.bf16.msra.mxu0 %v8091
    %8203 = vmatprep.mubr.bf16.mxu0 %v7867
    %8204 = vmatmul.mubr.bf16.gmra.mxu0 %v7866
    %v8205 = vpop.f32.mrf.mxu0
    %v8206 = vadd.f32 %v8166, %v8205
    %v8207 = vpop.f32.mrf.mxu0
    %v8208 = vpop.f32.mrf.mxu0
    %v8209 = vpop.f32.mrf.mxu0
    %8210 = vdwg.mxu0
    %8211 = vst [vmem:[#allocation11] sm:$0xff] %v8206
    // Predicated region
    $region42: #{tpu_custom_call.1} parent=1 // pred_check
      _
    $region43: #{tpu_custom_call.1} parent=1 // pred_check_branch
      %8213 = sbr.rel (0) target = $region45
    $region44: #{tpu_custom_call.1} parent=1 // pred_region
      %s8215 = ssub.s32 128, 128
      %8216 = vsyncadd [#allocation4], %s8215
      %s8218 = sshll.u32 [#allocation11], 4
      %s8219 = int_to_ptr.vmem [resolvable:$true] %s8218
      %8221 = dma.vmem_to_hbm [thread:$0]  %s8219, 128, %s5, [#allocation4]
    $region45: #{tpu_custom_call.1} parent=1 // pred_fallthru
      _
    // Predicated region
    $region46: #{tpu_custom_call.1} parent=1 // pred_check
      _
    $region47: #{tpu_custom_call.1} parent=1 // pred_check_branch
      %8223 = sbr.rel (0) target = $region49
    $region48: #{tpu_custom_call.1} parent=1 // pred_region
      %8224 = dma.done [#allocation4], 128
    $region49: #{tpu_custom_call.1} parent=1 // pred_fallthru
      _
    %8225 = vsyncpa [#allocation3], 1
    %8226 = vsyncpa [#allocation6], 1
    %8227 = vsyncpa [#allocation9], 1
    %8228 = vsyncpa [#allocation4], 1

</llo_original>
